<compile_context>
chip_gen: v6e
topology: v6e:2x2x1
jax: 0.10.0
libtpu: 0.0.40
codegen_flags: <defaults>
</compile_context>

<pallas_src>
import functools

import numpy as np
import jax
import jax.numpy as jnp
from jax.experimental import pallas as pl
from jax.experimental.pallas import tpu as pltpu


VMEM_LIMIT_BYTES = 32 * 1024 * 1024        # explicit scoped-VMEM limit (> v5e 16 MiB default)
_VMEM_BLOCK_BUDGET = 6 * 1024 * 1024       # per-operand, per-buffer tile budget


# ----------------------------------------------------------------------------
# Tile selection helpers
# ----------------------------------------------------------------------------
def _pick_spatial_tile(S, bytes_per_col):
    """Lane-dense tile of the flattened-spatial axis: a multiple of 128 dividing S,
    sized to the VMEM budget.  Falls back to the full extent for small/irregular S
    (always legal: block dim == full array dim)."""
    max_cols = max(128, _VMEM_BLOCK_BUDGET // max(int(bytes_per_col), 1))
    t = min(S, max_cols)
    if S >= 256:
        t = min(t, max(128, S // 2))   # >= 2 spatial tiles -> both v7x TensorCores busy
    t -= t % 128
    while t >= 128:
        if S % t == 0:
            return t
        t -= 128
    return S


def _pick_k_tile(K):
    """Reduction-axis tile for the fused encoder (K = 16 * num_bins)."""
    if K <= 4096:
        return K
    for t in (4096, 2048, 1024, 512):
        if K % t == 0:
            return t
    return K


# ----------------------------------------------------------------------------
# Kernel 1: fused 1x1 temporal encoding + 4x4/stride-4 depthwise spatial encoding
#   out[b, c, s] = sum_K  W_comb[c, K] * patches[b, K, s]
# ----------------------------------------------------------------------------
def _fused_encode_kernel(x_ref, w_ref, o_ref, acc_ref):
    @pl.when(pl.program_id(2) == 0)
    def _():
        acc_ref[...] = jnp.zeros_like(acc_ref)

    # f32 operands on purpose (match PyTorch f32 reference numerics); could be cast
    # to bf16 here for ~2x MXU throughput if tolerance allows.
    acc_ref[...] += jnp.dot(w_ref[...], x_ref[0], preferred_element_type=jnp.float32)

    @pl.when(pl.program_id(2) == pl.num_programs(2) - 1)
    def _():
        o_ref[0] = acc_ref[...].astype(o_ref.dtype)


def fused_encode(xp, w_comb):
    """xp: (B, 16*Nt, S2) stride-4 4x4 input patches (S2 = H/4 * W/4),
       w_comb: (k, 16*Nt) fused (temporal x depthwise) weights -> (B, k, S2)."""
    B, K, S = xp.shape
    k = w_comb.shape[0]
    TK = _pick_k_tile(K)
    TS = _pick_spatial_tile(S, TK * 4)
    return pl.pallas_call(
        _fused_encode_kernel,
        out_shape=jax.ShapeDtypeStruct((B, k, S), jnp.float32),
        grid=(B, S // TS, K // TK),
        in_specs=[
            pl.BlockSpec((1, TK, TS), lambda b, s, kk: (b, kk, s)),
            pl.BlockSpec((k, TK), lambda b, s, kk: (0, kk)),
        ],
        out_specs=pl.BlockSpec((1, k, TS), lambda b, s, kk: (b, 0, s)),
        scratch_shapes=[pltpu.VMEM((k, TS), jnp.float32)],
        compiler_params=pltpu.CompilerParams(
            dimension_semantics=("parallel", "parallel", "arbitrary"),
            vmem_limit_bytes=VMEM_LIMIT_BYTES),
    )(xp, w_comb)


# ----------------------------------------------------------------------------
# Kernel 2: 1x1 decoding conv (k -> num_bins) + bias + ReLU, lane-dense output
#   out[b, n, s] = relu( sum_c W[n, c] * x[b, c, s] + bias[n] )
# ----------------------------------------------------------------------------
def _decode_kernel(x_ref, w_ref, b_ref, o_ref):
    y = jnp.dot(w_ref[...], x_ref[0], preferred_element_type=jnp.float32)
    o_ref[0] = jnp.maximum(y + b_ref[...], 0.0).astype(o_ref.dtype)


def decode_1x1_relu(x, w, b):
    """x: (B, k, S), w: (Nt, k), b: (Nt, 1) -> (B, Nt, S)."""
    B, k, S = x.shape
    Nt = w.shape[0]
    TS = _pick_spatial_tile(S, (k + Nt) * 4)
    return pl.pallas_call(
        _decode_kernel,
        out_shape=jax.ShapeDtypeStruct((B, Nt, S), jnp.float32),
        grid=(B, S // TS),
        in_specs=[
            pl.BlockSpec((1, k, TS), lambda bb, s: (bb, 0, s)),
            pl.BlockSpec((Nt, k), lambda bb, s: (0, 0)),
            pl.BlockSpec((Nt, 1), lambda bb, s: (0, 0)),
        ],
        out_specs=pl.BlockSpec((1, Nt, TS), lambda bb, s: (bb, 0, s)),
        compiler_params=pltpu.CompilerParams(
            dimension_semantics=("parallel", "parallel"),
            vmem_limit_bytes=VMEM_LIMIT_BYTES),
    )(x, w, b)


# ----------------------------------------------------------------------------
# Kernel 3: fused UpBlock
#   UpsamplingBilinear2d(x2, align_corners=True) -> ReflectionPad2d(1)
#   -> Conv2d(k, k, 3, bias=True) -> ReLU
# The reflection pad is folded into the interpolation matrices, so each channel's
# padded upsampled plane is just  UhP (2h+2, h) @ y_c (h, w) @ UwPT (w, 2w+2).
# ----------------------------------------------------------------------------
def _interp_matrix_np(n):
    """1D bilinear x2 upsample matrix, align_corners=True (PyTorch UpsamplingBilinear2d)."""
    m = 2 * n
    U = np.zeros((m, n), dtype=np.float32)
    if n == 1:
        U[:, 0] = 1.0
        return U
    for i in range(m):
        src = i * (n - 1) / (m - 1)
        i0 = min(int(np.floor(src)), n - 2)
        frac = src - i0
        U[i, i0] = 1.0 - frac
        U[i, i0 + 1] = frac
    return U


def _reflect_pad_matrix_np(m):
    """(m+2, m) selector implementing ReflectionPad1d(1)."""
    P = np.zeros((m + 2, m), dtype=np.float32)
    P[0, 1] = 1.0
    for i in range(m):
        P[i + 1, i] = 1.0
    P[m + 1, m - 2] = 1.0
    return P


def _upblock_kernel(x_ref, uhp_ref, uwpT_ref, w_ref, b_ref, o_ref, *, k, h, w):
    H2, W2 = 2 * h, 2 * w
    # --- bilinear x2 + reflection pad, per channel (two small MXU matmuls each) ---
    pads = []
    for c in range(k):
        yc = x_ref[0, c]                                                     # (h, w)
        t = jnp.dot(uhp_ref[...], yc, preferred_element_type=jnp.float32)    # (2h+2, w)
        pads.append(
            jnp.dot(t, uwpT_ref[...], preferred_element_type=jnp.float32))   # (2h+2, 2w+2)
    # --- 3x3 conv (k -> k) + bias + ReLU; channel mix via unrolled SMEM-scalar FMAs
    #     (k is small; avoids minor-dim reshapes/transposes inside the kernel) ---
    for co in range(k):
        acc = jnp.zeros((H2, W2), jnp.float32)
        for ci in range(k):
            for di in range(3):
                for dj in range(3):
                    wv = w_ref[((co * k + ci) * 3 + di) * 3 + dj]
                    acc = acc + wv * pads[ci][di:di + H2, dj:dj + W2]
        o_ref[0, co] = jnp.maximum(acc + b_ref[co], 0.0)


def upblock(x, w_conv, b_conv):
    """UpBlock (bilinear x2 + reflect pad + 3x3 conv + bias + ReLU), NCHW -> NCHW."""
    B, k, h, w = x.shape
    H2, W2 = 2 * h, 2 * w
    uh_pad = jnp.asarray(_reflect_pad_matrix_np(H2) @ _interp_matrix_np(h))    # (2h+2, h)
    uw_padT = jnp.asarray((_reflect_pad_matrix_np(W2) @ _interp_matrix_np(w)).T)  # (w, 2w+2)
    w_flat = w_conv.reshape(-1).astype(jnp.float32)   # (k*k*9,) row-major (co, ci, kh, kw)
    b_flat = b_conv.reshape(-1).astype(jnp.float32)   # (k,)
    kern = functools.partial(_upblock_kernel, k=k, h=h, w=w)
    return pl.pallas_call(
        kern,
        out_shape=jax.ShapeDtypeStruct((B, k, H2, W2), jnp.float32),
        grid=(B,),
        in_specs=[
            pl.BlockSpec((1, k, h, w), lambda b: (b, 0, 0, 0)),
            pl.BlockSpec((H2 + 2, h), lambda b: (0, 0)),
            pl.BlockSpec((w, W2 + 2), lambda b: (0, 0)),
            pl.BlockSpec(memory_space=pltpu.MemorySpace.SMEM),
            pl.BlockSpec(memory_space=pltpu.MemorySpace.SMEM),
        ],
        out_specs=pl.BlockSpec((1, k, H2, W2), lambda b: (b, 0, 0, 0)),
        compiler_params=pltpu.CompilerParams(
            dimension_semantics=("parallel",),
            vmem_limit_bytes=VMEM_LIMIT_BYTES),
    )(x, uh_pad, uw_padT, w_flat, b_flat)


# ----------------------------------------------------------------------------
# Module forward (glue in plain JAX; all heavy math in the Pallas kernels above)
# ----------------------------------------------------------------------------
def csph_forward(x_nchw, params):
    B, Nt, H, W = x_nchw.shape
    k = params["W_enc"].shape[0]
    H4, W4 = H // 4, W // 4

    # --- fused csph1D (1x1, Nt->k) + csph2D (4x4 stride-4 depthwise) encoding ---
    # patches^T: (B, 16*Nt, H4*W4), reduction-dim order (t, dh, dw)
    xp = (x_nchw.reshape(B, Nt, H4, 4, W4, 4)
                .transpose(0, 1, 3, 5, 2, 4)
                .reshape(B, Nt * 16, H4 * W4))
    w_enc = params["W_enc"].reshape(k, Nt)                       # (k, Nt)
    w_dw = params["W_dw"].reshape(k, 16)                         # (k, 16)
    w_comb = (w_enc[:, :, None] * w_dw[:, None, :]).reshape(k, Nt * 16)
    B2 = fused_encode(xp, w_comb).reshape(B, k, H4, W4)          # NCHW directly

    # --- two fused UpBlocks ---
    B3_1 = upblock(B2, params["W_up1"], params["b_up1"])         # (B, k, H/2, W/2)
    B3_2 = upblock(B3_1, params["W_up2"], params["b_up2"])       # (B, k, H, W)

    # --- csph1D decoding: 1x1 conv k -> Nt, bias, ReLU (lane-dense output) ---
    w_dec = params["W_dec"].reshape(Nt, k)
    B4 = decode_1x1_relu(
        B3_2.reshape(B, k, H * W), w_dec, params["b_dec"].reshape(Nt, 1)
    ).reshape(B, Nt, H, W)                                       # NCHW directly

    return B4, B2


# ----------------------------------------------------------------------------
# Deterministic parameter init (synthetic; module __init__ defines the shapes)
# ----------------------------------------------------------------------------
def init_params(key, k, num_bins):
    ks = jax.random.split(key, 6)
    # TODO(synk): TruncatedFourierCoding ('TruncFourier') matrix not available;
    # using deterministic small-random Cmat instead.
    w_enc = (jax.random.normal(ks[0], (k, num_bins, 1, 1)) * 0.01).astype(jnp.float32)
    w_dw = (jax.random.normal(ks[1], (k, 1, 4, 4)) / 4.0).astype(jnp.float32)
    w_up1 = (jax.random.normal(ks[2], (k, k, 3, 3)) / np.sqrt(9 * k)).astype(jnp.float32)
    b_up1 = (jax.random.normal(ks[3], (k,)) * 0.01).astype(jnp.float32)
    w_up2 = (jax.random.normal(ks[4], (k, k, 3, 3)) / np.sqrt(9 * k)).astype(jnp.float32)
    b_up2 = (jax.random.normal(ks[5], (k,)) * 0.01).astype(jnp.float32)
    # kaiming_normal_(fan_in, relu) -> std = sqrt(2 / fan_in), fan_in = k
    w_dec = (jax.random.normal(jax.random.fold_in(key, 7), (num_bins, k, 1, 1))
             * np.sqrt(2.0 / k)).astype(jnp.float32)
    b_dec = jnp.zeros((num_bins,), jnp.float32)
    return dict(W_enc=w_enc, W_dw=w_dw, W_up1=w_up1, b_up1=b_up1,
                W_up2=w_up2, b_up2=b_up2, W_dec=w_dec, b_dec=b_dec)


if __name__ == "__main__":
    key = jax.random.PRNGKey(0)
    B, num_bins, H, W, k = 2, 32, 16, 16, 4   # (Batch, Nt, Nr, Nc), k codes

    xkey, pkey = jax.random.split(key)
    x = jax.random.uniform(xkey, (B, num_bins, H, W), dtype=jnp.float32)
    params = init_params(pkey, k=k, num_bins=num_bins)

    fwd = jax.jit(csph_forward)
    B4, B2 = fwd(x, params)
    jax.block_until_ready((B4, B2))

    assert B4.shape == (B, num_bins, H, W), B4.shape
    assert B2.shape == (B, k, H // 4, W // 4), B2.shape
    assert bool(jnp.all(jnp.isfinite(B4))) and bool(jnp.all(jnp.isfinite(B2)))
    print("KERNEL_OK")
</pallas_src>

<mosaic_0001>
module attributes {stable_mosaic.version = 11 : i64} {
  func.func @_fused_encode_kernel(%arg0: i32, %arg1: i32, %arg2: i32, %arg3: memref<1x512x16xf32, #tpu.memory_space<vmem>>, %arg4: memref<4x512xf32, #tpu.memory_space<vmem>>, %arg5: memref<1x4x16xf32, #tpu.memory_space<vmem>>, %arg6: memref<4x16xf32, #tpu.memory_space<vmem>>) attributes {dimension_semantics = [#tpu.dimension_semantics<parallel>, #tpu.dimension_semantics<parallel>, #tpu.dimension_semantics<arbitrary>], iteration_bounds = array<i64: 2, 1, 1>, scalar_prefetch = 0 : i64, scratch_operands = 1 : i64, tpu.core_type = #tpu.core_type<tc>, window_params = [{transform_indices = @transform_0, window_bounds = array<i64: 1, 512, 16>}, {transform_indices = @transform_1, window_bounds = array<i64: 4, 512>}, {transform_indices = @transform_2, window_bounds = array<i64: 1, 4, 16>}]} {
    %c0_i32 = arith.constant 0 : i32
    %0 = arith.cmpi eq, %arg2, %c0_i32 : i32
    %1 = arith.extui %0 : i1 to i32
    %c0_i32_0 = arith.constant 0 : i32
    %2 = arith.cmpi ne, %1, %c0_i32_0 : i32
    scf.if %2 {
      %cst_11 = arith.constant 0.000000e+00 : f32
      %13 = vector.broadcast %cst_11 : f32 to vector<4x16xf32>
      %c0_12 = arith.constant 0 : index
      %c0_13 = arith.constant 0 : index
      %14 = vector.load %arg6[%c0_12, %c0_13] : memref<4x16xf32, #tpu.memory_space<vmem>>, vector<4x16xf32>
      tpu.vector_store %arg6[%c0_12, %c0_13], %13 {strides = array<i32>} : memref<4x16xf32, #tpu.memory_space<vmem>>, vector<4x16xf32>,
    } else {
    }
    %c0 = arith.constant 0 : index
    %c0_1 = arith.constant 0 : index
    %3 = vector.load %arg6[%c0, %c0_1] : memref<4x16xf32, #tpu.memory_space<vmem>>, vector<4x16xf32>
    %c0_2 = arith.constant 0 : index
    %c0_3 = arith.constant 0 : index
    %4 = vector.load %arg4[%c0_2, %c0_3] : memref<4x512xf32, #tpu.memory_space<vmem>>, vector<4x512xf32>
    %c0_4 = arith.constant 0 : index
    %c0_5 = arith.constant 0 : index
    %c0_6 = arith.constant 0 : index
    %5 = vector.load %arg3[%c0_4, %c0_5, %c0_6] : memref<1x512x16xf32, #tpu.memory_space<vmem>>, vector<1x512x16xf32>
    %6 = vector.shape_cast %5 : vector<1x512x16xf32> to vector<512x16xf32>
    %cst = arith.constant dense<0.000000e+00> : vector<4x16xf32>
    %7 = tpu.matmul %4, %6, %cst {dimension_numbers = #tpu.dot_dimension_numbers<[1], [0], [0], [1], [0, 0, 1, 1], [], []>} : vector<4x512xf32>, vector<512x16xf32>, vector<4x16xf32> -> vector<4x16xf32>
    %8 = arith.addf %3, %7 : vector<4x16xf32>
    %c0_7 = arith.constant 0 : index
    %c0_8 = arith.constant 0 : index
    %9 = vector.load %arg6[%c0_7, %c0_8] : memref<4x16xf32, #tpu.memory_space<vmem>>, vector<4x16xf32>
    tpu.vector_store %arg6[%c0_7, %c0_8], %8 {strides = array<i32>} : memref<4x16xf32, #tpu.memory_space<vmem>>, vector<4x16xf32>,
    %c0_i32_9 = arith.constant 0 : i32
    %10 = arith.cmpi eq, %arg2, %c0_i32_9 : i32
    %11 = arith.extui %10 : i1 to i32
    %c0_i32_10 = arith.constant 0 : i32
    %12 = arith.cmpi ne, %11, %c0_i32_10 : i32
    scf.if %12 {
      %c0_11 = arith.constant 0 : index
      %c0_12 = arith.constant 0 : index
      %13 = vector.load %arg6[%c0_11, %c0_12] : memref<4x16xf32, #tpu.memory_space<vmem>>, vector<4x16xf32>
      %c0_13 = arith.constant 0 : index
      %c0_14 = arith.constant 0 : index
      %c0_15 = arith.constant 0 : index
      %14 = vector.load %arg5[%c0_13, %c0_14, %c0_15] : memref<1x4x16xf32, #tpu.memory_space<vmem>>, vector<1x4x16xf32>
      %15 = vector.shape_cast %14 : vector<1x4x16xf32> to vector<4x16xf32>
      %16 = vector.shape_cast %13 : vector<4x16xf32> to vector<1x4x16xf32>
      tpu.vector_store %arg5[%c0_13, %c0_14, %c0_15], %16 {strides = array<i32>} : memref<1x4x16xf32, #tpu.memory_space<vmem>>, vector<1x4x16xf32>,
    } else {
    }
    return
  }
  func.func @transform_0(%arg0: i32, %arg1: i32, %arg2: i32) -> (i32, i32, i32) {
    %c0_i32 = arith.constant 0 : i32
    return %arg0, %arg2, %arg1 : i32, i32, i32
  }
  func.func @transform_1(%arg0: i32, %arg1: i32, %arg2: i32) -> (i32, i32) {
    %c0_i32 = arith.constant 0 : i32
    %c0_i32_0 = arith.constant 0 : i32
    return %c0_i32, %arg2 : i32, i32
  }
  func.func @transform_2(%arg0: i32, %arg1: i32, %arg2: i32) -> (i32, i32, i32) {
    %c0_i32 = arith.constant 0 : i32
    %c0_i32_0 = arith.constant 0 : i32
    return %arg0, %c0_i32, %arg1 : i32, i32, i32
  }
}

module attributes {stable_mosaic.version = 11 : i64} {
  func.func @_upblock_kernel(%arg0: i32, %arg1: memref<1x4x8x8xf32, #tpu.memory_space<vmem>>, %arg2: memref<18x8xf32, #tpu.memory_space<vmem>>, %arg3: memref<8x18xf32, #tpu.memory_space<vmem>>, %arg4: memref<144xf32, #tpu.memory_space<smem>>, %arg5: memref<4xf32, #tpu.memory_space<smem>>, %arg6: memref<1x4x16x16xf32, #tpu.memory_space<vmem>>) attributes {dimension_semantics = [#tpu.dimension_semantics<parallel>], iteration_bounds = array<i64: 2>, scalar_prefetch = 0 : i64, scratch_operands = 0 : i64, tpu.core_type = #tpu.core_type<tc>, window_params = [{transform_indices = @transform_0, window_bounds = array<i64: 1, 4, 8, 8>}, {pipeline_mode = #tpu.pipeline_mode<synchronous>, transform_indices = @transform_1, window_bounds = array<i64: 18, 8>}, {pipeline_mode = #tpu.pipeline_mode<synchronous>, transform_indices = @transform_2, window_bounds = array<i64: 8, 18>}, {transform_indices = @transform_3, window_bounds = array<i64: 144>}, {transform_indices = @transform_4, window_bounds = array<i64: 4>}, {transform_indices = @transform_5, window_bounds = array<i64: 1, 4, 16, 16>}]} {
    %c0 = arith.constant 0 : index
    %c0_0 = arith.constant 0 : index
    %c0_1 = arith.constant 0 : index
    %c0_2 = arith.constant 0 : index
    %0 = vector.load %arg1[%c0, %c0_0, %c0_1, %c0_2] : memref<1x4x8x8xf32, #tpu.memory_space<vmem>>, vector<1x1x8x8xf32>
    %1 = vector.shape_cast %0 : vector<1x1x8x8xf32> to vector<8x8xf32>
    %c0_3 = arith.constant 0 : index
    %c0_4 = arith.constant 0 : index
    %2 = vector.load %arg2[%c0_3, %c0_4] : memref<18x8xf32, #tpu.memory_space<vmem>>, vector<18x8xf32>
    %cst = arith.constant dense<0.000000e+00> : vector<18x8xf32>
    %3 = tpu.matmul %2, %1, %cst {dimension_numbers = #tpu.dot_dimension_numbers<[1], [0], [0], [1], [0, 0, 1, 1], [], []>} : vector<18x8xf32>, vector<8x8xf32>, vector<18x8xf32> -> vector<18x8xf32>
    %c0_5 = arith.constant 0 : index
    %c0_6 = arith.constant 0 : index
    %4 = vector.load %arg3[%c0_5, %c0_6] : memref<8x18xf32, #tpu.memory_space<vmem>>, vector<8x18xf32>
    %cst_7 = arith.constant dense<0.000000e+00> : vector<18x18xf32>
    %5 = tpu.matmul %3, %4, %cst_7 {dimension_numbers = #tpu.dot_dimension_numbers<[1], [0], [0], [1], [0, 0, 1, 1], [], []>} : vector<18x8xf32>, vector<8x18xf32>, vector<18x18xf32> -> vector<18x18xf32>
    %c0_8 = arith.constant 0 : index
    %c1 = arith.constant 1 : index
    %c0_9 = arith.constant 0 : index
    %c0_10 = arith.constant 0 : index
    %6 = vector.load %arg1[%c0_8, %c1, %c0_9, %c0_10] : memref<1x4x8x8xf32, #tpu.memory_space<vmem>>, vector<1x1x8x8xf32>
    %7 = vector.shape_cast %6 : vector<1x1x8x8xf32> to vector<8x8xf32>
    %c0_11 = arith.constant 0 : index
    %c0_12 = arith.constant 0 : index
    %8 = vector.load %arg2[%c0_11, %c0_12] : memref<18x8xf32, #tpu.memory_space<vmem>>, vector<18x8xf32>
    %cst_13 = arith.constant dense<0.000000e+00> : vector<18x8xf32>
    %9 = tpu.matmul %8, %7, %cst_13 {dimension_numbers = #tpu.dot_dimension_numbers<[1], [0], [0], [1], [0, 0, 1, 1], [], []>} : vector<18x8xf32>, vector<8x8xf32>, vector<18x8xf32> -> vector<18x8xf32>
    %c0_14 = arith.constant 0 : index
    %c0_15 = arith.constant 0 : index
    %10 = vector.load %arg3[%c0_14, %c0_15] : memref<8x18xf32, #tpu.memory_space<vmem>>, vector<8x18xf32>
    %cst_16 = arith.constant dense<0.000000e+00> : vector<18x18xf32>
    %11 = tpu.matmul %9, %10, %cst_16 {dimension_numbers = #tpu.dot_dimension_numbers<[1], [0], [0], [1], [0, 0, 1, 1], [], []>} : vector<18x8xf32>, vector<8x18xf32>, vector<18x18xf32> -> vector<18x18xf32>
    %c0_17 = arith.constant 0 : index
    %c2 = arith.constant 2 : index
    %c0_18 = arith.constant 0 : index
    %c0_19 = arith.constant 0 : index
    %12 = vector.load %arg1[%c0_17, %c2, %c0_18, %c0_19] : memref<1x4x8x8xf32, #tpu.memory_space<vmem>>, vector<1x1x8x8xf32>
    %13 = vector.shape_cast %12 : vector<1x1x8x8xf32> to vector<8x8xf32>
    %c0_20 = arith.constant 0 : index
    %c0_21 = arith.constant 0 : index
    %14 = vector.load %arg2[%c0_20, %c0_21] : memref<18x8xf32, #tpu.memory_space<vmem>>, vector<18x8xf32>
    %cst_22 = arith.constant dense<0.000000e+00> : vector<18x8xf32>
    %15 = tpu.matmul %14, %13, %cst_22 {dimension_numbers = #tpu.dot_dimension_numbers<[1], [0], [0], [1], [0, 0, 1, 1], [], []>} : vector<18x8xf32>, vector<8x8xf32>, vector<18x8xf32> -> vector<18x8xf32>
    %c0_23 = arith.constant 0 : index
    %c0_24 = arith.constant 0 : index
    %16 = vector.load %arg3[%c0_23, %c0_24] : memref<8x18xf32, #tpu.memory_space<vmem>>, vector<8x18xf32>
    %cst_25 = arith.constant dense<0.000000e+00> : vector<18x18xf32>
    %17 = tpu.matmul %15, %16, %cst_25 {dimension_numbers = #tpu.dot_dimension_numbers<[1], [0], [0], [1], [0, 0, 1, 1], [], []>} : vector<18x8xf32>, vector<8x18xf32>, vector<18x18xf32> -> vector<18x18xf32>
    %c0_26 = arith.constant 0 : index
    %c3 = arith.constant 3 : index
    %c0_27 = arith.constant 0 : index
    %c0_28 = arith.constant 0 : index
    %18 = vector.load %arg1[%c0_26, %c3, %c0_27, %c0_28] : memref<1x4x8x8xf32, #tpu.memory_space<vmem>>, vector<1x1x8x8xf32>
    %19 = vector.shape_cast %18 : vector<1x1x8x8xf32> to vector<8x8xf32>
    %c0_29 = arith.constant 0 : index
    %c0_30 = arith.constant 0 : index
    %20 = vector.load %arg2[%c0_29, %c0_30] : memref<18x8xf32, #tpu.memory_space<vmem>>, vector<18x8xf32>
    %cst_31 = arith.constant dense<0.000000e+00> : vector<18x8xf32>
    %21 = tpu.matmul %20, %19, %cst_31 {dimension_numbers = #tpu.dot_dimension_numbers<[1], [0], [0], [1], [0, 0, 1, 1], [], []>} : vector<18x8xf32>, vector<8x8xf32>, vector<18x8xf32> -> vector<18x8xf32>
    %c0_32 = arith.constant 0 : index
    %c0_33 = arith.constant 0 : index
    %22 = vector.load %arg3[%c0_32, %c0_33] : memref<8x18xf32, #tpu.memory_space<vmem>>, vector<8x18xf32>
    %cst_34 = arith.constant dense<0.000000e+00> : vector<18x18xf32>
    %23 = tpu.matmul %21, %22, %cst_34 {dimension_numbers = #tpu.dot_dimension_numbers<[1], [0], [0], [1], [0, 0, 1, 1], [], []>} : vector<18x8xf32>, vector<8x18xf32>, vector<18x18xf32> -> vector<18x18xf32>
    %cst_35 = arith.constant 0.000000e+00 : f32
    %24 = vector.broadcast %cst_35 : f32 to vector<16x16xf32>
    %c0_36 = arith.constant 0 : index
    %25 = memref.load %arg4[%c0_36] : memref<144xf32, #tpu.memory_space<smem>>
    %26 = vector.extract_strided_slice %5 {offsets = [0, 0], sizes = [16, 16], strides = [1, 1]} : vector<18x18xf32> to vector<16x16xf32>
    %27 = vector.broadcast %25 : f32 to vector<16x16xf32>
    %28 = arith.mulf %27, %26 : vector<16x16xf32>
    %29 = arith.addf %24, %28 : vector<16x16xf32>
    %c1_37 = arith.constant 1 : index
    %30 = memref.load %arg4[%c1_37] : memref<144xf32, #tpu.memory_space<smem>>
    %31 = vector.extract_strided_slice %5 {offsets = [0, 1], sizes = [16, 16], strides = [1, 1]} : vector<18x18xf32> to vector<16x16xf32>
    %32 = vector.broadcast %30 : f32 to vector<16x16xf32>
    %33 = arith.mulf %32, %31 : vector<16x16xf32>
    %34 = arith.addf %29, %33 : vector<16x16xf32>
    %c2_38 = arith.constant 2 : index
    %35 = memref.load %arg4[%c2_38] : memref<144xf32, #tpu.memory_space<smem>>
    %36 = vector.extract_strided_slice %5 {offsets = [0, 2], sizes = [16, 16], strides = [1, 1]} : vector<18x18xf32> to vector<16x16xf32>
    %37 = vector.broadcast %35 : f32 to vector<16x16xf32>
    %38 = arith.mulf %37, %36 : vector<16x16xf32>
    %39 = arith.addf %34, %38 : vector<16x16xf32>
    %c3_39 = arith.constant 3 : index
    %40 = memref.load %arg4[%c3_39] : memref<144xf32, #tpu.memory_space<smem>>
    %41 = vector.extract_strided_slice %5 {offsets = [1, 0], sizes = [16, 16], strides = [1, 1]} : vector<18x18xf32> to vector<16x16xf32>
    %42 = vector.broadcast %40 : f32 to vector<16x16xf32>
    %43 = arith.mulf %42, %41 : vector<16x16xf32>
    %44 = arith.addf %39, %43 : vector<16x16xf32>
    %c4 = arith.constant 4 : index
    %45 = memref.load %arg4[%c4] : memref<144xf32, #tpu.memory_space<smem>>
    %46 = vector.extract_strided_slice %5 {offsets = [1, 1], sizes = [16, 16], strides = [1, 1]} : vector<18x18xf32> to vector<16x16xf32>
    %47 = vector.broadcast %45 : f32 to vector<16x16xf32>
    %48 = arith.mulf %47, %46 : vector<16x16xf32>
    %49 = arith.addf %44, %48 : vector<16x16xf32>
    %c5 = arith.constant 5 : index
    %50 = memref.load %arg4[%c5] : memref<144xf32, #tpu.memory_space<smem>>
    %51 = vector.extract_strided_slice %5 {offsets = [1, 2], sizes = [16, 16], strides = [1, 1]} : vector<18x18xf32> to vector<16x16xf32>
    %52 = vector.broadcast %50 : f32 to vector<16x16xf32>
    %53 = arith.mulf %52, %51 : vector<16x16xf32>
    %54 = arith.addf %49, %53 : vector<16x16xf32>
    %c6 = arith.constant 6 : index
    %55 = memref.load %arg4[%c6] : memref<144xf32, #tpu.memory_space<smem>>
    %56 = vector.extract_strided_slice %5 {offsets = [2, 0], sizes = [16, 16], strides = [1, 1]} : vector<18x18xf32> to vector<16x16xf32>
    %57 = vector.broadcast %55 : f32 to vector<16x16xf32>
    %58 = arith.mulf %57, %56 : vector<16x16xf32>
    %59 = arith.addf %54, %58 : vector<16x16xf32>
    %c7 = arith.constant 7 : index
    %60 = memref.load %arg4[%c7] : memref<144xf32, #tpu.memory_space<smem>>
    %61 = vector.extract_strided_slice %5 {offsets = [2, 1], sizes = [16, 16], strides = [1, 1]} : vector<18x18xf32> to vector<16x16xf32>
    %62 = vector.broadcast %60 : f32 to vector<16x16xf32>
    %63 = arith.mulf %62, %61 : vector<16x16xf32>
    %64 = arith.addf %59, %63 : vector<16x16xf32>
    %c8 = arith.constant 8 : index
    %65 = memref.load %arg4[%c8] : memref<144xf32, #tpu.memory_space<smem>>
    %66 = vector.extract_strided_slice %5 {offsets = [2, 2], sizes = [16, 16], strides = [1, 1]} : vector<18x18xf32> to vector<16x16xf32>
    %67 = vector.broadcast %65 : f32 to vector<16x16xf32>
    %68 = arith.mulf %67, %66 : vector<16x16xf32>
    %69 = arith.addf %64, %68 : vector<16x16xf32>
    %c9 = arith.constant 9 : index
    %70 = memref.load %arg4[%c9] : memref<144xf32, #tpu.memory_space<smem>>
    %71 = vector.extract_strided_slice %11 {offsets = [0, 0], sizes = [16, 16], strides = [1, 1]} : vector<18x18xf32> to vector<16x16xf32>
    %72 = vector.broadcast %70 : f32 to vector<16x16xf32>
    %73 = arith.mulf %72, %71 : vector<16x16xf32>
    %74 = arith.addf %69, %73 : vector<16x16xf32>
    %c10 = arith.constant 10 : index
    %75 = memref.load %arg4[%c10] : memref<144xf32, #tpu.memory_space<smem>>
    %76 = vector.extract_strided_slice %11 {offsets = [0, 1], sizes = [16, 16], strides = [1, 1]} : vector<18x18xf32> to vector<16x16xf32>
    %77 = vector.broadcast %75 : f32 to vector<16x16xf32>
    %78 = arith.mulf %77, %76 : vector<16x16xf32>
    %79 = arith.addf %74, %78 : vector<16x16xf32>
    %c11 = arith.constant 11 : index
    %80 = memref.load %arg4[%c11] : memref<144xf32, #tpu.memory_space<smem>>
    %81 = vector.extract_strided_slice %11 {offsets = [0, 2], sizes = [16, 16], strides = [1, 1]} : vector<18x18xf32> to vector<16x16xf32>
    %82 = vector.broadcast %80 : f32 to vector<16x16xf32>
    %83 = arith.mulf %82, %81 : vector<16x16xf32>
    %84 = arith.addf %79, %83 : vector<16x16xf32>
    %c12 = arith.constant 12 : index
    %85 = memref.load %arg4[%c12] : memref<144xf32, #tpu.memory_space<smem>>
    %86 = vector.extract_strided_slice %11 {offsets = [1, 0], sizes = [16, 16], strides = [1, 1]} : vector<18x18xf32> to vector<16x16xf32>
    %87 = vector.broadcast %85 : f32 to vector<16x16xf32>
    %88 = arith.mulf %87, %86 : vector<16x16xf32>
    %89 = arith.addf %84, %88 : vector<16x16xf32>
    %c13 = arith.constant 13 : index
    %90 = memref.load %arg4[%c13] : memref<144xf32, #tpu.memory_space<smem>>
    %91 = vector.extract_strided_slice %11 {offsets = [1, 1], sizes = [16, 16], strides = [1, 1]} : vector<18x18xf32> to vector<16x16xf32>
    %92 = vector.broadcast %90 : f32 to vector<16x16xf32>
    %93 = arith.mulf %92, %91 : vector<16x16xf32>
    %94 = arith.addf %89, %93 : vector<16x16xf32>
    %c14 = arith.constant 14 : index
    %95 = memref.load %arg4[%c14] : memref<144xf32, #tpu.memory_space<smem>>
    %96 = vector.extract_strided_slice %11 {offsets = [1, 2], sizes = [16, 16], strides = [1, 1]} : vector<18x18xf32> to vector<16x16xf32>
    %97 = vector.broadcast %95 : f32 to vector<16x16xf32>
    %98 = arith.mulf %97, %96 : vector<16x16xf32>
    %99 = arith.addf %94, %98 : vector<16x16xf32>
    %c15 = arith.constant 15 : index
    %100 = memref.load %arg4[%c15] : memref<144xf32, #tpu.memory_space<smem>>
    %101 = vector.extract_strided_slice %11 {offsets = [2, 0], sizes = [16, 16], strides = [1, 1]} : vector<18x18xf32> to vector<16x16xf32>
    %102 = vector.broadcast %100 : f32 to vector<16x16xf32>
    %103 = arith.mulf %102, %101 : vector<16x16xf32>
    %104 = arith.addf %99, %103 : vector<16x16xf32>
    %c16 = arith.constant 16 : index
    %105 = memref.load %arg4[%c16] : memref<144xf32, #tpu.memory_space<smem>>
    %106 = vector.extract_strided_slice %11 {offsets = [2, 1], sizes = [16, 16], strides = [1, 1]} : vector<18x18xf32> to vector<16x16xf32>
    %107 = vector.broadcast %105 : f32 to vector<16x16xf32>
    %108 = arith.mulf %107, %106 : vector<16x16xf32>
    %109 = arith.addf %104, %108 : vector<16x16xf32>
    %c17 = arith.constant 17 : index
    %110 = memref.load %arg4[%c17] : memref<144xf32, #tpu.memory_space<smem>>
    %111 = vector.extract_strided_slice %11 {offsets = [2, 2], sizes = [16, 16], strides = [1, 1]} : vector<18x18xf32> to vector<16x16xf32>
    %112 = vector.broadcast %110 : f32 to vector<16x16xf32>
    %113 = arith.mulf %112, %111 : vector<16x16xf32>
    %114 = arith.addf %109, %113 : vector<16x16xf32>
    %c18 = arith.constant 18 : index
    %115 = memref.load %arg4[%c18] : memref<144xf32, #tpu.memory_space<smem>>
    %116 = vector.extract_strided_slice %17 {offsets = [0, 0], sizes = [16, 16], strides = [1, 1]} : vector<18x18xf32> to vector<16x16xf32>
    %117 = vector.broadcast %115 : f32 to vector<16x16xf32>
    %118 = arith.mulf %117, %116 : vector<16x16xf32>
    %119 = arith.addf %114, %118 : vector<16x16xf32>
    %c19 = arith.constant 19 : index
    %120 = memref.load %arg4[%c19] : memref<144xf32, #tpu.memory_space<smem>>
    %121 = vector.extract_strided_slice %17 {offsets = [0, 1], sizes = [16, 16], strides = [1, 1]} : vector<18x18xf32> to vector<16x16xf32>
    %122 = vector.broadcast %120 : f32 to vector<16x16xf32>
    %123 = arith.mulf %122, %121 : vector<16x16xf32>
    %124 = arith.addf %119, %123 : vector<16x16xf32>
    %c20 = arith.constant 20 : index
    %125 = memref.load %arg4[%c20] : memref<144xf32, #tpu.memory_space<smem>>
    %126 = vector.extract_strided_slice %17 {offsets = [0, 2], sizes = [16, 16], strides = [1, 1]} : vector<18x18xf32> to vector<16x16xf32>
    %127 = vector.broadcast %125 : f32 to vector<16x16xf32>
    %128 = arith.mulf %127, %126 : vector<16x16xf32>
    %129 = arith.addf %124, %128 : vector<16x16xf32>
    %c21 = arith.constant 21 : index
    %130 = memref.load %arg4[%c21] : memref<144xf32, #tpu.memory_space<smem>>
    %131 = vector.extract_strided_slice %17 {offsets = [1, 0], sizes = [16, 16], strides = [1, 1]} : vector<18x18xf32> to vector<16x16xf32>
    %132 = vector.broadcast %130 : f32 to vector<16x16xf32>
    %133 = arith.mulf %132, %131 : vector<16x16xf32>
    %134 = arith.addf %129, %133 : vector<16x16xf32>
    %c22 = arith.constant 22 : index
    %135 = memref.load %arg4[%c22] : memref<144xf32, #tpu.memory_space<smem>>
    %136 = vector.extract_strided_slice %17 {offsets = [1, 1], sizes = [16, 16], strides = [1, 1]} : vector<18x18xf32> to vector<16x16xf32>
    %137 = vector.broadcast %135 : f32 to vector<16x16xf32>
    %138 = arith.mulf %137, %136 : vector<16x16xf32>
    %139 = arith.addf %134, %138 : vector<16x16xf32>
    %c23 = arith.constant 23 : index
    %140 = memref.load %arg4[%c23] : memref<144xf32, #tpu.memory_space<smem>>
    %141 = vector.extract_strided_slice %17 {offsets = [1, 2], sizes = [16, 16], strides = [1, 1]} : vector<18x18xf32> to vector<16x16xf32>
    %142 = vector.broadcast %140 : f32 to vector<16x16xf32>
    %143 = arith.mulf %142, %141 : vector<16x16xf32>
    %144 = arith.addf %139, %143 : vector<16x16xf32>
    %c24 = arith.constant 24 : index
    %145 = memref.load %arg4[%c24] : memref<144xf32, #tpu.memory_space<smem>>
    %146 = vector.extract_strided_slice %17 {offsets = [2, 0], sizes = [16, 16], strides = [1, 1]} : vector<18x18xf32> to vector<16x16xf32>
    %147 = vector.broadcast %145 : f32 to vector<16x16xf32>
    %148 = arith.mulf %147, %146 : vector<16x16xf32>
    %149 = arith.addf %144, %148 : vector<16x16xf32>
    %c25 = arith.constant 25 : index
    %150 = memref.load %arg4[%c25] : memref<144xf32, #tpu.memory_space<smem>>
    %151 = vector.extract_strided_slice %17 {offsets = [2, 1], sizes = [16, 16], strides = [1, 1]} : vector<18x18xf32> to vector<16x16xf32>
    %152 = vector.broadcast %150 : f32 to vector<16x16xf32>
    %153 = arith.mulf %152, %151 : vector<16x16xf32>
    %154 = arith.addf %149, %153 : vector<16x16xf32>
    %c26 = arith.constant 26 : index
    %155 = memref.load %arg4[%c26] : memref<144xf32, #tpu.memory_space<smem>>
    %156 = vector.extract_strided_slice %17 {offsets = [2, 2], sizes = [16, 16], strides = [1, 1]} : vector<18x18xf32> to vector<16x16xf32>
    %157 = vector.broadcast %155 : f32 to vector<16x16xf32>
    %158 = arith.mulf %157, %156 : vector<16x16xf32>
    %159 = arith.addf %154, %158 : vector<16x16xf32>
    %c27 = arith.constant 27 : index
    %160 = memref.load %arg4[%c27] : memref<144xf32, #tpu.memory_space<smem>>
    %161 = vector.extract_strided_slice %23 {offsets = [0, 0], sizes = [16, 16], strides = [1, 1]} : vector<18x18xf32> to vector<16x16xf32>
    %162 = vector.broadcast %160 : f32 to vector<16x16xf32>
    %163 = arith.mulf %162, %161 : vector<16x16xf32>
    %164 = arith.addf %159, %163 : vector<16x16xf32>
    %c28 = arith.constant 28 : index
    %165 = memref.load %arg4[%c28] : memref<144xf32, #tpu.memory_space<smem>>
    %166 = vector.extract_strided_slice %23 {offsets = [0, 1], sizes = [16, 16], strides = [1, 1]} : vector<18x18xf32> to vector<16x16xf32>
    %167 = vector.broadcast %165 : f32 to vector<16x16xf32>
    %168 = arith.mulf %167, %166 : vector<16x16xf32>
    %169 = arith.addf %164, %168 : vector<16x16xf32>
    %c29 = arith.constant 29 : index
    %170 = memref.load %arg4[%c29] : memref<144xf32, #tpu.memory_space<smem>>
    %171 = vector.extract_strided_slice %23 {offsets = [0, 2], sizes = [16, 16], strides = [1, 1]} : vector<18x18xf32> to vector<16x16xf32>
    %172 = vector.broadcast %170 : f32 to vector<16x16xf32>
    %173 = arith.mulf %172, %171 : vector<16x16xf32>
    %174 = arith.addf %169, %173 : vector<16x16xf32>
    %c30 = arith.constant 30 : index
    %175 = memref.load %arg4[%c30] : memref<144xf32, #tpu.memory_space<smem>>
    %176 = vector.extract_strided_slice %23 {offsets = [1, 0], sizes = [16, 16], strides = [1, 1]} : vector<18x18xf32> to vector<16x16xf32>
    %177 = vector.broadcast %175 : f32 to vector<16x16xf32>
    %178 = arith.mulf %177, %176 : vector<16x16xf32>
    %179 = arith.addf %174, %178 : vector<16x16xf32>
    %c31 = arith.constant 31 : index
    %180 = memref.load %arg4[%c31] : memref<144xf32, #tpu.memory_space<smem>>
    %181 = vector.extract_strided_slice %23 {offsets = [1, 1], sizes = [16, 16], strides = [1, 1]} : vector<18x18xf32> to vector<16x16xf32>
    %182 = vector.broadcast %180 : f32 to vector<16x16xf32>
    %183 = arith.mulf %182, %181 : vector<16x16xf32>
    %184 = arith.addf %179, %183 : vector<16x16xf32>
    %c32 = arith.constant 32 : index
    %185 = memref.load %arg4[%c32] : memref<144xf32, #tpu.memory_space<smem>>
    %186 = vector.extract_strided_slice %23 {offsets = [1, 2], sizes = [16, 16], strides = [1, 1]} : vector<18x18xf32> to vector<16x16xf32>
    %187 = vector.broadcast %185 : f32 to vector<16x16xf32>
    %188 = arith.mulf %187, %186 : vector<16x16xf32>
    %189 = arith.addf %184, %188 : vector<16x16xf32>
    %c33 = arith.constant 33 : index
    %190 = memref.load %arg4[%c33] : memref<144xf32, #tpu.memory_space<smem>>
    %191 = vector.extract_strided_slice %23 {offsets = [2, 0], sizes = [16, 16], strides = [1, 1]} : vector<18x18xf32> to vector<16x16xf32>
    %192 = vector.broadcast %190 : f32 to vector<16x16xf32>
    %193 = arith.mulf %192, %191 : vector<16x16xf32>
    %194 = arith.addf %189, %193 : vector<16x16xf32>
    %c34 = arith.constant 34 : index
    %195 = memref.load %arg4[%c34] : memref<144xf32, #tpu.memory_space<smem>>
    %196 = vector.extract_strided_slice %23 {offsets = [2, 1], sizes = [16, 16], strides = [1, 1]} : vector<18x18xf32> to vector<16x16xf32>
    %197 = vector.broadcast %195 : f32 to vector<16x16xf32>
    %198 = arith.mulf %197, %196 : vector<16x16xf32>
    %199 = arith.addf %194, %198 : vector<16x16xf32>
    %c35 = arith.constant 35 : index
    %200 = memref.load %arg4[%c35] : memref<144xf32, #tpu.memory_space<smem>>
    %201 = vector.extract_strided_slice %23 {offsets = [2, 2], sizes = [16, 16], strides = [1, 1]} : vector<18x18xf32> to vector<16x16xf32>
    %202 = vector.broadcast %200 : f32 to vector<16x16xf32>
    %203 = arith.mulf %202, %201 : vector<16x16xf32>
    %204 = arith.addf %199, %203 : vector<16x16xf32>
    %c0_40 = arith.constant 0 : index
    %205 = memref.load %arg5[%c0_40] : memref<4xf32, #tpu.memory_space<smem>>
    %206 = vector.broadcast %205 : f32 to vector<16x16xf32>
    %207 = arith.addf %204, %206 : vector<16x16xf32>
    %cst_41 = arith.constant 0.000000e+00 : f32
    %208 = vector.broadcast %cst_41 : f32 to vector<16x16xf32>
    %209 = arith.maximumf %207, %208 : vector<16x16xf32>
    %c0_42 = arith.constant 0 : index
    %c0_43 = arith.constant 0 : index
    %c0_44 = arith.constant 0 : index
    %c0_45 = arith.constant 0 : index
    %210 = vector.load %arg6[%c0_42, %c0_43, %c0_44, %c0_45] : memref<1x4x16x16xf32, #tpu.memory_space<vmem>>, vector<1x1x16x16xf32>
    %211 = vector.shape_cast %210 : vector<1x1x16x16xf32> to vector<16x16xf32>
    %212 = vector.shape_cast %209 : vector<16x16xf32> to vector<1x1x16x16xf32>
    tpu.vector_store %arg6[%c0_42, %c0_43, %c0_44, %c0_45], %212 {strides = array<i32>} : memref<1x4x16x16xf32, #tpu.memory_space<vmem>>, vector<1x1x16x16xf32>,
    %cst_46 = arith.constant 0.000000e+00 : f32
    %213 = vector.broadcast %cst_46 : f32 to vector<16x16xf32>
    %c36 = arith.constant 36 : index
    %214 = memref.load %arg4[%c36] : memref<144xf32, #tpu.memory_space<smem>>
    %215 = vector.extract_strided_slice %5 {offsets = [0, 0], sizes = [16, 16], strides = [1, 1]} : vector<18x18xf32> to vector<16x16xf32>
    %216 = vector.broadcast %214 : f32 to vector<16x16xf32>
    %217 = arith.mulf %216, %215 : vector<16x16xf32>
    %218 = arith.addf %213, %217 : vector<16x16xf32>
    %c37 = arith.constant 37 : index
    %219 = memref.load %arg4[%c37] : memref<144xf32, #tpu.memory_space<smem>>
    %220 = vector.extract_strided_slice %5 {offsets = [0, 1], sizes = [16, 16], strides = [1, 1]} : vector<18x18xf32> to vector<16x16xf32>
    %221 = vector.broadcast %219 : f32 to vector<16x16xf32>
    %222 = arith.mulf %221, %220 : vector<16x16xf32>
    %223 = arith.addf %218, %222 : vector<16x16xf32>
    %c38 = arith.constant 38 : index
    %224 = memref.load %arg4[%c38] : memref<144xf32, #tpu.memory_space<smem>>
    %225 = vector.extract_strided_slice %5 {offsets = [0, 2], sizes = [16, 16], strides = [1, 1]} : vector<18x18xf32> to vector<16x16xf32>
    %226 = vector.broadcast %224 : f32 to vector<16x16xf32>
    %227 = arith.mulf %226, %225 : vector<16x16xf32>
    %228 = arith.addf %223, %227 : vector<16x16xf32>
    %c39 = arith.constant 39 : index
    %229 = memref.load %arg4[%c39] : memref<144xf32, #tpu.memory_space<smem>>
    %230 = vector.extract_strided_slice %5 {offsets = [1, 0], sizes = [16, 16], strides = [1, 1]} : vector<18x18xf32> to vector<16x16xf32>
    %231 = vector.broadcast %229 : f32 to vector<16x16xf32>
    %232 = arith.mulf %231, %230 : vector<16x16xf32>
    %233 = arith.addf %228, %232 : vector<16x16xf32>
    %c40 = arith.constant 40 : index
    %234 = memref.load %arg4[%c40] : memref<144xf32, #tpu.memory_space<smem>>
    %235 = vector.extract_strided_slice %5 {offsets = [1, 1], sizes = [16, 16], strides = [1, 1]} : vector<18x18xf32> to vector<16x16xf32>
    %236 = vector.broadcast %234 : f32 to vector<16x16xf32>
    %237 = arith.mulf %236, %235 : vector<16x16xf32>
    %238 = arith.addf %233, %237 : vector<16x16xf32>
    %c41 = arith.constant 41 : index
    %239 = memref.load %arg4[%c41] : memref<144xf32, #tpu.memory_space<smem>>
    %240 = vector.extract_strided_slice %5 {offsets = [1, 2], sizes = [16, 16], strides = [1, 1]} : vector<18x18xf32> to vector<16x16xf32>
    %241 = vector.broadcast %239 : f32 to vector<16x16xf32>
    %242 = arith.mulf %241, %240 : vector<16x16xf32>
    %243 = arith.addf %238, %242 : vector<16x16xf32>
    %c42 = arith.constant 42 : index
    %244 = memref.load %arg4[%c42] : memref<144xf32, #tpu.memory_space<smem>>
    %245 = vector.extract_strided_slice %5 {offsets = [2, 0], sizes = [16, 16], strides = [1, 1]} : vector<18x18xf32> to vector<16x16xf32>
    %246 = vector.broadcast %244 : f32 to vector<16x16xf32>
    %247 = arith.mulf %246, %245 : vector<16x16xf32>
    %248 = arith.addf %243, %247 : vector<16x16xf32>
    %c43 = arith.constant 43 : index
    %249 = memref.load %arg4[%c43] : memref<144xf32, #tpu.memory_space<smem>>
    %250 = vector.extract_strided_slice %5 {offsets = [2, 1], sizes = [16, 16], strides = [1, 1]} : vector<18x18xf32> to vector<16x16xf32>
    %251 = vector.broadcast %249 : f32 to vector<16x16xf32>
    %252 = arith.mulf %251, %250 : vector<16x16xf32>
    %253 = arith.addf %248, %252 : vector<16x16xf32>
    %c44 = arith.constant 44 : index
    %254 = memref.load %arg4[%c44] : memref<144xf32, #tpu.memory_space<smem>>
    %255 = vector.extract_strided_slice %5 {offsets = [2, 2], sizes = [16, 16], strides = [1, 1]} : vector<18x18xf32> to vector<16x16xf32>
    %256 = vector.broadcast %254 : f32 to vector<16x16xf32>
    %257 = arith.mulf %256, %255 : vector<16x16xf32>
    %258 = arith.addf %253, %257 : vector<16x16xf32>
    %c45 = arith.constant 45 : index
    %259 = memref.load %arg4[%c45] : memref<144xf32, #tpu.memory_space<smem>>
    %260 = vector.extract_strided_slice %11 {offsets = [0, 0], sizes = [16, 16], strides = [1, 1]} : vector<18x18xf32> to vector<16x16xf32>
    %261 = vector.broadcast %259 : f32 to vector<16x16xf32>
    %262 = arith.mulf %261, %260 : vector<16x16xf32>
    %263 = arith.addf %258, %262 : vector<16x16xf32>
    %c46 = arith.constant 46 : index
    %264 = memref.load %arg4[%c46] : memref<144xf32, #tpu.memory_space<smem>>
    %265 = vector.extract_strided_slice %11 {offsets = [0, 1], sizes = [16, 16], strides = [1, 1]} : vector<18x18xf32> to vector<16x16xf32>
    %266 = vector.broadcast %264 : f32 to vector<16x16xf32>
    %267 = arith.mulf %266, %265 : vector<16x16xf32>
    %268 = arith.addf %263, %267 : vector<16x16xf32>
    %c47 = arith.constant 47 : index
    %269 = memref.load %arg4[%c47] : memref<144xf32, #tpu.memory_space<smem>>
    %270 = vector.extract_strided_slice %11 {offsets = [0, 2], sizes = [16, 16], strides = [1, 1]} : vector<18x18xf32> to vector<16x16xf32>
    %271 = vector.broadcast %269 : f32 to vector<16x16xf32>
    %272 = arith.mulf %271, %270 : vector<16x16xf32>
    %273 = arith.addf %268, %272 : vector<16x16xf32>
    %c48 = arith.constant 48 : index
    %274 = memref.load %arg4[%c48] : memref<144xf32, #tpu.memory_space<smem>>
    %275 = vector.extract_strided_slice %11 {offsets = [1, 0], sizes = [16, 16], strides = [1, 1]} : vector<18x18xf32> to vector<16x16xf32>
    %276 = vector.broadcast %274 : f32 to vector<16x16xf32>
    %277 = arith.mulf %276, %275 : vector<16x16xf32>
    %278 = arith.addf %273, %277 : vector<16x16xf32>
    %c49 = arith.constant 49 : index
    %279 = memref.load %arg4[%c49] : memref<144xf32, #tpu.memory_space<smem>>
    %280 = vector.extract_strided_slice %11 {offsets = [1, 1], sizes = [16, 16], strides = [1, 1]} : vector<18x18xf32> to vector<16x16xf32>
    %281 = vector.broadcast %279 : f32 to vector<16x16xf32>
    %282 = arith.mulf %281, %280 : vector<16x16xf32>
    %283 = arith.addf %278, %282 : vector<16x16xf32>
    %c50 = arith.constant 50 : index
    %284 = memref.load %arg4[%c50] : memref<144xf32, #tpu.memory_space<smem>>
    %285 = vector.extract_strided_slice %11 {offsets = [1, 2], sizes = [16, 16], strides = [1, 1]} : vector<18x18xf32> to vector<16x16xf32>
    %286 = vector.broadcast %284 : f32 to vector<16x16xf32>
    %287 = arith.mulf %286, %285 : vector<16x16xf32>
    %288 = arith.addf %283, %287 : vector<16x16xf32>
    %c51 = arith.constant 51 : index
    %289 = memref.load %arg4[%c51] : memref<144xf32, #tpu.memory_space<smem>>
    %290 = vector.extract_strided_slice %11 {offsets = [2, 0], sizes = [16, 16], strides = [1, 1]} : vector<18x18xf32> to vector<16x16xf32>
    %291 = vector.broadcast %289 : f32 to vector<16x16xf32>
    %292 = arith.mulf %291, %290 : vector<16x16xf32>
    %293 = arith.addf %288, %292 : vector<16x16xf32>
    %c52 = arith.constant 52 : index
    %294 = memref.load %arg4[%c52] : memref<144xf32, #tpu.memory_space<smem>>
    %295 = vector.extract_strided_slice %11 {offsets = [2, 1], sizes = [16, 16], strides = [1, 1]} : vector<18x18xf32> to vector<16x16xf32>
    %296 = vector.broadcast %294 : f32 to vector<16x16xf32>
    %297 = arith.mulf %296, %295 : vector<16x16xf32>
    %298 = arith.addf %293, %297 : vector<16x16xf32>
    %c53 = arith.constant 53 : index
    %299 = memref.load %arg4[%c53] : memref<144xf32, #tpu.memory_space<smem>>
    %300 = vector.extract_strided_slice %11 {offsets = [2, 2], sizes = [16, 16], strides = [1, 1]} : vector<18x18xf32> to vector<16x16xf32>
    %301 = vector.broadcast %299 : f32 to vector<16x16xf32>
    %302 = arith.mulf %301, %300 : vector<16x16xf32>
    %303 = arith.addf %298, %302 : vector<16x16xf32>
    %c54 = arith.constant 54 : index
    %304 = memref.load %arg4[%c54] : memref<144xf32, #tpu.memory_space<smem>>
    %305 = vector.extract_strided_slice %17 {offsets = [0, 0], sizes = [16, 16], strides = [1, 1]} : vector<18x18xf32> to vector<16x16xf32>
    %306 = vector.broadcast %304 : f32 to vector<16x16xf32>
    %307 = arith.mulf %306, %305 : vector<16x16xf32>
    %308 = arith.addf %303, %307 : vector<16x16xf32>
    %c55 = arith.constant 55 : index
    %309 = memref.load %arg4[%c55] : memref<144xf32, #tpu.memory_space<smem>>
    %310 = vector.extract_strided_slice %17 {offsets = [0, 1], sizes = [16, 16], strides = [1, 1]} : vector<18x18xf32> to vector<16x16xf32>
    %311 = vector.broadcast %309 : f32 to vector<16x16xf32>
    %312 = arith.mulf %311, %310 : vector<16x16xf32>
    %313 = arith.addf %308, %312 : vector<16x16xf32>
    %c56 = arith.constant 56 : index
    %314 = memref.load %arg4[%c56] : memref<144xf32, #tpu.memory_space<smem>>
    %315 = vector.extract_strided_slice %17 {offsets = [0, 2], sizes = [16, 16], strides = [1, 1]} : vector<18x18xf32> to vector<16x16xf32>
    %316 = vector.broadcast %314 : f32 to vector<16x16xf32>
    %317 = arith.mulf %316, %315 : vector<16x16xf32>
    %318 = arith.addf %313, %317 : vector<16x16xf32>
    %c57 = arith.constant 57 : index
    %319 = memref.load %arg4[%c57] : memref<144xf32, #tpu.memory_space<smem>>
    %320 = vector.extract_strided_slice %17 {offsets = [1, 0], sizes = [16, 16], strides = [1, 1]} : vector<18x18xf32> to vector<16x16xf32>
    %321 = vector.broadcast %319 : f32 to vector<16x16xf32>
    %322 = arith.mulf %321, %320 : vector<16x16xf32>
    %323 = arith.addf %318, %322 : vector<16x16xf32>
    %c58 = arith.constant 58 : index
    %324 = memref.load %arg4[%c58] : memref<144xf32, #tpu.memory_space<smem>>
    %325 = vector.extract_strided_slice %17 {offsets = [1, 1], sizes = [16, 16], strides = [1, 1]} : vector<18x18xf32> to vector<16x16xf32>
    %326 = vector.broadcast %324 : f32 to vector<16x16xf32>
    %327 = arith.mulf %326, %325 : vector<16x16xf32>
    %328 = arith.addf %323, %327 : vector<16x16xf32>
    %c59 = arith.constant 59 : index
    %329 = memref.load %arg4[%c59] : memref<144xf32, #tpu.memory_space<smem>>
    %330 = vector.extract_strided_slice %17 {offsets = [1, 2], sizes = [16, 16], strides = [1, 1]} : vector<18x18xf32> to vector<16x16xf32>
    %331 = vector.broadcast %329 : f32 to vector<16x16xf32>
    %332 = arith.mulf %331, %330 : vector<16x16xf32>
    %333 = arith.addf %328, %332 : vector<16x16xf32>
    %c60 = arith.constant 60 : index
    %334 = memref.load %arg4[%c60] : memref<144xf32, #tpu.memory_space<smem>>
    %335 = vector.extract_strided_slice %17 {offsets = [2, 0], sizes = [16, 16], strides = [1, 1]} : vector<18x18xf32> to vector<16x16xf32>
    %336 = vector.broadcast %334 : f32 to vector<16x16xf32>
    %337 = arith.mulf %336, %335 : vector<16x16xf32>
    %338 = arith.addf %333, %337 : vector<16x16xf32>
    %c61 = arith.constant 61 : index
    %339 = memref.load %arg4[%c61] : memref<144xf32, #tpu.memory_space<smem>>
    %340 = vector.extract_strided_slice %17 {offsets = [2, 1], sizes = [16, 16], strides = [1, 1]} : vector<18x18xf32> to vector<16x16xf32>
    %341 = vector.broadcast %339 : f32 to vector<16x16xf32>
    %342 = arith.mulf %341, %340 : vector<16x16xf32>
    %343 = arith.addf %338, %342 : vector<16x16xf32>
    %c62 = arith.constant 62 : index
    %344 = memref.load %arg4[%c62] : memref<144xf32, #tpu.memory_space<smem>>
    %345 = vector.extract_strided_slice %17 {offsets = [2, 2], sizes = [16, 16], strides = [1, 1]} : vector<18x18xf32> to vector<16x16xf32>
    %346 = vector.broadcast %344 : f32 to vector<16x16xf32>
    %347 = arith.mulf %346, %345 : vector<16x16xf32>
    %348 = arith.addf %343, %347 : vector<16x16xf32>
    %c63 = arith.constant 63 : index
    %349 = memref.load %arg4[%c63] : memref<144xf32, #tpu.memory_space<smem>>
    %350 = vector.extract_strided_slice %23 {offsets = [0, 0], sizes = [16, 16], strides = [1, 1]} : vector<18x18xf32> to vector<16x16xf32>
    %351 = vector.broadcast %349 : f32 to vector<16x16xf32>
    %352 = arith.mulf %351, %350 : vector<16x16xf32>
    %353 = arith.addf %348, %352 : vector<16x16xf32>
    %c64 = arith.constant 64 : index
    %354 = memref.load %arg4[%c64] : memref<144xf32, #tpu.memory_space<smem>>
    %355 = vector.extract_strided_slice %23 {offsets = [0, 1], sizes = [16, 16], strides = [1, 1]} : vector<18x18xf32> to vector<16x16xf32>
    %356 = vector.broadcast %354 : f32 to vector<16x16xf32>
    %357 = arith.mulf %356, %355 : vector<16x16xf32>
    %358 = arith.addf %353, %357 : vector<16x16xf32>
    %c65 = arith.constant 65 : index
    %359 = memref.load %arg4[%c65] : memref<144xf32, #tpu.memory_space<smem>>
    %360 = vector.extract_strided_slice %23 {offsets = [0, 2], sizes = [16, 16], strides = [1, 1]} : vector<18x18xf32> to vector<16x16xf32>
    %361 = vector.broadcast %359 : f32 to vector<16x16xf32>
    %362 = arith.mulf %361, %360 : vector<16x16xf32>
    %363 = arith.addf %358, %362 : vector<16x16xf32>
    %c66 = arith.constant 66 : index
    %364 = memref.load %arg4[%c66] : memref<144xf32, #tpu.memory_space<smem>>
    %365 = vector.extract_strided_slice %23 {offsets = [1, 0], sizes = [16, 16], strides = [1, 1]} : vector<18x18xf32> to vector<16x16xf32>
    %366 = vector.broadcast %364 : f32 to vector<16x16xf32>
    %367 = arith.mulf %366, %365 : vector<16x16xf32>
    %368 = arith.addf %363, %367 : vector<16x16xf32>
    %c67 = arith.constant 67 : index
    %369 = memref.load %arg4[%c67] : memref<144xf32, #tpu.memory_space<smem>>
    %370 = vector.extract_strided_slice %23 {offsets = [1, 1], sizes = [16, 16], strides = [1, 1]} : vector<18x18xf32> to vector<16x16xf32>
    %371 = vector.broadcast %369 : f32 to vector<16x16xf32>
    %372 = arith.mulf %371, %370 : vector<16x16xf32>
    %373 = arith.addf %368, %372 : vector<16x16xf32>
    %c68 = arith.constant 68 : index
    %374 = memref.load %arg4[%c68] : memref<144xf32, #tpu.memory_space<smem>>
    %375 = vector.extract_strided_slice %23 {offsets = [1, 2], sizes = [16, 16], strides = [1, 1]} : vector<18x18xf32> to vector<16x16xf32>
    %376 = vector.broadcast %374 : f32 to vector<16x16xf32>
    %377 = arith.mulf %376, %375 : vector<16x16xf32>
    %378 = arith.addf %373, %377 : vector<16x16xf32>
    %c69 = arith.constant 69 : index
    %379 = memref.load %arg4[%c69] : memref<144xf32, #tpu.memory_space<smem>>
    %380 = vector.extract_strided_slice %23 {offsets = [2, 0], sizes = [16, 16], strides = [1, 1]} : vector<18x18xf32> to vector<16x16xf32>
    %381 = vector.broadcast %379 : f32 to vector<16x16xf32>
    %382 = arith.mulf %381, %380 : vector<16x16xf32>
    %383 = arith.addf %378, %382 : vector<16x16xf32>
    %c70 = arith.constant 70 : index
    %384 = memref.load %arg4[%c70] : memref<144xf32, #tpu.memory_space<smem>>
    %385 = vector.extract_strided_slice %23 {offsets = [2, 1], sizes = [16, 16], strides = [1, 1]} : vector<18x18xf32> to vector<16x16xf32>
    %386 = vector.broadcast %384 : f32 to vector<16x16xf32>
    %387 = arith.mulf %386, %385 : vector<16x16xf32>
    %388 = arith.addf %383, %387 : vector<16x16xf32>
    %c71 = arith.constant 71 : index
    %389 = memref.load %arg4[%c71] : memref<144xf32, #tpu.memory_space<smem>>
    %390 = vector.extract_strided_slice %23 {offsets = [2, 2], sizes = [16, 16], strides = [1, 1]} : vector<18x18xf32> to vector<16x16xf32>
    %391 = vector.broadcast %389 : f32 to vector<16x16xf32>
    %392 = arith.mulf %391, %390 : vector<16x16xf32>
    %393 = arith.addf %388, %392 : vector<16x16xf32>
    %c1_47 = arith.constant 1 : index
    %394 = memref.load %arg5[%c1_47] : memref<4xf32, #tpu.memory_space<smem>>
    %395 = vector.broadcast %394 : f32 to vector<16x16xf32>
    %396 = arith.addf %393, %395 : vector<16x16xf32>
    %cst_48 = arith.constant 0.000000e+00 : f32
    %397 = vector.broadcast %cst_48 : f32 to vector<16x16xf32>
    %398 = arith.maximumf %396, %397 : vector<16x16xf32>
    %c0_49 = arith.constant 0 : index
    %c1_50 = arith.constant 1 : index
    %c0_51 = arith.constant 0 : index
    %c0_52 = arith.constant 0 : index
    %399 = vector.load %arg6[%c0_49, %c1_50, %c0_51, %c0_52] : memref<1x4x16x16xf32, #tpu.memory_space<vmem>>, vector<1x1x16x16xf32>
    %400 = vector.shape_cast %399 : vector<1x1x16x16xf32> to vector<16x16xf32>
    %401 = vector.shape_cast %398 : vector<16x16xf32> to vector<1x1x16x16xf32>
    tpu.vector_store %arg6[%c0_49, %c1_50, %c0_51, %c0_52], %401 {strides = array<i32>} : memref<1x4x16x16xf32, #tpu.memory_space<vmem>>, vector<1x1x16x16xf32>,
    %cst_53 = arith.constant 0.000000e+00 : f32
    %402 = vector.broadcast %cst_53 : f32 to vector<16x16xf32>
    %c72 = arith.constant 72 : index
    %403 = memref.load %arg4[%c72] : memref<144xf32, #tpu.memory_space<smem>>
    %404 = vector.extract_strided_slice %5 {offsets = [0, 0], sizes = [16, 16], strides = [1, 1]} : vector<18x18xf32> to vector<16x16xf32>
    %405 = vector.broadcast %403 : f32 to vector<16x16xf32>
    %406 = arith.mulf %405, %404 : vector<16x16xf32>
    %407 = arith.addf %402, %406 : vector<16x16xf32>
    %c73 = arith.constant 73 : index
    %408 = memref.load %arg4[%c73] : memref<144xf32, #tpu.memory_space<smem>>
    %409 = vector.extract_strided_slice %5 {offsets = [0, 1], sizes = [16, 16], strides = [1, 1]} : vector<18x18xf32> to vector<16x16xf32>
    %410 = vector.broadcast %408 : f32 to vector<16x16xf32>
    %411 = arith.mulf %410, %409 : vector<16x16xf32>
    %412 = arith.addf %407, %411 : vector<16x16xf32>
    %c74 = arith.constant 74 : index
    %413 = memref.load %arg4[%c74] : memref<144xf32, #tpu.memory_space<smem>>
    %414 = vector.extract_strided_slice %5 {offsets = [0, 2], sizes = [16, 16], strides = [1, 1]} : vector<18x18xf32> to vector<16x16xf32>
    %415 = vector.broadcast %413 : f32 to vector<16x16xf32>
    %416 = arith.mulf %415, %414 : vector<16x16xf32>
    %417 = arith.addf %412, %416 : vector<16x16xf32>
    %c75 = arith.constant 75 : index
    %418 = memref.load %arg4[%c75] : memref<144xf32, #tpu.memory_space<smem>>
    %419 = vector.extract_strided_slice %5 {offsets = [1, 0], sizes = [16, 16], strides = [1, 1]} : vector<18x18xf32> to vector<16x16xf32>
    %420 = vector.broadcast %418 : f32 to vector<16x16xf32>
    %421 = arith.mulf %420, %419 : vector<16x16xf32>
    %422 = arith.addf %417, %421 : vector<16x16xf32>
    %c76 = arith.constant 76 : index
    %423 = memref.load %arg4[%c76] : memref<144xf32, #tpu.memory_space<smem>>
    %424 = vector.extract_strided_slice %5 {offsets = [1, 1], sizes = [16, 16], strides = [1, 1]} : vector<18x18xf32> to vector<16x16xf32>
    %425 = vector.broadcast %423 : f32 to vector<16x16xf32>
    %426 = arith.mulf %425, %424 : vector<16x16xf32>
    %427 = arith.addf %422, %426 : vector<16x16xf32>
    %c77 = arith.constant 77 : index
    %428 = memref.load %arg4[%c77] : memref<144xf32, #tpu.memory_space<smem>>
    %429 = vector.extract_strided_slice %5 {offsets = [1, 2], sizes = [16, 16], strides = [1, 1]} : vector<18x18xf32> to vector<16x16xf32>
    %430 = vector.broadcast %428 : f32 to vector<16x16xf32>
    %431 = arith.mulf %430, %429 : vector<16x16xf32>
    %432 = arith.addf %427, %431 : vector<16x16xf32>
    %c78 = arith.constant 78 : index
    %433 = memref.load %arg4[%c78] : memref<144xf32, #tpu.memory_space<smem>>
    %434 = vector.extract_strided_slice %5 {offsets = [2, 0], sizes = [16, 16], strides = [1, 1]} : vector<18x18xf32> to vector<16x16xf32>
    %435 = vector.broadcast %433 : f32 to vector<16x16xf32>
    %436 = arith.mulf %435, %434 : vector<16x16xf32>
    %437 = arith.addf %432, %436 : vector<16x16xf32>
    %c79 = arith.constant 79 : index
    %438 = memref.load %arg4[%c79] : memref<144xf32, #tpu.memory_space<smem>>
    %439 = vector.extract_strided_slice %5 {offsets = [2, 1], sizes = [16, 16], strides = [1, 1]} : vector<18x18xf32> to vector<16x16xf32>
    %440 = vector.broadcast %438 : f32 to vector<16x16xf32>
    %441 = arith.mulf %440, %439 : vector<16x16xf32>
    %442 = arith.addf %437, %441 : vector<16x16xf32>
    %c80 = arith.constant 80 : index
    %443 = memref.load %arg4[%c80] : memref<144xf32, #tpu.memory_space<smem>>
    %444 = vector.extract_strided_slice %5 {offsets = [2, 2], sizes = [16, 16], strides = [1, 1]} : vector<18x18xf32> to vector<16x16xf32>
    %445 = vector.broadcast %443 : f32 to vector<16x16xf32>
    %446 = arith.mulf %445, %444 : vector<16x16xf32>
    %447 = arith.addf %442, %446 : vector<16x16xf32>
    %c81 = arith.constant 81 : index
    %448 = memref.load %arg4[%c81] : memref<144xf32, #tpu.memory_space<smem>>
    %449 = vector.extract_strided_slice %11 {offsets = [0, 0], sizes = [16, 16], strides = [1, 1]} : vector<18x18xf32> to vector<16x16xf32>
    %450 = vector.broadcast %448 : f32 to vector<16x16xf32>
    %451 = arith.mulf %450, %449 : vector<16x16xf32>
    %452 = arith.addf %447, %451 : vector<16x16xf32>
    %c82 = arith.constant 82 : index
    %453 = memref.load %arg4[%c82] : memref<144xf32, #tpu.memory_space<smem>>
    %454 = vector.extract_strided_slice %11 {offsets = [0, 1], sizes = [16, 16], strides = [1, 1]} : vector<18x18xf32> to vector<16x16xf32>
    %455 = vector.broadcast %453 : f32 to vector<16x16xf32>
    %456 = arith.mulf %455, %454 : vector<16x16xf32>
    %457 = arith.addf %452, %456 : vector<16x16xf32>
    %c83 = arith.constant 83 : index
    %458 = memref.load %arg4[%c83] : memref<144xf32, #tpu.memory_space<smem>>
    %459 = vector.extract_strided_slice %11 {offsets = [0, 2], sizes = [16, 16], strides = [1, 1]} : vector<18x18xf32> to vector<16x16xf32>
    %460 = vector.broadcast %458 : f32 to vector<16x16xf32>
    %461 = arith.mulf %460, %459 : vector<16x16xf32>
    %462 = arith.addf %457, %461 : vector<16x16xf32>
    %c84 = arith.constant 84 : index
    %463 = memref.load %arg4[%c84] : memref<144xf32, #tpu.memory_space<smem>>
    %464 = vector.extract_strided_slice %11 {offsets = [1, 0], sizes = [16, 16], strides = [1, 1]} : vector<18x18xf32> to vector<16x16xf32>
    %465 = vector.broadcast %463 : f32 to vector<16x16xf32>
    %466 = arith.mulf %465, %464 : vector<16x16xf32>
    %467 = arith.addf %462, %466 : vector<16x16xf32>
    %c85 = arith.constant 85 : index
    %468 = memref.load %arg4[%c85] : memref<144xf32, #tpu.memory_space<smem>>
    %469 = vector.extract_strided_slice %11 {offsets = [1, 1], sizes = [16, 16], strides = [1, 1]} : vector<18x18xf32> to vector<16x16xf32>
    %470 = vector.broadcast %468 : f32 to vector<16x16xf32>
    %471 = arith.mulf %470, %469 : vector<16x16xf32>
    %472 = arith.addf %467, %471 : vector<16x16xf32>
    %c86 = arith.constant 86 : index
    %473 = memref.load %arg4[%c86] : memref<144xf32, #tpu.memory_space<smem>>
    %474 = vector.extract_strided_slice %11 {offsets = [1, 2], sizes = [16, 16], strides = [1, 1]} : vector<18x18xf32> to vector<16x16xf32>
    %475 = vector.broadcast %473 : f32 to vector<16x16xf32>
    %476 = arith.mulf %475, %474 : vector<16x16xf32>
    %477 = arith.addf %472, %476 : vector<16x16xf32>
    %c87 = arith.constant 87 : index
    %478 = memref.load %arg4[%c87] : memref<144xf32, #tpu.memory_space<smem>>
    %479 = vector.extract_strided_slice %11 {offsets = [2, 0], sizes = [16, 16], strides = [1, 1]} : vector<18x18xf32> to vector<16x16xf32>
    %480 = vector.broadcast %478 : f32 to vector<16x16xf32>
    %481 = arith.mulf %480, %479 : vector<16x16xf32>
    %482 = arith.addf %477, %481 : vector<16x16xf32>
    %c88 = arith.constant 88 : index
    %483 = memref.load %arg4[%c88] : memref<144xf32, #tpu.memory_space<smem>>
    %484 = vector.extract_strided_slice %11 {offsets = [2, 1], sizes = [16, 16], strides = [1, 1]} : vector<18x18xf32> to vector<16x16xf32>
    %485 = vector.broadcast %483 : f32 to vector<16x16xf32>
    %486 = arith.mulf %485, %484 : vector<16x16xf32>
    %487 = arith.addf %482, %486 : vector<16x16xf32>
    %c89 = arith.constant 89 : index
    %488 = memref.load %arg4[%c89] : memref<144xf32, #tpu.memory_space<smem>>
    %489 = vector.extract_strided_slice %11 {offsets = [2, 2], sizes = [16, 16], strides = [1, 1]} : vector<18x18xf32> to vector<16x16xf32>
    %490 = vector.broadcast %488 : f32 to vector<16x16xf32>
    %491 = arith.mulf %490, %489 : vector<16x16xf32>
    %492 = arith.addf %487, %491 : vector<16x16xf32>
    %c90 = arith.constant 90 : index
    %493 = memref.load %arg4[%c90] : memref<144xf32, #tpu.memory_space<smem>>
    %494 = vector.extract_strided_slice %17 {offsets = [0, 0], sizes = [16, 16], strides = [1, 1]} : vector<18x18xf32> to vector<16x16xf32>
    %495 = vector.broadcast %493 : f32 to vector<16x16xf32>
    %496 = arith.mulf %495, %494 : vector<16x16xf32>
    %497 = arith.addf %492, %496 : vector<16x16xf32>
    %c91 = arith.constant 91 : index
    %498 = memref.load %arg4[%c91] : memref<144xf32, #tpu.memory_space<smem>>
    %499 = vector.extract_strided_slice %17 {offsets = [0, 1], sizes = [16, 16], strides = [1, 1]} : vector<18x18xf32> to vector<16x16xf32>
    %500 = vector.broadcast %498 : f32 to vector<16x16xf32>
    %501 = arith.mulf %500, %499 : vector<16x16xf32>
    %502 = arith.addf %497, %501 : vector<16x16xf32>
    %c92 = arith.constant 92 : index
    %503 = memref.load %arg4[%c92] : memref<144xf32, #tpu.memory_space<smem>>
    %504 = vector.extract_strided_slice %17 {offsets = [0, 2], sizes = [16, 16], strides = [1, 1]} : vector<18x18xf32> to vector<16x16xf32>
    %505 = vector.broadcast %503 : f32 to vector<16x16xf32>
    %506 = arith.mulf %505, %504 : vector<16x16xf32>
    %507 = arith.addf %502, %506 : vector<16x16xf32>
    %c93 = arith.constant 93 : index
    %508 = memref.load %arg4[%c93] : memref<144xf32, #tpu.memory_space<smem>>
    %509 = vector.extract_strided_slice %17 {offsets = [1, 0], sizes = [16, 16], strides = [1, 1]} : vector<18x18xf32> to vector<16x16xf32>
    %510 = vector.broadcast %508 : f32 to vector<16x16xf32>
    %511 = arith.mulf %510, %509 : vector<16x16xf32>
    %512 = arith.addf %507, %511 : vector<16x16xf32>
    %c94 = arith.constant 94 : index
    %513 = memref.load %arg4[%c94] : memref<144xf32, #tpu.memory_space<smem>>
    %514 = vector.extract_strided_slice %17 {offsets = [1, 1], sizes = [16, 16], strides = [1, 1]} : vector<18x18xf32> to vector<16x16xf32>
    %515 = vector.broadcast %513 : f32 to vector<16x16xf32>
    %516 = arith.mulf %515, %514 : vector<16x16xf32>
    %517 = arith.addf %512, %516 : vector<16x16xf32>
    %c95 = arith.constant 95 : index
    %518 = memref.load %arg4[%c95] : memref<144xf32, #tpu.memory_space<smem>>
    %519 = vector.extract_strided_slice %17 {offsets = [1, 2], sizes = [16, 16], strides = [1, 1]} : vector<18x18xf32> to vector<16x16xf32>
    %520 = vector.broadcast %518 : f32 to vector<16x16xf32>
    %521 = arith.mulf %520, %519 : vector<16x16xf32>
    %522 = arith.addf %517, %521 : vector<16x16xf32>
    %c96 = arith.constant 96 : index
    %523 = memref.load %arg4[%c96] : memref<144xf32, #tpu.memory_space<smem>>
    %524 = vector.extract_strided_slice %17 {offsets = [2, 0], sizes = [16, 16], strides = [1, 1]} : vector<18x18xf32> to vector<16x16xf32>
    %525 = vector.broadcast %523 : f32 to vector<16x16xf32>
    %526 = arith.mulf %525, %524 : vector<16x16xf32>
    %527 = arith.addf %522, %526 : vector<16x16xf32>
    %c97 = arith.constant 97 : index
    %528 = memref.load %arg4[%c97] : memref<144xf32, #tpu.memory_space<smem>>
    %529 = vector.extract_strided_slice %17 {offsets = [2, 1], sizes = [16, 16], strides = [1, 1]} : vector<18x18xf32> to vector<16x16xf32>
    %530 = vector.broadcast %528 : f32 to vector<16x16xf32>
    %531 = arith.mulf %530, %529 : vector<16x16xf32>
    %532 = arith.addf %527, %531 : vector<16x16xf32>
    %c98 = arith.constant 98 : index
    %533 = memref.load %arg4[%c98] : memref<144xf32, #tpu.memory_space<smem>>
    %534 = vector.extract_strided_slice %17 {offsets = [2, 2], sizes = [16, 16], strides = [1, 1]} : vector<18x18xf32> to vector<16x16xf32>
    %535 = vector.broadcast %533 : f32 to vector<16x16xf32>
    %536 = arith.mulf %535, %534 : vector<16x16xf32>
    %537 = arith.addf %532, %536 : vector<16x16xf32>
    %c99 = arith.constant 99 : index
    %538 = memref.load %arg4[%c99] : memref<144xf32, #tpu.memory_space<smem>>
    %539 = vector.extract_strided_slice %23 {offsets = [0, 0], sizes = [16, 16], strides = [1, 1]} : vector<18x18xf32> to vector<16x16xf32>
    %540 = vector.broadcast %538 : f32 to vector<16x16xf32>
    %541 = arith.mulf %540, %539 : vector<16x16xf32>
    %542 = arith.addf %537, %541 : vector<16x16xf32>
    %c100 = arith.constant 100 : index
    %543 = memref.load %arg4[%c100] : memref<144xf32, #tpu.memory_space<smem>>
    %544 = vector.extract_strided_slice %23 {offsets = [0, 1], sizes = [16, 16], strides = [1, 1]} : vector<18x18xf32> to vector<16x16xf32>
    %545 = vector.broadcast %543 : f32 to vector<16x16xf32>
    %546 = arith.mulf %545, %544 : vector<16x16xf32>
    %547 = arith.addf %542, %546 : vector<16x16xf32>
    %c101 = arith.constant 101 : index
    %548 = memref.load %arg4[%c101] : memref<144xf32, #tpu.memory_space<smem>>
    %549 = vector.extract_strided_slice %23 {offsets = [0, 2], sizes = [16, 16], strides = [1, 1]} : vector<18x18xf32> to vector<16x16xf32>
    %550 = vector.broadcast %548 : f32 to vector<16x16xf32>
    %551 = arith.mulf %550, %549 : vector<16x16xf32>
    %552 = arith.addf %547, %551 : vector<16x16xf32>
    %c102 = arith.constant 102 : index
    %553 = memref.load %arg4[%c102] : memref<144xf32, #tpu.memory_space<smem>>
    %554 = vector.extract_strided_slice %23 {offsets = [1, 0], sizes = [16, 16], strides = [1, 1]} : vector<18x18xf32> to vector<16x16xf32>
    %555 = vector.broadcast %553 : f32 to vector<16x16xf32>
    %556 = arith.mulf %555, %554 : vector<16x16xf32>
    %557 = arith.addf %552, %556 : vector<16x16xf32>
    %c103 = arith.constant 103 : index
    %558 = memref.load %arg4[%c103] : memref<144xf32, #tpu.memory_space<smem>>
    %559 = vector.extract_strided_slice %23 {offsets = [1, 1], sizes = [16, 16], strides = [1, 1]} : vector<18x18xf32> to vector<16x16xf32>
    %560 = vector.broadcast %558 : f32 to vector<16x16xf32>
    %561 = arith.mulf %560, %559 : vector<16x16xf32>
    %562 = arith.addf %557, %561 : vector<16x16xf32>
    %c104 = arith.constant 104 : index
    %563 = memref.load %arg4[%c104] : memref<144xf32, #tpu.memory_space<smem>>
    %564 = vector.extract_strided_slice %23 {offsets = [1, 2], sizes = [16, 16], strides = [1, 1]} : vector<18x18xf32> to vector<16x16xf32>
    %565 = vector.broadcast %563 : f32 to vector<16x16xf32>
    %566 = arith.mulf %565, %564 : vector<16x16xf32>
    %567 = arith.addf %562, %566 : vector<16x16xf32>
    %c105 = arith.constant 105 : index
    %568 = memref.load %arg4[%c105] : memref<144xf32, #tpu.memory_space<smem>>
    %569 = vector.extract_strided_slice %23 {offsets = [2, 0], sizes = [16, 16], strides = [1, 1]} : vector<18x18xf32> to vector<16x16xf32>
    %570 = vector.broadcast %568 : f32 to vector<16x16xf32>
    %571 = arith.mulf %570, %569 : vector<16x16xf32>
    %572 = arith.addf %567, %571 : vector<16x16xf32>
    %c106 = arith.constant 106 : index
    %573 = memref.load %arg4[%c106] : memref<144xf32, #tpu.memory_space<smem>>
    %574 = vector.extract_strided_slice %23 {offsets = [2, 1], sizes = [16, 16], strides = [1, 1]} : vector<18x18xf32> to vector<16x16xf32>
    %575 = vector.broadcast %573 : f32 to vector<16x16xf32>
    %576 = arith.mulf %575, %574 : vector<16x16xf32>
    %577 = arith.addf %572, %576 : vector<16x16xf32>
    %c107 = arith.constant 107 : index
    %578 = memref.load %arg4[%c107] : memref<144xf32, #tpu.memory_space<smem>>
    %579 = vector.extract_strided_slice %23 {offsets = [2, 2], sizes = [16, 16], strides = [1, 1]} : vector<18x18xf32> to vector<16x16xf32>
    %580 = vector.broadcast %578 : f32 to vector<16x16xf32>
    %581 = arith.mulf %580, %579 : vector<16x16xf32>
    %582 = arith.addf %577, %581 : vector<16x16xf32>
    %c2_54 = arith.constant 2 : index
    %583 = memref.load %arg5[%c2_54] : memref<4xf32, #tpu.memory_space<smem>>
    %584 = vector.broadcast %583 : f32 to vector<16x16xf32>
    %585 = arith.addf %582, %584 : vector<16x16xf32>
    %cst_55 = arith.constant 0.000000e+00 : f32
    %586 = vector.broadcast %cst_55 : f32 to vector<16x16xf32>
    %587 = arith.maximumf %585, %586 : vector<16x16xf32>
    %c0_56 = arith.constant 0 : index
    %c2_57 = arith.constant 2 : index
    %c0_58 = arith.constant 0 : index
    %c0_59 = arith.constant 0 : index
    %588 = vector.load %arg6[%c0_56, %c2_57, %c0_58, %c0_59] : memref<1x4x16x16xf32, #tpu.memory_space<vmem>>, vector<1x1x16x16xf32>
    %589 = vector.shape_cast %588 : vector<1x1x16x16xf32> to vector<16x16xf32>
    %590 = vector.shape_cast %587 : vector<16x16xf32> to vector<1x1x16x16xf32>
    tpu.vector_store %arg6[%c0_56, %c2_57, %c0_58, %c0_59], %590 {strides = array<i32>} : memref<1x4x16x16xf32, #tpu.memory_space<vmem>>, vector<1x1x16x16xf32>,
    %cst_60 = arith.constant 0.000000e+00 : f32
    %591 = vector.broadcast %cst_60 : f32 to vector<16x16xf32>
    %c108 = arith.constant 108 : index
    %592 = memref.load %arg4[%c108] : memref<144xf32, #tpu.memory_space<smem>>
    %593 = vector.extract_strided_slice %5 {offsets = [0, 0], sizes = [16, 16], strides = [1, 1]} : vector<18x18xf32> to vector<16x16xf32>
    %594 = vector.broadcast %592 : f32 to vector<16x16xf32>
    %595 = arith.mulf %594, %593 : vector<16x16xf32>
    %596 = arith.addf %591, %595 : vector<16x16xf32>
    %c109 = arith.constant 109 : index
    %597 = memref.load %arg4[%c109] : memref<144xf32, #tpu.memory_space<smem>>
    %598 = vector.extract_strided_slice %5 {offsets = [0, 1], sizes = [16, 16], strides = [1, 1]} : vector<18x18xf32> to vector<16x16xf32>
    %599 = vector.broadcast %597 : f32 to vector<16x16xf32>
    %600 = arith.mulf %599, %598 : vector<16x16xf32>
    %601 = arith.addf %596, %600 : vector<16x16xf32>
    %c110 = arith.constant 110 : index
    %602 = memref.load %arg4[%c110] : memref<144xf32, #tpu.memory_space<smem>>
    %603 = vector.extract_strided_slice %5 {offsets = [0, 2], sizes = [16, 16], strides = [1, 1]} : vector<18x18xf32> to vector<16x16xf32>
    %604 = vector.broadcast %602 : f32 to vector<16x16xf32>
    %605 = arith.mulf %604, %603 : vector<16x16xf32>
    %606 = arith.addf %601, %605 : vector<16x16xf32>
    %c111 = arith.constant 111 : index
    %607 = memref.load %arg4[%c111] : memref<144xf32, #tpu.memory_space<smem>>
    %608 = vector.extract_strided_slice %5 {offsets = [1, 0], sizes = [16, 16], strides = [1, 1]} : vector<18x18xf32> to vector<16x16xf32>
    %609 = vector.broadcast %607 : f32 to vector<16x16xf32>
    %610 = arith.mulf %609, %608 : vector<16x16xf32>
    %611 = arith.addf %606, %610 : vector<16x16xf32>
    %c112 = arith.constant 112 : index
    %612 = memref.load %arg4[%c112] : memref<144xf32, #tpu.memory_space<smem>>
    %613 = vector.extract_strided_slice %5 {offsets = [1, 1], sizes = [16, 16], strides = [1, 1]} : vector<18x18xf32> to vector<16x16xf32>
    %614 = vector.broadcast %612 : f32 to vector<16x16xf32>
    %615 = arith.mulf %614, %613 : vector<16x16xf32>
    %616 = arith.addf %611, %615 : vector<16x16xf32>
    %c113 = arith.constant 113 : index
    %617 = memref.load %arg4[%c113] : memref<144xf32, #tpu.memory_space<smem>>
    %618 = vector.extract_strided_slice %5 {offsets = [1, 2], sizes = [16, 16], strides = [1, 1]} : vector<18x18xf32> to vector<16x16xf32>
    %619 = vector.broadcast %617 : f32 to vector<16x16xf32>
    %620 = arith.mulf %619, %618 : vector<16x16xf32>
    %621 = arith.addf %616, %620 : vector<16x16xf32>
    %c114 = arith.constant 114 : index
    %622 = memref.load %arg4[%c114] : memref<144xf32, #tpu.memory_space<smem>>
    %623 = vector.extract_strided_slice %5 {offsets = [2, 0], sizes = [16, 16], strides = [1, 1]} : vector<18x18xf32> to vector<16x16xf32>
    %624 = vector.broadcast %622 : f32 to vector<16x16xf32>
    %625 = arith.mulf %624, %623 : vector<16x16xf32>
    %626 = arith.addf %621, %625 : vector<16x16xf32>
    %c115 = arith.constant 115 : index
    %627 = memref.load %arg4[%c115] : memref<144xf32, #tpu.memory_space<smem>>
    %628 = vector.extract_strided_slice %5 {offsets = [2, 1], sizes = [16, 16], strides = [1, 1]} : vector<18x18xf32> to vector<16x16xf32>
    %629 = vector.broadcast %627 : f32 to vector<16x16xf32>
    %630 = arith.mulf %629, %628 : vector<16x16xf32>
    %631 = arith.addf %626, %630 : vector<16x16xf32>
    %c116 = arith.constant 116 : index
    %632 = memref.load %arg4[%c116] : memref<144xf32, #tpu.memory_space<smem>>
    %633 = vector.extract_strided_slice %5 {offsets = [2, 2], sizes = [16, 16], strides = [1, 1]} : vector<18x18xf32> to vector<16x16xf32>
    %634 = vector.broadcast %632 : f32 to vector<16x16xf32>
    %635 = arith.mulf %634, %633 : vector<16x16xf32>
    %636 = arith.addf %631, %635 : vector<16x16xf32>
    %c117 = arith.constant 117 : index
    %637 = memref.load %arg4[%c117] : memref<144xf32, #tpu.memory_space<smem>>
    %638 = vector.extract_strided_slice %11 {offsets = [0, 0], sizes = [16, 16], strides = [1, 1]} : vector<18x18xf32> to vector<16x16xf32>
    %639 = vector.broadcast %637 : f32 to vector<16x16xf32>
    %640 = arith.mulf %639, %638 : vector<16x16xf32>
    %641 = arith.addf %636, %640 : vector<16x16xf32>
    %c118 = arith.constant 118 : index
    %642 = memref.load %arg4[%c118] : memref<144xf32, #tpu.memory_space<smem>>
    %643 = vector.extract_strided_slice %11 {offsets = [0, 1], sizes = [16, 16], strides = [1, 1]} : vector<18x18xf32> to vector<16x16xf32>
    %644 = vector.broadcast %642 : f32 to vector<16x16xf32>
    %645 = arith.mulf %644, %643 : vector<16x16xf32>
    %646 = arith.addf %641, %645 : vector<16x16xf32>
    %c119 = arith.constant 119 : index
    %647 = memref.load %arg4[%c119] : memref<144xf32, #tpu.memory_space<smem>>
    %648 = vector.extract_strided_slice %11 {offsets = [0, 2], sizes = [16, 16], strides = [1, 1]} : vector<18x18xf32> to vector<16x16xf32>
    %649 = vector.broadcast %647 : f32 to vector<16x16xf32>
    %650 = arith.mulf %649, %648 : vector<16x16xf32>
    %651 = arith.addf %646, %650 : vector<16x16xf32>
    %c120 = arith.constant 120 : index
    %652 = memref.load %arg4[%c120] : memref<144xf32, #tpu.memory_space<smem>>
    %653 = vector.extract_strided_slice %11 {offsets = [1, 0], sizes = [16, 16], strides = [1, 1]} : vector<18x18xf32> to vector<16x16xf32>
    %654 = vector.broadcast %652 : f32 to vector<16x16xf32>
    %655 = arith.mulf %654, %653 : vector<16x16xf32>
    %656 = arith.addf %651, %655 : vector<16x16xf32>
    %c121 = arith.constant 121 : index
    %657 = memref.load %arg4[%c121] : memref<144xf32, #tpu.memory_space<smem>>
    %658 = vector.extract_strided_slice %11 {offsets = [1, 1], sizes = [16, 16], strides = [1, 1]} : vector<18x18xf32> to vector<16x16xf32>
    %659 = vector.broadcast %657 : f32 to vector<16x16xf32>
    %660 = arith.mulf %659, %658 : vector<16x16xf32>
    %661 = arith.addf %656, %660 : vector<16x16xf32>
    %c122 = arith.constant 122 : index
    %662 = memref.load %arg4[%c122] : memref<144xf32, #tpu.memory_space<smem>>
    %663 = vector.extract_strided_slice %11 {offsets = [1, 2], sizes = [16, 16], strides = [1, 1]} : vector<18x18xf32> to vector<16x16xf32>
    %664 = vector.broadcast %662 : f32 to vector<16x16xf32>
    %665 = arith.mulf %664, %663 : vector<16x16xf32>
    %666 = arith.addf %661, %665 : vector<16x16xf32>
    %c123 = arith.constant 123 : index
    %667 = memref.load %arg4[%c123] : memref<144xf32, #tpu.memory_space<smem>>
    %668 = vector.extract_strided_slice %11 {offsets = [2, 0], sizes = [16, 16], strides = [1, 1]} : vector<18x18xf32> to vector<16x16xf32>
    %669 = vector.broadcast %667 : f32 to vector<16x16xf32>
    %670 = arith.mulf %669, %668 : vector<16x16xf32>
    %671 = arith.addf %666, %670 : vector<16x16xf32>
    %c124 = arith.constant 124 : index
    %672 = memref.load %arg4[%c124] : memref<144xf32, #tpu.memory_space<smem>>
    %673 = vector.extract_strided_slice %11 {offsets = [2, 1], sizes = [16, 16], strides = [1, 1]} : vector<18x18xf32> to vector<16x16xf32>
    %674 = vector.broadcast %672 : f32 to vector<16x16xf32>
    %675 = arith.mulf %674, %673 : vector<16x16xf32>
    %676 = arith.addf %671, %675 : vector<16x16xf32>
    %c125 = arith.constant 125 : index
    %677 = memref.load %arg4[%c125] : memref<144xf32, #tpu.memory_space<smem>>
    %678 = vector.extract_strided_slice %11 {offsets = [2, 2], sizes = [16, 16], strides = [1, 1]} : vector<18x18xf32> to vector<16x16xf32>
    %679 = vector.broadcast %677 : f32 to vector<16x16xf32>
    %680 = arith.mulf %679, %678 : vector<16x16xf32>
    %681 = arith.addf %676, %680 : vector<16x16xf32>
    %c126 = arith.constant 126 : index
    %682 = memref.load %arg4[%c126] : memref<144xf32, #tpu.memory_space<smem>>
    %683 = vector.extract_strided_slice %17 {offsets = [0, 0], sizes = [16, 16], strides = [1, 1]} : vector<18x18xf32> to vector<16x16xf32>
    %684 = vector.broadcast %682 : f32 to vector<16x16xf32>
    %685 = arith.mulf %684, %683 : vector<16x16xf32>
    %686 = arith.addf %681, %685 : vector<16x16xf32>
    %c127 = arith.constant 127 : index
    %687 = memref.load %arg4[%c127] : memref<144xf32, #tpu.memory_space<smem>>
    %688 = vector.extract_strided_slice %17 {offsets = [0, 1], sizes = [16, 16], strides = [1, 1]} : vector<18x18xf32> to vector<16x16xf32>
    %689 = vector.broadcast %687 : f32 to vector<16x16xf32>
    %690 = arith.mulf %689, %688 : vector<16x16xf32>
    %691 = arith.addf %686, %690 : vector<16x16xf32>
    %c128 = arith.constant 128 : index
    %692 = memref.load %arg4[%c128] : memref<144xf32, #tpu.memory_space<smem>>
    %693 = vector.extract_strided_slice %17 {offsets = [0, 2], sizes = [16, 16], strides = [1, 1]} : vector<18x18xf32> to vector<16x16xf32>
    %694 = vector.broadcast %692 : f32 to vector<16x16xf32>
    %695 = arith.mulf %694, %693 : vector<16x16xf32>
    %696 = arith.addf %691, %695 : vector<16x16xf32>
    %c129 = arith.constant 129 : index
    %697 = memref.load %arg4[%c129] : memref<144xf32, #tpu.memory_space<smem>>
    %698 = vector.extract_strided_slice %17 {offsets = [1, 0], sizes = [16, 16], strides = [1, 1]} : vector<18x18xf32> to vector<16x16xf32>
    %699 = vector.broadcast %697 : f32 to vector<16x16xf32>
    %700 = arith.mulf %699, %698 : vector<16x16xf32>
    %701 = arith.addf %696, %700 : vector<16x16xf32>
    %c130 = arith.constant 130 : index
    %702 = memref.load %arg4[%c130] : memref<144xf32, #tpu.memory_space<smem>>
    %703 = vector.extract_strided_slice %17 {offsets = [1, 1], sizes = [16, 16], strides = [1, 1]} : vector<18x18xf32> to vector<16x16xf32>
    %704 = vector.broadcast %702 : f32 to vector<16x16xf32>
    %705 = arith.mulf %704, %703 : vector<16x16xf32>
    %706 = arith.addf %701, %705 : vector<16x16xf32>
    %c131 = arith.constant 131 : index
    %707 = memref.load %arg4[%c131] : memref<144xf32, #tpu.memory_space<smem>>
    %708 = vector.extract_strided_slice %17 {offsets = [1, 2], sizes = [16, 16], strides = [1, 1]} : vector<18x18xf32> to vector<16x16xf32>
    %709 = vector.broadcast %707 : f32 to vector<16x16xf32>
    %710 = arith.mulf %709, %708 : vector<16x16xf32>
    %711 = arith.addf %706, %710 : vector<16x16xf32>
    %c132 = arith.constant 132 : index
    %712 = memref.load %arg4[%c132] : memref<144xf32, #tpu.memory_space<smem>>
    %713 = vector.extract_strided_slice %17 {offsets = [2, 0], sizes = [16, 16], strides = [1, 1]} : vector<18x18xf32> to vector<16x16xf32>
    %714 = vector.broadcast %712 : f32 to vector<16x16xf32>
    %715 = arith.mulf %714, %713 : vector<16x16xf32>
    %716 = arith.addf %711, %715 : vector<16x16xf32>
    %c133 = arith.constant 133 : index
    %717 = memref.load %arg4[%c133] : memref<144xf32, #tpu.memory_space<smem>>
    %718 = vector.extract_strided_slice %17 {offsets = [2, 1], sizes = [16, 16], strides = [1, 1]} : vector<18x18xf32> to vector<16x16xf32>
    %719 = vector.broadcast %717 : f32 to vector<16x16xf32>
    %720 = arith.mulf %719, %718 : vector<16x16xf32>
    %721 = arith.addf %716, %720 : vector<16x16xf32>
    %c134 = arith.constant 134 : index
    %722 = memref.load %arg4[%c134] : memref<144xf32, #tpu.memory_space<smem>>
    %723 = vector.extract_strided_slice %17 {offsets = [2, 2], sizes = [16, 16], strides = [1, 1]} : vector<18x18xf32> to vector<16x16xf32>
    %724 = vector.broadcast %722 : f32 to vector<16x16xf32>
    %725 = arith.mulf %724, %723 : vector<16x16xf32>
    %726 = arith.addf %721, %725 : vector<16x16xf32>
    %c135 = arith.constant 135 : index
    %727 = memref.load %arg4[%c135] : memref<144xf32, #tpu.memory_space<smem>>
    %728 = vector.extract_strided_slice %23 {offsets = [0, 0], sizes = [16, 16], strides = [1, 1]} : vector<18x18xf32> to vector<16x16xf32>
    %729 = vector.broadcast %727 : f32 to vector<16x16xf32>
    %730 = arith.mulf %729, %728 : vector<16x16xf32>
    %731 = arith.addf %726, %730 : vector<16x16xf32>
    %c136 = arith.constant 136 : index
    %732 = memref.load %arg4[%c136] : memref<144xf32, #tpu.memory_space<smem>>
    %733 = vector.extract_strided_slice %23 {offsets = [0, 1], sizes = [16, 16], strides = [1, 1]} : vector<18x18xf32> to vector<16x16xf32>
    %734 = vector.broadcast %732 : f32 to vector<16x16xf32>
    %735 = arith.mulf %734, %733 : vector<16x16xf32>
    %736 = arith.addf %731, %735 : vector<16x16xf32>
    %c137 = arith.constant 137 : index
    %737 = memref.load %arg4[%c137] : memref<144xf32, #tpu.memory_space<smem>>
    %738 = vector.extract_strided_slice %23 {offsets = [0, 2], sizes = [16, 16], strides = [1, 1]} : vector<18x18xf32> to vector<16x16xf32>
    %739 = vector.broadcast %737 : f32 to vector<16x16xf32>
    %740 = arith.mulf %739, %738 : vector<16x16xf32>
    %741 = arith.addf %736, %740 : vector<16x16xf32>
    %c138 = arith.constant 138 : index
    %742 = memref.load %arg4[%c138] : memref<144xf32, #tpu.memory_space<smem>>
    %743 = vector.extract_strided_slice %23 {offsets = [1, 0], sizes = [16, 16], strides = [1, 1]} : vector<18x18xf32> to vector<16x16xf32>
    %744 = vector.broadcast %742 : f32 to vector<16x16xf32>
    %745 = arith.mulf %744, %743 : vector<16x16xf32>
    %746 = arith.addf %741, %745 : vector<16x16xf32>
    %c139 = arith.constant 139 : index
    %747 = memref.load %arg4[%c139] : memref<144xf32, #tpu.memory_space<smem>>
    %748 = vector.extract_strided_slice %23 {offsets = [1, 1], sizes = [16, 16], strides = [1, 1]} : vector<18x18xf32> to vector<16x16xf32>
    %749 = vector.broadcast %747 : f32 to vector<16x16xf32>
    %750 = arith.mulf %749, %748 : vector<16x16xf32>
    %751 = arith.addf %746, %750 : vector<16x16xf32>
    %c140 = arith.constant 140 : index
    %752 = memref.load %arg4[%c140] : memref<144xf32, #tpu.memory_space<smem>>
    %753 = vector.extract_strided_slice %23 {offsets = [1, 2], sizes = [16, 16], strides = [1, 1]} : vector<18x18xf32> to vector<16x16xf32>
    %754 = vector.broadcast %752 : f32 to vector<16x16xf32>
    %755 = arith.mulf %754, %753 : vector<16x16xf32>
    %756 = arith.addf %751, %755 : vector<16x16xf32>
    %c141 = arith.constant 141 : index
    %757 = memref.load %arg4[%c141] : memref<144xf32, #tpu.memory_space<smem>>
    %758 = vector.extract_strided_slice %23 {offsets = [2, 0], sizes = [16, 16], strides = [1, 1]} : vector<18x18xf32> to vector<16x16xf32>
    %759 = vector.broadcast %757 : f32 to vector<16x16xf32>
    %760 = arith.mulf %759, %758 : vector<16x16xf32>
    %761 = arith.addf %756, %760 : vector<16x16xf32>
    %c142 = arith.constant 142 : index
    %762 = memref.load %arg4[%c142] : memref<144xf32, #tpu.memory_space<smem>>
    %763 = vector.extract_strided_slice %23 {offsets = [2, 1], sizes = [16, 16], strides = [1, 1]} : vector<18x18xf32> to vector<16x16xf32>
    %764 = vector.broadcast %762 : f32 to vector<16x16xf32>
    %765 = arith.mulf %764, %763 : vector<16x16xf32>
    %766 = arith.addf %761, %765 : vector<16x16xf32>
    %c143 = arith.constant 143 : index
    %767 = memref.load %arg4[%c143] : memref<144xf32, #tpu.memory_space<smem>>
    %768 = vector.extract_strided_slice %23 {offsets = [2, 2], sizes = [16, 16], strides = [1, 1]} : vector<18x18xf32> to vector<16x16xf32>
    %769 = vector.broadcast %767 : f32 to vector<16x16xf32>
    %770 = arith.mulf %769, %768 : vector<16x16xf32>
    %771 = arith.addf %766, %770 : vector<16x16xf32>
    %c3_61 = arith.constant 3 : index
    %772 = memref.load %arg5[%c3_61] : memref<4xf32, #tpu.memory_space<smem>>
    %773 = vector.broadcast %772 : f32 to vector<16x16xf32>
    %774 = arith.addf %771, %773 : vector<16x16xf32>
    %cst_62 = arith.constant 0.000000e+00 : f32
    %775 = vector.broadcast %cst_62 : f32 to vector<16x16xf32>
    %776 = arith.maximumf %774, %775 : vector<16x16xf32>
    %c0_63 = arith.constant 0 : index
    %c3_64 = arith.constant 3 : index
    %c0_65 = arith.constant 0 : index
    %c0_66 = arith.constant 0 : index
    %777 = vector.load %arg6[%c0_63, %c3_64, %c0_65, %c0_66] : memref<1x4x16x16xf32, #tpu.memory_space<vmem>>, vector<1x1x16x16xf32>
    %778 = vector.shape_cast %777 : vector<1x1x16x16xf32> to vector<16x16xf32>
    %779 = vector.shape_cast %776 : vector<16x16xf32> to vector<1x1x16x16xf32>
    tpu.vector_store %arg6[%c0_63, %c3_64, %c0_65, %c0_66], %779 {strides = array<i32>} : memref<1x4x16x16xf32, #tpu.memory_space<vmem>>, vector<1x1x16x16xf32>,
    return
  }
  func.func @transform_0(%arg0: i32) -> (i32, i32, i32, i32) {
    %c0_i32 = arith.constant 0 : i32
    %c0_i32_0 = arith.constant 0 : i32
    %c0_i32_1 = arith.constant 0 : i32
    %c0_i32_2 = arith.constant 0 : i32
    return %arg0, %c0_i32, %c0_i32_0, %c0_i32_1 : i32, i32, i32, i32
  }
  func.func @transform_1(%arg0: i32) -> (i32, i32) {
    %c0_i32 = arith.constant 0 : i32
    %c0_i32_0 = arith.constant 0 : i32
    %c0_i32_1 = arith.constant 0 : i32
    return %c0_i32, %c0_i32_0 : i32, i32
  }
  func.func @transform_2(%arg0: i32) -> (i32, i32) {
    %c0_i32 = arith.constant 0 : i32
    %c0_i32_0 = arith.constant 0 : i32
    %c0_i32_1 = arith.constant 0 : i32
    return %c0_i32, %c0_i32_0 : i32, i32
  }
  func.func @transform_3(%arg0: i32) -> i32 {
    %c0_i32 = arith.constant 0 : i32
    %c0_i32_0 = arith.constant 0 : i32
    return %c0_i32 : i32
  }
  func.func @transform_4(%arg0: i32) -> i32 {
    %c0_i32 = arith.constant 0 : i32
    %c0_i32_0 = arith.constant 0 : i32
    return %c0_i32 : i32
  }
  func.func @transform_5(%arg0: i32) -> (i32, i32, i32, i32) {
    %c0_i32 = arith.constant 0 : i32
    %c0_i32_0 = arith.constant 0 : i32
    %c0_i32_1 = arith.constant 0 : i32
    %c0_i32_2 = arith.constant 0 : i32
    return %arg0, %c0_i32, %c0_i32_0, %c0_i32_1 : i32, i32, i32, i32
  }
}

module attributes {stable_mosaic.version = 11 : i64} {
  func.func @_upblock_kernel(%arg0: i32, %arg1: memref<1x4x4x4xf32, #tpu.memory_space<vmem>>, %arg2: memref<10x4xf32, #tpu.memory_space<vmem>>, %arg3: memref<4x10xf32, #tpu.memory_space<vmem>>, %arg4: memref<144xf32, #tpu.memory_space<smem>>, %arg5: memref<4xf32, #tpu.memory_space<smem>>, %arg6: memref<1x4x8x8xf32, #tpu.memory_space<vmem>>) attributes {dimension_semantics = [#tpu.dimension_semantics<parallel>], iteration_bounds = array<i64: 2>, scalar_prefetch = 0 : i64, scratch_operands = 0 : i64, tpu.core_type = #tpu.core_type<tc>, window_params = [{transform_indices = @transform_0, window_bounds = array<i64: 1, 4, 4, 4>}, {pipeline_mode = #tpu.pipeline_mode<synchronous>, transform_indices = @transform_1, window_bounds = array<i64: 10, 4>}, {pipeline_mode = #tpu.pipeline_mode<synchronous>, transform_indices = @transform_2, window_bounds = array<i64: 4, 10>}, {transform_indices = @transform_3, window_bounds = array<i64: 144>}, {transform_indices = @transform_4, window_bounds = array<i64: 4>}, {transform_indices = @transform_5, window_bounds = array<i64: 1, 4, 8, 8>}]} {
    %c0 = arith.constant 0 : index
    %c0_0 = arith.constant 0 : index
    %c0_1 = arith.constant 0 : index
    %c0_2 = arith.constant 0 : index
    %0 = vector.load %arg1[%c0, %c0_0, %c0_1, %c0_2] : memref<1x4x4x4xf32, #tpu.memory_space<vmem>>, vector<1x1x4x4xf32>
    %1 = vector.shape_cast %0 : vector<1x1x4x4xf32> to vector<4x4xf32>
    %c0_3 = arith.constant 0 : index
    %c0_4 = arith.constant 0 : index
    %2 = vector.load %arg2[%c0_3, %c0_4] : memref<10x4xf32, #tpu.memory_space<vmem>>, vector<10x4xf32>
    %cst = arith.constant dense<0.000000e+00> : vector<10x4xf32>
    %3 = tpu.matmul %2, %1, %cst {dimension_numbers = #tpu.dot_dimension_numbers<[1], [0], [0], [1], [0, 0, 1, 1], [], []>} : vector<10x4xf32>, vector<4x4xf32>, vector<10x4xf32> -> vector<10x4xf32>
    %c0_5 = arith.constant 0 : index
    %c0_6 = arith.constant 0 : index
    %4 = vector.load %arg3[%c0_5, %c0_6] : memref<4x10xf32, #tpu.memory_space<vmem>>, vector<4x10xf32>
    %cst_7 = arith.constant dense<0.000000e+00> : vector<10x10xf32>
    %5 = tpu.matmul %3, %4, %cst_7 {dimension_numbers = #tpu.dot_dimension_numbers<[1], [0], [0], [1], [0, 0, 1, 1], [], []>} : vector<10x4xf32>, vector<4x10xf32>, vector<10x10xf32> -> vector<10x10xf32>
    %c0_8 = arith.constant 0 : index
    %c1 = arith.constant 1 : index
    %c0_9 = arith.constant 0 : index
    %c0_10 = arith.constant 0 : index
    %6 = vector.load %arg1[%c0_8, %c1, %c0_9, %c0_10] : memref<1x4x4x4xf32, #tpu.memory_space<vmem>>, vector<1x1x4x4xf32>
    %7 = vector.shape_cast %6 : vector<1x1x4x4xf32> to vector<4x4xf32>
    %c0_11 = arith.constant 0 : index
    %c0_12 = arith.constant 0 : index
    %8 = vector.load %arg2[%c0_11, %c0_12] : memref<10x4xf32, #tpu.memory_space<vmem>>, vector<10x4xf32>
    %cst_13 = arith.constant dense<0.000000e+00> : vector<10x4xf32>
    %9 = tpu.matmul %8, %7, %cst_13 {dimension_numbers = #tpu.dot_dimension_numbers<[1], [0], [0], [1], [0, 0, 1, 1], [], []>} : vector<10x4xf32>, vector<4x4xf32>, vector<10x4xf32> -> vector<10x4xf32>
    %c0_14 = arith.constant 0 : index
    %c0_15 = arith.constant 0 : index
    %10 = vector.load %arg3[%c0_14, %c0_15] : memref<4x10xf32, #tpu.memory_space<vmem>>, vector<4x10xf32>
    %cst_16 = arith.constant dense<0.000000e+00> : vector<10x10xf32>
    %11 = tpu.matmul %9, %10, %cst_16 {dimension_numbers = #tpu.dot_dimension_numbers<[1], [0], [0], [1], [0, 0, 1, 1], [], []>} : vector<10x4xf32>, vector<4x10xf32>, vector<10x10xf32> -> vector<10x10xf32>
    %c0_17 = arith.constant 0 : index
    %c2 = arith.constant 2 : index
    %c0_18 = arith.constant 0 : index
    %c0_19 = arith.constant 0 : index
    %12 = vector.load %arg1[%c0_17, %c2, %c0_18, %c0_19] : memref<1x4x4x4xf32, #tpu.memory_space<vmem>>, vector<1x1x4x4xf32>
    %13 = vector.shape_cast %12 : vector<1x1x4x4xf32> to vector<4x4xf32>
    %c0_20 = arith.constant 0 : index
    %c0_21 = arith.constant 0 : index
    %14 = vector.load %arg2[%c0_20, %c0_21] : memref<10x4xf32, #tpu.memory_space<vmem>>, vector<10x4xf32>
    %cst_22 = arith.constant dense<0.000000e+00> : vector<10x4xf32>
    %15 = tpu.matmul %14, %13, %cst_22 {dimension_numbers = #tpu.dot_dimension_numbers<[1], [0], [0], [1], [0, 0, 1, 1], [], []>} : vector<10x4xf32>, vector<4x4xf32>, vector<10x4xf32> -> vector<10x4xf32>
    %c0_23 = arith.constant 0 : index
    %c0_24 = arith.constant 0 : index
    %16 = vector.load %arg3[%c0_23, %c0_24] : memref<4x10xf32, #tpu.memory_space<vmem>>, vector<4x10xf32>
    %cst_25 = arith.constant dense<0.000000e+00> : vector<10x10xf32>
    %17 = tpu.matmul %15, %16, %cst_25 {dimension_numbers = #tpu.dot_dimension_numbers<[1], [0], [0], [1], [0, 0, 1, 1], [], []>} : vector<10x4xf32>, vector<4x10xf32>, vector<10x10xf32> -> vector<10x10xf32>
    %c0_26 = arith.constant 0 : index
    %c3 = arith.constant 3 : index
    %c0_27 = arith.constant 0 : index
    %c0_28 = arith.constant 0 : index
    %18 = vector.load %arg1[%c0_26, %c3, %c0_27, %c0_28] : memref<1x4x4x4xf32, #tpu.memory_space<vmem>>, vector<1x1x4x4xf32>
    %19 = vector.shape_cast %18 : vector<1x1x4x4xf32> to vector<4x4xf32>
    %c0_29 = arith.constant 0 : index
    %c0_30 = arith.constant 0 : index
    %20 = vector.load %arg2[%c0_29, %c0_30] : memref<10x4xf32, #tpu.memory_space<vmem>>, vector<10x4xf32>
    %cst_31 = arith.constant dense<0.000000e+00> : vector<10x4xf32>
    %21 = tpu.matmul %20, %19, %cst_31 {dimension_numbers = #tpu.dot_dimension_numbers<[1], [0], [0], [1], [0, 0, 1, 1], [], []>} : vector<10x4xf32>, vector<4x4xf32>, vector<10x4xf32> -> vector<10x4xf32>
    %c0_32 = arith.constant 0 : index
    %c0_33 = arith.constant 0 : index
    %22 = vector.load %arg3[%c0_32, %c0_33] : memref<4x10xf32, #tpu.memory_space<vmem>>, vector<4x10xf32>
    %cst_34 = arith.constant dense<0.000000e+00> : vector<10x10xf32>
    %23 = tpu.matmul %21, %22, %cst_34 {dimension_numbers = #tpu.dot_dimension_numbers<[1], [0], [0], [1], [0, 0, 1, 1], [], []>} : vector<10x4xf32>, vector<4x10xf32>, vector<10x10xf32> -> vector<10x10xf32>
    %cst_35 = arith.constant 0.000000e+00 : f32
    %24 = vector.broadcast %cst_35 : f32 to vector<8x8xf32>
    %c0_36 = arith.constant 0 : index
    %25 = memref.load %arg4[%c0_36] : memref<144xf32, #tpu.memory_space<smem>>
    %26 = vector.extract_strided_slice %5 {offsets = [0, 0], sizes = [8, 8], strides = [1, 1]} : vector<10x10xf32> to vector<8x8xf32>
    %27 = vector.broadcast %25 : f32 to vector<8x8xf32>
    %28 = arith.mulf %27, %26 : vector<8x8xf32>
    %29 = arith.addf %24, %28 : vector<8x8xf32>
    %c1_37 = arith.constant 1 : index
    %30 = memref.load %arg4[%c1_37] : memref<144xf32, #tpu.memory_space<smem>>
    %31 = vector.extract_strided_slice %5 {offsets = [0, 1], sizes = [8, 8], strides = [1, 1]} : vector<10x10xf32> to vector<8x8xf32>
    %32 = vector.broadcast %30 : f32 to vector<8x8xf32>
    %33 = arith.mulf %32, %31 : vector<8x8xf32>
    %34 = arith.addf %29, %33 : vector<8x8xf32>
    %c2_38 = arith.constant 2 : index
    %35 = memref.load %arg4[%c2_38] : memref<144xf32, #tpu.memory_space<smem>>
    %36 = vector.extract_strided_slice %5 {offsets = [0, 2], sizes = [8, 8], strides = [1, 1]} : vector<10x10xf32> to vector<8x8xf32>
    %37 = vector.broadcast %35 : f32 to vector<8x8xf32>
    %38 = arith.mulf %37, %36 : vector<8x8xf32>
    %39 = arith.addf %34, %38 : vector<8x8xf32>
    %c3_39 = arith.constant 3 : index
    %40 = memref.load %arg4[%c3_39] : memref<144xf32, #tpu.memory_space<smem>>
    %41 = vector.extract_strided_slice %5 {offsets = [1, 0], sizes = [8, 8], strides = [1, 1]} : vector<10x10xf32> to vector<8x8xf32>
    %42 = vector.broadcast %40 : f32 to vector<8x8xf32>
    %43 = arith.mulf %42, %41 : vector<8x8xf32>
    %44 = arith.addf %39, %43 : vector<8x8xf32>
    %c4 = arith.constant 4 : index
    %45 = memref.load %arg4[%c4] : memref<144xf32, #tpu.memory_space<smem>>
    %46 = vector.extract_strided_slice %5 {offsets = [1, 1], sizes = [8, 8], strides = [1, 1]} : vector<10x10xf32> to vector<8x8xf32>
    %47 = vector.broadcast %45 : f32 to vector<8x8xf32>
    %48 = arith.mulf %47, %46 : vector<8x8xf32>
    %49 = arith.addf %44, %48 : vector<8x8xf32>
    %c5 = arith.constant 5 : index
    %50 = memref.load %arg4[%c5] : memref<144xf32, #tpu.memory_space<smem>>
    %51 = vector.extract_strided_slice %5 {offsets = [1, 2], sizes = [8, 8], strides = [1, 1]} : vector<10x10xf32> to vector<8x8xf32>
    %52 = vector.broadcast %50 : f32 to vector<8x8xf32>
    %53 = arith.mulf %52, %51 : vector<8x8xf32>
    %54 = arith.addf %49, %53 : vector<8x8xf32>
    %c6 = arith.constant 6 : index
    %55 = memref.load %arg4[%c6] : memref<144xf32, #tpu.memory_space<smem>>
    %56 = vector.extract_strided_slice %5 {offsets = [2, 0], sizes = [8, 8], strides = [1, 1]} : vector<10x10xf32> to vector<8x8xf32>
    %57 = vector.broadcast %55 : f32 to vector<8x8xf32>
    %58 = arith.mulf %57, %56 : vector<8x8xf32>
    %59 = arith.addf %54, %58 : vector<8x8xf32>
    %c7 = arith.constant 7 : index
    %60 = memref.load %arg4[%c7] : memref<144xf32, #tpu.memory_space<smem>>
    %61 = vector.extract_strided_slice %5 {offsets = [2, 1], sizes = [8, 8], strides = [1, 1]} : vector<10x10xf32> to vector<8x8xf32>
    %62 = vector.broadcast %60 : f32 to vector<8x8xf32>
    %63 = arith.mulf %62, %61 : vector<8x8xf32>
    %64 = arith.addf %59, %63 : vector<8x8xf32>
    %c8 = arith.constant 8 : index
    %65 = memref.load %arg4[%c8] : memref<144xf32, #tpu.memory_space<smem>>
    %66 = vector.extract_strided_slice %5 {offsets = [2, 2], sizes = [8, 8], strides = [1, 1]} : vector<10x10xf32> to vector<8x8xf32>
    %67 = vector.broadcast %65 : f32 to vector<8x8xf32>
    %68 = arith.mulf %67, %66 : vector<8x8xf32>
    %69 = arith.addf %64, %68 : vector<8x8xf32>
    %c9 = arith.constant 9 : index
    %70 = memref.load %arg4[%c9] : memref<144xf32, #tpu.memory_space<smem>>
    %71 = vector.extract_strided_slice %11 {offsets = [0, 0], sizes = [8, 8], strides = [1, 1]} : vector<10x10xf32> to vector<8x8xf32>
    %72 = vector.broadcast %70 : f32 to vector<8x8xf32>
    %73 = arith.mulf %72, %71 : vector<8x8xf32>
    %74 = arith.addf %69, %73 : vector<8x8xf32>
    %c10 = arith.constant 10 : index
    %75 = memref.load %arg4[%c10] : memref<144xf32, #tpu.memory_space<smem>>
    %76 = vector.extract_strided_slice %11 {offsets = [0, 1], sizes = [8, 8], strides = [1, 1]} : vector<10x10xf32> to vector<8x8xf32>
    %77 = vector.broadcast %75 : f32 to vector<8x8xf32>
    %78 = arith.mulf %77, %76 : vector<8x8xf32>
    %79 = arith.addf %74, %78 : vector<8x8xf32>
    %c11 = arith.constant 11 : index
    %80 = memref.load %arg4[%c11] : memref<144xf32, #tpu.memory_space<smem>>
    %81 = vector.extract_strided_slice %11 {offsets = [0, 2], sizes = [8, 8], strides = [1, 1]} : vector<10x10xf32> to vector<8x8xf32>
    %82 = vector.broadcast %80 : f32 to vector<8x8xf32>
    %83 = arith.mulf %82, %81 : vector<8x8xf32>
    %84 = arith.addf %79, %83 : vector<8x8xf32>
    %c12 = arith.constant 12 : index
    %85 = memref.load %arg4[%c12] : memref<144xf32, #tpu.memory_space<smem>>
    %86 = vector.extract_strided_slice %11 {offsets = [1, 0], sizes = [8, 8], strides = [1, 1]} : vector<10x10xf32> to vector<8x8xf32>
    %87 = vector.broadcast %85 : f32 to vector<8x8xf32>
    %88 = arith.mulf %87, %86 : vector<8x8xf32>
    %89 = arith.addf %84, %88 : vector<8x8xf32>
    %c13 = arith.constant 13 : index
    %90 = memref.load %arg4[%c13] : memref<144xf32, #tpu.memory_space<smem>>
    %91 = vector.extract_strided_slice %11 {offsets = [1, 1], sizes = [8, 8], strides = [1, 1]} : vector<10x10xf32> to vector<8x8xf32>
    %92 = vector.broadcast %90 : f32 to vector<8x8xf32>
    %93 = arith.mulf %92, %91 : vector<8x8xf32>
    %94 = arith.addf %89, %93 : vector<8x8xf32>
    %c14 = arith.constant 14 : index
    %95 = memref.load %arg4[%c14] : memref<144xf32, #tpu.memory_space<smem>>
    %96 = vector.extract_strided_slice %11 {offsets = [1, 2], sizes = [8, 8], strides = [1, 1]} : vector<10x10xf32> to vector<8x8xf32>
    %97 = vector.broadcast %95 : f32 to vector<8x8xf32>
    %98 = arith.mulf %97, %96 : vector<8x8xf32>
    %99 = arith.addf %94, %98 : vector<8x8xf32>
    %c15 = arith.constant 15 : index
    %100 = memref.load %arg4[%c15] : memref<144xf32, #tpu.memory_space<smem>>
    %101 = vector.extract_strided_slice %11 {offsets = [2, 0], sizes = [8, 8], strides = [1, 1]} : vector<10x10xf32> to vector<8x8xf32>
    %102 = vector.broadcast %100 : f32 to vector<8x8xf32>
    %103 = arith.mulf %102, %101 : vector<8x8xf32>
    %104 = arith.addf %99, %103 : vector<8x8xf32>
    %c16 = arith.constant 16 : index
    %105 = memref.load %arg4[%c16] : memref<144xf32, #tpu.memory_space<smem>>
    %106 = vector.extract_strided_slice %11 {offsets = [2, 1], sizes = [8, 8], strides = [1, 1]} : vector<10x10xf32> to vector<8x8xf32>
    %107 = vector.broadcast %105 : f32 to vector<8x8xf32>
    %108 = arith.mulf %107, %106 : vector<8x8xf32>
    %109 = arith.addf %104, %108 : vector<8x8xf32>
    %c17 = arith.constant 17 : index
    %110 = memref.load %arg4[%c17] : memref<144xf32, #tpu.memory_space<smem>>
    %111 = vector.extract_strided_slice %11 {offsets = [2, 2], sizes = [8, 8], strides = [1, 1]} : vector<10x10xf32> to vector<8x8xf32>
    %112 = vector.broadcast %110 : f32 to vector<8x8xf32>
    %113 = arith.mulf %112, %111 : vector<8x8xf32>
    %114 = arith.addf %109, %113 : vector<8x8xf32>
    %c18 = arith.constant 18 : index
    %115 = memref.load %arg4[%c18] : memref<144xf32, #tpu.memory_space<smem>>
    %116 = vector.extract_strided_slice %17 {offsets = [0, 0], sizes = [8, 8], strides = [1, 1]} : vector<10x10xf32> to vector<8x8xf32>
    %117 = vector.broadcast %115 : f32 to vector<8x8xf32>
    %118 = arith.mulf %117, %116 : vector<8x8xf32>
    %119 = arith.addf %114, %118 : vector<8x8xf32>
    %c19 = arith.constant 19 : index
    %120 = memref.load %arg4[%c19] : memref<144xf32, #tpu.memory_space<smem>>
    %121 = vector.extract_strided_slice %17 {offsets = [0, 1], sizes = [8, 8], strides = [1, 1]} : vector<10x10xf32> to vector<8x8xf32>
    %122 = vector.broadcast %120 : f32 to vector<8x8xf32>
    %123 = arith.mulf %122, %121 : vector<8x8xf32>
    %124 = arith.addf %119, %123 : vector<8x8xf32>
    %c20 = arith.constant 20 : index
    %125 = memref.load %arg4[%c20] : memref<144xf32, #tpu.memory_space<smem>>
    %126 = vector.extract_strided_slice %17 {offsets = [0, 2], sizes = [8, 8], strides = [1, 1]} : vector<10x10xf32> to vector<8x8xf32>
    %127 = vector.broadcast %125 : f32 to vector<8x8xf32>
    %128 = arith.mulf %127, %126 : vector<8x8xf32>
    %129 = arith.addf %124, %128 : vector<8x8xf32>
    %c21 = arith.constant 21 : index
    %130 = memref.load %arg4[%c21] : memref<144xf32, #tpu.memory_space<smem>>
    %131 = vector.extract_strided_slice %17 {offsets = [1, 0], sizes = [8, 8], strides = [1, 1]} : vector<10x10xf32> to vector<8x8xf32>
    %132 = vector.broadcast %130 : f32 to vector<8x8xf32>
    %133 = arith.mulf %132, %131 : vector<8x8xf32>
    %134 = arith.addf %129, %133 : vector<8x8xf32>
    %c22 = arith.constant 22 : index
    %135 = memref.load %arg4[%c22] : memref<144xf32, #tpu.memory_space<smem>>
    %136 = vector.extract_strided_slice %17 {offsets = [1, 1], sizes = [8, 8], strides = [1, 1]} : vector<10x10xf32> to vector<8x8xf32>
    %137 = vector.broadcast %135 : f32 to vector<8x8xf32>
    %138 = arith.mulf %137, %136 : vector<8x8xf32>
    %139 = arith.addf %134, %138 : vector<8x8xf32>
    %c23 = arith.constant 23 : index
    %140 = memref.load %arg4[%c23] : memref<144xf32, #tpu.memory_space<smem>>
    %141 = vector.extract_strided_slice %17 {offsets = [1, 2], sizes = [8, 8], strides = [1, 1]} : vector<10x10xf32> to vector<8x8xf32>
    %142 = vector.broadcast %140 : f32 to vector<8x8xf32>
    %143 = arith.mulf %142, %141 : vector<8x8xf32>
    %144 = arith.addf %139, %143 : vector<8x8xf32>
    %c24 = arith.constant 24 : index
    %145 = memref.load %arg4[%c24] : memref<144xf32, #tpu.memory_space<smem>>
    %146 = vector.extract_strided_slice %17 {offsets = [2, 0], sizes = [8, 8], strides = [1, 1]} : vector<10x10xf32> to vector<8x8xf32>
    %147 = vector.broadcast %145 : f32 to vector<8x8xf32>
    %148 = arith.mulf %147, %146 : vector<8x8xf32>
    %149 = arith.addf %144, %148 : vector<8x8xf32>
    %c25 = arith.constant 25 : index
    %150 = memref.load %arg4[%c25] : memref<144xf32, #tpu.memory_space<smem>>
    %151 = vector.extract_strided_slice %17 {offsets = [2, 1], sizes = [8, 8], strides = [1, 1]} : vector<10x10xf32> to vector<8x8xf32>
    %152 = vector.broadcast %150 : f32 to vector<8x8xf32>
    %153 = arith.mulf %152, %151 : vector<8x8xf32>
    %154 = arith.addf %149, %153 : vector<8x8xf32>
    %c26 = arith.constant 26 : index
    %155 = memref.load %arg4[%c26] : memref<144xf32, #tpu.memory_space<smem>>
    %156 = vector.extract_strided_slice %17 {offsets = [2, 2], sizes = [8, 8], strides = [1, 1]} : vector<10x10xf32> to vector<8x8xf32>
    %157 = vector.broadcast %155 : f32 to vector<8x8xf32>
    %158 = arith.mulf %157, %156 : vector<8x8xf32>
    %159 = arith.addf %154, %158 : vector<8x8xf32>
    %c27 = arith.constant 27 : index
    %160 = memref.load %arg4[%c27] : memref<144xf32, #tpu.memory_space<smem>>
    %161 = vector.extract_strided_slice %23 {offsets = [0, 0], sizes = [8, 8], strides = [1, 1]} : vector<10x10xf32> to vector<8x8xf32>
    %162 = vector.broadcast %160 : f32 to vector<8x8xf32>
    %163 = arith.mulf %162, %161 : vector<8x8xf32>
    %164 = arith.addf %159, %163 : vector<8x8xf32>
    %c28 = arith.constant 28 : index
    %165 = memref.load %arg4[%c28] : memref<144xf32, #tpu.memory_space<smem>>
    %166 = vector.extract_strided_slice %23 {offsets = [0, 1], sizes = [8, 8], strides = [1, 1]} : vector<10x10xf32> to vector<8x8xf32>
    %167 = vector.broadcast %165 : f32 to vector<8x8xf32>
    %168 = arith.mulf %167, %166 : vector<8x8xf32>
    %169 = arith.addf %164, %168 : vector<8x8xf32>
    %c29 = arith.constant 29 : index
    %170 = memref.load %arg4[%c29] : memref<144xf32, #tpu.memory_space<smem>>
    %171 = vector.extract_strided_slice %23 {offsets = [0, 2], sizes = [8, 8], strides = [1, 1]} : vector<10x10xf32> to vector<8x8xf32>
    %172 = vector.broadcast %170 : f32 to vector<8x8xf32>
    %173 = arith.mulf %172, %171 : vector<8x8xf32>
    %174 = arith.addf %169, %173 : vector<8x8xf32>
    %c30 = arith.constant 30 : index
    %175 = memref.load %arg4[%c30] : memref<144xf32, #tpu.memory_space<smem>>
    %176 = vector.extract_strided_slice %23 {offsets = [1, 0], sizes = [8, 8], strides = [1, 1]} : vector<10x10xf32> to vector<8x8xf32>
    %177 = vector.broadcast %175 : f32 to vector<8x8xf32>
    %178 = arith.mulf %177, %176 : vector<8x8xf32>
    %179 = arith.addf %174, %178 : vector<8x8xf32>
    %c31 = arith.constant 31 : index
    %180 = memref.load %arg4[%c31] : memref<144xf32, #tpu.memory_space<smem>>
    %181 = vector.extract_strided_slice %23 {offsets = [1, 1], sizes = [8, 8], strides = [1, 1]} : vector<10x10xf32> to vector<8x8xf32>
    %182 = vector.broadcast %180 : f32 to vector<8x8xf32>
    %183 = arith.mulf %182, %181 : vector<8x8xf32>
    %184 = arith.addf %179, %183 : vector<8x8xf32>
    %c32 = arith.constant 32 : index
    %185 = memref.load %arg4[%c32] : memref<144xf32, #tpu.memory_space<smem>>
    %186 = vector.extract_strided_slice %23 {offsets = [1, 2], sizes = [8, 8], strides = [1, 1]} : vector<10x10xf32> to vector<8x8xf32>
    %187 = vector.broadcast %185 : f32 to vector<8x8xf32>
    %188 = arith.mulf %187, %186 : vector<8x8xf32>
    %189 = arith.addf %184, %188 : vector<8x8xf32>
    %c33 = arith.constant 33 : index
    %190 = memref.load %arg4[%c33] : memref<144xf32, #tpu.memory_space<smem>>
    %191 = vector.extract_strided_slice %23 {offsets = [2, 0], sizes = [8, 8], strides = [1, 1]} : vector<10x10xf32> to vector<8x8xf32>
    %192 = vector.broadcast %190 : f32 to vector<8x8xf32>
    %193 = arith.mulf %192, %191 : vector<8x8xf32>
    %194 = arith.addf %189, %193 : vector<8x8xf32>
    %c34 = arith.constant 34 : index
    %195 = memref.load %arg4[%c34] : memref<144xf32, #tpu.memory_space<smem>>
    %196 = vector.extract_strided_slice %23 {offsets = [2, 1], sizes = [8, 8], strides = [1, 1]} : vector<10x10xf32> to vector<8x8xf32>
    %197 = vector.broadcast %195 : f32 to vector<8x8xf32>
    %198 = arith.mulf %197, %196 : vector<8x8xf32>
    %199 = arith.addf %194, %198 : vector<8x8xf32>
    %c35 = arith.constant 35 : index
    %200 = memref.load %arg4[%c35] : memref<144xf32, #tpu.memory_space<smem>>
    %201 = vector.extract_strided_slice %23 {offsets = [2, 2], sizes = [8, 8], strides = [1, 1]} : vector<10x10xf32> to vector<8x8xf32>
    %202 = vector.broadcast %200 : f32 to vector<8x8xf32>
    %203 = arith.mulf %202, %201 : vector<8x8xf32>
    %204 = arith.addf %199, %203 : vector<8x8xf32>
    %c0_40 = arith.constant 0 : index
    %205 = memref.load %arg5[%c0_40] : memref<4xf32, #tpu.memory_space<smem>>
    %206 = vector.broadcast %205 : f32 to vector<8x8xf32>
    %207 = arith.addf %204, %206 : vector<8x8xf32>
    %cst_41 = arith.constant 0.000000e+00 : f32
    %208 = vector.broadcast %cst_41 : f32 to vector<8x8xf32>
    %209 = arith.maximumf %207, %208 : vector<8x8xf32>
    %c0_42 = arith.constant 0 : index
    %c0_43 = arith.constant 0 : index
    %c0_44 = arith.constant 0 : index
    %c0_45 = arith.constant 0 : index
    %210 = vector.load %arg6[%c0_42, %c0_43, %c0_44, %c0_45] : memref<1x4x8x8xf32, #tpu.memory_space<vmem>>, vector<1x1x8x8xf32>
    %211 = vector.shape_cast %210 : vector<1x1x8x8xf32> to vector<8x8xf32>
    %212 = vector.shape_cast %209 : vector<8x8xf32> to vector<1x1x8x8xf32>
    tpu.vector_store %arg6[%c0_42, %c0_43, %c0_44, %c0_45], %212 {strides = array<i32>} : memref<1x4x8x8xf32, #tpu.memory_space<vmem>>, vector<1x1x8x8xf32>,
    %cst_46 = arith.constant 0.000000e+00 : f32
    %213 = vector.broadcast %cst_46 : f32 to vector<8x8xf32>
    %c36 = arith.constant 36 : index
    %214 = memref.load %arg4[%c36] : memref<144xf32, #tpu.memory_space<smem>>
    %215 = vector.extract_strided_slice %5 {offsets = [0, 0], sizes = [8, 8], strides = [1, 1]} : vector<10x10xf32> to vector<8x8xf32>
    %216 = vector.broadcast %214 : f32 to vector<8x8xf32>
    %217 = arith.mulf %216, %215 : vector<8x8xf32>
    %218 = arith.addf %213, %217 : vector<8x8xf32>
    %c37 = arith.constant 37 : index
    %219 = memref.load %arg4[%c37] : memref<144xf32, #tpu.memory_space<smem>>
    %220 = vector.extract_strided_slice %5 {offsets = [0, 1], sizes = [8, 8], strides = [1, 1]} : vector<10x10xf32> to vector<8x8xf32>
    %221 = vector.broadcast %219 : f32 to vector<8x8xf32>
    %222 = arith.mulf %221, %220 : vector<8x8xf32>
    %223 = arith.addf %218, %222 : vector<8x8xf32>
    %c38 = arith.constant 38 : index
    %224 = memref.load %arg4[%c38] : memref<144xf32, #tpu.memory_space<smem>>
    %225 = vector.extract_strided_slice %5 {offsets = [0, 2], sizes = [8, 8], strides = [1, 1]} : vector<10x10xf32> to vector<8x8xf32>
    %226 = vector.broadcast %224 : f32 to vector<8x8xf32>
    %227 = arith.mulf %226, %225 : vector<8x8xf32>
    %228 = arith.addf %223, %227 : vector<8x8xf32>
    %c39 = arith.constant 39 : index
    %229 = memref.load %arg4[%c39] : memref<144xf32, #tpu.memory_space<smem>>
    %230 = vector.extract_strided_slice %5 {offsets = [1, 0], sizes = [8, 8], strides = [1, 1]} : vector<10x10xf32> to vector<8x8xf32>
    %231 = vector.broadcast %229 : f32 to vector<8x8xf32>
    %232 = arith.mulf %231, %230 : vector<8x8xf32>
    %233 = arith.addf %228, %232 : vector<8x8xf32>
    %c40 = arith.constant 40 : index
    %234 = memref.load %arg4[%c40] : memref<144xf32, #tpu.memory_space<smem>>
    %235 = vector.extract_strided_slice %5 {offsets = [1, 1], sizes = [8, 8], strides = [1, 1]} : vector<10x10xf32> to vector<8x8xf32>
    %236 = vector.broadcast %234 : f32 to vector<8x8xf32>
    %237 = arith.mulf %236, %235 : vector<8x8xf32>
    %238 = arith.addf %233, %237 : vector<8x8xf32>
    %c41 = arith.constant 41 : index
    %239 = memref.load %arg4[%c41] : memref<144xf32, #tpu.memory_space<smem>>
    %240 = vector.extract_strided_slice %5 {offsets = [1, 2], sizes = [8, 8], strides = [1, 1]} : vector<10x10xf32> to vector<8x8xf32>
    %241 = vector.broadcast %239 : f32 to vector<8x8xf32>
    %242 = arith.mulf %241, %240 : vector<8x8xf32>
    %243 = arith.addf %238, %242 : vector<8x8xf32>
    %c42 = arith.constant 42 : index
    %244 = memref.load %arg4[%c42] : memref<144xf32, #tpu.memory_space<smem>>
    %245 = vector.extract_strided_slice %5 {offsets = [2, 0], sizes = [8, 8], strides = [1, 1]} : vector<10x10xf32> to vector<8x8xf32>
    %246 = vector.broadcast %244 : f32 to vector<8x8xf32>
    %247 = arith.mulf %246, %245 : vector<8x8xf32>
    %248 = arith.addf %243, %247 : vector<8x8xf32>
    %c43 = arith.constant 43 : index
    %249 = memref.load %arg4[%c43] : memref<144xf32, #tpu.memory_space<smem>>
    %250 = vector.extract_strided_slice %5 {offsets = [2, 1], sizes = [8, 8], strides = [1, 1]} : vector<10x10xf32> to vector<8x8xf32>
    %251 = vector.broadcast %249 : f32 to vector<8x8xf32>
    %252 = arith.mulf %251, %250 : vector<8x8xf32>
    %253 = arith.addf %248, %252 : vector<8x8xf32>
    %c44 = arith.constant 44 : index
    %254 = memref.load %arg4[%c44] : memref<144xf32, #tpu.memory_space<smem>>
    %255 = vector.extract_strided_slice %5 {offsets = [2, 2], sizes = [8, 8], strides = [1, 1]} : vector<10x10xf32> to vector<8x8xf32>
    %256 = vector.broadcast %254 : f32 to vector<8x8xf32>
    %257 = arith.mulf %256, %255 : vector<8x8xf32>
    %258 = arith.addf %253, %257 : vector<8x8xf32>
    %c45 = arith.constant 45 : index
    %259 = memref.load %arg4[%c45] : memref<144xf32, #tpu.memory_space<smem>>
    %260 = vector.extract_strided_slice %11 {offsets = [0, 0], sizes = [8, 8], strides = [1, 1]} : vector<10x10xf32> to vector<8x8xf32>
    %261 = vector.broadcast %259 : f32 to vector<8x8xf32>
    %262 = arith.mulf %261, %260 : vector<8x8xf32>
    %263 = arith.addf %258, %262 : vector<8x8xf32>
    %c46 = arith.constant 46 : index
    %264 = memref.load %arg4[%c46] : memref<144xf32, #tpu.memory_space<smem>>
    %265 = vector.extract_strided_slice %11 {offsets = [0, 1], sizes = [8, 8], strides = [1, 1]} : vector<10x10xf32> to vector<8x8xf32>
    %266 = vector.broadcast %264 : f32 to vector<8x8xf32>
    %267 = arith.mulf %266, %265 : vector<8x8xf32>
    %268 = arith.addf %263, %267 : vector<8x8xf32>
    %c47 = arith.constant 47 : index
    %269 = memref.load %arg4[%c47] : memref<144xf32, #tpu.memory_space<smem>>
    %270 = vector.extract_strided_slice %11 {offsets = [0, 2], sizes = [8, 8], strides = [1, 1]} : vector<10x10xf32> to vector<8x8xf32>
    %271 = vector.broadcast %269 : f32 to vector<8x8xf32>
    %272 = arith.mulf %271, %270 : vector<8x8xf32>
    %273 = arith.addf %268, %272 : vector<8x8xf32>
    %c48 = arith.constant 48 : index
    %274 = memref.load %arg4[%c48] : memref<144xf32, #tpu.memory_space<smem>>
    %275 = vector.extract_strided_slice %11 {offsets = [1, 0], sizes = [8, 8], strides = [1, 1]} : vector<10x10xf32> to vector<8x8xf32>
    %276 = vector.broadcast %274 : f32 to vector<8x8xf32>
    %277 = arith.mulf %276, %275 : vector<8x8xf32>
    %278 = arith.addf %273, %277 : vector<8x8xf32>
    %c49 = arith.constant 49 : index
    %279 = memref.load %arg4[%c49] : memref<144xf32, #tpu.memory_space<smem>>
    %280 = vector.extract_strided_slice %11 {offsets = [1, 1], sizes = [8, 8], strides = [1, 1]} : vector<10x10xf32> to vector<8x8xf32>
    %281 = vector.broadcast %279 : f32 to vector<8x8xf32>
    %282 = arith.mulf %281, %280 : vector<8x8xf32>
    %283 = arith.addf %278, %282 : vector<8x8xf32>
    %c50 = arith.constant 50 : index
    %284 = memref.load %arg4[%c50] : memref<144xf32, #tpu.memory_space<smem>>
    %285 = vector.extract_strided_slice %11 {offsets = [1, 2], sizes = [8, 8], strides = [1, 1]} : vector<10x10xf32> to vector<8x8xf32>
    %286 = vector.broadcast %284 : f32 to vector<8x8xf32>
    %287 = arith.mulf %286, %285 : vector<8x8xf32>
    %288 = arith.addf %283, %287 : vector<8x8xf32>
    %c51 = arith.constant 51 : index
    %289 = memref.load %arg4[%c51] : memref<144xf32, #tpu.memory_space<smem>>
    %290 = vector.extract_strided_slice %11 {offsets = [2, 0], sizes = [8, 8], strides = [1, 1]} : vector<10x10xf32> to vector<8x8xf32>
    %291 = vector.broadcast %289 : f32 to vector<8x8xf32>
    %292 = arith.mulf %291, %290 : vector<8x8xf32>
    %293 = arith.addf %288, %292 : vector<8x8xf32>
    %c52 = arith.constant 52 : index
    %294 = memref.load %arg4[%c52] : memref<144xf32, #tpu.memory_space<smem>>
    %295 = vector.extract_strided_slice %11 {offsets = [2, 1], sizes = [8, 8], strides = [1, 1]} : vector<10x10xf32> to vector<8x8xf32>
    %296 = vector.broadcast %294 : f32 to vector<8x8xf32>
    %297 = arith.mulf %296, %295 : vector<8x8xf32>
    %298 = arith.addf %293, %297 : vector<8x8xf32>
    %c53 = arith.constant 53 : index
    %299 = memref.load %arg4[%c53] : memref<144xf32, #tpu.memory_space<smem>>
    %300 = vector.extract_strided_slice %11 {offsets = [2, 2], sizes = [8, 8], strides = [1, 1]} : vector<10x10xf32> to vector<8x8xf32>
    %301 = vector.broadcast %299 : f32 to vector<8x8xf32>
    %302 = arith.mulf %301, %300 : vector<8x8xf32>
    %303 = arith.addf %298, %302 : vector<8x8xf32>
    %c54 = arith.constant 54 : index
    %304 = memref.load %arg4[%c54] : memref<144xf32, #tpu.memory_space<smem>>
    %305 = vector.extract_strided_slice %17 {offsets = [0, 0], sizes = [8, 8], strides = [1, 1]} : vector<10x10xf32> to vector<8x8xf32>
    %306 = vector.broadcast %304 : f32 to vector<8x8xf32>
    %307 = arith.mulf %306, %305 : vector<8x8xf32>
    %308 = arith.addf %303, %307 : vector<8x8xf32>
    %c55 = arith.constant 55 : index
    %309 = memref.load %arg4[%c55] : memref<144xf32, #tpu.memory_space<smem>>
    %310 = vector.extract_strided_slice %17 {offsets = [0, 1], sizes = [8, 8], strides = [1, 1]} : vector<10x10xf32> to vector<8x8xf32>
    %311 = vector.broadcast %309 : f32 to vector<8x8xf32>
    %312 = arith.mulf %311, %310 : vector<8x8xf32>
    %313 = arith.addf %308, %312 : vector<8x8xf32>
    %c56 = arith.constant 56 : index
    %314 = memref.load %arg4[%c56] : memref<144xf32, #tpu.memory_space<smem>>
    %315 = vector.extract_strided_slice %17 {offsets = [0, 2], sizes = [8, 8], strides = [1, 1]} : vector<10x10xf32> to vector<8x8xf32>
    %316 = vector.broadcast %314 : f32 to vector<8x8xf32>
    %317 = arith.mulf %316, %315 : vector<8x8xf32>
    %318 = arith.addf %313, %317 : vector<8x8xf32>
    %c57 = arith.constant 57 : index
    %319 = memref.load %arg4[%c57] : memref<144xf32, #tpu.memory_space<smem>>
    %320 = vector.extract_strided_slice %17 {offsets = [1, 0], sizes = [8, 8], strides = [1, 1]} : vector<10x10xf32> to vector<8x8xf32>
    %321 = vector.broadcast %319 : f32 to vector<8x8xf32>
    %322 = arith.mulf %321, %320 : vector<8x8xf32>
    %323 = arith.addf %318, %322 : vector<8x8xf32>
    %c58 = arith.constant 58 : index
    %324 = memref.load %arg4[%c58] : memref<144xf32, #tpu.memory_space<smem>>
    %325 = vector.extract_strided_slice %17 {offsets = [1, 1], sizes = [8, 8], strides = [1, 1]} : vector<10x10xf32> to vector<8x8xf32>
    %326 = vector.broadcast %324 : f32 to vector<8x8xf32>
    %327 = arith.mulf %326, %325 : vector<8x8xf32>
    %328 = arith.addf %323, %327 : vector<8x8xf32>
    %c59 = arith.constant 59 : index
    %329 = memref.load %arg4[%c59] : memref<144xf32, #tpu.memory_space<smem>>
    %330 = vector.extract_strided_slice %17 {offsets = [1, 2], sizes = [8, 8], strides = [1, 1]} : vector<10x10xf32> to vector<8x8xf32>
    %331 = vector.broadcast %329 : f32 to vector<8x8xf32>
    %332 = arith.mulf %331, %330 : vector<8x8xf32>
    %333 = arith.addf %328, %332 : vector<8x8xf32>
    %c60 = arith.constant 60 : index
    %334 = memref.load %arg4[%c60] : memref<144xf32, #tpu.memory_space<smem>>
    %335 = vector.extract_strided_slice %17 {offsets = [2, 0], sizes = [8, 8], strides = [1, 1]} : vector<10x10xf32> to vector<8x8xf32>
    %336 = vector.broadcast %334 : f32 to vector<8x8xf32>
    %337 = arith.mulf %336, %335 : vector<8x8xf32>
    %338 = arith.addf %333, %337 : vector<8x8xf32>
    %c61 = arith.constant 61 : index
    %339 = memref.load %arg4[%c61] : memref<144xf32, #tpu.memory_space<smem>>
    %340 = vector.extract_strided_slice %17 {offsets = [2, 1], sizes = [8, 8], strides = [1, 1]} : vector<10x10xf32> to vector<8x8xf32>
    %341 = vector.broadcast %339 : f32 to vector<8x8xf32>
    %342 = arith.mulf %341, %340 : vector<8x8xf32>
    %343 = arith.addf %338, %342 : vector<8x8xf32>
    %c62 = arith.constant 62 : index
    %344 = memref.load %arg4[%c62] : memref<144xf32, #tpu.memory_space<smem>>
    %345 = vector.extract_strided_slice %17 {offsets = [2, 2], sizes = [8, 8], strides = [1, 1]} : vector<10x10xf32> to vector<8x8xf32>
    %346 = vector.broadcast %344 : f32 to vector<8x8xf32>
    %347 = arith.mulf %346, %345 : vector<8x8xf32>
    %348 = arith.addf %343, %347 : vector<8x8xf32>
    %c63 = arith.constant 63 : index
    %349 = memref.load %arg4[%c63] : memref<144xf32, #tpu.memory_space<smem>>
    %350 = vector.extract_strided_slice %23 {offsets = [0, 0], sizes = [8, 8], strides = [1, 1]} : vector<10x10xf32> to vector<8x8xf32>
    %351 = vector.broadcast %349 : f32 to vector<8x8xf32>
    %352 = arith.mulf %351, %350 : vector<8x8xf32>
    %353 = arith.addf %348, %352 : vector<8x8xf32>
    %c64 = arith.constant 64 : index
    %354 = memref.load %arg4[%c64] : memref<144xf32, #tpu.memory_space<smem>>
    %355 = vector.extract_strided_slice %23 {offsets = [0, 1], sizes = [8, 8], strides = [1, 1]} : vector<10x10xf32> to vector<8x8xf32>
    %356 = vector.broadcast %354 : f32 to vector<8x8xf32>
    %357 = arith.mulf %356, %355 : vector<8x8xf32>
    %358 = arith.addf %353, %357 : vector<8x8xf32>
    %c65 = arith.constant 65 : index
    %359 = memref.load %arg4[%c65] : memref<144xf32, #tpu.memory_space<smem>>
    %360 = vector.extract_strided_slice %23 {offsets = [0, 2], sizes = [8, 8], strides = [1, 1]} : vector<10x10xf32> to vector<8x8xf32>
    %361 = vector.broadcast %359 : f32 to vector<8x8xf32>
    %362 = arith.mulf %361, %360 : vector<8x8xf32>
    %363 = arith.addf %358, %362 : vector<8x8xf32>
    %c66 = arith.constant 66 : index
    %364 = memref.load %arg4[%c66] : memref<144xf32, #tpu.memory_space<smem>>
    %365 = vector.extract_strided_slice %23 {offsets = [1, 0], sizes = [8, 8], strides = [1, 1]} : vector<10x10xf32> to vector<8x8xf32>
    %366 = vector.broadcast %364 : f32 to vector<8x8xf32>
    %367 = arith.mulf %366, %365 : vector<8x8xf32>
    %368 = arith.addf %363, %367 : vector<8x8xf32>
    %c67 = arith.constant 67 : index
    %369 = memref.load %arg4[%c67] : memref<144xf32, #tpu.memory_space<smem>>
    %370 = vector.extract_strided_slice %23 {offsets = [1, 1], sizes = [8, 8], strides = [1, 1]} : vector<10x10xf32> to vector<8x8xf32>
    %371 = vector.broadcast %369 : f32 to vector<8x8xf32>
    %372 = arith.mulf %371, %370 : vector<8x8xf32>
    %373 = arith.addf %368, %372 : vector<8x8xf32>
    %c68 = arith.constant 68 : index
    %374 = memref.load %arg4[%c68] : memref<144xf32, #tpu.memory_space<smem>>
    %375 = vector.extract_strided_slice %23 {offsets = [1, 2], sizes = [8, 8], strides = [1, 1]} : vector<10x10xf32> to vector<8x8xf32>
    %376 = vector.broadcast %374 : f32 to vector<8x8xf32>
    %377 = arith.mulf %376, %375 : vector<8x8xf32>
    %378 = arith.addf %373, %377 : vector<8x8xf32>
    %c69 = arith.constant 69 : index
    %379 = memref.load %arg4[%c69] : memref<144xf32, #tpu.memory_space<smem>>
    %380 = vector.extract_strided_slice %23 {offsets = [2, 0], sizes = [8, 8], strides = [1, 1]} : vector<10x10xf32> to vector<8x8xf32>
    %381 = vector.broadcast %379 : f32 to vector<8x8xf32>
    %382 = arith.mulf %381, %380 : vector<8x8xf32>
    %383 = arith.addf %378, %382 : vector<8x8xf32>
    %c70 = arith.constant 70 : index
    %384 = memref.load %arg4[%c70] : memref<144xf32, #tpu.memory_space<smem>>
    %385 = vector.extract_strided_slice %23 {offsets = [2, 1], sizes = [8, 8], strides = [1, 1]} : vector<10x10xf32> to vector<8x8xf32>
    %386 = vector.broadcast %384 : f32 to vector<8x8xf32>
    %387 = arith.mulf %386, %385 : vector<8x8xf32>
    %388 = arith.addf %383, %387 : vector<8x8xf32>
    %c71 = arith.constant 71 : index
    %389 = memref.load %arg4[%c71] : memref<144xf32, #tpu.memory_space<smem>>
    %390 = vector.extract_strided_slice %23 {offsets = [2, 2], sizes = [8, 8], strides = [1, 1]} : vector<10x10xf32> to vector<8x8xf32>
    %391 = vector.broadcast %389 : f32 to vector<8x8xf32>
    %392 = arith.mulf %391, %390 : vector<8x8xf32>
    %393 = arith.addf %388, %392 : vector<8x8xf32>
    %c1_47 = arith.constant 1 : index
    %394 = memref.load %arg5[%c1_47] : memref<4xf32, #tpu.memory_space<smem>>
    %395 = vector.broadcast %394 : f32 to vector<8x8xf32>
    %396 = arith.addf %393, %395 : vector<8x8xf32>
    %cst_48 = arith.constant 0.000000e+00 : f32
    %397 = vector.broadcast %cst_48 : f32 to vector<8x8xf32>
    %398 = arith.maximumf %396, %397 : vector<8x8xf32>
    %c0_49 = arith.constant 0 : index
    %c1_50 = arith.constant 1 : index
    %c0_51 = arith.constant 0 : index
    %c0_52 = arith.constant 0 : index
    %399 = vector.load %arg6[%c0_49, %c1_50, %c0_51, %c0_52] : memref<1x4x8x8xf32, #tpu.memory_space<vmem>>, vector<1x1x8x8xf32>
    %400 = vector.shape_cast %399 : vector<1x1x8x8xf32> to vector<8x8xf32>
    %401 = vector.shape_cast %398 : vector<8x8xf32> to vector<1x1x8x8xf32>
    tpu.vector_store %arg6[%c0_49, %c1_50, %c0_51, %c0_52], %401 {strides = array<i32>} : memref<1x4x8x8xf32, #tpu.memory_space<vmem>>, vector<1x1x8x8xf32>,
    %cst_53 = arith.constant 0.000000e+00 : f32
    %402 = vector.broadcast %cst_53 : f32 to vector<8x8xf32>
    %c72 = arith.constant 72 : index
    %403 = memref.load %arg4[%c72] : memref<144xf32, #tpu.memory_space<smem>>
    %404 = vector.extract_strided_slice %5 {offsets = [0, 0], sizes = [8, 8], strides = [1, 1]} : vector<10x10xf32> to vector<8x8xf32>
    %405 = vector.broadcast %403 : f32 to vector<8x8xf32>
    %406 = arith.mulf %405, %404 : vector<8x8xf32>
    %407 = arith.addf %402, %406 : vector<8x8xf32>
    %c73 = arith.constant 73 : index
    %408 = memref.load %arg4[%c73] : memref<144xf32, #tpu.memory_space<smem>>
    %409 = vector.extract_strided_slice %5 {offsets = [0, 1], sizes = [8, 8], strides = [1, 1]} : vector<10x10xf32> to vector<8x8xf32>
    %410 = vector.broadcast %408 : f32 to vector<8x8xf32>
    %411 = arith.mulf %410, %409 : vector<8x8xf32>
    %412 = arith.addf %407, %411 : vector<8x8xf32>
    %c74 = arith.constant 74 : index
    %413 = memref.load %arg4[%c74] : memref<144xf32, #tpu.memory_space<smem>>
    %414 = vector.extract_strided_slice %5 {offsets = [0, 2], sizes = [8, 8], strides = [1, 1]} : vector<10x10xf32> to vector<8x8xf32>
    %415 = vector.broadcast %413 : f32 to vector<8x8xf32>
    %416 = arith.mulf %415, %414 : vector<8x8xf32>
    %417 = arith.addf %412, %416 : vector<8x8xf32>
    %c75 = arith.constant 75 : index
    %418 = memref.load %arg4[%c75] : memref<144xf32, #tpu.memory_space<smem>>
    %419 = vector.extract_strided_slice %5 {offsets = [1, 0], sizes = [8, 8], strides = [1, 1]} : vector<10x10xf32> to vector<8x8xf32>
    %420 = vector.broadcast %418 : f32 to vector<8x8xf32>
    %421 = arith.mulf %420, %419 : vector<8x8xf32>
    %422 = arith.addf %417, %421 : vector<8x8xf32>
    %c76 = arith.constant 76 : index
    %423 = memref.load %arg4[%c76] : memref<144xf32, #tpu.memory_space<smem>>
    %424 = vector.extract_strided_slice %5 {offsets = [1, 1], sizes = [8, 8], strides = [1, 1]} : vector<10x10xf32> to vector<8x8xf32>
    %425 = vector.broadcast %423 : f32 to vector<8x8xf32>
    %426 = arith.mulf %425, %424 : vector<8x8xf32>
    %427 = arith.addf %422, %426 : vector<8x8xf32>
    %c77 = arith.constant 77 : index
    %428 = memref.load %arg4[%c77] : memref<144xf32, #tpu.memory_space<smem>>
    %429 = vector.extract_strided_slice %5 {offsets = [1, 2], sizes = [8, 8], strides = [1, 1]} : vector<10x10xf32> to vector<8x8xf32>
    %430 = vector.broadcast %428 : f32 to vector<8x8xf32>
    %431 = arith.mulf %430, %429 : vector<8x8xf32>
    %432 = arith.addf %427, %431 : vector<8x8xf32>
    %c78 = arith.constant 78 : index
    %433 = memref.load %arg4[%c78] : memref<144xf32, #tpu.memory_space<smem>>
    %434 = vector.extract_strided_slice %5 {offsets = [2, 0], sizes = [8, 8], strides = [1, 1]} : vector<10x10xf32> to vector<8x8xf32>
    %435 = vector.broadcast %433 : f32 to vector<8x8xf32>
    %436 = arith.mulf %435, %434 : vector<8x8xf32>
    %437 = arith.addf %432, %436 : vector<8x8xf32>
    %c79 = arith.constant 79 : index
    %438 = memref.load %arg4[%c79] : memref<144xf32, #tpu.memory_space<smem>>
    %439 = vector.extract_strided_slice %5 {offsets = [2, 1], sizes = [8, 8], strides = [1, 1]} : vector<10x10xf32> to vector<8x8xf32>
    %440 = vector.broadcast %438 : f32 to vector<8x8xf32>
    %441 = arith.mulf %440, %439 : vector<8x8xf32>
    %442 = arith.addf %437, %441 : vector<8x8xf32>
    %c80 = arith.constant 80 : index
    %443 = memref.load %arg4[%c80] : memref<144xf32, #tpu.memory_space<smem>>
    %444 = vector.extract_strided_slice %5 {offsets = [2, 2], sizes = [8, 8], strides = [1, 1]} : vector<10x10xf32> to vector<8x8xf32>
    %445 = vector.broadcast %443 : f32 to vector<8x8xf32>
    %446 = arith.mulf %445, %444 : vector<8x8xf32>
    %447 = arith.addf %442, %446 : vector<8x8xf32>
    %c81 = arith.constant 81 : index
    %448 = memref.load %arg4[%c81] : memref<144xf32, #tpu.memory_space<smem>>
    %449 = vector.extract_strided_slice %11 {offsets = [0, 0], sizes = [8, 8], strides = [1, 1]} : vector<10x10xf32> to vector<8x8xf32>
    %450 = vector.broadcast %448 : f32 to vector<8x8xf32>
    %451 = arith.mulf %450, %449 : vector<8x8xf32>
    %452 = arith.addf %447, %451 : vector<8x8xf32>
    %c82 = arith.constant 82 : index
    %453 = memref.load %arg4[%c82] : memref<144xf32, #tpu.memory_space<smem>>
    %454 = vector.extract_strided_slice %11 {offsets = [0, 1], sizes = [8, 8], strides = [1, 1]} : vector<10x10xf32> to vector<8x8xf32>
    %455 = vector.broadcast %453 : f32 to vector<8x8xf32>
    %456 = arith.mulf %455, %454 : vector<8x8xf32>
    %457 = arith.addf %452, %456 : vector<8x8xf32>
    %c83 = arith.constant 83 : index
    %458 = memref.load %arg4[%c83] : memref<144xf32, #tpu.memory_space<smem>>
    %459 = vector.extract_strided_slice %11 {offsets = [0, 2], sizes = [8, 8], strides = [1, 1]} : vector<10x10xf32> to vector<8x8xf32>
    %460 = vector.broadcast %458 : f32 to vector<8x8xf32>
    %461 = arith.mulf %460, %459 : vector<8x8xf32>
    %462 = arith.addf %457, %461 : vector<8x8xf32>
    %c84 = arith.constant 84 : index
    %463 = memref.load %arg4[%c84] : memref<144xf32, #tpu.memory_space<smem>>
    %464 = vector.extract_strided_slice %11 {offsets = [1, 0], sizes = [8, 8], strides = [1, 1]} : vector<10x10xf32> to vector<8x8xf32>
    %465 = vector.broadcast %463 : f32 to vector<8x8xf32>
    %466 = arith.mulf %465, %464 : vector<8x8xf32>
    %467 = arith.addf %462, %466 : vector<8x8xf32>
    %c85 = arith.constant 85 : index
    %468 = memref.load %arg4[%c85] : memref<144xf32, #tpu.memory_space<smem>>
    %469 = vector.extract_strided_slice %11 {offsets = [1, 1], sizes = [8, 8], strides = [1, 1]} : vector<10x10xf32> to vector<8x8xf32>
    %470 = vector.broadcast %468 : f32 to vector<8x8xf32>
    %471 = arith.mulf %470, %469 : vector<8x8xf32>
    %472 = arith.addf %467, %471 : vector<8x8xf32>
    %c86 = arith.constant 86 : index
    %473 = memref.load %arg4[%c86] : memref<144xf32, #tpu.memory_space<smem>>
    %474 = vector.extract_strided_slice %11 {offsets = [1, 2], sizes = [8, 8], strides = [1, 1]} : vector<10x10xf32> to vector<8x8xf32>
    %475 = vector.broadcast %473 : f32 to vector<8x8xf32>
    %476 = arith.mulf %475, %474 : vector<8x8xf32>
    %477 = arith.addf %472, %476 : vector<8x8xf32>
    %c87 = arith.constant 87 : index
    %478 = memref.load %arg4[%c87] : memref<144xf32, #tpu.memory_space<smem>>
    %479 = vector.extract_strided_slice %11 {offsets = [2, 0], sizes = [8, 8], strides = [1, 1]} : vector<10x10xf32> to vector<8x8xf32>
    %480 = vector.broadcast %478 : f32 to vector<8x8xf32>
    %481 = arith.mulf %480, %479 : vector<8x8xf32>
    %482 = arith.addf %477, %481 : vector<8x8xf32>
    %c88 = arith.constant 88 : index
    %483 = memref.load %arg4[%c88] : memref<144xf32, #tpu.memory_space<smem>>
    %484 = vector.extract_strided_slice %11 {offsets = [2, 1], sizes = [8, 8], strides = [1, 1]} : vector<10x10xf32> to vector<8x8xf32>
    %485 = vector.broadcast %483 : f32 to vector<8x8xf32>
    %486 = arith.mulf %485, %484 : vector<8x8xf32>
    %487 = arith.addf %482, %486 : vector<8x8xf32>
    %c89 = arith.constant 89 : index
    %488 = memref.load %arg4[%c89] : memref<144xf32, #tpu.memory_space<smem>>
    %489 = vector.extract_strided_slice %11 {offsets = [2, 2], sizes = [8, 8], strides = [1, 1]} : vector<10x10xf32> to vector<8x8xf32>
    %490 = vector.broadcast %488 : f32 to vector<8x8xf32>
    %491 = arith.mulf %490, %489 : vector<8x8xf32>
    %492 = arith.addf %487, %491 : vector<8x8xf32>
    %c90 = arith.constant 90 : index
    %493 = memref.load %arg4[%c90] : memref<144xf32, #tpu.memory_space<smem>>
    %494 = vector.extract_strided_slice %17 {offsets = [0, 0], sizes = [8, 8], strides = [1, 1]} : vector<10x10xf32> to vector<8x8xf32>
    %495 = vector.broadcast %493 : f32 to vector<8x8xf32>
    %496 = arith.mulf %495, %494 : vector<8x8xf32>
    %497 = arith.addf %492, %496 : vector<8x8xf32>
    %c91 = arith.constant 91 : index
    %498 = memref.load %arg4[%c91] : memref<144xf32, #tpu.memory_space<smem>>
    %499 = vector.extract_strided_slice %17 {offsets = [0, 1], sizes = [8, 8], strides = [1, 1]} : vector<10x10xf32> to vector<8x8xf32>
    %500 = vector.broadcast %498 : f32 to vector<8x8xf32>
    %501 = arith.mulf %500, %499 : vector<8x8xf32>
    %502 = arith.addf %497, %501 : vector<8x8xf32>
    %c92 = arith.constant 92 : index
    %503 = memref.load %arg4[%c92] : memref<144xf32, #tpu.memory_space<smem>>
    %504 = vector.extract_strided_slice %17 {offsets = [0, 2], sizes = [8, 8], strides = [1, 1]} : vector<10x10xf32> to vector<8x8xf32>
    %505 = vector.broadcast %503 : f32 to vector<8x8xf32>
    %506 = arith.mulf %505, %504 : vector<8x8xf32>
    %507 = arith.addf %502, %506 : vector<8x8xf32>
    %c93 = arith.constant 93 : index
    %508 = memref.load %arg4[%c93] : memref<144xf32, #tpu.memory_space<smem>>
    %509 = vector.extract_strided_slice %17 {offsets = [1, 0], sizes = [8, 8], strides = [1, 1]} : vector<10x10xf32> to vector<8x8xf32>
    %510 = vector.broadcast %508 : f32 to vector<8x8xf32>
    %511 = arith.mulf %510, %509 : vector<8x8xf32>
    %512 = arith.addf %507, %511 : vector<8x8xf32>
    %c94 = arith.constant 94 : index
    %513 = memref.load %arg4[%c94] : memref<144xf32, #tpu.memory_space<smem>>
    %514 = vector.extract_strided_slice %17 {offsets = [1, 1], sizes = [8, 8], strides = [1, 1]} : vector<10x10xf32> to vector<8x8xf32>
    %515 = vector.broadcast %513 : f32 to vector<8x8xf32>
    %516 = arith.mulf %515, %514 : vector<8x8xf32>
    %517 = arith.addf %512, %516 : vector<8x8xf32>
    %c95 = arith.constant 95 : index
    %518 = memref.load %arg4[%c95] : memref<144xf32, #tpu.memory_space<smem>>
    %519 = vector.extract_strided_slice %17 {offsets = [1, 2], sizes = [8, 8], strides = [1, 1]} : vector<10x10xf32> to vector<8x8xf32>
    %520 = vector.broadcast %518 : f32 to vector<8x8xf32>
    %521 = arith.mulf %520, %519 : vector<8x8xf32>
    %522 = arith.addf %517, %521 : vector<8x8xf32>
    %c96 = arith.constant 96 : index
    %523 = memref.load %arg4[%c96] : memref<144xf32, #tpu.memory_space<smem>>
    %524 = vector.extract_strided_slice %17 {offsets = [2, 0], sizes = [8, 8], strides = [1, 1]} : vector<10x10xf32> to vector<8x8xf32>
    %525 = vector.broadcast %523 : f32 to vector<8x8xf32>
    %526 = arith.mulf %525, %524 : vector<8x8xf32>
    %527 = arith.addf %522, %526 : vector<8x8xf32>
    %c97 = arith.constant 97 : index
    %528 = memref.load %arg4[%c97] : memref<144xf32, #tpu.memory_space<smem>>
    %529 = vector.extract_strided_slice %17 {offsets = [2, 1], sizes = [8, 8], strides = [1, 1]} : vector<10x10xf32> to vector<8x8xf32>
    %530 = vector.broadcast %528 : f32 to vector<8x8xf32>
    %531 = arith.mulf %530, %529 : vector<8x8xf32>
    %532 = arith.addf %527, %531 : vector<8x8xf32>
    %c98 = arith.constant 98 : index
    %533 = memref.load %arg4[%c98] : memref<144xf32, #tpu.memory_space<smem>>
    %534 = vector.extract_strided_slice %17 {offsets = [2, 2], sizes = [8, 8], strides = [1, 1]} : vector<10x10xf32> to vector<8x8xf32>
    %535 = vector.broadcast %533 : f32 to vector<8x8xf32>
    %536 = arith.mulf %535, %534 : vector<8x8xf32>
    %537 = arith.addf %532, %536 : vector<8x8xf32>
    %c99 = arith.constant 99 : index
    %538 = memref.load %arg4[%c99] : memref<144xf32, #tpu.memory_space<smem>>
    %539 = vector.extract_strided_slice %23 {offsets = [0, 0], sizes = [8, 8], strides = [1, 1]} : vector<10x10xf32> to vector<8x8xf32>
    %540 = vector.broadcast %538 : f32 to vector<8x8xf32>
    %541 = arith.mulf %540, %539 : vector<8x8xf32>
    %542 = arith.addf %537, %541 : vector<8x8xf32>
    %c100 = arith.constant 100 : index
    %543 = memref.load %arg4[%c100] : memref<144xf32, #tpu.memory_space<smem>>
    %544 = vector.extract_strided_slice %23 {offsets = [0, 1], sizes = [8, 8], strides = [1, 1]} : vector<10x10xf32> to vector<8x8xf32>
    %545 = vector.broadcast %543 : f32 to vector<8x8xf32>
    %546 = arith.mulf %545, %544 : vector<8x8xf32>
    %547 = arith.addf %542, %546 : vector<8x8xf32>
    %c101 = arith.constant 101 : index
    %548 = memref.load %arg4[%c101] : memref<144xf32, #tpu.memory_space<smem>>
    %549 = vector.extract_strided_slice %23 {offsets = [0, 2], sizes = [8, 8], strides = [1, 1]} : vector<10x10xf32> to vector<8x8xf32>
    %550 = vector.broadcast %548 : f32 to vector<8x8xf32>
    %551 = arith.mulf %550, %549 : vector<8x8xf32>
    %552 = arith.addf %547, %551 : vector<8x8xf32>
    %c102 = arith.constant 102 : index
    %553 = memref.load %arg4[%c102] : memref<144xf32, #tpu.memory_space<smem>>
    %554 = vector.extract_strided_slice %23 {offsets = [1, 0], sizes = [8, 8], strides = [1, 1]} : vector<10x10xf32> to vector<8x8xf32>
    %555 = vector.broadcast %553 : f32 to vector<8x8xf32>
    %556 = arith.mulf %555, %554 : vector<8x8xf32>
    %557 = arith.addf %552, %556 : vector<8x8xf32>
    %c103 = arith.constant 103 : index
    %558 = memref.load %arg4[%c103] : memref<144xf32, #tpu.memory_space<smem>>
    %559 = vector.extract_strided_slice %23 {offsets = [1, 1], sizes = [8, 8], strides = [1, 1]} : vector<10x10xf32> to vector<8x8xf32>
    %560 = vector.broadcast %558 : f32 to vector<8x8xf32>
    %561 = arith.mulf %560, %559 : vector<8x8xf32>
    %562 = arith.addf %557, %561 : vector<8x8xf32>
    %c104 = arith.constant 104 : index
    %563 = memref.load %arg4[%c104] : memref<144xf32, #tpu.memory_space<smem>>
    %564 = vector.extract_strided_slice %23 {offsets = [1, 2], sizes = [8, 8], strides = [1, 1]} : vector<10x10xf32> to vector<8x8xf32>
    %565 = vector.broadcast %563 : f32 to vector<8x8xf32>
    %566 = arith.mulf %565, %564 : vector<8x8xf32>
    %567 = arith.addf %562, %566 : vector<8x8xf32>
    %c105 = arith.constant 105 : index
    %568 = memref.load %arg4[%c105] : memref<144xf32, #tpu.memory_space<smem>>
    %569 = vector.extract_strided_slice %23 {offsets = [2, 0], sizes = [8, 8], strides = [1, 1]} : vector<10x10xf32> to vector<8x8xf32>
    %570 = vector.broadcast %568 : f32 to vector<8x8xf32>
    %571 = arith.mulf %570, %569 : vector<8x8xf32>
    %572 = arith.addf %567, %571 : vector<8x8xf32>
    %c106 = arith.constant 106 : index
    %573 = memref.load %arg4[%c106] : memref<144xf32, #tpu.memory_space<smem>>
    %574 = vector.extract_strided_slice %23 {offsets = [2, 1], sizes = [8, 8], strides = [1, 1]} : vector<10x10xf32> to vector<8x8xf32>
    %575 = vector.broadcast %573 : f32 to vector<8x8xf32>
    %576 = arith.mulf %575, %574 : vector<8x8xf32>
    %577 = arith.addf %572, %576 : vector<8x8xf32>
    %c107 = arith.constant 107 : index
    %578 = memref.load %arg4[%c107] : memref<144xf32, #tpu.memory_space<smem>>
    %579 = vector.extract_strided_slice %23 {offsets = [2, 2], sizes = [8, 8], strides = [1, 1]} : vector<10x10xf32> to vector<8x8xf32>
    %580 = vector.broadcast %578 : f32 to vector<8x8xf32>
    %581 = arith.mulf %580, %579 : vector<8x8xf32>
    %582 = arith.addf %577, %581 : vector<8x8xf32>
    %c2_54 = arith.constant 2 : index
    %583 = memref.load %arg5[%c2_54] : memref<4xf32, #tpu.memory_space<smem>>
    %584 = vector.broadcast %583 : f32 to vector<8x8xf32>
    %585 = arith.addf %582, %584 : vector<8x8xf32>
    %cst_55 = arith.constant 0.000000e+00 : f32
    %586 = vector.broadcast %cst_55 : f32 to vector<8x8xf32>
    %587 = arith.maximumf %585, %586 : vector<8x8xf32>
    %c0_56 = arith.constant 0 : index
    %c2_57 = arith.constant 2 : index
    %c0_58 = arith.constant 0 : index
    %c0_59 = arith.constant 0 : index
    %588 = vector.load %arg6[%c0_56, %c2_57, %c0_58, %c0_59] : memref<1x4x8x8xf32, #tpu.memory_space<vmem>>, vector<1x1x8x8xf32>
    %589 = vector.shape_cast %588 : vector<1x1x8x8xf32> to vector<8x8xf32>
    %590 = vector.shape_cast %587 : vector<8x8xf32> to vector<1x1x8x8xf32>
    tpu.vector_store %arg6[%c0_56, %c2_57, %c0_58, %c0_59], %590 {strides = array<i32>} : memref<1x4x8x8xf32, #tpu.memory_space<vmem>>, vector<1x1x8x8xf32>,
    %cst_60 = arith.constant 0.000000e+00 : f32
    %591 = vector.broadcast %cst_60 : f32 to vector<8x8xf32>
    %c108 = arith.constant 108 : index
    %592 = memref.load %arg4[%c108] : memref<144xf32, #tpu.memory_space<smem>>
    %593 = vector.extract_strided_slice %5 {offsets = [0, 0], sizes = [8, 8], strides = [1, 1]} : vector<10x10xf32> to vector<8x8xf32>
    %594 = vector.broadcast %592 : f32 to vector<8x8xf32>
    %595 = arith.mulf %594, %593 : vector<8x8xf32>
    %596 = arith.addf %591, %595 : vector<8x8xf32>
    %c109 = arith.constant 109 : index
    %597 = memref.load %arg4[%c109] : memref<144xf32, #tpu.memory_space<smem>>
    %598 = vector.extract_strided_slice %5 {offsets = [0, 1], sizes = [8, 8], strides = [1, 1]} : vector<10x10xf32> to vector<8x8xf32>
    %599 = vector.broadcast %597 : f32 to vector<8x8xf32>
    %600 = arith.mulf %599, %598 : vector<8x8xf32>
    %601 = arith.addf %596, %600 : vector<8x8xf32>
    %c110 = arith.constant 110 : index
    %602 = memref.load %arg4[%c110] : memref<144xf32, #tpu.memory_space<smem>>
    %603 = vector.extract_strided_slice %5 {offsets = [0, 2], sizes = [8, 8], strides = [1, 1]} : vector<10x10xf32> to vector<8x8xf32>
    %604 = vector.broadcast %602 : f32 to vector<8x8xf32>
    %605 = arith.mulf %604, %603 : vector<8x8xf32>
    %606 = arith.addf %601, %605 : vector<8x8xf32>
    %c111 = arith.constant 111 : index
    %607 = memref.load %arg4[%c111] : memref<144xf32, #tpu.memory_space<smem>>
    %608 = vector.extract_strided_slice %5 {offsets = [1, 0], sizes = [8, 8], strides = [1, 1]} : vector<10x10xf32> to vector<8x8xf32>
    %609 = vector.broadcast %607 : f32 to vector<8x8xf32>
    %610 = arith.mulf %609, %608 : vector<8x8xf32>
    %611 = arith.addf %606, %610 : vector<8x8xf32>
    %c112 = arith.constant 112 : index
    %612 = memref.load %arg4[%c112] : memref<144xf32, #tpu.memory_space<smem>>
    %613 = vector.extract_strided_slice %5 {offsets = [1, 1], sizes = [8, 8], strides = [1, 1]} : vector<10x10xf32> to vector<8x8xf32>
    %614 = vector.broadcast %612 : f32 to vector<8x8xf32>
    %615 = arith.mulf %614, %613 : vector<8x8xf32>
    %616 = arith.addf %611, %615 : vector<8x8xf32>
    %c113 = arith.constant 113 : index
    %617 = memref.load %arg4[%c113] : memref<144xf32, #tpu.memory_space<smem>>
    %618 = vector.extract_strided_slice %5 {offsets = [1, 2], sizes = [8, 8], strides = [1, 1]} : vector<10x10xf32> to vector<8x8xf32>
    %619 = vector.broadcast %617 : f32 to vector<8x8xf32>
    %620 = arith.mulf %619, %618 : vector<8x8xf32>
    %621 = arith.addf %616, %620 : vector<8x8xf32>
    %c114 = arith.constant 114 : index
    %622 = memref.load %arg4[%c114] : memref<144xf32, #tpu.memory_space<smem>>
    %623 = vector.extract_strided_slice %5 {offsets = [2, 0], sizes = [8, 8], strides = [1, 1]} : vector<10x10xf32> to vector<8x8xf32>
    %624 = vector.broadcast %622 : f32 to vector<8x8xf32>
    %625 = arith.mulf %624, %623 : vector<8x8xf32>
    %626 = arith.addf %621, %625 : vector<8x8xf32>
    %c115 = arith.constant 115 : index
    %627 = memref.load %arg4[%c115] : memref<144xf32, #tpu.memory_space<smem>>
    %628 = vector.extract_strided_slice %5 {offsets = [2, 1], sizes = [8, 8], strides = [1, 1]} : vector<10x10xf32> to vector<8x8xf32>
    %629 = vector.broadcast %627 : f32 to vector<8x8xf32>
    %630 = arith.mulf %629, %628 : vector<8x8xf32>
    %631 = arith.addf %626, %630 : vector<8x8xf32>
    %c116 = arith.constant 116 : index
    %632 = memref.load %arg4[%c116] : memref<144xf32, #tpu.memory_space<smem>>
    %633 = vector.extract_strided_slice %5 {offsets = [2, 2], sizes = [8, 8], strides = [1, 1]} : vector<10x10xf32> to vector<8x8xf32>
    %634 = vector.broadcast %632 : f32 to vector<8x8xf32>
    %635 = arith.mulf %634, %633 : vector<8x8xf32>
    %636 = arith.addf %631, %635 : vector<8x8xf32>
    %c117 = arith.constant 117 : index
    %637 = memref.load %arg4[%c117] : memref<144xf32, #tpu.memory_space<smem>>
    %638 = vector.extract_strided_slice %11 {offsets = [0, 0], sizes = [8, 8], strides = [1, 1]} : vector<10x10xf32> to vector<8x8xf32>
    %639 = vector.broadcast %637 : f32 to vector<8x8xf32>
    %640 = arith.mulf %639, %638 : vector<8x8xf32>
    %641 = arith.addf %636, %640 : vector<8x8xf32>
    %c118 = arith.constant 118 : index
    %642 = memref.load %arg4[%c118] : memref<144xf32, #tpu.memory_space<smem>>
    %643 = vector.extract_strided_slice %11 {offsets = [0, 1], sizes = [8, 8], strides = [1, 1]} : vector<10x10xf32> to vector<8x8xf32>
    %644 = vector.broadcast %642 : f32 to vector<8x8xf32>
    %645 = arith.mulf %644, %643 : vector<8x8xf32>
    %646 = arith.addf %641, %645 : vector<8x8xf32>
    %c119 = arith.constant 119 : index
    %647 = memref.load %arg4[%c119] : memref<144xf32, #tpu.memory_space<smem>>
    %648 = vector.extract_strided_slice %11 {offsets = [0, 2], sizes = [8, 8], strides = [1, 1]} : vector<10x10xf32> to vector<8x8xf32>
    %649 = vector.broadcast %647 : f32 to vector<8x8xf32>
    %650 = arith.mulf %649, %648 : vector<8x8xf32>
    %651 = arith.addf %646, %650 : vector<8x8xf32>
    %c120 = arith.constant 120 : index
    %652 = memref.load %arg4[%c120] : memref<144xf32, #tpu.memory_space<smem>>
    %653 = vector.extract_strided_slice %11 {offsets = [1, 0], sizes = [8, 8], strides = [1, 1]} : vector<10x10xf32> to vector<8x8xf32>
    %654 = vector.broadcast %652 : f32 to vector<8x8xf32>
    %655 = arith.mulf %654, %653 : vector<8x8xf32>
    %656 = arith.addf %651, %655 : vector<8x8xf32>
    %c121 = arith.constant 121 : index
    %657 = memref.load %arg4[%c121] : memref<144xf32, #tpu.memory_space<smem>>
    %658 = vector.extract_strided_slice %11 {offsets = [1, 1], sizes = [8, 8], strides = [1, 1]} : vector<10x10xf32> to vector<8x8xf32>
    %659 = vector.broadcast %657 : f32 to vector<8x8xf32>
    %660 = arith.mulf %659, %658 : vector<8x8xf32>
    %661 = arith.addf %656, %660 : vector<8x8xf32>
    %c122 = arith.constant 122 : index
    %662 = memref.load %arg4[%c122] : memref<144xf32, #tpu.memory_space<smem>>
    %663 = vector.extract_strided_slice %11 {offsets = [1, 2], sizes = [8, 8], strides = [1, 1]} : vector<10x10xf32> to vector<8x8xf32>
    %664 = vector.broadcast %662 : f32 to vector<8x8xf32>
    %665 = arith.mulf %664, %663 : vector<8x8xf32>
    %666 = arith.addf %661, %665 : vector<8x8xf32>
    %c123 = arith.constant 123 : index
    %667 = memref.load %arg4[%c123] : memref<144xf32, #tpu.memory_space<smem>>
    %668 = vector.extract_strided_slice %11 {offsets = [2, 0], sizes = [8, 8], strides = [1, 1]} : vector<10x10xf32> to vector<8x8xf32>
    %669 = vector.broadcast %667 : f32 to vector<8x8xf32>
    %670 = arith.mulf %669, %668 : vector<8x8xf32>
    %671 = arith.addf %666, %670 : vector<8x8xf32>
    %c124 = arith.constant 124 : index
    %672 = memref.load %arg4[%c124] : memref<144xf32, #tpu.memory_space<smem>>
    %673 = vector.extract_strided_slice %11 {offsets = [2, 1], sizes = [8, 8], strides = [1, 1]} : vector<10x10xf32> to vector<8x8xf32>
    %674 = vector.broadcast %672 : f32 to vector<8x8xf32>
    %675 = arith.mulf %674, %673 : vector<8x8xf32>
    %676 = arith.addf %671, %675 : vector<8x8xf32>
    %c125 = arith.constant 125 : index
    %677 = memref.load %arg4[%c125] : memref<144xf32, #tpu.memory_space<smem>>
    %678 = vector.extract_strided_slice %11 {offsets = [2, 2], sizes = [8, 8], strides = [1, 1]} : vector<10x10xf32> to vector<8x8xf32>
    %679 = vector.broadcast %677 : f32 to vector<8x8xf32>
    %680 = arith.mulf %679, %678 : vector<8x8xf32>
    %681 = arith.addf %676, %680 : vector<8x8xf32>
    %c126 = arith.constant 126 : index
    %682 = memref.load %arg4[%c126] : memref<144xf32, #tpu.memory_space<smem>>
    %683 = vector.extract_strided_slice %17 {offsets = [0, 0], sizes = [8, 8], strides = [1, 1]} : vector<10x10xf32> to vector<8x8xf32>
    %684 = vector.broadcast %682 : f32 to vector<8x8xf32>
    %685 = arith.mulf %684, %683 : vector<8x8xf32>
    %686 = arith.addf %681, %685 : vector<8x8xf32>
    %c127 = arith.constant 127 : index
    %687 = memref.load %arg4[%c127] : memref<144xf32, #tpu.memory_space<smem>>
    %688 = vector.extract_strided_slice %17 {offsets = [0, 1], sizes = [8, 8], strides = [1, 1]} : vector<10x10xf32> to vector<8x8xf32>
    %689 = vector.broadcast %687 : f32 to vector<8x8xf32>
    %690 = arith.mulf %689, %688 : vector<8x8xf32>
    %691 = arith.addf %686, %690 : vector<8x8xf32>
    %c128 = arith.constant 128 : index
    %692 = memref.load %arg4[%c128] : memref<144xf32, #tpu.memory_space<smem>>
    %693 = vector.extract_strided_slice %17 {offsets = [0, 2], sizes = [8, 8], strides = [1, 1]} : vector<10x10xf32> to vector<8x8xf32>
    %694 = vector.broadcast %692 : f32 to vector<8x8xf32>
    %695 = arith.mulf %694, %693 : vector<8x8xf32>
    %696 = arith.addf %691, %695 : vector<8x8xf32>
    %c129 = arith.constant 129 : index
    %697 = memref.load %arg4[%c129] : memref<144xf32, #tpu.memory_space<smem>>
    %698 = vector.extract_strided_slice %17 {offsets = [1, 0], sizes = [8, 8], strides = [1, 1]} : vector<10x10xf32> to vector<8x8xf32>
    %699 = vector.broadcast %697 : f32 to vector<8x8xf32>
    %700 = arith.mulf %699, %698 : vector<8x8xf32>
    %701 = arith.addf %696, %700 : vector<8x8xf32>
    %c130 = arith.constant 130 : index
    %702 = memref.load %arg4[%c130] : memref<144xf32, #tpu.memory_space<smem>>
    %703 = vector.extract_strided_slice %17 {offsets = [1, 1], sizes = [8, 8], strides = [1, 1]} : vector<10x10xf32> to vector<8x8xf32>
    %704 = vector.broadcast %702 : f32 to vector<8x8xf32>
    %705 = arith.mulf %704, %703 : vector<8x8xf32>
    %706 = arith.addf %701, %705 : vector<8x8xf32>
    %c131 = arith.constant 131 : index
    %707 = memref.load %arg4[%c131] : memref<144xf32, #tpu.memory_space<smem>>
    %708 = vector.extract_strided_slice %17 {offsets = [1, 2], sizes = [8, 8], strides = [1, 1]} : vector<10x10xf32> to vector<8x8xf32>
    %709 = vector.broadcast %707 : f32 to vector<8x8xf32>
    %710 = arith.mulf %709, %708 : vector<8x8xf32>
    %711 = arith.addf %706, %710 : vector<8x8xf32>
    %c132 = arith.constant 132 : index
    %712 = memref.load %arg4[%c132] : memref<144xf32, #tpu.memory_space<smem>>
    %713 = vector.extract_strided_slice %17 {offsets = [2, 0], sizes = [8, 8], strides = [1, 1]} : vector<10x10xf32> to vector<8x8xf32>
    %714 = vector.broadcast %712 : f32 to vector<8x8xf32>
    %715 = arith.mulf %714, %713 : vector<8x8xf32>
    %716 = arith.addf %711, %715 : vector<8x8xf32>
    %c133 = arith.constant 133 : index
    %717 = memref.load %arg4[%c133] : memref<144xf32, #tpu.memory_space<smem>>
    %718 = vector.extract_strided_slice %17 {offsets = [2, 1], sizes = [8, 8], strides = [1, 1]} : vector<10x10xf32> to vector<8x8xf32>
    %719 = vector.broadcast %717 : f32 to vector<8x8xf32>
    %720 = arith.mulf %719, %718 : vector<8x8xf32>
    %721 = arith.addf %716, %720 : vector<8x8xf32>
    %c134 = arith.constant 134 : index
    %722 = memref.load %arg4[%c134] : memref<144xf32, #tpu.memory_space<smem>>
    %723 = vector.extract_strided_slice %17 {offsets = [2, 2], sizes = [8, 8], strides = [1, 1]} : vector<10x10xf32> to vector<8x8xf32>
    %724 = vector.broadcast %722 : f32 to vector<8x8xf32>
    %725 = arith.mulf %724, %723 : vector<8x8xf32>
    %726 = arith.addf %721, %725 : vector<8x8xf32>
    %c135 = arith.constant 135 : index
    %727 = memref.load %arg4[%c135] : memref<144xf32, #tpu.memory_space<smem>>
    %728 = vector.extract_strided_slice %23 {offsets = [0, 0], sizes = [8, 8], strides = [1, 1]} : vector<10x10xf32> to vector<8x8xf32>
    %729 = vector.broadcast %727 : f32 to vector<8x8xf32>
    %730 = arith.mulf %729, %728 : vector<8x8xf32>
    %731 = arith.addf %726, %730 : vector<8x8xf32>
    %c136 = arith.constant 136 : index
    %732 = memref.load %arg4[%c136] : memref<144xf32, #tpu.memory_space<smem>>
    %733 = vector.extract_strided_slice %23 {offsets = [0, 1], sizes = [8, 8], strides = [1, 1]} : vector<10x10xf32> to vector<8x8xf32>
    %734 = vector.broadcast %732 : f32 to vector<8x8xf32>
    %735 = arith.mulf %734, %733 : vector<8x8xf32>
    %736 = arith.addf %731, %735 : vector<8x8xf32>
    %c137 = arith.constant 137 : index
    %737 = memref.load %arg4[%c137] : memref<144xf32, #tpu.memory_space<smem>>
    %738 = vector.extract_strided_slice %23 {offsets = [0, 2], sizes = [8, 8], strides = [1, 1]} : vector<10x10xf32> to vector<8x8xf32>
    %739 = vector.broadcast %737 : f32 to vector<8x8xf32>
    %740 = arith.mulf %739, %738 : vector<8x8xf32>
    %741 = arith.addf %736, %740 : vector<8x8xf32>
    %c138 = arith.constant 138 : index
    %742 = memref.load %arg4[%c138] : memref<144xf32, #tpu.memory_space<smem>>
    %743 = vector.extract_strided_slice %23 {offsets = [1, 0], sizes = [8, 8], strides = [1, 1]} : vector<10x10xf32> to vector<8x8xf32>
    %744 = vector.broadcast %742 : f32 to vector<8x8xf32>
    %745 = arith.mulf %744, %743 : vector<8x8xf32>
    %746 = arith.addf %741, %745 : vector<8x8xf32>
    %c139 = arith.constant 139 : index
    %747 = memref.load %arg4[%c139] : memref<144xf32, #tpu.memory_space<smem>>
    %748 = vector.extract_strided_slice %23 {offsets = [1, 1], sizes = [8, 8], strides = [1, 1]} : vector<10x10xf32> to vector<8x8xf32>
    %749 = vector.broadcast %747 : f32 to vector<8x8xf32>
    %750 = arith.mulf %749, %748 : vector<8x8xf32>
    %751 = arith.addf %746, %750 : vector<8x8xf32>
    %c140 = arith.constant 140 : index
    %752 = memref.load %arg4[%c140] : memref<144xf32, #tpu.memory_space<smem>>
    %753 = vector.extract_strided_slice %23 {offsets = [1, 2], sizes = [8, 8], strides = [1, 1]} : vector<10x10xf32> to vector<8x8xf32>
    %754 = vector.broadcast %752 : f32 to vector<8x8xf32>
    %755 = arith.mulf %754, %753 : vector<8x8xf32>
    %756 = arith.addf %751, %755 : vector<8x8xf32>
    %c141 = arith.constant 141 : index
    %757 = memref.load %arg4[%c141] : memref<144xf32, #tpu.memory_space<smem>>
    %758 = vector.extract_strided_slice %23 {offsets = [2, 0], sizes = [8, 8], strides = [1, 1]} : vector<10x10xf32> to vector<8x8xf32>
    %759 = vector.broadcast %757 : f32 to vector<8x8xf32>
    %760 = arith.mulf %759, %758 : vector<8x8xf32>
    %761 = arith.addf %756, %760 : vector<8x8xf32>
    %c142 = arith.constant 142 : index
    %762 = memref.load %arg4[%c142] : memref<144xf32, #tpu.memory_space<smem>>
    %763 = vector.extract_strided_slice %23 {offsets = [2, 1], sizes = [8, 8], strides = [1, 1]} : vector<10x10xf32> to vector<8x8xf32>
    %764 = vector.broadcast %762 : f32 to vector<8x8xf32>
    %765 = arith.mulf %764, %763 : vector<8x8xf32>
    %766 = arith.addf %761, %765 : vector<8x8xf32>
    %c143 = arith.constant 143 : index
    %767 = memref.load %arg4[%c143] : memref<144xf32, #tpu.memory_space<smem>>
    %768 = vector.extract_strided_slice %23 {offsets = [2, 2], sizes = [8, 8], strides = [1, 1]} : vector<10x10xf32> to vector<8x8xf32>
    %769 = vector.broadcast %767 : f32 to vector<8x8xf32>
    %770 = arith.mulf %769, %768 : vector<8x8xf32>
    %771 = arith.addf %766, %770 : vector<8x8xf32>
    %c3_61 = arith.constant 3 : index
    %772 = memref.load %arg5[%c3_61] : memref<4xf32, #tpu.memory_space<smem>>
    %773 = vector.broadcast %772 : f32 to vector<8x8xf32>
    %774 = arith.addf %771, %773 : vector<8x8xf32>
    %cst_62 = arith.constant 0.000000e+00 : f32
    %775 = vector.broadcast %cst_62 : f32 to vector<8x8xf32>
    %776 = arith.maximumf %774, %775 : vector<8x8xf32>
    %c0_63 = arith.constant 0 : index
    %c3_64 = arith.constant 3 : index
    %c0_65 = arith.constant 0 : index
    %c0_66 = arith.constant 0 : index
    %777 = vector.load %arg6[%c0_63, %c3_64, %c0_65, %c0_66] : memref<1x4x8x8xf32, #tpu.memory_space<vmem>>, vector<1x1x8x8xf32>
    %778 = vector.shape_cast %777 : vector<1x1x8x8xf32> to vector<8x8xf32>
    %779 = vector.shape_cast %776 : vector<8x8xf32> to vector<1x1x8x8xf32>
    tpu.vector_store %arg6[%c0_63, %c3_64, %c0_65, %c0_66], %779 {strides = array<i32>} : memref<1x4x8x8xf32, #tpu.memory_space<vmem>>, vector<1x1x8x8xf32>,
    return
  }
  func.func @transform_0(%arg0: i32) -> (i32, i32, i32, i32) {
    %c0_i32 = arith.constant 0 : i32
    %c0_i32_0 = arith.constant 0 : i32
    %c0_i32_1 = arith.constant 0 : i32
    %c0_i32_2 = arith.constant 0 : i32
    return %arg0, %c0_i32, %c0_i32_0, %c0_i32_1 : i32, i32, i32, i32
  }
  func.func @transform_1(%arg0: i32) -> (i32, i32) {
    %c0_i32 = arith.constant 0 : i32
    %c0_i32_0 = arith.constant 0 : i32
    %c0_i32_1 = arith.constant 0 : i32
    return %c0_i32, %c0_i32_0 : i32, i32
  }
  func.func @transform_2(%arg0: i32) -> (i32, i32) {
    %c0_i32 = arith.constant 0 : i32
    %c0_i32_0 = arith.constant 0 : i32
    %c0_i32_1 = arith.constant 0 : i32
    return %c0_i32, %c0_i32_0 : i32, i32
  }
  func.func @transform_3(%arg0: i32) -> i32 {
    %c0_i32 = arith.constant 0 : i32
    %c0_i32_0 = arith.constant 0 : i32
    return %c0_i32 : i32
  }
  func.func @transform_4(%arg0: i32) -> i32 {
    %c0_i32 = arith.constant 0 : i32
    %c0_i32_0 = arith.constant 0 : i32
    return %c0_i32 : i32
  }
  func.func @transform_5(%arg0: i32) -> (i32, i32, i32, i32) {
    %c0_i32 = arith.constant 0 : i32
    %c0_i32_0 = arith.constant 0 : i32
    %c0_i32_1 = arith.constant 0 : i32
    %c0_i32_2 = arith.constant 0 : i32
    return %arg0, %c0_i32, %c0_i32_0, %c0_i32_1 : i32, i32, i32, i32
  }
}

module attributes {stable_mosaic.version = 11 : i64} {
  func.func @_decode_kernel(%arg0: i32, %arg1: i32, %arg2: memref<1x4x128xf32, #tpu.memory_space<vmem>>, %arg3: memref<32x4xf32, #tpu.memory_space<vmem>>, %arg4: memref<32x1xf32, #tpu.memory_space<vmem>>, %arg5: memref<1x32x128xf32, #tpu.memory_space<vmem>>) attributes {dimension_semantics = [#tpu.dimension_semantics<parallel>, #tpu.dimension_semantics<parallel>], iteration_bounds = array<i64: 2, 2>, scalar_prefetch = 0 : i64, scratch_operands = 0 : i64, tpu.core_type = #tpu.core_type<tc>, window_params = [{transform_indices = @transform_0, window_bounds = array<i64: 1, 4, 128>}, {pipeline_mode = #tpu.pipeline_mode<synchronous>, transform_indices = @transform_1, window_bounds = array<i64: 32, 4>}, {pipeline_mode = #tpu.pipeline_mode<synchronous>, transform_indices = @transform_2, window_bounds = array<i64: 32, 1>}, {transform_indices = @transform_3, window_bounds = array<i64: 1, 32, 128>}]} {
    %c0 = arith.constant 0 : index
    %c0_0 = arith.constant 0 : index
    %0 = vector.load %arg3[%c0, %c0_0] : memref<32x4xf32, #tpu.memory_space<vmem>>, vector<32x4xf32>
    %c0_1 = arith.constant 0 : index
    %c0_2 = arith.constant 0 : index
    %c0_3 = arith.constant 0 : index
    %1 = vector.load %arg2[%c0_1, %c0_2, %c0_3] : memref<1x4x128xf32, #tpu.memory_space<vmem>>, vector<1x4x128xf32>
    %2 = vector.shape_cast %1 : vector<1x4x128xf32> to vector<4x128xf32>
    %cst = arith.constant dense<0.000000e+00> : vector<32x128xf32>
    %3 = tpu.matmul %0, %2, %cst {dimension_numbers = #tpu.dot_dimension_numbers<[1], [0], [0], [1], [0, 0, 1, 1], [], []>} : vector<32x4xf32>, vector<4x128xf32>, vector<32x128xf32> -> vector<32x128xf32>
    %c0_4 = arith.constant 0 : index
    %c0_5 = arith.constant 0 : index
    %4 = vector.load %arg4[%c0_4, %c0_5] : memref<32x1xf32, #tpu.memory_space<vmem>>, vector<32x1xf32>
    %5 = vector.broadcast %4 : vector<32x1xf32> to vector<32x128xf32>
    %6 = arith.addf %3, %5 : vector<32x128xf32>
    %cst_6 = arith.constant 0.000000e+00 : f32
    %7 = vector.broadcast %cst_6 : f32 to vector<32x128xf32>
    %8 = arith.maximumf %6, %7 : vector<32x128xf32>
    %c0_7 = arith.constant 0 : index
    %c0_8 = arith.constant 0 : index
    %c0_9 = arith.constant 0 : index
    %9 = vector.load %arg5[%c0_7, %c0_8, %c0_9] : memref<1x32x128xf32, #tpu.memory_space<vmem>>, vector<1x32x128xf32>
    %10 = vector.shape_cast %9 : vector<1x32x128xf32> to vector<32x128xf32>
    %11 = vector.shape_cast %8 : vector<32x128xf32> to vector<1x32x128xf32>
    tpu.vector_store %arg5[%c0_7, %c0_8, %c0_9], %11 {strides = array<i32>} : memref<1x32x128xf32, #tpu.memory_space<vmem>>, vector<1x32x128xf32>,
    return
  }
  func.func @transform_0(%arg0: i32, %arg1: i32) -> (i32, i32, i32) {
    %c0_i32 = arith.constant 0 : i32
    %c0_i32_0 = arith.constant 0 : i32
    return %arg0, %c0_i32, %arg1 : i32, i32, i32
  }
  func.func @transform_1(%arg0: i32, %arg1: i32) -> (i32, i32) {
    %c0_i32 = arith.constant 0 : i32
    %c0_i32_0 = arith.constant 0 : i32
    %c0_i32_1 = arith.constant 0 : i32
    return %c0_i32, %c0_i32_0 : i32, i32
  }
  func.func @transform_2(%arg0: i32, %arg1: i32) -> (i32, i32) {
    %c0_i32 = arith.constant 0 : i32
    %c0_i32_0 = arith.constant 0 : i32
    %c0_i32_1 = arith.constant 0 : i32
    return %c0_i32, %c0_i32_0 : i32, i32
  }
  func.func @transform_3(%arg0: i32, %arg1: i32) -> (i32, i32, i32) {
    %c0_i32 = arith.constant 0 : i32
    %c0_i32_0 = arith.constant 0 : i32
    return %arg0, %c0_i32, %arg1 : i32, i32, i32
  }
}

</mosaic_0001>

<llo_original>
// kernel: mul.11
$region0: #{mul.11}
  %s0 = inlined_call_operand.vmem [shape: f32[4,1,4,4], index: 0, kind: input, shape index: {}]
  %s1 = inlined_call_operand.vmem [shape: f32[4,16], index: 1, kind: output, shape index: {}]
  $region1: #{mul.11} parent=0
    #allocation0 [shape = 'u8[4096]{0}', space=vmem, size = 0x1000, scoped, tag = 'scoped mem for output reshape']
    #allocation1 [shape = 'u8[16384]{0}', space=vmem, size = 0x4000, scoped, tag = 'scoped mem for input reshape']
    %s3 = sshll.u32 1, 4
    %s4 = ssub.s32 %s3, 1
    %s5 = smul.addr 4, 3
    %s6 = scalar_lea.vmem %s0, %s5
    %v7 = vld [vmem:[%s6] sm:%s4]
    %s8 = scalar_lea.vmem [#allocation1], 24
    %9 = vst [vmem:[%s8] sm:%s4] %v7
    %s10 = smul.addr 4, 2
    %s11 = scalar_lea.vmem %s0, %s10
    %v12 = vld [vmem:[%s11] sm:%s4]
    %s13 = scalar_lea.vmem [#allocation1], 16
    %14 = vst [vmem:[%s13] sm:%s4] %v12
    %s15 = scalar_lea.vmem %s0, 4
    %v16 = vld [vmem:[%s15] sm:%s4]
    %s17 = scalar_lea.vmem [#allocation1], 8
    %18 = vst [vmem:[%s17] sm:%s4] %v16
    %v19 = vld [vmem:[%s0] sm:%s4]
    %20 = vst [vmem:[#allocation1] sm:%s4] %v19
    %v21 = vld [vmem:[#allocation1] ss:$8 sm:$0xf]
    %vm22 = vcmask 31744
    %23 = vst.msk [vmem:[#allocation0] sm:$0xf] %vm22, %v21
    %s24 = scalar_lea.vmem [#allocation1], 3
    %v25 = vld [vmem:[%s24] ss:$8 sm:$0xf]
    %26 = vrot.lane.b32.xlu0 %v25, 12
    %v27 = vpop.permute.xlu0 %26
    %vm28 = vcmask 130144
    %29 = vst.msk [vmem:[#allocation0] sm:$0xf] %vm28, %v27
    %s30 = scalar_lea.vmem [#allocation1], 2
    %v31 = vld [vmem:[%s30] ss:$8 sm:$0xf]
    %32 = vrot.lane.b32.xlu0 %v31, 8
    %v33 = vpop.permute.xlu0 %32
    %vm34 = vcmask 97344
    %35 = vst.msk [vmem:[#allocation0] sm:$0xf] %vm34, %v33
    %s36 = scalar_lea.vmem [#allocation1], 1
    %v37 = vld [vmem:[%s36] ss:$8 sm:$0xf]
    %38 = vrot.lane.b32.xlu0 %v37, 4
    %v39 = vpop.permute.xlu0 %38
    %vm40 = vcmask 64544
    %41 = vst.msk [vmem:[#allocation0] sm:$0xf] %vm40, %v39
    %s43 = sshll.u32 1, 4
    %s44 = ssub.s32 %s43, 1
    %v46 = vld [vmem:[#allocation0] sm:%s44]
    %s47 = sshll.u32 1, 4
    %s48 = ssub.s32 %s47, 1
    %49 = vst [vmem:[%s1] sm:%s48] %v46

// kernel: csph_forward.4
$region0: #{csph_forward.4}
  #allocation0 [shape = 'u32[]', space=smem, size = 0x4, offset = 0x4, fixed_abs, tag = 'smem constant byte address 0x4 - core index']
  #allocation1 [shape = 'u32[144,128]{1,0:T(1,128)}', space=vmem, size = 0x12000, scoped, tag = 'internal scratch']
  #allocation2 [shape = 'f32[4,16]{1,0:T(4,128)}', space=vmem, size = 0x800, scoped, tag = 'scratch operand']
  %s0 = inlined_call_operand.vmem [shape: f32[2,512,16], index: 0, kind: input, shape index: {}]
  %s1 = inlined_call_operand.vmem [shape: f32[4,512], index: 1, kind: input, shape index: {}]
  %s2 = inlined_call_operand.vmem [shape: f32[2,4,16], index: 2, kind: output, shape index: {}]
  %s3 = sld [smem:[#allocation0]]
  $region49: #{csph_forward.4} parent=0
    _
  %s5 = ssub.s32 1, %s3
  %s6 = scalar_select 0, %s5, %s3
  loop: start=0, step=1, limit=4
  $region2: #{csph_forward.4} parent=0 // loop_pre_header
    _
  $region3: #{csph_forward.4} parent=0 // loop_header
    %s8 = sphi 0, %s12
    %p9 = scmp.ge.s32.totalorder %s8, 4
    %s15 = sphi 0, %s34
    %s16 = sphi 0, %s30
    %s17 = sphi 0, %s26
    %s18 = sphi 0, %s15
    %s19 = sphi 0, %s16
    %s20 = sphi 0, %s17
    %s21 = sphi 0, %s18
    %s22 = sphi 0, %s19
    %s23 = sphi 0, %s20
    %s41 = sphi 0, %s43
    %s44 = sphi 0, %s41
    %s45 = sphi 0, %s44
    %s61 = sphi 0, %s45
    %s67 = sphi 0, %s69
    %s70 = sphi 0, %s67
    %s71 = sphi 0, %s70
    %s87 = sphi 0, %s71
    %s95 = sphi 0, %s97
    %s98 = sphi 0, %s95
    %s99 = sphi 0, %s98
    %s115 = sphi 0, %s99
  $region4: #{csph_forward.4} parent=0 // loop_header_branch
    %11 = sbr.rel (%p9) target = $region8
  $region5: #{csph_forward.4} parent=0 // loop_body
    %s13 = ssub.s32 %s8, 1
    %s14 = ssub.s32 %s8, 2
    %s24 = sadd.s32 1, %s17
    %p25 = scmp.ge.s32.totalorder %s24, 1
    %s26 = scalar_select %p25, 0, %s24
    %s27 = sadd.s32 1, %s16
    %s28 = scalar_select %p25, %s27, %s16
    %p29 = scmp.ge.s32.totalorder %s28, 1
    %s30 = scalar_select %p29, 0, %s28
    %s31 = sadd.s32 1, %s15
    %s32 = scalar_select %p29, %s31, %s15
    %p33 = scmp.ge.s32.totalorder %s32, 2
    %s34 = scalar_select %p33, 0, %s32
    %s35 = ssub.s32 %s15, %s34
    %s36 = ssub.s32 %s17, %s26
    %s37 = sor.u32 %s35, %s36
    %s38 = ssub.s32 %s16, %s30
    %s39 = sor.u32 %s37, %s38
    %p40 = scmp.eq.s32.totalorder %s39, 0
    %s42 = sadd.s32 %s41, 1
    %s43 = scalar_select %p40, %s41, %s42
    %p46 = pneg %p40
    %p47 = scmp.eq.s32.totalorder %s8, 1
    %p48 = por %p46, %p47
    %p49 = scmp.ne.s32.totalorder %s41, %s44
    %p50 = scmp.eq.s32.totalorder %s8, 0
    %p51 = por %p49, %p50
    %p52 = scmp.ne.s32.totalorder %s41, %s44
    %p53 = scmp.eq.s32.totalorder %s13, 1
    %p54 = por %p52, %p53
    %p55 = scmp.ne.s32.totalorder %s44, %s45
    %p56 = scmp.eq.s32.totalorder %s13, 0
    %p57 = por %p55, %p56
    %p58 = scmp.ne.s32.totalorder %s44, %s45
    %p59 = scmp.eq.s32.totalorder %s14, 1
    %p60 = por %p58, %p59
    %p62 = scmp.ne.s32.totalorder %s45, %s61
    %p63 = scmp.eq.s32.totalorder %s14, 0
    %p64 = por %p62, %p63
    %s65 = ssub.s32 %s17, %s26
    %p66 = scmp.eq.s32.totalorder %s65, 0
    %s68 = sadd.s32 %s67, 1
    %s69 = scalar_select %p66, %s67, %s68
    %p72 = pneg %p66
    %p73 = scmp.eq.s32.totalorder %s8, 1
    %p74 = por %p72, %p73
    %p75 = scmp.ne.s32.totalorder %s67, %s70
    %p76 = scmp.eq.s32.totalorder %s8, 0
    %p77 = por %p75, %p76
    %p78 = scmp.ne.s32.totalorder %s67, %s70
    %p79 = scmp.eq.s32.totalorder %s13, 1
    %p80 = por %p78, %p79
    %p81 = scmp.ne.s32.totalorder %s70, %s71
    %p82 = scmp.eq.s32.totalorder %s13, 0
    %p83 = por %p81, %p82
    %p84 = scmp.ne.s32.totalorder %s70, %s71
    %p85 = scmp.eq.s32.totalorder %s14, 1
    %p86 = por %p84, %p85
    %p88 = scmp.ne.s32.totalorder %s71, %s87
    %p89 = scmp.eq.s32.totalorder %s14, 0
    %p90 = por %p88, %p89
    %s91 = ssub.s32 %s15, %s34
    %s92 = ssub.s32 %s16, %s30
    %s93 = sor.u32 %s91, %s92
    %p94 = scmp.eq.s32.totalorder %s93, 0
    %s96 = sadd.s32 %s95, 1
    %s97 = scalar_select %p94, %s95, %s96
    %p100 = pneg %p94
    %p101 = scmp.eq.s32.totalorder %s8, 1
    %p102 = por %p100, %p101
    %p103 = scmp.ne.s32.totalorder %s95, %s98
    %p104 = scmp.eq.s32.totalorder %s8, 0
    %p105 = por %p103, %p104
    %p106 = scmp.ne.s32.totalorder %s95, %s98
    %p107 = scmp.eq.s32.totalorder %s13, 1
    %p108 = por %p106, %p107
    %p109 = scmp.ne.s32.totalorder %s98, %s99
    %p110 = scmp.eq.s32.totalorder %s13, 0
    %p111 = por %p109, %p110
    %p112 = scmp.ne.s32.totalorder %s98, %s99
    %p113 = scmp.eq.s32.totalorder %s14, 1
    %p114 = por %p112, %p113
    %p116 = scmp.ne.s32.totalorder %s99, %s115
    %p117 = scmp.eq.s32.totalorder %s14, 0
    %p118 = por %p116, %p117
    %p119 = scmp.le.s32.totalorder 1, %s8
    %p120 = scmp.lt.s32.totalorder %s8, 3
    %p121 = pnand %p119, %p120
    %p122 = pneg %p121
    // Predicated region
    $region9: #{csph_forward.4} parent=5 // pred_check
      _
    $region10: #{csph_forward.4} parent=5 // pred_check_branch
      %124 = sbr.rel (%p121) target = $region12
    $region11: #{csph_forward.4} parent=5 // pred_region
      %s125 = ssub.s32 %s8, 1
      // Predicated region
      $region13: #{csph_forward.4} parent=11 // pred_check
        %p126 = pneg %p83
      $region14: #{csph_forward.4} parent=11 // pred_check_branch
        %128 = sbr.rel (%p126) target = $region16
      $region15: #{csph_forward.4} parent=11 // pred_region
        %s129 = smul.u32 4, %s20
        %p130 = scmp.lt.s32.totalorder %s129, 3
        %s131 = scalar_select %p130, %s129, 3
        %s132 = smul.addr %s131, 4
        %s133 = scalar_lea.vmem %s1, %s132
        %s134 = smul.u32 4, %s20
      $region16: #{csph_forward.4} parent=11 // pred_fallthru
        _
    $region12: #{csph_forward.4} parent=5 // pred_fallthru
      _
    %p135 = scmp.lt.s32.totalorder %s8, 2
    // Predicated region
    $region17: #{csph_forward.4} parent=5 // pred_check
      %p136 = pneg %p135
    $region18: #{csph_forward.4} parent=5 // pred_check_branch
      %138 = sbr.rel (%p136) target = $region20
    $region19: #{csph_forward.4} parent=5 // pred_region
      // Predicated region
      $region21: #{csph_forward.4} parent=19 // pred_check
        %p139 = pneg %p51
      $region22: #{csph_forward.4} parent=19 // pred_check_branch
        %141 = sbr.rel (%p139) target = $region24
      $region23: #{csph_forward.4} parent=19 // pred_region
        %s142 = smul.u32 64, %s17
        %p143 = scmp.lt.s32.totalorder %s15, 1
        %s144 = scalar_select %p143, %s15, 1
        %p145 = scmp.lt.s32.totalorder %s142, 63
        %s146 = scalar_select %p145, %s142, 63
        %p147 = scmp.lt.s32.totalorder %s16, 0
        %s148 = scalar_select %p147, %s16, 0
        %s149 = sadd.s32 %s148, %s146
        %s150 = smul.addr %s144, 64
        %s151 = sadd.s32 %s149, %s150
        %s152 = smul.addr %s151, 8
        %s153 = scalar_lea.vmem %s0, %s152
        %s154 = smul.u32 64, %s17
      $region24: #{csph_forward.4} parent=19 // pred_fallthru
        _
    $region20: #{csph_forward.4} parent=5 // pred_fallthru
      _
    %p155 = scmp.le.s32.totalorder 1, %s8
    %p156 = scmp.lt.s32.totalorder %s8, 3
    %p157 = pnand %p155, %p156
    %p158 = pneg %p157
    // Predicated region
    $region25: #{csph_forward.4} parent=5 // pred_check
      _
    $region26: #{csph_forward.4} parent=5 // pred_check_branch
      %160 = sbr.rel (%p157) target = $region28
    $region27: #{csph_forward.4} parent=5 // pred_region
      %s161 = ssub.s32 %s8, 1
      %s162 = smul.u32 64, %s20
      %p163 = scmp.lt.s32.totalorder %s18, 1
      %s164 = scalar_select %p163, %s18, 1
      %p165 = scmp.lt.s32.totalorder %s162, 63
      %s166 = scalar_select %p165, %s162, 63
      %p167 = scmp.lt.s32.totalorder %s19, 0
      %s168 = scalar_select %p167, %s19, 0
      %s169 = sadd.s32 %s168, %s166
      %s170 = smul.addr %s164, 64
      %s171 = sadd.s32 %s169, %s170
      %s172 = smul.addr %s171, 8
      %s173 = scalar_lea.vmem %s0, %s172
      %p174 = pneg %p57
      %p175 = pneg %p54
      %s176 = smul.u32 4, %s20
      %p177 = scmp.lt.s32.totalorder %s176, 3
      %s178 = scalar_select %p177, %s176, 3
      %s179 = smul.addr %s178, 4
      %s180 = scalar_lea.vmem %s1, %s179
      %p181 = pneg %p83
      %p182 = pneg %p80
      %p183 = pneg %p111
      %p184 = pneg %p108
      %p185 = scmp.lt.s32.totalorder %s18, 1
      %s186 = scalar_select %p185, %s18, 1
      %p187 = scmp.lt.s32.totalorder %s19, 0
      %s188 = scalar_select %p187, %s19, 0
      %s189 = sadd.s32 %s188, %s186
      %s190 = smul.addr %s189, 4
      %s191 = scalar_lea.vmem %s2, %s190
      %s192 = smul.u32 64, %s20
      %p193 = scmp.lt.s32.totalorder %s18, 1
      %s194 = scalar_select %p193, %s18, 1
      %p195 = scmp.lt.s32.totalorder %s192, 63
      %s196 = scalar_select %p195, %s192, 63
      %p197 = scmp.lt.s32.totalorder %s19, 0
      %s198 = scalar_select %p197, %s19, 0
      %s199 = sadd.s32 %s198, %s196
      %s200 = smul.addr %s194, 64
      %s201 = sadd.s32 %s199, %s200
      %s202 = smul.addr %s201, 8
      %s203 = scalar_lea.vmem %s0, %s202
      %s204 = smul.u32 64, %s20
      %s205 = smul.u32 4, %s20
      %p206 = scmp.lt.s32.totalorder %s205, 3
      %s207 = scalar_select %p206, %s205, 3
      %s208 = smul.addr %s207, 4
      %s209 = scalar_lea.vmem %s1, %s208
      %s210 = smul.u32 4, %s20
      %p211 = scmp.lt.s32.totalorder %s18, 1
      %s212 = scalar_select %p211, %s18, 1
      %p213 = scmp.lt.s32.totalorder %s19, 0
      %s214 = scalar_select %p213, %s19, 0
      %s215 = sadd.s32 %s214, %s212
      %s216 = smul.addr %s215, 4
      %s217 = scalar_lea.vmem %s2, %s216
      %p218 = scmp.eq.s32.totalorder %s20, 0
      // Predicated region
      $region29: #{csph_forward.4} parent=27 // pred_check
        %p219 = pneg %p218
      $region30: #{csph_forward.4} parent=27 // pred_check_branch
        %221 = sbr.rel (%p219) target = $region32
      $region31: #{csph_forward.4} parent=27 // pred_region
        %vm222 = vcmask 125952
        %223 = vst.msk [vmem:[#allocation2] sm:$0xf] %vm222, 0.0
      $region32: #{csph_forward.4} parent=27 // pred_fallthru
        _
      %v224 = vld [vmem:[#allocation2] sm:$0xf]
      %v225 = vld [vmem:[%s209] sm:$0xff]
      %v226 = vld [vmem:[%s209 + $0x8] sm:$0xff]
      %v227 = vld [vmem:[%s203] sm:$0xff]
      %v228 = vld [vmem:[%s203 + $0x8] sm:$0xff]
      %v229 = vld [vmem:[%s203 + $0x10] sm:$0xff]
      %v230 = vld [vmem:[%s203 + $0x18] sm:$0xff]
      %v231 = vld [vmem:[%s203 + $0x20] sm:$0xff]
      %v232 = vld [vmem:[%s203 + $0x28] sm:$0xff]
      %v233 = vld [vmem:[%s203 + $0x30] sm:$0xff]
      %v234 = vld [vmem:[%s203 + $0x38] sm:$0xff]
      %v235 = vld [vmem:[%s203 + $0x40] sm:$0xff]
      %v236 = vld [vmem:[%s203 + $0x48] sm:$0xff]
      %v237 = vld [vmem:[%s203 + $0x50] sm:$0xff]
      %v238 = vld [vmem:[%s203 + $0x58] sm:$0xff]
      %v239 = vld [vmem:[%s203 + $0x60] sm:$0xff]
      %v240 = vld [vmem:[%s203 + $0x68] sm:$0xff]
      %v241 = vld [vmem:[%s203 + $0x70] sm:$0xff]
      %v242 = vld [vmem:[%s203 + $0x78] sm:$0xff]
      %v243 = vld [vmem:[%s203 + $0x80] sm:$0xff]
      %v244 = vld [vmem:[%s203 + $0x88] sm:$0xff]
      %v245 = vld [vmem:[%s203 + $0x90] sm:$0xff]
      %v246 = vld [vmem:[%s203 + $0x98] sm:$0xff]
      %v247 = vld [vmem:[%s203 + $0xa0] sm:$0xff]
      %v248 = vld [vmem:[%s203 + $0xa8] sm:$0xff]
      %v249 = vld [vmem:[%s203 + $0xb0] sm:$0xff]
      %v250 = vld [vmem:[%s203 + $0xb8] sm:$0xff]
      %v251 = vld [vmem:[%s203 + $0xc0] sm:$0xff]
      %v252 = vld [vmem:[%s203 + $0xc8] sm:$0xff]
      %v253 = vld [vmem:[%s203 + $0xd0] sm:$0xff]
      %v254 = vld [vmem:[%s203 + $0xd8] sm:$0xff]
      %v255 = vld [vmem:[%s203 + $0xe0] sm:$0xff]
      %v256 = vld [vmem:[%s203 + $0xe8] sm:$0xff]
      %v257 = vld [vmem:[%s203 + $0xf0] sm:$0xff]
      %v258 = vld [vmem:[%s203 + $0xf8] sm:$0xff]
      %v259 = vld [vmem:[%s203 + $0x100] sm:$0xff]
      %v260 = vld [vmem:[%s203 + $0x108] sm:$0xff]
      %v261 = vld [vmem:[%s203 + $0x110] sm:$0xff]
      %v262 = vld [vmem:[%s203 + $0x118] sm:$0xff]
      %v263 = vld [vmem:[%s203 + $0x120] sm:$0xff]
      %v264 = vld [vmem:[%s203 + $0x128] sm:$0xff]
      %v265 = vld [vmem:[%s203 + $0x130] sm:$0xff]
      %v266 = vld [vmem:[%s203 + $0x138] sm:$0xff]
      %v267 = vld [vmem:[%s203 + $0x140] sm:$0xff]
      %v268 = vld [vmem:[%s203 + $0x148] sm:$0xff]
      %v269 = vld [vmem:[%s203 + $0x150] sm:$0xff]
      %v270 = vld [vmem:[%s203 + $0x158] sm:$0xff]
      %v271 = vld [vmem:[%s203 + $0x160] sm:$0xff]
      %v272 = vld [vmem:[%s203 + $0x168] sm:$0xff]
      %v273 = vld [vmem:[%s203 + $0x170] sm:$0xff]
      %v274 = vld [vmem:[%s203 + $0x178] sm:$0xff]
      %v275 = vld [vmem:[%s203 + $0x180] sm:$0xff]
      %v276 = vld [vmem:[%s203 + $0x188] sm:$0xff]
      %v277 = vld [vmem:[%s203 + $0x190] sm:$0xff]
      %v278 = vld [vmem:[%s203 + $0x198] sm:$0xff]
      %v279 = vld [vmem:[%s203 + $0x1a0] sm:$0xff]
      %v280 = vld [vmem:[%s203 + $0x1a8] sm:$0xff]
      %v281 = vld [vmem:[%s203 + $0x1b0] sm:$0xff]
      %v282 = vld [vmem:[%s203 + $0x1b8] sm:$0xff]
      %v283 = vld [vmem:[%s203 + $0x1c0] sm:$0xff]
      %v284 = vld [vmem:[%s203 + $0x1c8] sm:$0xff]
      %v285 = vld [vmem:[%s203 + $0x1d0] sm:$0xff]
      %v286 = vld [vmem:[%s203 + $0x1d8] sm:$0xff]
      %v287 = vld [vmem:[%s203 + $0x1e0] sm:$0xff]
      %v288 = vld [vmem:[%s203 + $0x1e8] sm:$0xff]
      %v289 = vld [vmem:[%s203 + $0x1f0] sm:$0xff]
      %v290 = vld [vmem:[%s203 + $0x1f8] sm:$0xff]
      %v293 = vcombine.high %v225, %v225
      %v294 = vcombine.high %v226, %v226
      %297 = vmatprep.subr.mxu0 0.0
      %298 = vmatpush1.msra.mxu0 %v242
      %299 = vmatprep.subr.mxu0 0.0
      %300 = vmatpush1.msra.mxu0 %v241
      %301 = vmatprep.subr.mxu0 0.0
      %302 = vmatpush1.msra.mxu0 %v240
      %303 = vmatprep.subr.mxu0 0.0
      %304 = vmatpush1.msra.mxu0 %v239
      %305 = vmatprep.subr.mxu0 0.0
      %306 = vmatpush1.msra.mxu0 %v238
      %307 = vmatprep.subr.mxu0 0.0
      %308 = vmatpush1.msra.mxu0 %v237
      %309 = vmatprep.subr.mxu0 0.0
      %310 = vmatpush1.msra.mxu0 %v236
      %311 = vmatprep.subr.mxu0 0.0
      %312 = vmatpush1.msra.mxu0 %v235
      %313 = vmatprep.subr.mxu0 0.0
      %314 = vmatpush1.msra.mxu0 %v234
      %315 = vmatprep.subr.mxu0 0.0
      %316 = vmatpush1.msra.mxu0 %v233
      %317 = vmatprep.subr.mxu0 0.0
      %318 = vmatpush1.msra.mxu0 %v232
      %319 = vmatprep.subr.mxu0 0.0
      %320 = vmatpush1.msra.mxu0 %v231
      %321 = vmatprep.subr.mxu0 0.0
      %322 = vmatpush1.msra.mxu0 %v230
      %323 = vmatprep.subr.mxu0 0.0
      %324 = vmatpush1.msra.mxu0 %v229
      %325 = vmatprep.subr.mxu0 0.0
      %326 = vmatpush1.msra.mxu0 %v228
      %327 = vmatprep.subr.mxu0 0.0
      %328 = vmatpush1.msra.mxu0 %v227
      %329 = vmatprep.subr.mxu0 0.0
      %330 = vmatpush2.msra.mxu0 %v258
      %331 = vmatprep.subr.mxu0 0.0
      %332 = vmatpush2.msra.mxu0 %v257
      %333 = vmatprep.subr.mxu0 0.0
      %334 = vmatpush2.msra.mxu0 %v256
      %335 = vmatprep.subr.mxu0 0.0
      %336 = vmatpush2.msra.mxu0 %v255
      %337 = vmatprep.subr.mxu0 0.0
      %338 = vmatpush2.msra.mxu0 %v254
      %339 = vmatprep.subr.mxu0 0.0
      %340 = vmatpush2.msra.mxu0 %v253
      %341 = vmatprep.subr.mxu0 0.0
      %342 = vmatpush2.msra.mxu0 %v252
      %343 = vmatprep.subr.mxu0 0.0
      %344 = vmatpush2.msra.mxu0 %v251
      %345 = vmatprep.subr.mxu0 0.0
      %346 = vmatpush2.msra.mxu0 %v250
      %347 = vmatprep.subr.mxu0 0.0
      %348 = vmatpush2.msra.mxu0 %v249
      %349 = vmatprep.subr.mxu0 0.0
      %350 = vmatpush2.msra.mxu0 %v248
      %351 = vmatprep.subr.mxu0 0.0
      %352 = vmatpush2.msra.mxu0 %v247
      %353 = vmatprep.subr.mxu0 0.0
      %354 = vmatpush2.msra.mxu0 %v246
      %355 = vmatprep.subr.mxu0 0.0
      %356 = vmatpush2.msra.mxu0 %v245
      %357 = vmatprep.subr.mxu0 0.0
      %358 = vmatpush2.msra.mxu0 %v244
      %359 = vmatprep.subr.mxu0 0.0
      %360 = vmatpush2.msra.mxu0 %v243
      %361 = vmatprep.mubr.f32.mxu0 %v293
      %362 = vmatmul.mubr.f32.gmra.mxu0 %v225
      %v363 = vpop.f32.mrf.mxu0
      %v364 = vadd.f32 0.0, %v363
      %v365 = vpop.f32.mrf.mxu0
      %366 = vdwg.mxu0
      %367 = vmatprep.subr.mxu0 0.0
      %368 = vmatpush1.msra.mxu0 %v274
      %369 = vmatprep.subr.mxu0 0.0
      %370 = vmatpush1.msra.mxu0 %v273
      %371 = vmatprep.subr.mxu0 0.0
      %372 = vmatpush1.msra.mxu0 %v272
      %373 = vmatprep.subr.mxu0 0.0
      %374 = vmatpush1.msra.mxu0 %v271
      %375 = vmatprep.subr.mxu0 0.0
      %376 = vmatpush1.msra.mxu0 %v270
      %377 = vmatprep.subr.mxu0 0.0
      %378 = vmatpush1.msra.mxu0 %v269
      %379 = vmatprep.subr.mxu0 0.0
      %380 = vmatpush1.msra.mxu0 %v268
      %381 = vmatprep.subr.mxu0 0.0
      %382 = vmatpush1.msra.mxu0 %v267
      %383 = vmatprep.subr.mxu0 0.0
      %384 = vmatpush1.msra.mxu0 %v266
      %385 = vmatprep.subr.mxu0 0.0
      %386 = vmatpush1.msra.mxu0 %v265
      %387 = vmatprep.subr.mxu0 0.0
      %388 = vmatpush1.msra.mxu0 %v264
      %389 = vmatprep.subr.mxu0 0.0
      %390 = vmatpush1.msra.mxu0 %v263
      %391 = vmatprep.subr.mxu0 0.0
      %392 = vmatpush1.msra.mxu0 %v262
      %393 = vmatprep.subr.mxu0 0.0
      %394 = vmatpush1.msra.mxu0 %v261
      %395 = vmatprep.subr.mxu0 0.0
      %396 = vmatpush1.msra.mxu0 %v260
      %397 = vmatprep.subr.mxu0 0.0
      %398 = vmatpush1.msra.mxu0 %v259
      %399 = vmatprep.subr.mxu0 0.0
      %400 = vmatpush2.msra.mxu0 %v290
      %401 = vmatprep.subr.mxu0 0.0
      %402 = vmatpush2.msra.mxu0 %v289
      %403 = vmatprep.subr.mxu0 0.0
      %404 = vmatpush2.msra.mxu0 %v288
      %405 = vmatprep.subr.mxu0 0.0
      %406 = vmatpush2.msra.mxu0 %v287
      %407 = vmatprep.subr.mxu0 0.0
      %408 = vmatpush2.msra.mxu0 %v286
      %409 = vmatprep.subr.mxu0 0.0
      %410 = vmatpush2.msra.mxu0 %v285
      %411 = vmatprep.subr.mxu0 0.0
      %412 = vmatpush2.msra.mxu0 %v284
      %413 = vmatprep.subr.mxu0 0.0
      %414 = vmatpush2.msra.mxu0 %v283
      %415 = vmatprep.subr.mxu0 0.0
      %416 = vmatpush2.msra.mxu0 %v282
      %417 = vmatprep.subr.mxu0 0.0
      %418 = vmatpush2.msra.mxu0 %v281
      %419 = vmatprep.subr.mxu0 0.0
      %420 = vmatpush2.msra.mxu0 %v280
      %421 = vmatprep.subr.mxu0 0.0
      %422 = vmatpush2.msra.mxu0 %v279
      %423 = vmatprep.subr.mxu0 0.0
      %424 = vmatpush2.msra.mxu0 %v278
      %425 = vmatprep.subr.mxu0 0.0
      %426 = vmatpush2.msra.mxu0 %v277
      %427 = vmatprep.subr.mxu0 0.0
      %428 = vmatpush2.msra.mxu0 %v276
      %429 = vmatprep.subr.mxu0 0.0
      %430 = vmatpush2.msra.mxu0 %v275
      %431 = vmatprep.mubr.f32.mxu0 %v294
      %432 = vmatmul.mubr.f32.gmra.mxu0 %v226
      %v433 = vpop.f32.mrf.mxu0
      %v434 = vadd.f32 %v364, %v433
      %v435 = vpop.f32.mrf.mxu0
      %436 = vdwg.mxu0
      %v437 = vadd.f32 %v224, %v434
      %vm438 = vcmask 125952
      %439 = vst.msk [vmem:[#allocation2] sm:$0xf] %vm438, %v437
      // Predicated region
      $region33: #{csph_forward.4} parent=27 // pred_check
        %p440 = pneg %p218
      $region34: #{csph_forward.4} parent=27 // pred_check_branch
        %442 = sbr.rel (%p440) target = $region36
      $region35: #{csph_forward.4} parent=27 // pred_region
        %v443 = vld [vmem:[#allocation2] sm:$0xf]
        %444 = vst.msk [vmem:[%s217] sm:$0xf] %vm438, %v443
      $region36: #{csph_forward.4} parent=27 // pred_fallthru
        _
      %p445 = scmp.lt.s32.totalorder %s18, 1
      %s446 = scalar_select %p445, %s18, 1
      %p447 = scmp.lt.s32.totalorder %s19, 0
      %s448 = scalar_select %p447, %s19, 0
      %s449 = sadd.s32 %s448, %s446
      %s450 = smul.addr %s449, 4
      %s451 = scalar_lea.vmem %s2, %s450
      // Predicated region
      $region37: #{csph_forward.4} parent=27 // pred_check
        %p452 = pneg %p108
      $region38: #{csph_forward.4} parent=27 // pred_check_branch
        %454 = sbr.rel (%p452) target = $region40
      $region39: #{csph_forward.4} parent=27 // pred_region
        _
      $region40: #{csph_forward.4} parent=27 // pred_fallthru
        _
    $region28: #{csph_forward.4} parent=5 // pred_fallthru
      _
    %p455 = scmp.le.s32.totalorder 2, %s8
    // Predicated region
    $region41: #{csph_forward.4} parent=5 // pred_check
      %p456 = pneg %p455
    $region42: #{csph_forward.4} parent=5 // pred_check_branch
      %458 = sbr.rel (%p456) target = $region44
    $region43: #{csph_forward.4} parent=5 // pred_region
      %s459 = ssub.s32 %s8, 2
      // Predicated region
      $region45: #{csph_forward.4} parent=43 // pred_check
        %p460 = pneg %p114
      $region46: #{csph_forward.4} parent=43 // pred_check_branch
        %462 = sbr.rel (%p460) target = $region48
      $region47: #{csph_forward.4} parent=43 // pred_region
        %p463 = scmp.lt.s32.totalorder %s21, 1
        %s464 = scalar_select %p463, %s21, 1
        %p465 = scmp.lt.s32.totalorder %s22, 0
        %s466 = scalar_select %p465, %s22, 0
        %s467 = sadd.s32 %s466, %s464
        %s468 = smul.addr %s467, 4
        %s469 = scalar_lea.vmem %s2, %s468
      $region48: #{csph_forward.4} parent=43 // pred_fallthru
        _
    $region44: #{csph_forward.4} parent=5 // pred_fallthru
      _
  $region6: #{csph_forward.4} parent=0 // loop_footer
    %s12 = sadd.s32 1, %s8
  $region7: #{csph_forward.4} parent=0 // loop_footer_branch
    %7 = sbr.rel target = $region3
  $region8: #{csph_forward.4} parent=0 // loop_exit
    _

// kernel: csph_forward.7
$region0: #{csph_forward.7}
  #allocation0 [shape = 'u32[]', space=smem, size = 0x4, offset = 0x4, fixed_abs, tag = 'smem constant byte address 0x4 - core index']
  #allocation1 [shape = 'u32[144,128]{1,0:T(1,128)}', space=vmem, size = 0x12000, scoped, tag = 'internal scratch']
  %s0 = inlined_call_operand.vmem [shape: f32[2,4,256], index: 0, kind: input, shape index: {}]
  %s1 = inlined_call_operand.vmem [shape: f32[32,4], index: 1, kind: input, shape index: {}]
  %s2 = inlined_call_operand.vmem [shape: f32[32,1], index: 2, kind: input, shape index: {}]
  %s3 = inlined_call_operand.vmem [shape: f32[2,32,256], index: 3, kind: output, shape index: {}]
  %s4 = sld [smem:[#allocation0]]
  $region79: #{csph_forward.7} parent=0
    _
  %s6 = ssub.s32 1, %s4
  %s7 = scalar_select 0, %s6, %s4
  $region1: #{csph_forward.7} parent=0
    #allocation2 [shape = 'u8[32768]{0}', space=vmem, size = 0x8000, scoped, tag = 'output window, operand 0']
    loop: start=0, step=1, limit=6
    $region2: #{csph_forward.7} parent=1 // loop_pre_header
      _
    $region3: #{csph_forward.7} parent=1 // loop_header
      %s9 = sphi 0, %s13
      %p10 = scmp.ge.s32.totalorder %s9, 6
      %s16 = sphi 0, %s28
      %s17 = sphi 0, %s24
      %s18 = sphi 0, %s16
      %s19 = sphi 0, %s17
      %s20 = sphi 0, %s18
      %s21 = sphi 0, %s19
      %s33 = sphi 0, %s35
      %s36 = sphi 0, %s33
      %s37 = sphi 0, %s36
      %s53 = sphi 0, %s37
      %s57 = sphi 0, %s57
      %s59 = sphi 0, %s57
      %s60 = sphi 0, %s59
      %s74 = sphi 0, %s60
      %s78 = sphi 0, %s78
      %s80 = sphi 0, %s78
      %s81 = sphi 0, %s80
      %s95 = sphi 0, %s81
      %s103 = sphi 0, %s105
      %s106 = sphi 0, %s103
      %s107 = sphi 0, %s106
      %s123 = sphi 0, %s107
    $region4: #{csph_forward.7} parent=1 // loop_header_branch
      %12 = sbr.rel (%p10) target = $region8
    $region5: #{csph_forward.7} parent=1 // loop_body
      %s14 = ssub.s32 %s9, 1
      %s15 = ssub.s32 %s9, 2
      %s22 = sadd.s32 1, %s17
      %p23 = scmp.ge.s32.totalorder %s22, 2
      %s24 = scalar_select %p23, 0, %s22
      %s25 = sadd.s32 1, %s16
      %s26 = scalar_select %p23, %s25, %s16
      %p27 = scmp.ge.s32.totalorder %s26, 2
      %s28 = scalar_select %p27, 0, %s26
      %s29 = ssub.s32 %s16, %s28
      %s30 = ssub.s32 %s17, %s24
      %s31 = sor.u32 %s29, %s30
      %p32 = scmp.eq.s32.totalorder %s31, 0
      %s34 = sadd.s32 %s33, 1
      %s35 = scalar_select %p32, %s33, %s34
      %p38 = pneg %p32
      %p39 = scmp.eq.s32.totalorder %s9, 3
      %p40 = por %p38, %p39
      %p41 = scmp.ne.s32.totalorder %s33, %s36
      %p42 = scmp.eq.s32.totalorder %s9, 0
      %p43 = por %p41, %p42
      %p44 = scmp.ne.s32.totalorder %s33, %s36
      %p45 = scmp.eq.s32.totalorder %s14, 3
      %p46 = por %p44, %p45
      %p47 = scmp.ne.s32.totalorder %s36, %s37
      %p48 = scmp.eq.s32.totalorder %s14, 0
      %p49 = por %p47, %p48
      %p50 = scmp.ne.s32.totalorder %s36, %s37
      %p51 = scmp.eq.s32.totalorder %s15, 3
      %p52 = por %p50, %p51
      %p54 = scmp.ne.s32.totalorder %s37, %s53
      %p55 = scmp.eq.s32.totalorder %s15, 0
      %p56 = por %p54, %p55
      %s58 = sadd.s32 %s57, 1
      %p61 = scmp.eq.s32.totalorder %s9, 3
      %p62 = scmp.ne.s32.totalorder %s57, %s59
      %p63 = scmp.eq.s32.totalorder %s9, 0
      %p64 = por %p62, %p63
      %p65 = scmp.ne.s32.totalorder %s57, %s59
      %p66 = scmp.eq.s32.totalorder %s14, 3
      %p67 = por %p65, %p66
      %p68 = scmp.ne.s32.totalorder %s59, %s60
      %p69 = scmp.eq.s32.totalorder %s14, 0
      %p70 = por %p68, %p69
      %p71 = scmp.ne.s32.totalorder %s59, %s60
      %p72 = scmp.eq.s32.totalorder %s15, 3
      %p73 = por %p71, %p72
      %p75 = scmp.ne.s32.totalorder %s60, %s74
      %p76 = scmp.eq.s32.totalorder %s15, 0
      %p77 = por %p75, %p76
      %s79 = sadd.s32 %s78, 1
      %p82 = scmp.eq.s32.totalorder %s9, 3
      %p83 = scmp.ne.s32.totalorder %s78, %s80
      %p84 = scmp.eq.s32.totalorder %s9, 0
      %p85 = por %p83, %p84
      %p86 = scmp.ne.s32.totalorder %s78, %s80
      %p87 = scmp.eq.s32.totalorder %s14, 3
      %p88 = por %p86, %p87
      %p89 = scmp.ne.s32.totalorder %s80, %s81
      %p90 = scmp.eq.s32.totalorder %s14, 0
      %p91 = por %p89, %p90
      %p92 = scmp.ne.s32.totalorder %s80, %s81
      %p93 = scmp.eq.s32.totalorder %s15, 3
      %p94 = por %p92, %p93
      %p96 = scmp.ne.s32.totalorder %s81, %s95
      %p97 = scmp.eq.s32.totalorder %s15, 0
      %p98 = por %p96, %p97
      %s99 = ssub.s32 %s16, %s28
      %s100 = ssub.s32 %s17, %s24
      %s101 = sor.u32 %s99, %s100
      %p102 = scmp.eq.s32.totalorder %s101, 0
      %s104 = sadd.s32 %s103, 1
      %s105 = scalar_select %p102, %s103, %s104
      %p108 = pneg %p102
      %p109 = scmp.eq.s32.totalorder %s9, 3
      %p110 = por %p108, %p109
      %p111 = scmp.ne.s32.totalorder %s103, %s106
      %p112 = scmp.eq.s32.totalorder %s9, 0
      %p113 = por %p111, %p112
      %p114 = scmp.ne.s32.totalorder %s103, %s106
      %p115 = scmp.eq.s32.totalorder %s14, 3
      %p116 = por %p114, %p115
      %p117 = scmp.ne.s32.totalorder %s106, %s107
      %p118 = scmp.eq.s32.totalorder %s14, 0
      %p119 = por %p117, %p118
      %p120 = scmp.ne.s32.totalorder %s106, %s107
      %p121 = scmp.eq.s32.totalorder %s15, 3
      %p122 = por %p120, %p121
      %p124 = scmp.ne.s32.totalorder %s107, %s123
      %p125 = scmp.eq.s32.totalorder %s15, 0
      %p126 = por %p124, %p125
      %p127 = scmp.le.s32.totalorder 1, %s9
      %p128 = scmp.lt.s32.totalorder %s9, 5
      %p129 = pnand %p127, %p128
      %p130 = pneg %p129
      // Predicated region
      $region9: #{csph_forward.7} parent=5 // pred_check
        _
      $region10: #{csph_forward.7} parent=5 // pred_check_branch
        %132 = sbr.rel (%p129) target = $region12
      $region11: #{csph_forward.7} parent=5 // pred_region
        %s133 = ssub.s32 %s9, 1
        // Predicated region
        $region13: #{csph_forward.7} parent=11 // pred_check
          %p134 = pneg %p70
        $region14: #{csph_forward.7} parent=11 // pred_check_branch
          %136 = sbr.rel (%p134) target = $region16
        $region15: #{csph_forward.7} parent=11 // pred_region
          _
        $region16: #{csph_forward.7} parent=11 // pred_fallthru
          _
        // Predicated region
        $region17: #{csph_forward.7} parent=11 // pred_check
          %p137 = pneg %p91
        $region18: #{csph_forward.7} parent=11 // pred_check_branch
          %139 = sbr.rel (%p137) target = $region20
        $region19: #{csph_forward.7} parent=11 // pred_region
          _
        $region20: #{csph_forward.7} parent=11 // pred_fallthru
          _
      $region12: #{csph_forward.7} parent=5 // pred_fallthru
        _
      %p140 = scmp.lt.s32.totalorder %s9, 4
      // Predicated region
      $region21: #{csph_forward.7} parent=5 // pred_check
        %p141 = pneg %p140
      $region22: #{csph_forward.7} parent=5 // pred_check_branch
        %143 = sbr.rel (%p141) target = $region24
      $region23: #{csph_forward.7} parent=5 // pred_region
        // Predicated region
        $region25: #{csph_forward.7} parent=23 // pred_check
          %p144 = pneg %p43
        $region26: #{csph_forward.7} parent=23 // pred_check_branch
          %146 = sbr.rel (%p144) target = $region28
        $region27: #{csph_forward.7} parent=23 // pred_region
          %p147 = scmp.lt.s32.totalorder %s16, 1
          %s148 = scalar_select %p147, %s16, 1
          %p149 = scmp.lt.s32.totalorder %s17, 1
          %s150 = scalar_select %p149, %s17, 1
          %s151 = smul.addr %s148, 2
          %s152 = sadd.s32 %s150, %s151
          %s153 = smul.addr %s152, 4
          %s154 = scalar_lea.vmem %s0, %s153
        $region28: #{csph_forward.7} parent=23 // pred_fallthru
          _
      $region24: #{csph_forward.7} parent=5 // pred_fallthru
        _
      %p155 = scmp.le.s32.totalorder 1, %s9
      %p156 = scmp.lt.s32.totalorder %s9, 5
      %p157 = pnand %p155, %p156
      %p158 = pneg %p157
      // Predicated region
      $region29: #{csph_forward.7} parent=5 // pred_check
        _
      $region30: #{csph_forward.7} parent=5 // pred_check_branch
        %160 = sbr.rel (%p157) target = $region32
      $region31: #{csph_forward.7} parent=5 // pred_region
        %s161 = ssub.s32 %s9, 1
        %p162 = scmp.lt.s32.totalorder %s18, 1
        %s163 = scalar_select %p162, %s18, 1
        %p164 = scmp.lt.s32.totalorder %s19, 1
        %s165 = scalar_select %p164, %s19, 1
        %s166 = smul.addr %s163, 2
        %s167 = sadd.s32 %s165, %s166
        %s168 = smul.addr %s167, 4
        %s169 = scalar_lea.vmem %s0, %s168
        %p170 = pneg %p49
        %p171 = pneg %p46
        %p172 = pneg %p70
        %p173 = pneg %p67
        %p174 = pneg %p91
        %p175 = pneg %p88
        %p176 = pneg %p119
        %p177 = pneg %p116
        %s178 = sand.u32 %s106, 1
        %s179 = sand.u32 %s106, 1
        %s180 = smul.addr %s179, 32
        %s181 = scalar_lea.vmem [#allocation2], %s180
        %p182 = scmp.lt.s32.totalorder %s18, 1
        %s183 = scalar_select %p182, %s18, 1
        %p184 = scmp.lt.s32.totalorder %s19, 1
        %s185 = scalar_select %p184, %s19, 1
        %s186 = smul.addr %s183, 2
        %s187 = sadd.s32 %s185, %s186
        %s188 = smul.addr %s187, 4
        %s189 = scalar_lea.vmem %s0, %s188
        %v190 = vld [vmem:[%s1] sm:$0xff]
        %v191 = vld [vmem:[%s1 + $0x8] sm:$0xff]
        %v192 = vld [vmem:[%s1 + $0x10] sm:$0xff]
        %v193 = vld [vmem:[%s1 + $0x18] sm:$0xff]
        %v194 = vld [vmem:[%s189] sm:$0xf]
        %v195 = vld [vmem:[%s2] sm:$0xff]
        %v196 = vld [vmem:[%s2 + $0x8] sm:$0xff]
        %v197 = vld [vmem:[%s2 + $0x10] sm:$0xff]
        %v198 = vld [vmem:[%s2 + $0x18] sm:$0xff]
        %200 = vset.pattern.permute.xlu0 0
        %201 = vperm.xlu0 %200, %v195
        %v202 = vpop.permute.xlu0 %201
        %205 = vset.pattern.permute.xlu0 0
        %206 = vperm.xlu0 %205, %v196
        %v207 = vpop.permute.xlu0 %206
        %210 = vset.pattern.permute.xlu0 0
        %211 = vperm.xlu0 %210, %v197
        %v212 = vpop.permute.xlu0 %211
        %215 = vset.pattern.permute.xlu0 0
        %216 = vperm.xlu0 %215, %v198
        %v217 = vpop.permute.xlu0 %216
        %vm219 = vcmask 31744
        %v221 = vsel %vm219, %v190, 0
        %v224 = vsel %vm219, %v191, 0
        %v227 = vsel %vm219, %v192, 0
        %v230 = vsel %vm219, %v193, 0
        %vm232 = vcmask 1043456
        %v234 = vsel %vm232, %v194, 0
        %236 = vmatprep.subr.mxu0 0.0
        %237 = vmatpush1.msra.mxu0 0.0
        %238 = vmatprep.subr.mxu0 0.0
        %239 = vmatpush1.msra.mxu0 0.0
        %240 = vmatprep.subr.mxu0 0.0
        %241 = vmatpush1.msra.mxu0 0.0
        %242 = vmatprep.subr.mxu0 0.0
        %243 = vmatpush1.msra.mxu0 0.0
        %244 = vmatprep.subr.mxu0 0.0
        %245 = vmatpush1.msra.mxu0 0.0
        %246 = vmatprep.subr.mxu0 0.0
        %247 = vmatpush1.msra.mxu0 0.0
        %248 = vmatprep.subr.mxu0 0.0
        %249 = vmatpush1.msra.mxu0 0.0
        %250 = vmatprep.subr.mxu0 0.0
        %251 = vmatpush1.msra.mxu0 0.0
        %252 = vmatprep.subr.mxu0 0.0
        %253 = vmatpush1.msra.mxu0 0.0
        %254 = vmatprep.subr.mxu0 0.0
        %255 = vmatpush1.msra.mxu0 0.0
        %256 = vmatprep.subr.mxu0 0.0
        %257 = vmatpush1.msra.mxu0 0.0
        %258 = vmatprep.subr.mxu0 0.0
        %259 = vmatpush1.msra.mxu0 0.0
        %260 = vmatprep.subr.mxu0 0.0
        %261 = vmatpush1.msra.mxu0 0.0
        %262 = vmatprep.subr.mxu0 0.0
        %263 = vmatpush1.msra.mxu0 0.0
        %264 = vmatprep.subr.mxu0 0.0
        %265 = vmatpush1.msra.mxu0 0.0
        %266 = vmatprep.subr.mxu0 0.0
        %267 = vmatpush1.msra.mxu0 %v234
        %268 = vmatprep.subr.mxu0 0.0
        %269 = vmatpush2.msra.mxu0 0.0
        %270 = vmatprep.subr.mxu0 0.0
        %271 = vmatpush2.msra.mxu0 0.0
        %272 = vmatprep.subr.mxu0 0.0
        %273 = vmatpush2.msra.mxu0 0.0
        %274 = vmatprep.subr.mxu0 0.0
        %275 = vmatpush2.msra.mxu0 0.0
        %276 = vmatprep.subr.mxu0 0.0
        %277 = vmatpush2.msra.mxu0 0.0
        %278 = vmatprep.subr.mxu0 0.0
        %279 = vmatpush2.msra.mxu0 0.0
        %280 = vmatprep.subr.mxu0 0.0
        %281 = vmatpush2.msra.mxu0 0.0
        %282 = vmatprep.subr.mxu0 0.0
        %283 = vmatpush2.msra.mxu0 0.0
        %284 = vmatprep.subr.mxu0 0.0
        %285 = vmatpush2.msra.mxu0 0.0
        %286 = vmatprep.subr.mxu0 0.0
        %287 = vmatpush2.msra.mxu0 0.0
        %288 = vmatprep.subr.mxu0 0.0
        %289 = vmatpush2.msra.mxu0 0.0
        %290 = vmatprep.subr.mxu0 0.0
        %291 = vmatpush2.msra.mxu0 0.0
        %292 = vmatprep.subr.mxu0 0.0
        %293 = vmatpush2.msra.mxu0 0.0
        %294 = vmatprep.subr.mxu0 0.0
        %295 = vmatpush2.msra.mxu0 0.0
        %296 = vmatprep.subr.mxu0 0.0
        %297 = vmatpush2.msra.mxu0 0.0
        %298 = vmatprep.subr.mxu0 0.0
        %299 = vmatpush2.msra.mxu0 0.0
        %300 = vmatprep.mubr.f32.mxu0 0.0
        %301 = vmatmul.mubr.f32.gmra.mxu0 %v221
        %v302 = vpop.f32.mrf.mxu0
        %v303 = vadd.f32 %v202, %v302
        %v304 = vpop.f32.mrf.mxu0
        %305 = vmatprep.mubr.f32.mxu0 0.0
        %306 = vmatmul.mubr.f32.gmra.mxu0 %v224
        %v307 = vpop.f32.mrf.mxu0
        %v308 = vadd.f32 %v207, %v307
        %v309 = vpop.f32.mrf.mxu0
        %310 = vmatprep.mubr.f32.mxu0 0.0
        %311 = vmatmul.mubr.f32.gmra.mxu0 %v227
        %v312 = vpop.f32.mrf.mxu0
        %v313 = vadd.f32 %v212, %v312
        %v314 = vpop.f32.mrf.mxu0
        %315 = vmatprep.mubr.f32.mxu0 0.0
        %316 = vmatmul.mubr.f32.gmra.mxu0 %v230
        %v317 = vpop.f32.mrf.mxu0
        %v318 = vadd.f32 %v217, %v317
        %v319 = vpop.f32.mrf.mxu0
        %320 = vdwg.mxu0
        %v321 = vmax.f32 %v303, 0.0
        %v322 = vmax.f32 %v308, 0.0
        %v323 = vmax.f32 %v313, 0.0
        %v324 = vmax.f32 %v318, 0.0
        %325 = vst [vmem:[%s181] sm:$0xff] %v321
        %326 = vst [vmem:[%s181 + $0x8] sm:$0xff] %v322
        %327 = vst [vmem:[%s181 + $0x10] sm:$0xff] %v323
        %328 = vst [vmem:[%s181 + $0x18] sm:$0xff] %v324
        %s329 = sand.u32 %s106, 1
        %s330 = sand.u32 %s106, 1
        %s331 = smul.addr %s330, 32
        %s332 = scalar_lea.vmem [#allocation2], %s331
        // Predicated region
        $region33: #{csph_forward.7} parent=31 // pred_check
          %p333 = pneg %p116
        $region34: #{csph_forward.7} parent=31 // pred_check_branch
          %335 = sbr.rel (%p333) target = $region36
        $region35: #{csph_forward.7} parent=31 // pred_region
          %s336 = smul.addr %s18, 8
          %s337 = sadd.s32 %s19, %s336
          %s338 = smul.addr %s337, 8
          %s339 = scalar_lea.vmem %s3, %s338
          // Predicated region
          $region37: #{csph_forward.7} parent=35 // pred_check
            _
          $region38: #{csph_forward.7} parent=35 // pred_check_branch
            %341 = sbr.rel (0) target = $region40
          $region39: #{csph_forward.7} parent=35 // pred_region
            // Predicated region
            $region41: #{csph_forward.7} parent=39 // pred_check
              _
            $region42: #{csph_forward.7} parent=39 // pred_check_branch
              %343 = sbr.rel (0) target = $region44
            $region43: #{csph_forward.7} parent=39 // pred_region
              // Predicated region
              $region56: #{csph_forward.7} parent=43 // pred_check
                _
              $region57: #{csph_forward.7} parent=43 // pred_check_branch
                %365 = sbr.rel (0) target = $region59
              $region58: #{csph_forward.7} parent=43 // pred_region
                loop: start=0, step=1, limit=1
                $region60: #{csph_forward.7} parent=58 // loop_pre_header
                  _
                $region61: #{csph_forward.7} parent=58 // loop_header
                  %s367 = sphi 0, %s371
                  %p368 = scmp.ge.s32.totalorder %s367, 1
                  %s372 = sphi %s332, %s332
                  %s373 = sphi %s339, %s339
                $region62: #{csph_forward.7} parent=58 // loop_header_branch
                  %370 = sbr.rel (%p368) target = $region66
                $region63: #{csph_forward.7} parent=58 // loop_body
                  %v374 = vld [vmem:[%s372] sm:$0xff]
                  %375 = vst [vmem:[%s373] sm:$0xff] %v374
                  %v376 = vld [vmem:[%s372 + $0x8] sm:$0xff]
                  %377 = vst [vmem:[%s373 + $0x10] sm:$0xff] %v376
                  %v378 = vld [vmem:[%s372 + $0x10] sm:$0xff]
                  %379 = vst [vmem:[%s373 + $0x20] sm:$0xff] %v378
                  %v380 = vld [vmem:[%s372 + $0x18] sm:$0xff]
                  %381 = vst [vmem:[%s373 + $0x30] sm:$0xff] %v380
                $region64: #{csph_forward.7} parent=58 // loop_footer
                  %s371 = sadd.s32 1, %s367
                $region65: #{csph_forward.7} parent=58 // loop_footer_branch
                  %366 = sbr.rel target = $region61
                $region66: #{csph_forward.7} parent=58 // loop_exit
                  _
              $region59: #{csph_forward.7} parent=43 // pred_fallthru
                _
              // Predicated region
              $region67: #{csph_forward.7} parent=43 // pred_check
                _
              $region68: #{csph_forward.7} parent=43 // pred_check_branch
                %383 = sbr.rel target = $region70
              $region69: #{csph_forward.7} parent=43 // pred_region
                _
              $region70: #{csph_forward.7} parent=43 // pred_fallthru
                _
            $region44: #{csph_forward.7} parent=39 // pred_fallthru
              _
            // Predicated region
            $region45: #{csph_forward.7} parent=39 // pred_check
              _
            $region46: #{csph_forward.7} parent=39 // pred_check_branch
              %345 = sbr.rel target = $region48
            $region47: #{csph_forward.7} parent=39 // pred_region
              %s347 = ssub.s32 256, 1
              loop: start=0, step=1, limit=1
              $region49: #{csph_forward.7} parent=47 // loop_pre_header
                _
              $region50: #{csph_forward.7} parent=47 // loop_header
                %s349 = sphi 0, %s353
                %p350 = scmp.ge.s32.totalorder %s349, 1
                %s354 = sphi %s332, %s332
                %s355 = sphi %s339, %s339
              $region51: #{csph_forward.7} parent=47 // loop_header_branch
                %352 = sbr.rel (%p350) target = $region55
              $region52: #{csph_forward.7} parent=47 // loop_body
                %v356 = vld [vmem:[%s354] sm:%s347]
                %357 = vst [vmem:[%s355] sm:%s347] %v356
                %v358 = vld [vmem:[%s354 + $0x8] sm:%s347]
                %359 = vst [vmem:[%s355 + $0x10] sm:%s347] %v358
                %v360 = vld [vmem:[%s354 + $0x10] sm:%s347]
                %361 = vst [vmem:[%s355 + $0x20] sm:%s347] %v360
                %v362 = vld [vmem:[%s354 + $0x18] sm:%s347]
                %363 = vst [vmem:[%s355 + $0x30] sm:%s347] %v362
              $region53: #{csph_forward.7} parent=47 // loop_footer
                %s353 = sadd.s32 1, %s349
              $region54: #{csph_forward.7} parent=47 // loop_footer_branch
                %348 = sbr.rel target = $region50
              $region55: #{csph_forward.7} parent=47 // loop_exit
                _
            $region48: #{csph_forward.7} parent=39 // pred_fallthru
              _
          $region40: #{csph_forward.7} parent=35 // pred_fallthru
            _
          %384 = vnop
        $region36: #{csph_forward.7} parent=31 // pred_fallthru
          _
      $region32: #{csph_forward.7} parent=5 // pred_fallthru
        _
      %p385 = scmp.le.s32.totalorder 2, %s9
      // Predicated region
      $region71: #{csph_forward.7} parent=5 // pred_check
        %p386 = pneg %p385
      $region72: #{csph_forward.7} parent=5 // pred_check_branch
        %388 = sbr.rel (%p386) target = $region74
      $region73: #{csph_forward.7} parent=5 // pred_region
        %s389 = ssub.s32 %s9, 2
        // Predicated region
        $region75: #{csph_forward.7} parent=73 // pred_check
          %p390 = pneg %p122
        $region76: #{csph_forward.7} parent=73 // pred_check_branch
          %392 = sbr.rel (%p390) target = $region78
        $region77: #{csph_forward.7} parent=73 // pred_region
          %s393 = sand.u32 %s107, 1
          %s394 = sand.u32 %s107, 1
          %s395 = smul.addr %s394, 32
          %s396 = scalar_lea.vmem [#allocation2], %s395
        $region78: #{csph_forward.7} parent=73 // pred_fallthru
          _
      $region74: #{csph_forward.7} parent=5 // pred_fallthru
        _
    $region6: #{csph_forward.7} parent=1 // loop_footer
      %s13 = sadd.s32 1, %s9
    $region7: #{csph_forward.7} parent=1 // loop_footer_branch
      %8 = sbr.rel target = $region3
    $region8: #{csph_forward.7} parent=1 // loop_exit
      _

// kernel: csph_forward.6
$region0: #{csph_forward.6}
  #allocation0 [shape = 'u32[]', space=smem, size = 0x4, offset = 0x4, fixed_abs, tag = 'smem constant byte address 0x4 - core index']
  #allocation1 [shape = 'u32[144,128]{1,0:T(1,128)}', space=vmem, size = 0x12000, scoped, tag = 'internal scratch']
  %s0 = inlined_call_operand.vmem [shape: f32[2,4,8,8], index: 0, kind: input, shape index: {}]
  %s1 = inlined_call_operand.vmem [shape: f32[18,8], index: 1, kind: input, shape index: {}]
  %s2 = inlined_call_operand.vmem [shape: f32[8,18], index: 2, kind: input, shape index: {}]
  %s3 = inlined_call_operand.vmem [shape: f32[144], index: 3, kind: input, shape index: {}]
  %s4 = inlined_call_operand.vmem [shape: f32[4], index: 4, kind: input, shape index: {}]
  %s5 = inlined_call_operand.vmem [shape: f32[2,4,16,16], index: 5, kind: output, shape index: {}]
  %s6 = sld [smem:[#allocation0]]
  $region61: #{csph_forward.6} parent=0
    _
  %s8 = ssub.s32 1, %s6
  %s9 = scalar_select 0, %s8, %s6
  $region1: #{csph_forward.6} parent=0
    #allocation2 [shape = 'u8[1024]{0}', space=smem, size = 0x400, scoped, tag = 'input window, operand 3, single buffered']
    #allocation3 [shape = 's32[2]{0}', space=sflag, size = 0x8, scoped, tag = 'scoped memory for csph_forward.6']
    #allocation4 [shape = 'u8[512]{0}', space=smem, size = 0x200, scoped, tag = 'input window, operand 4, single buffered']
    #allocation5 [shape = 's32[1]{0}', space=sflag, size = 0x4, scoped, tag = 'scoped memory for csph_forward.6']
    %10 = vsyncpa [#allocation3], 0
    %11 = vsyncpa [#allocation5], 0
    loop: start=0, step=1, limit=4
    $region2: #{csph_forward.6} parent=1 // loop_pre_header
      _
    $region3: #{csph_forward.6} parent=1 // loop_header
      %s13 = sphi 0, %s17
      %p14 = scmp.ge.s32.totalorder %s13, 4
      %s23 = sphi 0, %s25
      %s26 = sphi 0, %s23
      %s27 = sphi 0, %s26
      %s43 = sphi 0, %s27
      %s47 = sphi 0, %s47
      %s49 = sphi 0, %s47
      %s50 = sphi 0, %s49
      %s64 = sphi 0, %s50
      %s68 = sphi 0, %s68
      %s70 = sphi 0, %s68
      %s71 = sphi 0, %s70
      %s85 = sphi 0, %s71
      %s89 = sphi 0, %s89
      %s91 = sphi 0, %s89
      %s92 = sphi 0, %s91
      %s106 = sphi 0, %s92
      %s110 = sphi 0, %s110
      %s112 = sphi 0, %s110
      %s113 = sphi 0, %s112
      %s127 = sphi 0, %s113
      %s133 = sphi 0, %s135
      %s136 = sphi 0, %s133
      %s137 = sphi 0, %s136
      %s153 = sphi 0, %s137
    $region4: #{csph_forward.6} parent=1 // loop_header_branch
      %16 = sbr.rel (%p14) target = $region8
    $region5: #{csph_forward.6} parent=1 // loop_body
      %s18 = ssub.s32 %s13, 1
      %s19 = ssub.s32 %s13, 2
      %s20 = sadd.s32 %s13, 1
      %s21 = ssub.s32 %s13, %s20
      %p22 = scmp.eq.s32.totalorder %s21, 0
      %s24 = sadd.s32 %s23, 1
      %s25 = scalar_select %p22, %s23, %s24
      %p28 = pneg %p22
      %p29 = scmp.eq.s32.totalorder %s13, 1
      %p30 = por %p28, %p29
      %p31 = scmp.ne.s32.totalorder %s23, %s26
      %p32 = scmp.eq.s32.totalorder %s13, 0
      %p33 = por %p31, %p32
      %p34 = scmp.ne.s32.totalorder %s23, %s26
      %p35 = scmp.eq.s32.totalorder %s18, 1
      %p36 = por %p34, %p35
      %p37 = scmp.ne.s32.totalorder %s26, %s27
      %p38 = scmp.eq.s32.totalorder %s18, 0
      %p39 = por %p37, %p38
      %p40 = scmp.ne.s32.totalorder %s26, %s27
      %p41 = scmp.eq.s32.totalorder %s19, 1
      %p42 = por %p40, %p41
      %p44 = scmp.ne.s32.totalorder %s27, %s43
      %p45 = scmp.eq.s32.totalorder %s19, 0
      %p46 = por %p44, %p45
      %s48 = sadd.s32 %s47, 1
      %p51 = scmp.eq.s32.totalorder %s13, 1
      %p52 = scmp.ne.s32.totalorder %s47, %s49
      %p53 = scmp.eq.s32.totalorder %s13, 0
      %p54 = por %p52, %p53
      %p55 = scmp.ne.s32.totalorder %s47, %s49
      %p56 = scmp.eq.s32.totalorder %s18, 1
      %p57 = por %p55, %p56
      %p58 = scmp.ne.s32.totalorder %s49, %s50
      %p59 = scmp.eq.s32.totalorder %s18, 0
      %p60 = por %p58, %p59
      %p61 = scmp.ne.s32.totalorder %s49, %s50
      %p62 = scmp.eq.s32.totalorder %s19, 1
      %p63 = por %p61, %p62
      %p65 = scmp.ne.s32.totalorder %s50, %s64
      %p66 = scmp.eq.s32.totalorder %s19, 0
      %p67 = por %p65, %p66
      %s69 = sadd.s32 %s68, 1
      %p72 = scmp.eq.s32.totalorder %s13, 1
      %p73 = scmp.ne.s32.totalorder %s68, %s70
      %p74 = scmp.eq.s32.totalorder %s13, 0
      %p75 = por %p73, %p74
      %p76 = scmp.ne.s32.totalorder %s68, %s70
      %p77 = scmp.eq.s32.totalorder %s18, 1
      %p78 = por %p76, %p77
      %p79 = scmp.ne.s32.totalorder %s70, %s71
      %p80 = scmp.eq.s32.totalorder %s18, 0
      %p81 = por %p79, %p80
      %p82 = scmp.ne.s32.totalorder %s70, %s71
      %p83 = scmp.eq.s32.totalorder %s19, 1
      %p84 = por %p82, %p83
      %p86 = scmp.ne.s32.totalorder %s71, %s85
      %p87 = scmp.eq.s32.totalorder %s19, 0
      %p88 = por %p86, %p87
      %s90 = sadd.s32 %s89, 1
      %p93 = scmp.eq.s32.totalorder %s13, 1
      %p94 = scmp.ne.s32.totalorder %s89, %s91
      %p95 = scmp.eq.s32.totalorder %s13, 0
      %p96 = por %p94, %p95
      %p97 = scmp.ne.s32.totalorder %s89, %s91
      %p98 = scmp.eq.s32.totalorder %s18, 1
      %p99 = por %p97, %p98
      %p100 = scmp.ne.s32.totalorder %s91, %s92
      %p101 = scmp.eq.s32.totalorder %s18, 0
      %p102 = por %p100, %p101
      %p103 = scmp.ne.s32.totalorder %s91, %s92
      %p104 = scmp.eq.s32.totalorder %s19, 1
      %p105 = por %p103, %p104
      %p107 = scmp.ne.s32.totalorder %s92, %s106
      %p108 = scmp.eq.s32.totalorder %s19, 0
      %p109 = por %p107, %p108
      %s111 = sadd.s32 %s110, 1
      %p114 = scmp.eq.s32.totalorder %s13, 1
      %p115 = scmp.ne.s32.totalorder %s110, %s112
      %p116 = scmp.eq.s32.totalorder %s13, 0
      %p117 = por %p115, %p116
      %p118 = scmp.ne.s32.totalorder %s110, %s112
      %p119 = scmp.eq.s32.totalorder %s18, 1
      %p120 = por %p118, %p119
      %p121 = scmp.ne.s32.totalorder %s112, %s113
      %p122 = scmp.eq.s32.totalorder %s18, 0
      %p123 = por %p121, %p122
      %p124 = scmp.ne.s32.totalorder %s112, %s113
      %p125 = scmp.eq.s32.totalorder %s19, 1
      %p126 = por %p124, %p125
      %p128 = scmp.ne.s32.totalorder %s113, %s127
      %p129 = scmp.eq.s32.totalorder %s19, 0
      %p130 = por %p128, %p129
      %s131 = ssub.s32 %s13, %s20
      %p132 = scmp.eq.s32.totalorder %s131, 0
      %s134 = sadd.s32 %s133, 1
      %s135 = scalar_select %p132, %s133, %s134
      %p138 = pneg %p132
      %p139 = scmp.eq.s32.totalorder %s13, 1
      %p140 = por %p138, %p139
      %p141 = scmp.ne.s32.totalorder %s133, %s136
      %p142 = scmp.eq.s32.totalorder %s13, 0
      %p143 = por %p141, %p142
      %p144 = scmp.ne.s32.totalorder %s133, %s136
      %p145 = scmp.eq.s32.totalorder %s18, 1
      %p146 = por %p144, %p145
      %p147 = scmp.ne.s32.totalorder %s136, %s137
      %p148 = scmp.eq.s32.totalorder %s18, 0
      %p149 = por %p147, %p148
      %p150 = scmp.ne.s32.totalorder %s136, %s137
      %p151 = scmp.eq.s32.totalorder %s19, 1
      %p152 = por %p150, %p151
      %p154 = scmp.ne.s32.totalorder %s137, %s153
      %p155 = scmp.eq.s32.totalorder %s19, 0
      %p156 = por %p154, %p155
      %p157 = scmp.le.s32.totalorder 1, %s13
      %p158 = scmp.lt.s32.totalorder %s13, 3
      %p159 = pnand %p157, %p158
      %p160 = pneg %p159
      // Predicated region
      $region9: #{csph_forward.6} parent=5 // pred_check
        _
      $region10: #{csph_forward.6} parent=5 // pred_check_branch
        %162 = sbr.rel (%p159) target = $region12
      $region11: #{csph_forward.6} parent=5 // pred_region
        %s163 = ssub.s32 %s13, 1
        // Predicated region
        $region13: #{csph_forward.6} parent=11 // pred_check
          %p164 = pneg %p60
        $region14: #{csph_forward.6} parent=11 // pred_check_branch
          %166 = sbr.rel (%p164) target = $region16
        $region15: #{csph_forward.6} parent=11 // pred_region
          _
        $region16: #{csph_forward.6} parent=11 // pred_fallthru
          _
        // Predicated region
        $region17: #{csph_forward.6} parent=11 // pred_check
          %p167 = pneg %p81
        $region18: #{csph_forward.6} parent=11 // pred_check_branch
          %169 = sbr.rel (%p167) target = $region20
        $region19: #{csph_forward.6} parent=11 // pred_region
          _
        $region20: #{csph_forward.6} parent=11 // pred_fallthru
          _
        // Predicated region
        $region21: #{csph_forward.6} parent=11 // pred_check
          %p170 = pneg %p102
        $region22: #{csph_forward.6} parent=11 // pred_check_branch
          %172 = sbr.rel (%p170) target = $region24
        $region23: #{csph_forward.6} parent=11 // pred_region
          %s174 = ssub.s32 32, 32
          %175 = vsyncadd [#allocation3], %s174
          %s177 = sshll.u32 %s3, 4
          %s178 = int_to_ptr.vmem [resolvable:$true] %s177
          %180 = dma.vmem_to_smem %s178, 32, [#allocation2], [#allocation3]
        $region24: #{csph_forward.6} parent=11 // pred_fallthru
          _
        // Predicated region
        $region25: #{csph_forward.6} parent=11 // pred_check
          %p181 = pneg %p123
        $region26: #{csph_forward.6} parent=11 // pred_check_branch
          %183 = sbr.rel (%p181) target = $region28
        $region27: #{csph_forward.6} parent=11 // pred_region
          %s185 = ssub.s32 16, 16
          %186 = vsyncadd [#allocation5], %s185
          %s188 = sshll.u32 %s4, 4
          %s189 = int_to_ptr.vmem [resolvable:$true] %s188
          %191 = dma.vmem_to_smem %s189, 16, [#allocation4], [#allocation5]
        $region28: #{csph_forward.6} parent=11 // pred_fallthru
          _
      $region12: #{csph_forward.6} parent=5 // pred_fallthru
        _
      %p192 = scmp.lt.s32.totalorder %s13, 2
      // Predicated region
      $region29: #{csph_forward.6} parent=5 // pred_check
        %p193 = pneg %p192
      $region30: #{csph_forward.6} parent=5 // pred_check_branch
        %195 = sbr.rel (%p193) target = $region32
      $region31: #{csph_forward.6} parent=5 // pred_region
        // Predicated region
        $region33: #{csph_forward.6} parent=31 // pred_check
          %p196 = pneg %p33
        $region34: #{csph_forward.6} parent=31 // pred_check_branch
          %198 = sbr.rel (%p196) target = $region36
        $region35: #{csph_forward.6} parent=31 // pred_region
          %p199 = scmp.lt.s32.totalorder %s13, 1
          %s200 = scalar_select %p199, %s13, 1
          %s201 = smul.addr %s200, 4
          %s202 = smul.addr %s201, 8
          %s203 = scalar_lea.vmem %s0, %s202
        $region36: #{csph_forward.6} parent=31 // pred_fallthru
          _
      $region32: #{csph_forward.6} parent=5 // pred_fallthru
        _
      %p204 = scmp.le.s32.totalorder 1, %s13
      %p205 = scmp.lt.s32.totalorder %s13, 3
      %p206 = pnand %p204, %p205
      %p207 = pneg %p206
      // Predicated region
      $region37: #{csph_forward.6} parent=5 // pred_check
        _
      $region38: #{csph_forward.6} parent=5 // pred_check_branch
        %209 = sbr.rel (%p206) target = $region40
      $region39: #{csph_forward.6} parent=5 // pred_region
        %s210 = ssub.s32 %s13, 1
        // Predicated region
        $region41: #{csph_forward.6} parent=39 // pred_check
          %p211 = pneg %p102
        $region42: #{csph_forward.6} parent=39 // pred_check_branch
          %213 = sbr.rel (%p211) target = $region44
        $region43: #{csph_forward.6} parent=39 // pred_region
          %214 = dma.done [#allocation3], 32
        $region44: #{csph_forward.6} parent=39 // pred_fallthru
          _
        // Predicated region
        $region45: #{csph_forward.6} parent=39 // pred_check
          %p215 = pneg %p123
        $region46: #{csph_forward.6} parent=39 // pred_check_branch
          %217 = sbr.rel (%p215) target = $region48
        $region47: #{csph_forward.6} parent=39 // pred_region
          %218 = dma.done [#allocation5], 16
        $region48: #{csph_forward.6} parent=39 // pred_fallthru
          _
        %219 = sfence
        %p220 = scmp.lt.s32.totalorder %s18, 1
        %s221 = scalar_select %p220, %s18, 1
        %s222 = smul.addr %s221, 4
        %s223 = smul.addr %s222, 8
        %s224 = scalar_lea.vmem %s0, %s223
        %p225 = pneg %p39
        %p226 = pneg %p36
        %p227 = pneg %p60
        %p228 = pneg %p57
        %p229 = pneg %p81
        %p230 = pneg %p78
        %p231 = pneg %p102
        %p232 = pneg %p99
        %p233 = pneg %p123
        %p234 = pneg %p120
        %p235 = pneg %p149
        %p236 = pneg %p146
        %p237 = scmp.lt.s32.totalorder %s18, 1
        %s238 = scalar_select %p237, %s18, 1
        %s239 = smul.addr %s238, 8
        %s240 = smul.addr %s239, 8
        %s241 = scalar_lea.vmem %s5, %s240
        %p242 = scmp.lt.s32.totalorder %s18, 1
        %s243 = scalar_select %p242, %s18, 1
        %s244 = smul.addr %s243, 4
        %s245 = smul.addr %s244, 8
        %s246 = scalar_lea.vmem %s0, %s245
        %p247 = scmp.lt.s32.totalorder %s18, 1
        %s248 = scalar_select %p247, %s18, 1
        %s249 = smul.addr %s248, 8
        %s250 = smul.addr %s249, 8
        %s251 = scalar_lea.vmem %s5, %s250
        %v252 = vld [vmem:[%s246] sm:$0xff]
        %v253 = vld [vmem:[%s1] sm:$0xff]
        %v254 = vld [vmem:[%s1 + $0x8] sm:$0xff]
        %v255 = vld [vmem:[%s1 + $0x10] sm:$0x3]
        %vm256 = vcmask 64512
        %v258 = vsel %vm256, %v253, 0
        %v261 = vsel %vm256, %v254, 0
        %v264 = vsel %vm256, %v255, 0
        %266 = vmatprep.subr.mxu0 0.0
        %267 = vmatpush1.msra.mxu0 0.0
        %268 = vmatprep.subr.mxu0 0.0
        %269 = vmatpush1.msra.mxu0 0.0
        %270 = vmatprep.subr.mxu0 0.0
        %271 = vmatpush1.msra.mxu0 0.0
        %272 = vmatprep.subr.mxu0 0.0
        %273 = vmatpush1.msra.mxu0 0.0
        %274 = vmatprep.subr.mxu0 0.0
        %275 = vmatpush1.msra.mxu0 0.0
        %276 = vmatprep.subr.mxu0 0.0
        %277 = vmatpush1.msra.mxu0 0.0
        %278 = vmatprep.subr.mxu0 0.0
        %279 = vmatpush1.msra.mxu0 0.0
        %280 = vmatprep.subr.mxu0 0.0
        %281 = vmatpush1.msra.mxu0 0.0
        %282 = vmatprep.subr.mxu0 0.0
        %283 = vmatpush1.msra.mxu0 0.0
        %284 = vmatprep.subr.mxu0 0.0
        %285 = vmatpush1.msra.mxu0 0.0
        %286 = vmatprep.subr.mxu0 0.0
        %287 = vmatpush1.msra.mxu0 0.0
        %288 = vmatprep.subr.mxu0 0.0
        %289 = vmatpush1.msra.mxu0 0.0
        %290 = vmatprep.subr.mxu0 0.0
        %291 = vmatpush1.msra.mxu0 0.0
        %292 = vmatprep.subr.mxu0 0.0
        %293 = vmatpush1.msra.mxu0 0.0
        %294 = vmatprep.subr.mxu0 0.0
        %295 = vmatpush1.msra.mxu0 0.0
        %296 = vmatprep.subr.mxu0 0.0
        %297 = vmatpush1.msra.mxu0 %v252
        %298 = vmatprep.subr.mxu0 0.0
        %299 = vmatpush2.msra.mxu0 0.0
        %300 = vmatprep.subr.mxu0 0.0
        %301 = vmatpush2.msra.mxu0 0.0
        %302 = vmatprep.subr.mxu0 0.0
        %303 = vmatpush2.msra.mxu0 0.0
        %304 = vmatprep.subr.mxu0 0.0
        %305 = vmatpush2.msra.mxu0 0.0
        %306 = vmatprep.subr.mxu0 0.0
        %307 = vmatpush2.msra.mxu0 0.0
        %308 = vmatprep.subr.mxu0 0.0
        %309 = vmatpush2.msra.mxu0 0.0
        %310 = vmatprep.subr.mxu0 0.0
        %311 = vmatpush2.msra.mxu0 0.0
        %312 = vmatprep.subr.mxu0 0.0
        %313 = vmatpush2.msra.mxu0 0.0
        %314 = vmatprep.subr.mxu0 0.0
        %315 = vmatpush2.msra.mxu0 0.0
        %316 = vmatprep.subr.mxu0 0.0
        %317 = vmatpush2.msra.mxu0 0.0
        %318 = vmatprep.subr.mxu0 0.0
        %319 = vmatpush2.msra.mxu0 0.0
        %320 = vmatprep.subr.mxu0 0.0
        %321 = vmatpush2.msra.mxu0 0.0
        %322 = vmatprep.subr.mxu0 0.0
        %323 = vmatpush2.msra.mxu0 0.0
        %324 = vmatprep.subr.mxu0 0.0
        %325 = vmatpush2.msra.mxu0 0.0
        %326 = vmatprep.subr.mxu0 0.0
        %327 = vmatpush2.msra.mxu0 0.0
        %328 = vmatprep.subr.mxu0 0.0
        %329 = vmatpush2.msra.mxu0 0.0
        %330 = vmatprep.mubr.f32.mxu0 0.0
        %331 = vmatmul.mubr.f32.gmra.mxu0 %v258
        %v332 = vpop.f32.mrf.mxu0
        %v333 = vadd.f32 0.0, %v332
        %v334 = vpop.f32.mrf.mxu0
        %335 = vmatprep.mubr.f32.mxu0 0.0
        %336 = vmatmul.mubr.f32.gmra.mxu0 %v261
        %v337 = vpop.f32.mrf.mxu0
        %v338 = vadd.f32 0.0, %v337
        %v339 = vpop.f32.mrf.mxu0
        %340 = vmatprep.mubr.f32.mxu0 0.0
        %341 = vmatmul.mubr.f32.gmra.mxu0 %v264
        %v342 = vpop.f32.mrf.mxu0
        %v343 = vadd.f32 0.0, %v342
        %v344 = vpop.f32.mrf.mxu0
        %345 = vdwg.mxu0
        %v346 = vld [vmem:[%s2] sm:$0xff]
        %v348 = vsel %vm256, %v333, 0
        %v351 = vsel %vm256, %v338, 0
        %v354 = vsel %vm256, %v343, 0
        %356 = vmatprep.subr.mxu0 0.0
        %357 = vmatpush1.msra.mxu0 0.0
        %358 = vmatprep.subr.mxu0 0.0
        %359 = vmatpush1.msra.mxu0 0.0
        %360 = vmatprep.subr.mxu0 0.0
        %361 = vmatpush1.msra.mxu0 0.0
        %362 = vmatprep.subr.mxu0 0.0
        %363 = vmatpush1.msra.mxu0 0.0
        %364 = vmatprep.subr.mxu0 0.0
        %365 = vmatpush1.msra.mxu0 0.0
        %366 = vmatprep.subr.mxu0 0.0
        %367 = vmatpush1.msra.mxu0 0.0
        %368 = vmatprep.subr.mxu0 0.0
        %369 = vmatpush1.msra.mxu0 0.0
        %370 = vmatprep.subr.mxu0 0.0
        %371 = vmatpush1.msra.mxu0 0.0
        %372 = vmatprep.subr.mxu0 0.0
        %373 = vmatpush1.msra.mxu0 0.0
        %374 = vmatprep.subr.mxu0 0.0
        %375 = vmatpush1.msra.mxu0 0.0
        %376 = vmatprep.subr.mxu0 0.0
        %377 = vmatpush1.msra.mxu0 0.0
        %378 = vmatprep.subr.mxu0 0.0
        %379 = vmatpush1.msra.mxu0 0.0
        %380 = vmatprep.subr.mxu0 0.0
        %381 = vmatpush1.msra.mxu0 0.0
        %382 = vmatprep.subr.mxu0 0.0
        %383 = vmatpush1.msra.mxu0 0.0
        %384 = vmatprep.subr.mxu0 0.0
        %385 = vmatpush1.msra.mxu0 0.0
        %386 = vmatprep.subr.mxu0 0.0
        %387 = vmatpush1.msra.mxu0 %v346
        %388 = vmatprep.subr.mxu0 0.0
        %389 = vmatpush2.msra.mxu0 0.0
        %390 = vmatprep.subr.mxu0 0.0
        %391 = vmatpush2.msra.mxu0 0.0
        %392 = vmatprep.subr.mxu0 0.0
        %393 = vmatpush2.msra.mxu0 0.0
        %394 = vmatprep.subr.mxu0 0.0
        %395 = vmatpush2.msra.mxu0 0.0
        %396 = vmatprep.subr.mxu0 0.0
        %397 = vmatpush2.msra.mxu0 0.0
        %398 = vmatprep.subr.mxu0 0.0
        %399 = vmatpush2.msra.mxu0 0.0
        %400 = vmatprep.subr.mxu0 0.0
        %401 = vmatpush2.msra.mxu0 0.0
        %402 = vmatprep.subr.mxu0 0.0
        %403 = vmatpush2.msra.mxu0 0.0
        %404 = vmatprep.subr.mxu0 0.0
        %405 = vmatpush2.msra.mxu0 0.0
        %406 = vmatprep.subr.mxu0 0.0
        %407 = vmatpush2.msra.mxu0 0.0
        %408 = vmatprep.subr.mxu0 0.0
        %409 = vmatpush2.msra.mxu0 0.0
        %410 = vmatprep.subr.mxu0 0.0
        %411 = vmatpush2.msra.mxu0 0.0
        %412 = vmatprep.subr.mxu0 0.0
        %413 = vmatpush2.msra.mxu0 0.0
        %414 = vmatprep.subr.mxu0 0.0
        %415 = vmatpush2.msra.mxu0 0.0
        %416 = vmatprep.subr.mxu0 0.0
        %417 = vmatpush2.msra.mxu0 0.0
        %418 = vmatprep.subr.mxu0 0.0
        %419 = vmatpush2.msra.mxu0 0.0
        %420 = vmatprep.mubr.f32.mxu0 0.0
        %421 = vmatmul.mubr.f32.gmra.mxu0 %v348
        %v422 = vpop.f32.mrf.mxu0
        %v423 = vadd.f32 0.0, %v422
        %v424 = vpop.f32.mrf.mxu0
        %425 = vmatprep.mubr.f32.mxu0 0.0
        %426 = vmatmul.mubr.f32.gmra.mxu0 %v351
        %v427 = vpop.f32.mrf.mxu0
        %v428 = vadd.f32 0.0, %v427
        %v429 = vpop.f32.mrf.mxu0
        %430 = vmatprep.mubr.f32.mxu0 0.0
        %431 = vmatmul.mubr.f32.gmra.mxu0 %v354
        %v432 = vpop.f32.mrf.mxu0
        %v433 = vadd.f32 0.0, %v432
        %v434 = vpop.f32.mrf.mxu0
        %435 = vdwg.mxu0
        %s436 = scalar_lea.vmem %s246, 8
        %v437 = vld [vmem:[%s436] sm:$0xff]
        %438 = vmatprep.subr.mxu0 0.0
        %439 = vmatpush1.msra.mxu0 0.0
        %440 = vmatprep.subr.mxu0 0.0
        %441 = vmatpush1.msra.mxu0 0.0
        %442 = vmatprep.subr.mxu0 0.0
        %443 = vmatpush1.msra.mxu0 0.0
        %444 = vmatprep.subr.mxu0 0.0
        %445 = vmatpush1.msra.mxu0 0.0
        %446 = vmatprep.subr.mxu0 0.0
        %447 = vmatpush1.msra.mxu0 0.0
        %448 = vmatprep.subr.mxu0 0.0
        %449 = vmatpush1.msra.mxu0 0.0
        %450 = vmatprep.subr.mxu0 0.0
        %451 = vmatpush1.msra.mxu0 0.0
        %452 = vmatprep.subr.mxu0 0.0
        %453 = vmatpush1.msra.mxu0 0.0
        %454 = vmatprep.subr.mxu0 0.0
        %455 = vmatpush1.msra.mxu0 0.0
        %456 = vmatprep.subr.mxu0 0.0
        %457 = vmatpush1.msra.mxu0 0.0
        %458 = vmatprep.subr.mxu0 0.0
        %459 = vmatpush1.msra.mxu0 0.0
        %460 = vmatprep.subr.mxu0 0.0
        %461 = vmatpush1.msra.mxu0 0.0
        %462 = vmatprep.subr.mxu0 0.0
        %463 = vmatpush1.msra.mxu0 0.0
        %464 = vmatprep.subr.mxu0 0.0
        %465 = vmatpush1.msra.mxu0 0.0
        %466 = vmatprep.subr.mxu0 0.0
        %467 = vmatpush1.msra.mxu0 0.0
        %468 = vmatprep.subr.mxu0 0.0
        %469 = vmatpush1.msra.mxu0 %v437
        %470 = vmatprep.subr.mxu0 0.0
        %471 = vmatpush2.msra.mxu0 0.0
        %472 = vmatprep.subr.mxu0 0.0
        %473 = vmatpush2.msra.mxu0 0.0
        %474 = vmatprep.subr.mxu0 0.0
        %475 = vmatpush2.msra.mxu0 0.0
        %476 = vmatprep.subr.mxu0 0.0
        %477 = vmatpush2.msra.mxu0 0.0
        %478 = vmatprep.subr.mxu0 0.0
        %479 = vmatpush2.msra.mxu0 0.0
        %480 = vmatprep.subr.mxu0 0.0
        %481 = vmatpush2.msra.mxu0 0.0
        %482 = vmatprep.subr.mxu0 0.0
        %483 = vmatpush2.msra.mxu0 0.0
        %484 = vmatprep.subr.mxu0 0.0
        %485 = vmatpush2.msra.mxu0 0.0
        %486 = vmatprep.subr.mxu0 0.0
        %487 = vmatpush2.msra.mxu0 0.0
        %488 = vmatprep.subr.mxu0 0.0
        %489 = vmatpush2.msra.mxu0 0.0
        %490 = vmatprep.subr.mxu0 0.0
        %491 = vmatpush2.msra.mxu0 0.0
        %492 = vmatprep.subr.mxu0 0.0
        %493 = vmatpush2.msra.mxu0 0.0
        %494 = vmatprep.subr.mxu0 0.0
        %495 = vmatpush2.msra.mxu0 0.0
        %496 = vmatprep.subr.mxu0 0.0
        %497 = vmatpush2.msra.mxu0 0.0
        %498 = vmatprep.subr.mxu0 0.0
        %499 = vmatpush2.msra.mxu0 0.0
        %500 = vmatprep.subr.mxu0 0.0
        %501 = vmatpush2.msra.mxu0 0.0
        %502 = vmatprep.mubr.f32.mxu0 0.0
        %503 = vmatmul.mubr.f32.gmra.mxu0 %v258
        %v504 = vpop.f32.mrf.mxu0
        %v505 = vadd.f32 0.0, %v504
        %v506 = vpop.f32.mrf.mxu0
        %507 = vmatprep.mubr.f32.mxu0 0.0
        %508 = vmatmul.mubr.f32.gmra.mxu0 %v261
        %v509 = vpop.f32.mrf.mxu0
        %v510 = vadd.f32 0.0, %v509
        %v511 = vpop.f32.mrf.mxu0
        %512 = vmatprep.mubr.f32.mxu0 0.0
        %513 = vmatmul.mubr.f32.gmra.mxu0 %v264
        %v514 = vpop.f32.mrf.mxu0
        %v515 = vadd.f32 0.0, %v514
        %v516 = vpop.f32.mrf.mxu0
        %517 = vdwg.mxu0
        %v519 = vsel %vm256, %v505, 0
        %v522 = vsel %vm256, %v510, 0
        %v525 = vsel %vm256, %v515, 0
        %527 = vmatprep.subr.mxu0 0.0
        %528 = vmatpush1.msra.mxu0 0.0
        %529 = vmatprep.subr.mxu0 0.0
        %530 = vmatpush1.msra.mxu0 0.0
        %531 = vmatprep.subr.mxu0 0.0
        %532 = vmatpush1.msra.mxu0 0.0
        %533 = vmatprep.subr.mxu0 0.0
        %534 = vmatpush1.msra.mxu0 0.0
        %535 = vmatprep.subr.mxu0 0.0
        %536 = vmatpush1.msra.mxu0 0.0
        %537 = vmatprep.subr.mxu0 0.0
        %538 = vmatpush1.msra.mxu0 0.0
        %539 = vmatprep.subr.mxu0 0.0
        %540 = vmatpush1.msra.mxu0 0.0
        %541 = vmatprep.subr.mxu0 0.0
        %542 = vmatpush1.msra.mxu0 0.0
        %543 = vmatprep.subr.mxu0 0.0
        %544 = vmatpush1.msra.mxu0 0.0
        %545 = vmatprep.subr.mxu0 0.0
        %546 = vmatpush1.msra.mxu0 0.0
        %547 = vmatprep.subr.mxu0 0.0
        %548 = vmatpush1.msra.mxu0 0.0
        %549 = vmatprep.subr.mxu0 0.0
        %550 = vmatpush1.msra.mxu0 0.0
        %551 = vmatprep.subr.mxu0 0.0
        %552 = vmatpush1.msra.mxu0 0.0
        %553 = vmatprep.subr.mxu0 0.0
        %554 = vmatpush1.msra.mxu0 0.0
        %555 = vmatprep.subr.mxu0 0.0
        %556 = vmatpush1.msra.mxu0 0.0
        %557 = vmatprep.subr.mxu0 0.0
        %558 = vmatpush1.msra.mxu0 %v346
        %559 = vmatprep.subr.mxu0 0.0
        %560 = vmatpush2.msra.mxu0 0.0
        %561 = vmatprep.subr.mxu0 0.0
        %562 = vmatpush2.msra.mxu0 0.0
        %563 = vmatprep.subr.mxu0 0.0
        %564 = vmatpush2.msra.mxu0 0.0
        %565 = vmatprep.subr.mxu0 0.0
        %566 = vmatpush2.msra.mxu0 0.0
        %567 = vmatprep.subr.mxu0 0.0
        %568 = vmatpush2.msra.mxu0 0.0
        %569 = vmatprep.subr.mxu0 0.0
        %570 = vmatpush2.msra.mxu0 0.0
        %571 = vmatprep.subr.mxu0 0.0
        %572 = vmatpush2.msra.mxu0 0.0
        %573 = vmatprep.subr.mxu0 0.0
        %574 = vmatpush2.msra.mxu0 0.0
        %575 = vmatprep.subr.mxu0 0.0
        %576 = vmatpush2.msra.mxu0 0.0
        %577 = vmatprep.subr.mxu0 0.0
        %578 = vmatpush2.msra.mxu0 0.0
        %579 = vmatprep.subr.mxu0 0.0
        %580 = vmatpush2.msra.mxu0 0.0
        %581 = vmatprep.subr.mxu0 0.0
        %582 = vmatpush2.msra.mxu0 0.0
        %583 = vmatprep.subr.mxu0 0.0
        %584 = vmatpush2.msra.mxu0 0.0
        %585 = vmatprep.subr.mxu0 0.0
        %586 = vmatpush2.msra.mxu0 0.0
        %587 = vmatprep.subr.mxu0 0.0
        %588 = vmatpush2.msra.mxu0 0.0
        %589 = vmatprep.subr.mxu0 0.0
        %590 = vmatpush2.msra.mxu0 0.0
        %591 = vmatprep.mubr.f32.mxu0 0.0
        %592 = vmatmul.mubr.f32.gmra.mxu0 %v519
        %v593 = vpop.f32.mrf.mxu0
        %v594 = vadd.f32 0.0, %v593
        %v595 = vpop.f32.mrf.mxu0
        %596 = vmatprep.mubr.f32.mxu0 0.0
        %597 = vmatmul.mubr.f32.gmra.mxu0 %v522
        %v598 = vpop.f32.mrf.mxu0
        %v599 = vadd.f32 0.0, %v598
        %v600 = vpop.f32.mrf.mxu0
        %601 = vmatprep.mubr.f32.mxu0 0.0
        %602 = vmatmul.mubr.f32.gmra.mxu0 %v525
        %v603 = vpop.f32.mrf.mxu0
        %v604 = vadd.f32 0.0, %v603
        %v605 = vpop.f32.mrf.mxu0
        %606 = vdwg.mxu0
        %s607 = scalar_lea.vmem %s246, 16
        %v608 = vld [vmem:[%s607] sm:$0xff]
        %609 = vmatprep.subr.mxu0 0.0
        %610 = vmatpush1.msra.mxu0 0.0
        %611 = vmatprep.subr.mxu0 0.0
        %612 = vmatpush1.msra.mxu0 0.0
        %613 = vmatprep.subr.mxu0 0.0
        %614 = vmatpush1.msra.mxu0 0.0
        %615 = vmatprep.subr.mxu0 0.0
        %616 = vmatpush1.msra.mxu0 0.0
        %617 = vmatprep.subr.mxu0 0.0
        %618 = vmatpush1.msra.mxu0 0.0
        %619 = vmatprep.subr.mxu0 0.0
        %620 = vmatpush1.msra.mxu0 0.0
        %621 = vmatprep.subr.mxu0 0.0
        %622 = vmatpush1.msra.mxu0 0.0
        %623 = vmatprep.subr.mxu0 0.0
        %624 = vmatpush1.msra.mxu0 0.0
        %625 = vmatprep.subr.mxu0 0.0
        %626 = vmatpush1.msra.mxu0 0.0
        %627 = vmatprep.subr.mxu0 0.0
        %628 = vmatpush1.msra.mxu0 0.0
        %629 = vmatprep.subr.mxu0 0.0
        %630 = vmatpush1.msra.mxu0 0.0
        %631 = vmatprep.subr.mxu0 0.0
        %632 = vmatpush1.msra.mxu0 0.0
        %633 = vmatprep.subr.mxu0 0.0
        %634 = vmatpush1.msra.mxu0 0.0
        %635 = vmatprep.subr.mxu0 0.0
        %636 = vmatpush1.msra.mxu0 0.0
        %637 = vmatprep.subr.mxu0 0.0
        %638 = vmatpush1.msra.mxu0 0.0
        %639 = vmatprep.subr.mxu0 0.0
        %640 = vmatpush1.msra.mxu0 %v608
        %641 = vmatprep.subr.mxu0 0.0
        %642 = vmatpush2.msra.mxu0 0.0
        %643 = vmatprep.subr.mxu0 0.0
        %644 = vmatpush2.msra.mxu0 0.0
        %645 = vmatprep.subr.mxu0 0.0
        %646 = vmatpush2.msra.mxu0 0.0
        %647 = vmatprep.subr.mxu0 0.0
        %648 = vmatpush2.msra.mxu0 0.0
        %649 = vmatprep.subr.mxu0 0.0
        %650 = vmatpush2.msra.mxu0 0.0
        %651 = vmatprep.subr.mxu0 0.0
        %652 = vmatpush2.msra.mxu0 0.0
        %653 = vmatprep.subr.mxu0 0.0
        %654 = vmatpush2.msra.mxu0 0.0
        %655 = vmatprep.subr.mxu0 0.0
        %656 = vmatpush2.msra.mxu0 0.0
        %657 = vmatprep.subr.mxu0 0.0
        %658 = vmatpush2.msra.mxu0 0.0
        %659 = vmatprep.subr.mxu0 0.0
        %660 = vmatpush2.msra.mxu0 0.0
        %661 = vmatprep.subr.mxu0 0.0
        %662 = vmatpush2.msra.mxu0 0.0
        %663 = vmatprep.subr.mxu0 0.0
        %664 = vmatpush2.msra.mxu0 0.0
        %665 = vmatprep.subr.mxu0 0.0
        %666 = vmatpush2.msra.mxu0 0.0
        %667 = vmatprep.subr.mxu0 0.0
        %668 = vmatpush2.msra.mxu0 0.0
        %669 = vmatprep.subr.mxu0 0.0
        %670 = vmatpush2.msra.mxu0 0.0
        %671 = vmatprep.subr.mxu0 0.0
        %672 = vmatpush2.msra.mxu0 0.0
        %673 = vmatprep.mubr.f32.mxu0 0.0
        %674 = vmatmul.mubr.f32.gmra.mxu0 %v258
        %v675 = vpop.f32.mrf.mxu0
        %v676 = vadd.f32 0.0, %v675
        %v677 = vpop.f32.mrf.mxu0
        %678 = vmatprep.mubr.f32.mxu0 0.0
        %679 = vmatmul.mubr.f32.gmra.mxu0 %v261
        %v680 = vpop.f32.mrf.mxu0
        %v681 = vadd.f32 0.0, %v680
        %v682 = vpop.f32.mrf.mxu0
        %683 = vmatprep.mubr.f32.mxu0 0.0
        %684 = vmatmul.mubr.f32.gmra.mxu0 %v264
        %v685 = vpop.f32.mrf.mxu0
        %v686 = vadd.f32 0.0, %v685
        %v687 = vpop.f32.mrf.mxu0
        %688 = vdwg.mxu0
        %v690 = vsel %vm256, %v676, 0
        %v693 = vsel %vm256, %v681, 0
        %v696 = vsel %vm256, %v686, 0
        %698 = vmatprep.subr.mxu0 0.0
        %699 = vmatpush1.msra.mxu0 0.0
        %700 = vmatprep.subr.mxu0 0.0
        %701 = vmatpush1.msra.mxu0 0.0
        %702 = vmatprep.subr.mxu0 0.0
        %703 = vmatpush1.msra.mxu0 0.0
        %704 = vmatprep.subr.mxu0 0.0
        %705 = vmatpush1.msra.mxu0 0.0
        %706 = vmatprep.subr.mxu0 0.0
        %707 = vmatpush1.msra.mxu0 0.0
        %708 = vmatprep.subr.mxu0 0.0
        %709 = vmatpush1.msra.mxu0 0.0
        %710 = vmatprep.subr.mxu0 0.0
        %711 = vmatpush1.msra.mxu0 0.0
        %712 = vmatprep.subr.mxu0 0.0
        %713 = vmatpush1.msra.mxu0 0.0
        %714 = vmatprep.subr.mxu0 0.0
        %715 = vmatpush1.msra.mxu0 0.0
        %716 = vmatprep.subr.mxu0 0.0
        %717 = vmatpush1.msra.mxu0 0.0
        %718 = vmatprep.subr.mxu0 0.0
        %719 = vmatpush1.msra.mxu0 0.0
        %720 = vmatprep.subr.mxu0 0.0
        %721 = vmatpush1.msra.mxu0 0.0
        %722 = vmatprep.subr.mxu0 0.0
        %723 = vmatpush1.msra.mxu0 0.0
        %724 = vmatprep.subr.mxu0 0.0
        %725 = vmatpush1.msra.mxu0 0.0
        %726 = vmatprep.subr.mxu0 0.0
        %727 = vmatpush1.msra.mxu0 0.0
        %728 = vmatprep.subr.mxu0 0.0
        %729 = vmatpush1.msra.mxu0 %v346
        %730 = vmatprep.subr.mxu0 0.0
        %731 = vmatpush2.msra.mxu0 0.0
        %732 = vmatprep.subr.mxu0 0.0
        %733 = vmatpush2.msra.mxu0 0.0
        %734 = vmatprep.subr.mxu0 0.0
        %735 = vmatpush2.msra.mxu0 0.0
        %736 = vmatprep.subr.mxu0 0.0
        %737 = vmatpush2.msra.mxu0 0.0
        %738 = vmatprep.subr.mxu0 0.0
        %739 = vmatpush2.msra.mxu0 0.0
        %740 = vmatprep.subr.mxu0 0.0
        %741 = vmatpush2.msra.mxu0 0.0
        %742 = vmatprep.subr.mxu0 0.0
        %743 = vmatpush2.msra.mxu0 0.0
        %744 = vmatprep.subr.mxu0 0.0
        %745 = vmatpush2.msra.mxu0 0.0
        %746 = vmatprep.subr.mxu0 0.0
        %747 = vmatpush2.msra.mxu0 0.0
        %748 = vmatprep.subr.mxu0 0.0
        %749 = vmatpush2.msra.mxu0 0.0
        %750 = vmatprep.subr.mxu0 0.0
        %751 = vmatpush2.msra.mxu0 0.0
        %752 = vmatprep.subr.mxu0 0.0
        %753 = vmatpush2.msra.mxu0 0.0
        %754 = vmatprep.subr.mxu0 0.0
        %755 = vmatpush2.msra.mxu0 0.0
        %756 = vmatprep.subr.mxu0 0.0
        %757 = vmatpush2.msra.mxu0 0.0
        %758 = vmatprep.subr.mxu0 0.0
        %759 = vmatpush2.msra.mxu0 0.0
        %760 = vmatprep.subr.mxu0 0.0
        %761 = vmatpush2.msra.mxu0 0.0
        %762 = vmatprep.mubr.f32.mxu0 0.0
        %763 = vmatmul.mubr.f32.gmra.mxu0 %v690
        %v764 = vpop.f32.mrf.mxu0
        %v765 = vadd.f32 0.0, %v764
        %v766 = vpop.f32.mrf.mxu0
        %767 = vmatprep.mubr.f32.mxu0 0.0
        %768 = vmatmul.mubr.f32.gmra.mxu0 %v693
        %v769 = vpop.f32.mrf.mxu0
        %v770 = vadd.f32 0.0, %v769
        %v771 = vpop.f32.mrf.mxu0
        %772 = vmatprep.mubr.f32.mxu0 0.0
        %773 = vmatmul.mubr.f32.gmra.mxu0 %v696
        %v774 = vpop.f32.mrf.mxu0
        %v775 = vadd.f32 0.0, %v774
        %v776 = vpop.f32.mrf.mxu0
        %777 = vdwg.mxu0
        %s778 = scalar_lea.vmem %s246, 24
        %v779 = vld [vmem:[%s778] sm:$0xff]
        %780 = vmatprep.subr.mxu0 0.0
        %781 = vmatpush1.msra.mxu0 0.0
        %782 = vmatprep.subr.mxu0 0.0
        %783 = vmatpush1.msra.mxu0 0.0
        %784 = vmatprep.subr.mxu0 0.0
        %785 = vmatpush1.msra.mxu0 0.0
        %786 = vmatprep.subr.mxu0 0.0
        %787 = vmatpush1.msra.mxu0 0.0
        %788 = vmatprep.subr.mxu0 0.0
        %789 = vmatpush1.msra.mxu0 0.0
        %790 = vmatprep.subr.mxu0 0.0
        %791 = vmatpush1.msra.mxu0 0.0
        %792 = vmatprep.subr.mxu0 0.0
        %793 = vmatpush1.msra.mxu0 0.0
        %794 = vmatprep.subr.mxu0 0.0
        %795 = vmatpush1.msra.mxu0 0.0
        %796 = vmatprep.subr.mxu0 0.0
        %797 = vmatpush1.msra.mxu0 0.0
        %798 = vmatprep.subr.mxu0 0.0
        %799 = vmatpush1.msra.mxu0 0.0
        %800 = vmatprep.subr.mxu0 0.0
        %801 = vmatpush1.msra.mxu0 0.0
        %802 = vmatprep.subr.mxu0 0.0
        %803 = vmatpush1.msra.mxu0 0.0
        %804 = vmatprep.subr.mxu0 0.0
        %805 = vmatpush1.msra.mxu0 0.0
        %806 = vmatprep.subr.mxu0 0.0
        %807 = vmatpush1.msra.mxu0 0.0
        %808 = vmatprep.subr.mxu0 0.0
        %809 = vmatpush1.msra.mxu0 0.0
        %810 = vmatprep.subr.mxu0 0.0
        %811 = vmatpush1.msra.mxu0 %v779
        %812 = vmatprep.subr.mxu0 0.0
        %813 = vmatpush2.msra.mxu0 0.0
        %814 = vmatprep.subr.mxu0 0.0
        %815 = vmatpush2.msra.mxu0 0.0
        %816 = vmatprep.subr.mxu0 0.0
        %817 = vmatpush2.msra.mxu0 0.0
        %818 = vmatprep.subr.mxu0 0.0
        %819 = vmatpush2.msra.mxu0 0.0
        %820 = vmatprep.subr.mxu0 0.0
        %821 = vmatpush2.msra.mxu0 0.0
        %822 = vmatprep.subr.mxu0 0.0
        %823 = vmatpush2.msra.mxu0 0.0
        %824 = vmatprep.subr.mxu0 0.0
        %825 = vmatpush2.msra.mxu0 0.0
        %826 = vmatprep.subr.mxu0 0.0
        %827 = vmatpush2.msra.mxu0 0.0
        %828 = vmatprep.subr.mxu0 0.0
        %829 = vmatpush2.msra.mxu0 0.0
        %830 = vmatprep.subr.mxu0 0.0
        %831 = vmatpush2.msra.mxu0 0.0
        %832 = vmatprep.subr.mxu0 0.0
        %833 = vmatpush2.msra.mxu0 0.0
        %834 = vmatprep.subr.mxu0 0.0
        %835 = vmatpush2.msra.mxu0 0.0
        %836 = vmatprep.subr.mxu0 0.0
        %837 = vmatpush2.msra.mxu0 0.0
        %838 = vmatprep.subr.mxu0 0.0
        %839 = vmatpush2.msra.mxu0 0.0
        %840 = vmatprep.subr.mxu0 0.0
        %841 = vmatpush2.msra.mxu0 0.0
        %842 = vmatprep.subr.mxu0 0.0
        %843 = vmatpush2.msra.mxu0 0.0
        %844 = vmatprep.mubr.f32.mxu0 0.0
        %845 = vmatmul.mubr.f32.gmra.mxu0 %v258
        %v846 = vpop.f32.mrf.mxu0
        %v847 = vadd.f32 0.0, %v846
        %v848 = vpop.f32.mrf.mxu0
        %849 = vmatprep.mubr.f32.mxu0 0.0
        %850 = vmatmul.mubr.f32.gmra.mxu0 %v261
        %v851 = vpop.f32.mrf.mxu0
        %v852 = vadd.f32 0.0, %v851
        %v853 = vpop.f32.mrf.mxu0
        %854 = vmatprep.mubr.f32.mxu0 0.0
        %855 = vmatmul.mubr.f32.gmra.mxu0 %v264
        %v856 = vpop.f32.mrf.mxu0
        %v857 = vadd.f32 0.0, %v856
        %v858 = vpop.f32.mrf.mxu0
        %859 = vdwg.mxu0
        %v861 = vsel %vm256, %v847, 0
        %v864 = vsel %vm256, %v852, 0
        %v867 = vsel %vm256, %v857, 0
        %869 = vmatprep.subr.mxu0 0.0
        %870 = vmatpush1.msra.mxu0 0.0
        %871 = vmatprep.subr.mxu0 0.0
        %872 = vmatpush1.msra.mxu0 0.0
        %873 = vmatprep.subr.mxu0 0.0
        %874 = vmatpush1.msra.mxu0 0.0
        %875 = vmatprep.subr.mxu0 0.0
        %876 = vmatpush1.msra.mxu0 0.0
        %877 = vmatprep.subr.mxu0 0.0
        %878 = vmatpush1.msra.mxu0 0.0
        %879 = vmatprep.subr.mxu0 0.0
        %880 = vmatpush1.msra.mxu0 0.0
        %881 = vmatprep.subr.mxu0 0.0
        %882 = vmatpush1.msra.mxu0 0.0
        %883 = vmatprep.subr.mxu0 0.0
        %884 = vmatpush1.msra.mxu0 0.0
        %885 = vmatprep.subr.mxu0 0.0
        %886 = vmatpush1.msra.mxu0 0.0
        %887 = vmatprep.subr.mxu0 0.0
        %888 = vmatpush1.msra.mxu0 0.0
        %889 = vmatprep.subr.mxu0 0.0
        %890 = vmatpush1.msra.mxu0 0.0
        %891 = vmatprep.subr.mxu0 0.0
        %892 = vmatpush1.msra.mxu0 0.0
        %893 = vmatprep.subr.mxu0 0.0
        %894 = vmatpush1.msra.mxu0 0.0
        %895 = vmatprep.subr.mxu0 0.0
        %896 = vmatpush1.msra.mxu0 0.0
        %897 = vmatprep.subr.mxu0 0.0
        %898 = vmatpush1.msra.mxu0 0.0
        %899 = vmatprep.subr.mxu0 0.0
        %900 = vmatpush1.msra.mxu0 %v346
        %901 = vmatprep.subr.mxu0 0.0
        %902 = vmatpush2.msra.mxu0 0.0
        %903 = vmatprep.subr.mxu0 0.0
        %904 = vmatpush2.msra.mxu0 0.0
        %905 = vmatprep.subr.mxu0 0.0
        %906 = vmatpush2.msra.mxu0 0.0
        %907 = vmatprep.subr.mxu0 0.0
        %908 = vmatpush2.msra.mxu0 0.0
        %909 = vmatprep.subr.mxu0 0.0
        %910 = vmatpush2.msra.mxu0 0.0
        %911 = vmatprep.subr.mxu0 0.0
        %912 = vmatpush2.msra.mxu0 0.0
        %913 = vmatprep.subr.mxu0 0.0
        %914 = vmatpush2.msra.mxu0 0.0
        %915 = vmatprep.subr.mxu0 0.0
        %916 = vmatpush2.msra.mxu0 0.0
        %917 = vmatprep.subr.mxu0 0.0
        %918 = vmatpush2.msra.mxu0 0.0
        %919 = vmatprep.subr.mxu0 0.0
        %920 = vmatpush2.msra.mxu0 0.0
        %921 = vmatprep.subr.mxu0 0.0
        %922 = vmatpush2.msra.mxu0 0.0
        %923 = vmatprep.subr.mxu0 0.0
        %924 = vmatpush2.msra.mxu0 0.0
        %925 = vmatprep.subr.mxu0 0.0
        %926 = vmatpush2.msra.mxu0 0.0
        %927 = vmatprep.subr.mxu0 0.0
        %928 = vmatpush2.msra.mxu0 0.0
        %929 = vmatprep.subr.mxu0 0.0
        %930 = vmatpush2.msra.mxu0 0.0
        %931 = vmatprep.subr.mxu0 0.0
        %932 = vmatpush2.msra.mxu0 0.0
        %933 = vmatprep.mubr.f32.mxu0 0.0
        %934 = vmatmul.mubr.f32.gmra.mxu0 %v861
        %v935 = vpop.f32.mrf.mxu0
        %v936 = vadd.f32 0.0, %v935
        %v937 = vpop.f32.mrf.mxu0
        %938 = vmatprep.mubr.f32.mxu0 0.0
        %939 = vmatmul.mubr.f32.gmra.mxu0 %v864
        %v940 = vpop.f32.mrf.mxu0
        %v941 = vadd.f32 0.0, %v940
        %v942 = vpop.f32.mrf.mxu0
        %943 = vmatprep.mubr.f32.mxu0 0.0
        %944 = vmatmul.mubr.f32.gmra.mxu0 %v867
        %v945 = vpop.f32.mrf.mxu0
        %v946 = vadd.f32 0.0, %v945
        %v947 = vpop.f32.mrf.mxu0
        %948 = vdwg.mxu0
        %s949 = sld [smem:[#allocation2]]
        %v950 = vstv %s949
        %v951 = vmul.f32 %v950, %v423
        %v952 = vmul.f32 %v950, %v428
        %v953 = vadd.f32 %v951, 0.0
        %v954 = vadd.f32 %v952, 0.0
        %s955 = sld [smem:[#allocation2 + $0x1]]
        %v956 = vstv %s955
        %v957 = vmul.f32 %v956, %v423
        %v958 = vmul.f32 %v956, %v428
        %961 = vrot.lane.b32.xlu0 %v957, 127
        %v962 = vpop.permute.xlu0 %961
        %963 = vrot.lane.b32.xlu0 %v958, 127
        %v964 = vpop.permute.xlu0 %963
        %v967 = vadd.f32 %v953, %v962
        %v968 = vadd.f32 %v954, %v964
        %s969 = sld [smem:[#allocation2 + $0x2]]
        %v970 = vstv %s969
        %v971 = vmul.f32 %v970, %v423
        %v972 = vmul.f32 %v970, %v428
        %975 = vrot.lane.b32.xlu0 %v971, 126
        %v976 = vpop.permute.xlu0 %975
        %977 = vrot.lane.b32.xlu0 %v972, 126
        %v978 = vpop.permute.xlu0 %977
        %v981 = vadd.f32 %v967, %v976
        %v982 = vadd.f32 %v968, %v978
        %s983 = sld [smem:[#allocation2 + $0x3]]
        %v984 = vstv %s983
        %v985 = vmul.f32 %v984, %v423
        %v986 = vmul.f32 %v984, %v428
        %v987 = vmul.f32 %v984, %v433
        %vm991 = vcmask 1046528
        %v992 = vrot.slane %v985, 1
        %v993 = vrot.slane %v986, 1
        %v994 = vsel %vm991, %v992, %v993
        %v995 = vrot.slane %v987, 1
        %v996 = vsel %vm991, %v993, %v995
        %v999 = vadd.f32 %v981, %v994
        %v1000 = vadd.f32 %v982, %v996
        %s1001 = sld [smem:[#allocation2 + $0x4]]
        %v1002 = vstv %s1001
        %v1003 = vmul.f32 %v1002, %v423
        %v1004 = vmul.f32 %v1002, %v428
        %v1005 = vmul.f32 %v1002, %v433
        %v1009 = vrot.slane %v1003, 1
        %v1010 = vrot.slane %v1004, 1
        %v1011 = vsel %vm991, %v1009, %v1010
        %v1012 = vrot.slane %v1005, 1
        %v1013 = vsel %vm991, %v1010, %v1012
        %1014 = vrot.lane.b32.xlu0 %v1011, 127
        %v1015 = vpop.permute.xlu0 %1014
        %1016 = vrot.lane.b32.xlu0 %v1013, 127
        %v1017 = vpop.permute.xlu0 %1016
        %v1020 = vadd.f32 %v999, %v1015
        %v1021 = vadd.f32 %v1000, %v1017
        %s1022 = sld [smem:[#allocation2 + $0x5]]
        %v1023 = vstv %s1022
        %v1024 = vmul.f32 %v1023, %v423
        %v1025 = vmul.f32 %v1023, %v428
        %v1026 = vmul.f32 %v1023, %v433
        %v1030 = vrot.slane %v1024, 1
        %v1031 = vrot.slane %v1025, 1
        %v1032 = vsel %vm991, %v1030, %v1031
        %v1033 = vrot.slane %v1026, 1
        %v1034 = vsel %vm991, %v1031, %v1033
        %1035 = vrot.lane.b32.xlu0 %v1032, 126
        %v1036 = vpop.permute.xlu0 %1035
        %1037 = vrot.lane.b32.xlu0 %v1034, 126
        %v1038 = vpop.permute.xlu0 %1037
        %v1041 = vadd.f32 %v1020, %v1036
        %v1042 = vadd.f32 %v1021, %v1038
        %s1043 = sld [smem:[#allocation2 + $0x6]]
        %v1044 = vstv %s1043
        %v1045 = vmul.f32 %v1044, %v423
        %v1046 = vmul.f32 %v1044, %v428
        %v1047 = vmul.f32 %v1044, %v433
        %vm1051 = vcmask 1045504
        %v1052 = vrot.slane %v1045, 2
        %v1053 = vrot.slane %v1046, 2
        %v1054 = vsel %vm1051, %v1052, %v1053
        %v1055 = vrot.slane %v1047, 2
        %v1056 = vsel %vm1051, %v1053, %v1055
        %v1059 = vadd.f32 %v1041, %v1054
        %v1060 = vadd.f32 %v1042, %v1056
        %s1061 = sld [smem:[#allocation2 + $0x7]]
        %v1062 = vstv %s1061
        %v1063 = vmul.f32 %v1062, %v423
        %v1064 = vmul.f32 %v1062, %v428
        %v1065 = vmul.f32 %v1062, %v433
        %v1069 = vrot.slane %v1063, 2
        %v1070 = vrot.slane %v1064, 2
        %v1071 = vsel %vm1051, %v1069, %v1070
        %v1072 = vrot.slane %v1065, 2
        %v1073 = vsel %vm1051, %v1070, %v1072
        %1074 = vrot.lane.b32.xlu0 %v1071, 127
        %v1075 = vpop.permute.xlu0 %1074
        %1076 = vrot.lane.b32.xlu0 %v1073, 127
        %v1077 = vpop.permute.xlu0 %1076
        %v1080 = vadd.f32 %v1059, %v1075
        %v1081 = vadd.f32 %v1060, %v1077
        %s1082 = sld [smem:[#allocation2 + $0x8]]
        %v1083 = vstv %s1082
        %v1084 = vmul.f32 %v1083, %v423
        %v1085 = vmul.f32 %v1083, %v428
        %v1086 = vmul.f32 %v1083, %v433
        %v1090 = vrot.slane %v1084, 2
        %v1091 = vrot.slane %v1085, 2
        %v1092 = vsel %vm1051, %v1090, %v1091
        %v1093 = vrot.slane %v1086, 2
        %v1094 = vsel %vm1051, %v1091, %v1093
        %1095 = vrot.lane.b32.xlu0 %v1092, 126
        %v1096 = vpop.permute.xlu0 %1095
        %1097 = vrot.lane.b32.xlu0 %v1094, 126
        %v1098 = vpop.permute.xlu0 %1097
        %v1101 = vadd.f32 %v1080, %v1096
        %v1102 = vadd.f32 %v1081, %v1098
        %s1103 = sld [smem:[#allocation2 + $0x9]]
        %v1104 = vstv %s1103
        %v1105 = vmul.f32 %v1104, %v594
        %v1106 = vmul.f32 %v1104, %v599
        %v1107 = vadd.f32 %v1101, %v1105
        %v1108 = vadd.f32 %v1102, %v1106
        %s1109 = sld [smem:[#allocation2 + $0xa]]
        %v1110 = vstv %s1109
        %v1111 = vmul.f32 %v1110, %v594
        %v1112 = vmul.f32 %v1110, %v599
        %1115 = vrot.lane.b32.xlu0 %v1111, 127
        %v1116 = vpop.permute.xlu0 %1115
        %1117 = vrot.lane.b32.xlu0 %v1112, 127
        %v1118 = vpop.permute.xlu0 %1117
        %v1121 = vadd.f32 %v1107, %v1116
        %v1122 = vadd.f32 %v1108, %v1118
        %s1123 = sld [smem:[#allocation2 + $0xb]]
        %v1124 = vstv %s1123
        %v1125 = vmul.f32 %v1124, %v594
        %v1126 = vmul.f32 %v1124, %v599
        %1129 = vrot.lane.b32.xlu0 %v1125, 126
        %v1130 = vpop.permute.xlu0 %1129
        %1131 = vrot.lane.b32.xlu0 %v1126, 126
        %v1132 = vpop.permute.xlu0 %1131
        %v1135 = vadd.f32 %v1121, %v1130
        %v1136 = vadd.f32 %v1122, %v1132
        %s1137 = sld [smem:[#allocation2 + $0xc]]
        %v1138 = vstv %s1137
        %v1139 = vmul.f32 %v1138, %v594
        %v1140 = vmul.f32 %v1138, %v599
        %v1141 = vmul.f32 %v1138, %v604
        %v1145 = vrot.slane %v1139, 1
        %v1146 = vrot.slane %v1140, 1
        %v1147 = vsel %vm991, %v1145, %v1146
        %v1148 = vrot.slane %v1141, 1
        %v1149 = vsel %vm991, %v1146, %v1148
        %v1152 = vadd.f32 %v1135, %v1147
        %v1153 = vadd.f32 %v1136, %v1149
        %s1154 = sld [smem:[#allocation2 + $0xd]]
        %v1155 = vstv %s1154
        %v1156 = vmul.f32 %v1155, %v594
        %v1157 = vmul.f32 %v1155, %v599
        %v1158 = vmul.f32 %v1155, %v604
        %v1162 = vrot.slane %v1156, 1
        %v1163 = vrot.slane %v1157, 1
        %v1164 = vsel %vm991, %v1162, %v1163
        %v1165 = vrot.slane %v1158, 1
        %v1166 = vsel %vm991, %v1163, %v1165
        %1167 = vrot.lane.b32.xlu0 %v1164, 127
        %v1168 = vpop.permute.xlu0 %1167
        %1169 = vrot.lane.b32.xlu0 %v1166, 127
        %v1170 = vpop.permute.xlu0 %1169
        %v1173 = vadd.f32 %v1152, %v1168
        %v1174 = vadd.f32 %v1153, %v1170
        %s1175 = sld [smem:[#allocation2 + $0xe]]
        %v1176 = vstv %s1175
        %v1177 = vmul.f32 %v1176, %v594
        %v1178 = vmul.f32 %v1176, %v599
        %v1179 = vmul.f32 %v1176, %v604
        %v1183 = vrot.slane %v1177, 1
        %v1184 = vrot.slane %v1178, 1
        %v1185 = vsel %vm991, %v1183, %v1184
        %v1186 = vrot.slane %v1179, 1
        %v1187 = vsel %vm991, %v1184, %v1186
        %1188 = vrot.lane.b32.xlu0 %v1185, 126
        %v1189 = vpop.permute.xlu0 %1188
        %1190 = vrot.lane.b32.xlu0 %v1187, 126
        %v1191 = vpop.permute.xlu0 %1190
        %v1194 = vadd.f32 %v1173, %v1189
        %v1195 = vadd.f32 %v1174, %v1191
        %s1196 = sld [smem:[#allocation2 + $0xf]]
        %v1197 = vstv %s1196
        %v1198 = vmul.f32 %v1197, %v594
        %v1199 = vmul.f32 %v1197, %v599
        %v1200 = vmul.f32 %v1197, %v604
        %v1204 = vrot.slane %v1198, 2
        %v1205 = vrot.slane %v1199, 2
        %v1206 = vsel %vm1051, %v1204, %v1205
        %v1207 = vrot.slane %v1200, 2
        %v1208 = vsel %vm1051, %v1205, %v1207
        %v1211 = vadd.f32 %v1194, %v1206
        %v1212 = vadd.f32 %v1195, %v1208
        %s1213 = sld [smem:[#allocation2 + $0x10]]
        %v1214 = vstv %s1213
        %v1215 = vmul.f32 %v1214, %v594
        %v1216 = vmul.f32 %v1214, %v599
        %v1217 = vmul.f32 %v1214, %v604
        %v1221 = vrot.slane %v1215, 2
        %v1222 = vrot.slane %v1216, 2
        %v1223 = vsel %vm1051, %v1221, %v1222
        %v1224 = vrot.slane %v1217, 2
        %v1225 = vsel %vm1051, %v1222, %v1224
        %1226 = vrot.lane.b32.xlu0 %v1223, 127
        %v1227 = vpop.permute.xlu0 %1226
        %1228 = vrot.lane.b32.xlu0 %v1225, 127
        %v1229 = vpop.permute.xlu0 %1228
        %v1232 = vadd.f32 %v1211, %v1227
        %v1233 = vadd.f32 %v1212, %v1229
        %s1234 = sld [smem:[#allocation2 + $0x11]]
        %v1235 = vstv %s1234
        %v1236 = vmul.f32 %v1235, %v594
        %v1237 = vmul.f32 %v1235, %v599
        %v1238 = vmul.f32 %v1235, %v604
        %v1242 = vrot.slane %v1236, 2
        %v1243 = vrot.slane %v1237, 2
        %v1244 = vsel %vm1051, %v1242, %v1243
        %v1245 = vrot.slane %v1238, 2
        %v1246 = vsel %vm1051, %v1243, %v1245
        %1247 = vrot.lane.b32.xlu0 %v1244, 126
        %v1248 = vpop.permute.xlu0 %1247
        %1249 = vrot.lane.b32.xlu0 %v1246, 126
        %v1250 = vpop.permute.xlu0 %1249
        %v1253 = vadd.f32 %v1232, %v1248
        %v1254 = vadd.f32 %v1233, %v1250
        %s1255 = sld [smem:[#allocation2 + $0x12]]
        %v1256 = vstv %s1255
        %v1257 = vmul.f32 %v1256, %v765
        %v1258 = vmul.f32 %v1256, %v770
        %v1259 = vadd.f32 %v1253, %v1257
        %v1260 = vadd.f32 %v1254, %v1258
        %s1261 = sld [smem:[#allocation2 + $0x13]]
        %v1262 = vstv %s1261
        %v1263 = vmul.f32 %v1262, %v765
        %v1264 = vmul.f32 %v1262, %v770
        %1267 = vrot.lane.b32.xlu0 %v1263, 127
        %v1268 = vpop.permute.xlu0 %1267
        %1269 = vrot.lane.b32.xlu0 %v1264, 127
        %v1270 = vpop.permute.xlu0 %1269
        %v1273 = vadd.f32 %v1259, %v1268
        %v1274 = vadd.f32 %v1260, %v1270
        %s1275 = sld [smem:[#allocation2 + $0x14]]
        %v1276 = vstv %s1275
        %v1277 = vmul.f32 %v1276, %v765
        %v1278 = vmul.f32 %v1276, %v770
        %1281 = vrot.lane.b32.xlu0 %v1277, 126
        %v1282 = vpop.permute.xlu0 %1281
        %1283 = vrot.lane.b32.xlu0 %v1278, 126
        %v1284 = vpop.permute.xlu0 %1283
        %v1287 = vadd.f32 %v1273, %v1282
        %v1288 = vadd.f32 %v1274, %v1284
        %s1289 = sld [smem:[#allocation2 + $0x15]]
        %v1290 = vstv %s1289
        %v1291 = vmul.f32 %v1290, %v765
        %v1292 = vmul.f32 %v1290, %v770
        %v1293 = vmul.f32 %v1290, %v775
        %v1297 = vrot.slane %v1291, 1
        %v1298 = vrot.slane %v1292, 1
        %v1299 = vsel %vm991, %v1297, %v1298
        %v1300 = vrot.slane %v1293, 1
        %v1301 = vsel %vm991, %v1298, %v1300
        %v1304 = vadd.f32 %v1287, %v1299
        %v1305 = vadd.f32 %v1288, %v1301
        %s1306 = sld [smem:[#allocation2 + $0x16]]
        %v1307 = vstv %s1306
        %v1308 = vmul.f32 %v1307, %v765
        %v1309 = vmul.f32 %v1307, %v770
        %v1310 = vmul.f32 %v1307, %v775
        %v1314 = vrot.slane %v1308, 1
        %v1315 = vrot.slane %v1309, 1
        %v1316 = vsel %vm991, %v1314, %v1315
        %v1317 = vrot.slane %v1310, 1
        %v1318 = vsel %vm991, %v1315, %v1317
        %1319 = vrot.lane.b32.xlu0 %v1316, 127
        %v1320 = vpop.permute.xlu0 %1319
        %1321 = vrot.lane.b32.xlu0 %v1318, 127
        %v1322 = vpop.permute.xlu0 %1321
        %v1325 = vadd.f32 %v1304, %v1320
        %v1326 = vadd.f32 %v1305, %v1322
        %s1327 = sld [smem:[#allocation2 + $0x17]]
        %v1328 = vstv %s1327
        %v1329 = vmul.f32 %v1328, %v765
        %v1330 = vmul.f32 %v1328, %v770
        %v1331 = vmul.f32 %v1328, %v775
        %v1335 = vrot.slane %v1329, 1
        %v1336 = vrot.slane %v1330, 1
        %v1337 = vsel %vm991, %v1335, %v1336
        %v1338 = vrot.slane %v1331, 1
        %v1339 = vsel %vm991, %v1336, %v1338
        %1340 = vrot.lane.b32.xlu0 %v1337, 126
        %v1341 = vpop.permute.xlu0 %1340
        %1342 = vrot.lane.b32.xlu0 %v1339, 126
        %v1343 = vpop.permute.xlu0 %1342
        %v1346 = vadd.f32 %v1325, %v1341
        %v1347 = vadd.f32 %v1326, %v1343
        %s1348 = sld [smem:[#allocation2 + $0x18]]
        %v1349 = vstv %s1348
        %v1350 = vmul.f32 %v1349, %v765
        %v1351 = vmul.f32 %v1349, %v770
        %v1352 = vmul.f32 %v1349, %v775
        %v1356 = vrot.slane %v1350, 2
        %v1357 = vrot.slane %v1351, 2
        %v1358 = vsel %vm1051, %v1356, %v1357
        %v1359 = vrot.slane %v1352, 2
        %v1360 = vsel %vm1051, %v1357, %v1359
        %v1363 = vadd.f32 %v1346, %v1358
        %v1364 = vadd.f32 %v1347, %v1360
        %s1365 = sld [smem:[#allocation2 + $0x19]]
        %v1366 = vstv %s1365
        %v1367 = vmul.f32 %v1366, %v765
        %v1368 = vmul.f32 %v1366, %v770
        %v1369 = vmul.f32 %v1366, %v775
        %v1373 = vrot.slane %v1367, 2
        %v1374 = vrot.slane %v1368, 2
        %v1375 = vsel %vm1051, %v1373, %v1374
        %v1376 = vrot.slane %v1369, 2
        %v1377 = vsel %vm1051, %v1374, %v1376
        %1378 = vrot.lane.b32.xlu0 %v1375, 127
        %v1379 = vpop.permute.xlu0 %1378
        %1380 = vrot.lane.b32.xlu0 %v1377, 127
        %v1381 = vpop.permute.xlu0 %1380
        %v1384 = vadd.f32 %v1363, %v1379
        %v1385 = vadd.f32 %v1364, %v1381
        %s1386 = sld [smem:[#allocation2 + $0x1a]]
        %v1387 = vstv %s1386
        %v1388 = vmul.f32 %v1387, %v765
        %v1389 = vmul.f32 %v1387, %v770
        %v1390 = vmul.f32 %v1387, %v775
        %v1394 = vrot.slane %v1388, 2
        %v1395 = vrot.slane %v1389, 2
        %v1396 = vsel %vm1051, %v1394, %v1395
        %v1397 = vrot.slane %v1390, 2
        %v1398 = vsel %vm1051, %v1395, %v1397
        %1399 = vrot.lane.b32.xlu0 %v1396, 126
        %v1400 = vpop.permute.xlu0 %1399
        %1401 = vrot.lane.b32.xlu0 %v1398, 126
        %v1402 = vpop.permute.xlu0 %1401
        %v1405 = vadd.f32 %v1384, %v1400
        %v1406 = vadd.f32 %v1385, %v1402
        %s1407 = sld [smem:[#allocation2 + $0x1b]]
        %v1408 = vstv %s1407
        %v1409 = vmul.f32 %v1408, %v936
        %v1410 = vmul.f32 %v1408, %v941
        %v1411 = vadd.f32 %v1405, %v1409
        %v1412 = vadd.f32 %v1406, %v1410
        %s1413 = sld [smem:[#allocation2 + $0x1c]]
        %v1414 = vstv %s1413
        %v1415 = vmul.f32 %v1414, %v936
        %v1416 = vmul.f32 %v1414, %v941
        %1419 = vrot.lane.b32.xlu0 %v1415, 127
        %v1420 = vpop.permute.xlu0 %1419
        %1421 = vrot.lane.b32.xlu0 %v1416, 127
        %v1422 = vpop.permute.xlu0 %1421
        %v1425 = vadd.f32 %v1411, %v1420
        %v1426 = vadd.f32 %v1412, %v1422
        %s1427 = sld [smem:[#allocation2 + $0x1d]]
        %v1428 = vstv %s1427
        %v1429 = vmul.f32 %v1428, %v936
        %v1430 = vmul.f32 %v1428, %v941
        %1433 = vrot.lane.b32.xlu0 %v1429, 126
        %v1434 = vpop.permute.xlu0 %1433
        %1435 = vrot.lane.b32.xlu0 %v1430, 126
        %v1436 = vpop.permute.xlu0 %1435
        %v1439 = vadd.f32 %v1425, %v1434
        %v1440 = vadd.f32 %v1426, %v1436
        %s1441 = sld [smem:[#allocation2 + $0x1e]]
        %v1442 = vstv %s1441
        %v1443 = vmul.f32 %v1442, %v936
        %v1444 = vmul.f32 %v1442, %v941
        %v1445 = vmul.f32 %v1442, %v946
        %v1449 = vrot.slane %v1443, 1
        %v1450 = vrot.slane %v1444, 1
        %v1451 = vsel %vm991, %v1449, %v1450
        %v1452 = vrot.slane %v1445, 1
        %v1453 = vsel %vm991, %v1450, %v1452
        %v1456 = vadd.f32 %v1439, %v1451
        %v1457 = vadd.f32 %v1440, %v1453
        %s1458 = sld [smem:[#allocation2 + $0x1f]]
        %v1459 = vstv %s1458
        %v1460 = vmul.f32 %v1459, %v936
        %v1461 = vmul.f32 %v1459, %v941
        %v1462 = vmul.f32 %v1459, %v946
        %v1466 = vrot.slane %v1460, 1
        %v1467 = vrot.slane %v1461, 1
        %v1468 = vsel %vm991, %v1466, %v1467
        %v1469 = vrot.slane %v1462, 1
        %v1470 = vsel %vm991, %v1467, %v1469
        %1471 = vrot.lane.b32.xlu0 %v1468, 127
        %v1472 = vpop.permute.xlu0 %1471
        %1473 = vrot.lane.b32.xlu0 %v1470, 127
        %v1474 = vpop.permute.xlu0 %1473
        %v1477 = vadd.f32 %v1456, %v1472
        %v1478 = vadd.f32 %v1457, %v1474
        %s1479 = sld [smem:[#allocation2 + $0x20]]
        %v1480 = vstv %s1479
        %v1481 = vmul.f32 %v1480, %v936
        %v1482 = vmul.f32 %v1480, %v941
        %v1483 = vmul.f32 %v1480, %v946
        %v1487 = vrot.slane %v1481, 1
        %v1488 = vrot.slane %v1482, 1
        %v1489 = vsel %vm991, %v1487, %v1488
        %v1490 = vrot.slane %v1483, 1
        %v1491 = vsel %vm991, %v1488, %v1490
        %1492 = vrot.lane.b32.xlu0 %v1489, 126
        %v1493 = vpop.permute.xlu0 %1492
        %1494 = vrot.lane.b32.xlu0 %v1491, 126
        %v1495 = vpop.permute.xlu0 %1494
        %v1498 = vadd.f32 %v1477, %v1493
        %v1499 = vadd.f32 %v1478, %v1495
        %s1500 = sld [smem:[#allocation2 + $0x21]]
        %v1501 = vstv %s1500
        %v1502 = vmul.f32 %v1501, %v936
        %v1503 = vmul.f32 %v1501, %v941
        %v1504 = vmul.f32 %v1501, %v946
        %v1508 = vrot.slane %v1502, 2
        %v1509 = vrot.slane %v1503, 2
        %v1510 = vsel %vm1051, %v1508, %v1509
        %v1511 = vrot.slane %v1504, 2
        %v1512 = vsel %vm1051, %v1509, %v1511
        %v1515 = vadd.f32 %v1498, %v1510
        %v1516 = vadd.f32 %v1499, %v1512
        %s1517 = sld [smem:[#allocation2 + $0x22]]
        %v1518 = vstv %s1517
        %v1519 = vmul.f32 %v1518, %v936
        %v1520 = vmul.f32 %v1518, %v941
        %v1521 = vmul.f32 %v1518, %v946
        %v1525 = vrot.slane %v1519, 2
        %v1526 = vrot.slane %v1520, 2
        %v1527 = vsel %vm1051, %v1525, %v1526
        %v1528 = vrot.slane %v1521, 2
        %v1529 = vsel %vm1051, %v1526, %v1528
        %1530 = vrot.lane.b32.xlu0 %v1527, 127
        %v1531 = vpop.permute.xlu0 %1530
        %1532 = vrot.lane.b32.xlu0 %v1529, 127
        %v1533 = vpop.permute.xlu0 %1532
        %v1536 = vadd.f32 %v1515, %v1531
        %v1537 = vadd.f32 %v1516, %v1533
        %s1538 = sld [smem:[#allocation2 + $0x23]]
        %v1539 = vstv %s1538
        %v1540 = vmul.f32 %v1539, %v936
        %v1541 = vmul.f32 %v1539, %v941
        %v1542 = vmul.f32 %v1539, %v946
        %v1546 = vrot.slane %v1540, 2
        %v1547 = vrot.slane %v1541, 2
        %v1548 = vsel %vm1051, %v1546, %v1547
        %v1549 = vrot.slane %v1542, 2
        %v1550 = vsel %vm1051, %v1547, %v1549
        %1551 = vrot.lane.b32.xlu0 %v1548, 126
        %v1552 = vpop.permute.xlu0 %1551
        %1553 = vrot.lane.b32.xlu0 %v1550, 126
        %v1554 = vpop.permute.xlu0 %1553
        %v1557 = vadd.f32 %v1536, %v1552
        %v1558 = vadd.f32 %v1537, %v1554
        %s1559 = sld [smem:[#allocation4]]
        %v1560 = vstv %s1559
        %v1561 = vadd.f32 %v1557, %v1560
        %v1562 = vadd.f32 %v1558, %v1560
        %v1563 = vmax.f32 %v1561, 0.0
        %v1564 = vmax.f32 %v1562, 0.0
        %vm1565 = vcmask 130048
        %1566 = vst.msk [vmem:[%s251] sm:$0xff] %vm1565, %v1563
        %1567 = vst.msk [vmem:[%s251 + $0x8] sm:$0xff] %vm1565, %v1564
        %s1568 = sld [smem:[#allocation2 + $0x24]]
        %v1569 = vstv %s1568
        %v1570 = vmul.f32 %v1569, %v423
        %v1571 = vmul.f32 %v1569, %v428
        %v1572 = vadd.f32 %v1570, 0.0
        %v1573 = vadd.f32 %v1571, 0.0
        %s1574 = sld [smem:[#allocation2 + $0x25]]
        %v1575 = vstv %s1574
        %v1576 = vmul.f32 %v1575, %v423
        %v1577 = vmul.f32 %v1575, %v428
        %1580 = vrot.lane.b32.xlu0 %v1576, 127
        %v1581 = vpop.permute.xlu0 %1580
        %1582 = vrot.lane.b32.xlu0 %v1577, 127
        %v1583 = vpop.permute.xlu0 %1582
        %v1586 = vadd.f32 %v1572, %v1581
        %v1587 = vadd.f32 %v1573, %v1583
        %s1588 = sld [smem:[#allocation2 + $0x26]]
        %v1589 = vstv %s1588
        %v1590 = vmul.f32 %v1589, %v423
        %v1591 = vmul.f32 %v1589, %v428
        %1594 = vrot.lane.b32.xlu0 %v1590, 126
        %v1595 = vpop.permute.xlu0 %1594
        %1596 = vrot.lane.b32.xlu0 %v1591, 126
        %v1597 = vpop.permute.xlu0 %1596
        %v1600 = vadd.f32 %v1586, %v1595
        %v1601 = vadd.f32 %v1587, %v1597
        %s1602 = sld [smem:[#allocation2 + $0x27]]
        %v1603 = vstv %s1602
        %v1604 = vmul.f32 %v1603, %v423
        %v1605 = vmul.f32 %v1603, %v428
        %v1606 = vmul.f32 %v1603, %v433
        %v1610 = vrot.slane %v1604, 1
        %v1611 = vrot.slane %v1605, 1
        %v1612 = vsel %vm991, %v1610, %v1611
        %v1613 = vrot.slane %v1606, 1
        %v1614 = vsel %vm991, %v1611, %v1613
        %v1617 = vadd.f32 %v1600, %v1612
        %v1618 = vadd.f32 %v1601, %v1614
        %s1619 = sld [smem:[#allocation2 + $0x28]]
        %v1620 = vstv %s1619
        %v1621 = vmul.f32 %v1620, %v423
        %v1622 = vmul.f32 %v1620, %v428
        %v1623 = vmul.f32 %v1620, %v433
        %v1627 = vrot.slane %v1621, 1
        %v1628 = vrot.slane %v1622, 1
        %v1629 = vsel %vm991, %v1627, %v1628
        %v1630 = vrot.slane %v1623, 1
        %v1631 = vsel %vm991, %v1628, %v1630
        %1632 = vrot.lane.b32.xlu0 %v1629, 127
        %v1633 = vpop.permute.xlu0 %1632
        %1634 = vrot.lane.b32.xlu0 %v1631, 127
        %v1635 = vpop.permute.xlu0 %1634
        %v1638 = vadd.f32 %v1617, %v1633
        %v1639 = vadd.f32 %v1618, %v1635
        %s1640 = sld [smem:[#allocation2 + $0x29]]
        %v1641 = vstv %s1640
        %v1642 = vmul.f32 %v1641, %v423
        %v1643 = vmul.f32 %v1641, %v428
        %v1644 = vmul.f32 %v1641, %v433
        %v1648 = vrot.slane %v1642, 1
        %v1649 = vrot.slane %v1643, 1
        %v1650 = vsel %vm991, %v1648, %v1649
        %v1651 = vrot.slane %v1644, 1
        %v1652 = vsel %vm991, %v1649, %v1651
        %1653 = vrot.lane.b32.xlu0 %v1650, 126
        %v1654 = vpop.permute.xlu0 %1653
        %1655 = vrot.lane.b32.xlu0 %v1652, 126
        %v1656 = vpop.permute.xlu0 %1655
        %v1659 = vadd.f32 %v1638, %v1654
        %v1660 = vadd.f32 %v1639, %v1656
        %s1661 = sld [smem:[#allocation2 + $0x2a]]
        %v1662 = vstv %s1661
        %v1663 = vmul.f32 %v1662, %v423
        %v1664 = vmul.f32 %v1662, %v428
        %v1665 = vmul.f32 %v1662, %v433
        %v1669 = vrot.slane %v1663, 2
        %v1670 = vrot.slane %v1664, 2
        %v1671 = vsel %vm1051, %v1669, %v1670
        %v1672 = vrot.slane %v1665, 2
        %v1673 = vsel %vm1051, %v1670, %v1672
        %v1676 = vadd.f32 %v1659, %v1671
        %v1677 = vadd.f32 %v1660, %v1673
        %s1678 = sld [smem:[#allocation2 + $0x2b]]
        %v1679 = vstv %s1678
        %v1680 = vmul.f32 %v1679, %v423
        %v1681 = vmul.f32 %v1679, %v428
        %v1682 = vmul.f32 %v1679, %v433
        %v1686 = vrot.slane %v1680, 2
        %v1687 = vrot.slane %v1681, 2
        %v1688 = vsel %vm1051, %v1686, %v1687
        %v1689 = vrot.slane %v1682, 2
        %v1690 = vsel %vm1051, %v1687, %v1689
        %1691 = vrot.lane.b32.xlu0 %v1688, 127
        %v1692 = vpop.permute.xlu0 %1691
        %1693 = vrot.lane.b32.xlu0 %v1690, 127
        %v1694 = vpop.permute.xlu0 %1693
        %v1697 = vadd.f32 %v1676, %v1692
        %v1698 = vadd.f32 %v1677, %v1694
        %s1699 = sld [smem:[#allocation2 + $0x2c]]
        %v1700 = vstv %s1699
        %v1701 = vmul.f32 %v1700, %v423
        %v1702 = vmul.f32 %v1700, %v428
        %v1703 = vmul.f32 %v1700, %v433
        %v1707 = vrot.slane %v1701, 2
        %v1708 = vrot.slane %v1702, 2
        %v1709 = vsel %vm1051, %v1707, %v1708
        %v1710 = vrot.slane %v1703, 2
        %v1711 = vsel %vm1051, %v1708, %v1710
        %1712 = vrot.lane.b32.xlu0 %v1709, 126
        %v1713 = vpop.permute.xlu0 %1712
        %1714 = vrot.lane.b32.xlu0 %v1711, 126
        %v1715 = vpop.permute.xlu0 %1714
        %v1718 = vadd.f32 %v1697, %v1713
        %v1719 = vadd.f32 %v1698, %v1715
        %s1720 = sld [smem:[#allocation2 + $0x2d]]
        %v1721 = vstv %s1720
        %v1722 = vmul.f32 %v1721, %v594
        %v1723 = vmul.f32 %v1721, %v599
        %v1724 = vadd.f32 %v1718, %v1722
        %v1725 = vadd.f32 %v1719, %v1723
        %s1726 = sld [smem:[#allocation2 + $0x2e]]
        %v1727 = vstv %s1726
        %v1728 = vmul.f32 %v1727, %v594
        %v1729 = vmul.f32 %v1727, %v599
        %1732 = vrot.lane.b32.xlu0 %v1728, 127
        %v1733 = vpop.permute.xlu0 %1732
        %1734 = vrot.lane.b32.xlu0 %v1729, 127
        %v1735 = vpop.permute.xlu0 %1734
        %v1738 = vadd.f32 %v1724, %v1733
        %v1739 = vadd.f32 %v1725, %v1735
        %s1740 = sld [smem:[#allocation2 + $0x2f]]
        %v1741 = vstv %s1740
        %v1742 = vmul.f32 %v1741, %v594
        %v1743 = vmul.f32 %v1741, %v599
        %1746 = vrot.lane.b32.xlu0 %v1742, 126
        %v1747 = vpop.permute.xlu0 %1746
        %1748 = vrot.lane.b32.xlu0 %v1743, 126
        %v1749 = vpop.permute.xlu0 %1748
        %v1752 = vadd.f32 %v1738, %v1747
        %v1753 = vadd.f32 %v1739, %v1749
        %s1754 = sld [smem:[#allocation2 + $0x30]]
        %v1755 = vstv %s1754
        %v1756 = vmul.f32 %v1755, %v594
        %v1757 = vmul.f32 %v1755, %v599
        %v1758 = vmul.f32 %v1755, %v604
        %v1762 = vrot.slane %v1756, 1
        %v1763 = vrot.slane %v1757, 1
        %v1764 = vsel %vm991, %v1762, %v1763
        %v1765 = vrot.slane %v1758, 1
        %v1766 = vsel %vm991, %v1763, %v1765
        %v1769 = vadd.f32 %v1752, %v1764
        %v1770 = vadd.f32 %v1753, %v1766
        %s1771 = sld [smem:[#allocation2 + $0x31]]
        %v1772 = vstv %s1771
        %v1773 = vmul.f32 %v1772, %v594
        %v1774 = vmul.f32 %v1772, %v599
        %v1775 = vmul.f32 %v1772, %v604
        %v1779 = vrot.slane %v1773, 1
        %v1780 = vrot.slane %v1774, 1
        %v1781 = vsel %vm991, %v1779, %v1780
        %v1782 = vrot.slane %v1775, 1
        %v1783 = vsel %vm991, %v1780, %v1782
        %1784 = vrot.lane.b32.xlu0 %v1781, 127
        %v1785 = vpop.permute.xlu0 %1784
        %1786 = vrot.lane.b32.xlu0 %v1783, 127
        %v1787 = vpop.permute.xlu0 %1786
        %v1790 = vadd.f32 %v1769, %v1785
        %v1791 = vadd.f32 %v1770, %v1787
        %s1792 = sld [smem:[#allocation2 + $0x32]]
        %v1793 = vstv %s1792
        %v1794 = vmul.f32 %v1793, %v594
        %v1795 = vmul.f32 %v1793, %v599
        %v1796 = vmul.f32 %v1793, %v604
        %v1800 = vrot.slane %v1794, 1
        %v1801 = vrot.slane %v1795, 1
        %v1802 = vsel %vm991, %v1800, %v1801
        %v1803 = vrot.slane %v1796, 1
        %v1804 = vsel %vm991, %v1801, %v1803
        %1805 = vrot.lane.b32.xlu0 %v1802, 126
        %v1806 = vpop.permute.xlu0 %1805
        %1807 = vrot.lane.b32.xlu0 %v1804, 126
        %v1808 = vpop.permute.xlu0 %1807
        %v1811 = vadd.f32 %v1790, %v1806
        %v1812 = vadd.f32 %v1791, %v1808
        %s1813 = sld [smem:[#allocation2 + $0x33]]
        %v1814 = vstv %s1813
        %v1815 = vmul.f32 %v1814, %v594
        %v1816 = vmul.f32 %v1814, %v599
        %v1817 = vmul.f32 %v1814, %v604
        %v1821 = vrot.slane %v1815, 2
        %v1822 = vrot.slane %v1816, 2
        %v1823 = vsel %vm1051, %v1821, %v1822
        %v1824 = vrot.slane %v1817, 2
        %v1825 = vsel %vm1051, %v1822, %v1824
        %v1828 = vadd.f32 %v1811, %v1823
        %v1829 = vadd.f32 %v1812, %v1825
        %s1830 = sld [smem:[#allocation2 + $0x34]]
        %v1831 = vstv %s1830
        %v1832 = vmul.f32 %v1831, %v594
        %v1833 = vmul.f32 %v1831, %v599
        %v1834 = vmul.f32 %v1831, %v604
        %v1838 = vrot.slane %v1832, 2
        %v1839 = vrot.slane %v1833, 2
        %v1840 = vsel %vm1051, %v1838, %v1839
        %v1841 = vrot.slane %v1834, 2
        %v1842 = vsel %vm1051, %v1839, %v1841
        %1843 = vrot.lane.b32.xlu0 %v1840, 127
        %v1844 = vpop.permute.xlu0 %1843
        %1845 = vrot.lane.b32.xlu0 %v1842, 127
        %v1846 = vpop.permute.xlu0 %1845
        %v1849 = vadd.f32 %v1828, %v1844
        %v1850 = vadd.f32 %v1829, %v1846
        %s1851 = sld [smem:[#allocation2 + $0x35]]
        %v1852 = vstv %s1851
        %v1853 = vmul.f32 %v1852, %v594
        %v1854 = vmul.f32 %v1852, %v599
        %v1855 = vmul.f32 %v1852, %v604
        %v1859 = vrot.slane %v1853, 2
        %v1860 = vrot.slane %v1854, 2
        %v1861 = vsel %vm1051, %v1859, %v1860
        %v1862 = vrot.slane %v1855, 2
        %v1863 = vsel %vm1051, %v1860, %v1862
        %1864 = vrot.lane.b32.xlu0 %v1861, 126
        %v1865 = vpop.permute.xlu0 %1864
        %1866 = vrot.lane.b32.xlu0 %v1863, 126
        %v1867 = vpop.permute.xlu0 %1866
        %v1870 = vadd.f32 %v1849, %v1865
        %v1871 = vadd.f32 %v1850, %v1867
        %s1872 = sld [smem:[#allocation2 + $0x36]]
        %v1873 = vstv %s1872
        %v1874 = vmul.f32 %v1873, %v765
        %v1875 = vmul.f32 %v1873, %v770
        %v1876 = vadd.f32 %v1870, %v1874
        %v1877 = vadd.f32 %v1871, %v1875
        %s1878 = sld [smem:[#allocation2 + $0x37]]
        %v1879 = vstv %s1878
        %v1880 = vmul.f32 %v1879, %v765
        %v1881 = vmul.f32 %v1879, %v770
        %1884 = vrot.lane.b32.xlu0 %v1880, 127
        %v1885 = vpop.permute.xlu0 %1884
        %1886 = vrot.lane.b32.xlu0 %v1881, 127
        %v1887 = vpop.permute.xlu0 %1886
        %v1890 = vadd.f32 %v1876, %v1885
        %v1891 = vadd.f32 %v1877, %v1887
        %s1892 = sld [smem:[#allocation2 + $0x38]]
        %v1893 = vstv %s1892
        %v1894 = vmul.f32 %v1893, %v765
        %v1895 = vmul.f32 %v1893, %v770
        %1898 = vrot.lane.b32.xlu0 %v1894, 126
        %v1899 = vpop.permute.xlu0 %1898
        %1900 = vrot.lane.b32.xlu0 %v1895, 126
        %v1901 = vpop.permute.xlu0 %1900
        %v1904 = vadd.f32 %v1890, %v1899
        %v1905 = vadd.f32 %v1891, %v1901
        %s1906 = sld [smem:[#allocation2 + $0x39]]
        %v1907 = vstv %s1906
        %v1908 = vmul.f32 %v1907, %v765
        %v1909 = vmul.f32 %v1907, %v770
        %v1910 = vmul.f32 %v1907, %v775
        %v1914 = vrot.slane %v1908, 1
        %v1915 = vrot.slane %v1909, 1
        %v1916 = vsel %vm991, %v1914, %v1915
        %v1917 = vrot.slane %v1910, 1
        %v1918 = vsel %vm991, %v1915, %v1917
        %v1921 = vadd.f32 %v1904, %v1916
        %v1922 = vadd.f32 %v1905, %v1918
        %s1923 = sld [smem:[#allocation2 + $0x3a]]
        %v1924 = vstv %s1923
        %v1925 = vmul.f32 %v1924, %v765
        %v1926 = vmul.f32 %v1924, %v770
        %v1927 = vmul.f32 %v1924, %v775
        %v1931 = vrot.slane %v1925, 1
        %v1932 = vrot.slane %v1926, 1
        %v1933 = vsel %vm991, %v1931, %v1932
        %v1934 = vrot.slane %v1927, 1
        %v1935 = vsel %vm991, %v1932, %v1934
        %1936 = vrot.lane.b32.xlu0 %v1933, 127
        %v1937 = vpop.permute.xlu0 %1936
        %1938 = vrot.lane.b32.xlu0 %v1935, 127
        %v1939 = vpop.permute.xlu0 %1938
        %v1942 = vadd.f32 %v1921, %v1937
        %v1943 = vadd.f32 %v1922, %v1939
        %s1944 = sld [smem:[#allocation2 + $0x3b]]
        %v1945 = vstv %s1944
        %v1946 = vmul.f32 %v1945, %v765
        %v1947 = vmul.f32 %v1945, %v770
        %v1948 = vmul.f32 %v1945, %v775
        %v1952 = vrot.slane %v1946, 1
        %v1953 = vrot.slane %v1947, 1
        %v1954 = vsel %vm991, %v1952, %v1953
        %v1955 = vrot.slane %v1948, 1
        %v1956 = vsel %vm991, %v1953, %v1955
        %1957 = vrot.lane.b32.xlu0 %v1954, 126
        %v1958 = vpop.permute.xlu0 %1957
        %1959 = vrot.lane.b32.xlu0 %v1956, 126
        %v1960 = vpop.permute.xlu0 %1959
        %v1963 = vadd.f32 %v1942, %v1958
        %v1964 = vadd.f32 %v1943, %v1960
        %s1965 = sld [smem:[#allocation2 + $0x3c]]
        %v1966 = vstv %s1965
        %v1967 = vmul.f32 %v1966, %v765
        %v1968 = vmul.f32 %v1966, %v770
        %v1969 = vmul.f32 %v1966, %v775
        %v1973 = vrot.slane %v1967, 2
        %v1974 = vrot.slane %v1968, 2
        %v1975 = vsel %vm1051, %v1973, %v1974
        %v1976 = vrot.slane %v1969, 2
        %v1977 = vsel %vm1051, %v1974, %v1976
        %v1980 = vadd.f32 %v1963, %v1975
        %v1981 = vadd.f32 %v1964, %v1977
        %s1982 = sld [smem:[#allocation2 + $0x3d]]
        %v1983 = vstv %s1982
        %v1984 = vmul.f32 %v1983, %v765
        %v1985 = vmul.f32 %v1983, %v770
        %v1986 = vmul.f32 %v1983, %v775
        %v1990 = vrot.slane %v1984, 2
        %v1991 = vrot.slane %v1985, 2
        %v1992 = vsel %vm1051, %v1990, %v1991
        %v1993 = vrot.slane %v1986, 2
        %v1994 = vsel %vm1051, %v1991, %v1993
        %1995 = vrot.lane.b32.xlu0 %v1992, 127
        %v1996 = vpop.permute.xlu0 %1995
        %1997 = vrot.lane.b32.xlu0 %v1994, 127
        %v1998 = vpop.permute.xlu0 %1997
        %v2001 = vadd.f32 %v1980, %v1996
        %v2002 = vadd.f32 %v1981, %v1998
        %s2003 = sld [smem:[#allocation2 + $0x3e]]
        %v2004 = vstv %s2003
        %v2005 = vmul.f32 %v2004, %v765
        %v2006 = vmul.f32 %v2004, %v770
        %v2007 = vmul.f32 %v2004, %v775
        %v2011 = vrot.slane %v2005, 2
        %v2012 = vrot.slane %v2006, 2
        %v2013 = vsel %vm1051, %v2011, %v2012
        %v2014 = vrot.slane %v2007, 2
        %v2015 = vsel %vm1051, %v2012, %v2014
        %2016 = vrot.lane.b32.xlu0 %v2013, 126
        %v2017 = vpop.permute.xlu0 %2016
        %2018 = vrot.lane.b32.xlu0 %v2015, 126
        %v2019 = vpop.permute.xlu0 %2018
        %v2022 = vadd.f32 %v2001, %v2017
        %v2023 = vadd.f32 %v2002, %v2019
        %s2024 = sld [smem:[#allocation2 + $0x3f]]
        %v2025 = vstv %s2024
        %v2026 = vmul.f32 %v2025, %v936
        %v2027 = vmul.f32 %v2025, %v941
        %v2028 = vadd.f32 %v2022, %v2026
        %v2029 = vadd.f32 %v2023, %v2027
        %s2030 = sld [smem:[#allocation2 + $0x40]]
        %v2031 = vstv %s2030
        %v2032 = vmul.f32 %v2031, %v936
        %v2033 = vmul.f32 %v2031, %v941
        %2036 = vrot.lane.b32.xlu0 %v2032, 127
        %v2037 = vpop.permute.xlu0 %2036
        %2038 = vrot.lane.b32.xlu0 %v2033, 127
        %v2039 = vpop.permute.xlu0 %2038
        %v2042 = vadd.f32 %v2028, %v2037
        %v2043 = vadd.f32 %v2029, %v2039
        %s2044 = sld [smem:[#allocation2 + $0x41]]
        %v2045 = vstv %s2044
        %v2046 = vmul.f32 %v2045, %v936
        %v2047 = vmul.f32 %v2045, %v941
        %2050 = vrot.lane.b32.xlu0 %v2046, 126
        %v2051 = vpop.permute.xlu0 %2050
        %2052 = vrot.lane.b32.xlu0 %v2047, 126
        %v2053 = vpop.permute.xlu0 %2052
        %v2056 = vadd.f32 %v2042, %v2051
        %v2057 = vadd.f32 %v2043, %v2053
        %s2058 = sld [smem:[#allocation2 + $0x42]]
        %v2059 = vstv %s2058
        %v2060 = vmul.f32 %v2059, %v936
        %v2061 = vmul.f32 %v2059, %v941
        %v2062 = vmul.f32 %v2059, %v946
        %v2066 = vrot.slane %v2060, 1
        %v2067 = vrot.slane %v2061, 1
        %v2068 = vsel %vm991, %v2066, %v2067
        %v2069 = vrot.slane %v2062, 1
        %v2070 = vsel %vm991, %v2067, %v2069
        %v2073 = vadd.f32 %v2056, %v2068
        %v2074 = vadd.f32 %v2057, %v2070
        %s2075 = sld [smem:[#allocation2 + $0x43]]
        %v2076 = vstv %s2075
        %v2077 = vmul.f32 %v2076, %v936
        %v2078 = vmul.f32 %v2076, %v941
        %v2079 = vmul.f32 %v2076, %v946
        %v2083 = vrot.slane %v2077, 1
        %v2084 = vrot.slane %v2078, 1
        %v2085 = vsel %vm991, %v2083, %v2084
        %v2086 = vrot.slane %v2079, 1
        %v2087 = vsel %vm991, %v2084, %v2086
        %2088 = vrot.lane.b32.xlu0 %v2085, 127
        %v2089 = vpop.permute.xlu0 %2088
        %2090 = vrot.lane.b32.xlu0 %v2087, 127
        %v2091 = vpop.permute.xlu0 %2090
        %v2094 = vadd.f32 %v2073, %v2089
        %v2095 = vadd.f32 %v2074, %v2091
        %s2096 = sld [smem:[#allocation2 + $0x44]]
        %v2097 = vstv %s2096
        %v2098 = vmul.f32 %v2097, %v936
        %v2099 = vmul.f32 %v2097, %v941
        %v2100 = vmul.f32 %v2097, %v946
        %v2104 = vrot.slane %v2098, 1
        %v2105 = vrot.slane %v2099, 1
        %v2106 = vsel %vm991, %v2104, %v2105
        %v2107 = vrot.slane %v2100, 1
        %v2108 = vsel %vm991, %v2105, %v2107
        %2109 = vrot.lane.b32.xlu0 %v2106, 126
        %v2110 = vpop.permute.xlu0 %2109
        %2111 = vrot.lane.b32.xlu0 %v2108, 126
        %v2112 = vpop.permute.xlu0 %2111
        %v2115 = vadd.f32 %v2094, %v2110
        %v2116 = vadd.f32 %v2095, %v2112
        %s2117 = sld [smem:[#allocation2 + $0x45]]
        %v2118 = vstv %s2117
        %v2119 = vmul.f32 %v2118, %v936
        %v2120 = vmul.f32 %v2118, %v941
        %v2121 = vmul.f32 %v2118, %v946
        %v2125 = vrot.slane %v2119, 2
        %v2126 = vrot.slane %v2120, 2
        %v2127 = vsel %vm1051, %v2125, %v2126
        %v2128 = vrot.slane %v2121, 2
        %v2129 = vsel %vm1051, %v2126, %v2128
        %v2132 = vadd.f32 %v2115, %v2127
        %v2133 = vadd.f32 %v2116, %v2129
        %s2134 = sld [smem:[#allocation2 + $0x46]]
        %v2135 = vstv %s2134
        %v2136 = vmul.f32 %v2135, %v936
        %v2137 = vmul.f32 %v2135, %v941
        %v2138 = vmul.f32 %v2135, %v946
        %v2142 = vrot.slane %v2136, 2
        %v2143 = vrot.slane %v2137, 2
        %v2144 = vsel %vm1051, %v2142, %v2143
        %v2145 = vrot.slane %v2138, 2
        %v2146 = vsel %vm1051, %v2143, %v2145
        %2147 = vrot.lane.b32.xlu0 %v2144, 127
        %v2148 = vpop.permute.xlu0 %2147
        %2149 = vrot.lane.b32.xlu0 %v2146, 127
        %v2150 = vpop.permute.xlu0 %2149
        %v2153 = vadd.f32 %v2132, %v2148
        %v2154 = vadd.f32 %v2133, %v2150
        %s2155 = sld [smem:[#allocation2 + $0x47]]
        %v2156 = vstv %s2155
        %v2157 = vmul.f32 %v2156, %v936
        %v2158 = vmul.f32 %v2156, %v941
        %v2159 = vmul.f32 %v2156, %v946
        %v2163 = vrot.slane %v2157, 2
        %v2164 = vrot.slane %v2158, 2
        %v2165 = vsel %vm1051, %v2163, %v2164
        %v2166 = vrot.slane %v2159, 2
        %v2167 = vsel %vm1051, %v2164, %v2166
        %2168 = vrot.lane.b32.xlu0 %v2165, 126
        %v2169 = vpop.permute.xlu0 %2168
        %2170 = vrot.lane.b32.xlu0 %v2167, 126
        %v2171 = vpop.permute.xlu0 %2170
        %v2174 = vadd.f32 %v2153, %v2169
        %v2175 = vadd.f32 %v2154, %v2171
        %s2176 = sld [smem:[#allocation4 + $0x1]]
        %v2177 = vstv %s2176
        %v2178 = vadd.f32 %v2174, %v2177
        %v2179 = vadd.f32 %v2175, %v2177
        %v2180 = vmax.f32 %v2178, 0.0
        %v2181 = vmax.f32 %v2179, 0.0
        %s2182 = scalar_lea.vmem %s251, 16
        %2183 = vst.msk [vmem:[%s2182] sm:$0xff] %vm1565, %v2180
        %2184 = vst.msk [vmem:[%s2182 + $0x8] sm:$0xff] %vm1565, %v2181
        %s2185 = sld [smem:[#allocation2 + $0x48]]
        %v2186 = vstv %s2185
        %v2187 = vmul.f32 %v2186, %v423
        %v2188 = vmul.f32 %v2186, %v428
        %v2189 = vadd.f32 %v2187, 0.0
        %v2190 = vadd.f32 %v2188, 0.0
        %s2191 = sld [smem:[#allocation2 + $0x49]]
        %v2192 = vstv %s2191
        %v2193 = vmul.f32 %v2192, %v423
        %v2194 = vmul.f32 %v2192, %v428
        %2197 = vrot.lane.b32.xlu0 %v2193, 127
        %v2198 = vpop.permute.xlu0 %2197
        %2199 = vrot.lane.b32.xlu0 %v2194, 127
        %v2200 = vpop.permute.xlu0 %2199
        %v2203 = vadd.f32 %v2189, %v2198
        %v2204 = vadd.f32 %v2190, %v2200
        %s2205 = sld [smem:[#allocation2 + $0x4a]]
        %v2206 = vstv %s2205
        %v2207 = vmul.f32 %v2206, %v423
        %v2208 = vmul.f32 %v2206, %v428
        %2211 = vrot.lane.b32.xlu0 %v2207, 126
        %v2212 = vpop.permute.xlu0 %2211
        %2213 = vrot.lane.b32.xlu0 %v2208, 126
        %v2214 = vpop.permute.xlu0 %2213
        %v2217 = vadd.f32 %v2203, %v2212
        %v2218 = vadd.f32 %v2204, %v2214
        %s2219 = sld [smem:[#allocation2 + $0x4b]]
        %v2220 = vstv %s2219
        %v2221 = vmul.f32 %v2220, %v423
        %v2222 = vmul.f32 %v2220, %v428
        %v2223 = vmul.f32 %v2220, %v433
        %v2227 = vrot.slane %v2221, 1
        %v2228 = vrot.slane %v2222, 1
        %v2229 = vsel %vm991, %v2227, %v2228
        %v2230 = vrot.slane %v2223, 1
        %v2231 = vsel %vm991, %v2228, %v2230
        %v2234 = vadd.f32 %v2217, %v2229
        %v2235 = vadd.f32 %v2218, %v2231
        %s2236 = sld [smem:[#allocation2 + $0x4c]]
        %v2237 = vstv %s2236
        %v2238 = vmul.f32 %v2237, %v423
        %v2239 = vmul.f32 %v2237, %v428
        %v2240 = vmul.f32 %v2237, %v433
        %v2244 = vrot.slane %v2238, 1
        %v2245 = vrot.slane %v2239, 1
        %v2246 = vsel %vm991, %v2244, %v2245
        %v2247 = vrot.slane %v2240, 1
        %v2248 = vsel %vm991, %v2245, %v2247
        %2249 = vrot.lane.b32.xlu0 %v2246, 127
        %v2250 = vpop.permute.xlu0 %2249
        %2251 = vrot.lane.b32.xlu0 %v2248, 127
        %v2252 = vpop.permute.xlu0 %2251
        %v2255 = vadd.f32 %v2234, %v2250
        %v2256 = vadd.f32 %v2235, %v2252
        %s2257 = sld [smem:[#allocation2 + $0x4d]]
        %v2258 = vstv %s2257
        %v2259 = vmul.f32 %v2258, %v423
        %v2260 = vmul.f32 %v2258, %v428
        %v2261 = vmul.f32 %v2258, %v433
        %v2265 = vrot.slane %v2259, 1
        %v2266 = vrot.slane %v2260, 1
        %v2267 = vsel %vm991, %v2265, %v2266
        %v2268 = vrot.slane %v2261, 1
        %v2269 = vsel %vm991, %v2266, %v2268
        %2270 = vrot.lane.b32.xlu0 %v2267, 126
        %v2271 = vpop.permute.xlu0 %2270
        %2272 = vrot.lane.b32.xlu0 %v2269, 126
        %v2273 = vpop.permute.xlu0 %2272
        %v2276 = vadd.f32 %v2255, %v2271
        %v2277 = vadd.f32 %v2256, %v2273
        %s2278 = sld [smem:[#allocation2 + $0x4e]]
        %v2279 = vstv %s2278
        %v2280 = vmul.f32 %v2279, %v423
        %v2281 = vmul.f32 %v2279, %v428
        %v2282 = vmul.f32 %v2279, %v433
        %v2286 = vrot.slane %v2280, 2
        %v2287 = vrot.slane %v2281, 2
        %v2288 = vsel %vm1051, %v2286, %v2287
        %v2289 = vrot.slane %v2282, 2
        %v2290 = vsel %vm1051, %v2287, %v2289
        %v2293 = vadd.f32 %v2276, %v2288
        %v2294 = vadd.f32 %v2277, %v2290
        %s2295 = sld [smem:[#allocation2 + $0x4f]]
        %v2296 = vstv %s2295
        %v2297 = vmul.f32 %v2296, %v423
        %v2298 = vmul.f32 %v2296, %v428
        %v2299 = vmul.f32 %v2296, %v433
        %v2303 = vrot.slane %v2297, 2
        %v2304 = vrot.slane %v2298, 2
        %v2305 = vsel %vm1051, %v2303, %v2304
        %v2306 = vrot.slane %v2299, 2
        %v2307 = vsel %vm1051, %v2304, %v2306
        %2308 = vrot.lane.b32.xlu0 %v2305, 127
        %v2309 = vpop.permute.xlu0 %2308
        %2310 = vrot.lane.b32.xlu0 %v2307, 127
        %v2311 = vpop.permute.xlu0 %2310
        %v2314 = vadd.f32 %v2293, %v2309
        %v2315 = vadd.f32 %v2294, %v2311
        %s2316 = sld [smem:[#allocation2 + $0x50]]
        %v2317 = vstv %s2316
        %v2318 = vmul.f32 %v2317, %v423
        %v2319 = vmul.f32 %v2317, %v428
        %v2320 = vmul.f32 %v2317, %v433
        %v2324 = vrot.slane %v2318, 2
        %v2325 = vrot.slane %v2319, 2
        %v2326 = vsel %vm1051, %v2324, %v2325
        %v2327 = vrot.slane %v2320, 2
        %v2328 = vsel %vm1051, %v2325, %v2327
        %2329 = vrot.lane.b32.xlu0 %v2326, 126
        %v2330 = vpop.permute.xlu0 %2329
        %2331 = vrot.lane.b32.xlu0 %v2328, 126
        %v2332 = vpop.permute.xlu0 %2331
        %v2335 = vadd.f32 %v2314, %v2330
        %v2336 = vadd.f32 %v2315, %v2332
        %s2337 = sld [smem:[#allocation2 + $0x51]]
        %v2338 = vstv %s2337
        %v2339 = vmul.f32 %v2338, %v594
        %v2340 = vmul.f32 %v2338, %v599
        %v2341 = vadd.f32 %v2335, %v2339
        %v2342 = vadd.f32 %v2336, %v2340
        %s2343 = sld [smem:[#allocation2 + $0x52]]
        %v2344 = vstv %s2343
        %v2345 = vmul.f32 %v2344, %v594
        %v2346 = vmul.f32 %v2344, %v599
        %2349 = vrot.lane.b32.xlu0 %v2345, 127
        %v2350 = vpop.permute.xlu0 %2349
        %2351 = vrot.lane.b32.xlu0 %v2346, 127
        %v2352 = vpop.permute.xlu0 %2351
        %v2355 = vadd.f32 %v2341, %v2350
        %v2356 = vadd.f32 %v2342, %v2352
        %s2357 = sld [smem:[#allocation2 + $0x53]]
        %v2358 = vstv %s2357
        %v2359 = vmul.f32 %v2358, %v594
        %v2360 = vmul.f32 %v2358, %v599
        %2363 = vrot.lane.b32.xlu0 %v2359, 126
        %v2364 = vpop.permute.xlu0 %2363
        %2365 = vrot.lane.b32.xlu0 %v2360, 126
        %v2366 = vpop.permute.xlu0 %2365
        %v2369 = vadd.f32 %v2355, %v2364
        %v2370 = vadd.f32 %v2356, %v2366
        %s2371 = sld [smem:[#allocation2 + $0x54]]
        %v2372 = vstv %s2371
        %v2373 = vmul.f32 %v2372, %v594
        %v2374 = vmul.f32 %v2372, %v599
        %v2375 = vmul.f32 %v2372, %v604
        %v2379 = vrot.slane %v2373, 1
        %v2380 = vrot.slane %v2374, 1
        %v2381 = vsel %vm991, %v2379, %v2380
        %v2382 = vrot.slane %v2375, 1
        %v2383 = vsel %vm991, %v2380, %v2382
        %v2386 = vadd.f32 %v2369, %v2381
        %v2387 = vadd.f32 %v2370, %v2383
        %s2388 = sld [smem:[#allocation2 + $0x55]]
        %v2389 = vstv %s2388
        %v2390 = vmul.f32 %v2389, %v594
        %v2391 = vmul.f32 %v2389, %v599
        %v2392 = vmul.f32 %v2389, %v604
        %v2396 = vrot.slane %v2390, 1
        %v2397 = vrot.slane %v2391, 1
        %v2398 = vsel %vm991, %v2396, %v2397
        %v2399 = vrot.slane %v2392, 1
        %v2400 = vsel %vm991, %v2397, %v2399
        %2401 = vrot.lane.b32.xlu0 %v2398, 127
        %v2402 = vpop.permute.xlu0 %2401
        %2403 = vrot.lane.b32.xlu0 %v2400, 127
        %v2404 = vpop.permute.xlu0 %2403
        %v2407 = vadd.f32 %v2386, %v2402
        %v2408 = vadd.f32 %v2387, %v2404
        %s2409 = sld [smem:[#allocation2 + $0x56]]
        %v2410 = vstv %s2409
        %v2411 = vmul.f32 %v2410, %v594
        %v2412 = vmul.f32 %v2410, %v599
        %v2413 = vmul.f32 %v2410, %v604
        %v2417 = vrot.slane %v2411, 1
        %v2418 = vrot.slane %v2412, 1
        %v2419 = vsel %vm991, %v2417, %v2418
        %v2420 = vrot.slane %v2413, 1
        %v2421 = vsel %vm991, %v2418, %v2420
        %2422 = vrot.lane.b32.xlu0 %v2419, 126
        %v2423 = vpop.permute.xlu0 %2422
        %2424 = vrot.lane.b32.xlu0 %v2421, 126
        %v2425 = vpop.permute.xlu0 %2424
        %v2428 = vadd.f32 %v2407, %v2423
        %v2429 = vadd.f32 %v2408, %v2425
        %s2430 = sld [smem:[#allocation2 + $0x57]]
        %v2431 = vstv %s2430
        %v2432 = vmul.f32 %v2431, %v594
        %v2433 = vmul.f32 %v2431, %v599
        %v2434 = vmul.f32 %v2431, %v604
        %v2438 = vrot.slane %v2432, 2
        %v2439 = vrot.slane %v2433, 2
        %v2440 = vsel %vm1051, %v2438, %v2439
        %v2441 = vrot.slane %v2434, 2
        %v2442 = vsel %vm1051, %v2439, %v2441
        %v2445 = vadd.f32 %v2428, %v2440
        %v2446 = vadd.f32 %v2429, %v2442
        %s2447 = sld [smem:[#allocation2 + $0x58]]
        %v2448 = vstv %s2447
        %v2449 = vmul.f32 %v2448, %v594
        %v2450 = vmul.f32 %v2448, %v599
        %v2451 = vmul.f32 %v2448, %v604
        %v2455 = vrot.slane %v2449, 2
        %v2456 = vrot.slane %v2450, 2
        %v2457 = vsel %vm1051, %v2455, %v2456
        %v2458 = vrot.slane %v2451, 2
        %v2459 = vsel %vm1051, %v2456, %v2458
        %2460 = vrot.lane.b32.xlu0 %v2457, 127
        %v2461 = vpop.permute.xlu0 %2460
        %2462 = vrot.lane.b32.xlu0 %v2459, 127
        %v2463 = vpop.permute.xlu0 %2462
        %v2466 = vadd.f32 %v2445, %v2461
        %v2467 = vadd.f32 %v2446, %v2463
        %s2468 = sld [smem:[#allocation2 + $0x59]]
        %v2469 = vstv %s2468
        %v2470 = vmul.f32 %v2469, %v594
        %v2471 = vmul.f32 %v2469, %v599
        %v2472 = vmul.f32 %v2469, %v604
        %v2476 = vrot.slane %v2470, 2
        %v2477 = vrot.slane %v2471, 2
        %v2478 = vsel %vm1051, %v2476, %v2477
        %v2479 = vrot.slane %v2472, 2
        %v2480 = vsel %vm1051, %v2477, %v2479
        %2481 = vrot.lane.b32.xlu0 %v2478, 126
        %v2482 = vpop.permute.xlu0 %2481
        %2483 = vrot.lane.b32.xlu0 %v2480, 126
        %v2484 = vpop.permute.xlu0 %2483
        %v2487 = vadd.f32 %v2466, %v2482
        %v2488 = vadd.f32 %v2467, %v2484
        %s2489 = sld [smem:[#allocation2 + $0x5a]]
        %v2490 = vstv %s2489
        %v2491 = vmul.f32 %v2490, %v765
        %v2492 = vmul.f32 %v2490, %v770
        %v2493 = vadd.f32 %v2487, %v2491
        %v2494 = vadd.f32 %v2488, %v2492
        %s2495 = sld [smem:[#allocation2 + $0x5b]]
        %v2496 = vstv %s2495
        %v2497 = vmul.f32 %v2496, %v765
        %v2498 = vmul.f32 %v2496, %v770
        %2501 = vrot.lane.b32.xlu0 %v2497, 127
        %v2502 = vpop.permute.xlu0 %2501
        %2503 = vrot.lane.b32.xlu0 %v2498, 127
        %v2504 = vpop.permute.xlu0 %2503
        %v2507 = vadd.f32 %v2493, %v2502
        %v2508 = vadd.f32 %v2494, %v2504
        %s2509 = sld [smem:[#allocation2 + $0x5c]]
        %v2510 = vstv %s2509
        %v2511 = vmul.f32 %v2510, %v765
        %v2512 = vmul.f32 %v2510, %v770
        %2515 = vrot.lane.b32.xlu0 %v2511, 126
        %v2516 = vpop.permute.xlu0 %2515
        %2517 = vrot.lane.b32.xlu0 %v2512, 126
        %v2518 = vpop.permute.xlu0 %2517
        %v2521 = vadd.f32 %v2507, %v2516
        %v2522 = vadd.f32 %v2508, %v2518
        %s2523 = sld [smem:[#allocation2 + $0x5d]]
        %v2524 = vstv %s2523
        %v2525 = vmul.f32 %v2524, %v765
        %v2526 = vmul.f32 %v2524, %v770
        %v2527 = vmul.f32 %v2524, %v775
        %v2531 = vrot.slane %v2525, 1
        %v2532 = vrot.slane %v2526, 1
        %v2533 = vsel %vm991, %v2531, %v2532
        %v2534 = vrot.slane %v2527, 1
        %v2535 = vsel %vm991, %v2532, %v2534
        %v2538 = vadd.f32 %v2521, %v2533
        %v2539 = vadd.f32 %v2522, %v2535
        %s2540 = sld [smem:[#allocation2 + $0x5e]]
        %v2541 = vstv %s2540
        %v2542 = vmul.f32 %v2541, %v765
        %v2543 = vmul.f32 %v2541, %v770
        %v2544 = vmul.f32 %v2541, %v775
        %v2548 = vrot.slane %v2542, 1
        %v2549 = vrot.slane %v2543, 1
        %v2550 = vsel %vm991, %v2548, %v2549
        %v2551 = vrot.slane %v2544, 1
        %v2552 = vsel %vm991, %v2549, %v2551
        %2553 = vrot.lane.b32.xlu0 %v2550, 127
        %v2554 = vpop.permute.xlu0 %2553
        %2555 = vrot.lane.b32.xlu0 %v2552, 127
        %v2556 = vpop.permute.xlu0 %2555
        %v2559 = vadd.f32 %v2538, %v2554
        %v2560 = vadd.f32 %v2539, %v2556
        %s2561 = sld [smem:[#allocation2 + $0x5f]]
        %v2562 = vstv %s2561
        %v2563 = vmul.f32 %v2562, %v765
        %v2564 = vmul.f32 %v2562, %v770
        %v2565 = vmul.f32 %v2562, %v775
        %v2569 = vrot.slane %v2563, 1
        %v2570 = vrot.slane %v2564, 1
        %v2571 = vsel %vm991, %v2569, %v2570
        %v2572 = vrot.slane %v2565, 1
        %v2573 = vsel %vm991, %v2570, %v2572
        %2574 = vrot.lane.b32.xlu0 %v2571, 126
        %v2575 = vpop.permute.xlu0 %2574
        %2576 = vrot.lane.b32.xlu0 %v2573, 126
        %v2577 = vpop.permute.xlu0 %2576
        %v2580 = vadd.f32 %v2559, %v2575
        %v2581 = vadd.f32 %v2560, %v2577
        %s2582 = sld [smem:[#allocation2 + $0x60]]
        %v2583 = vstv %s2582
        %v2584 = vmul.f32 %v2583, %v765
        %v2585 = vmul.f32 %v2583, %v770
        %v2586 = vmul.f32 %v2583, %v775
        %v2590 = vrot.slane %v2584, 2
        %v2591 = vrot.slane %v2585, 2
        %v2592 = vsel %vm1051, %v2590, %v2591
        %v2593 = vrot.slane %v2586, 2
        %v2594 = vsel %vm1051, %v2591, %v2593
        %v2597 = vadd.f32 %v2580, %v2592
        %v2598 = vadd.f32 %v2581, %v2594
        %s2599 = sld [smem:[#allocation2 + $0x61]]
        %v2600 = vstv %s2599
        %v2601 = vmul.f32 %v2600, %v765
        %v2602 = vmul.f32 %v2600, %v770
        %v2603 = vmul.f32 %v2600, %v775
        %v2607 = vrot.slane %v2601, 2
        %v2608 = vrot.slane %v2602, 2
        %v2609 = vsel %vm1051, %v2607, %v2608
        %v2610 = vrot.slane %v2603, 2
        %v2611 = vsel %vm1051, %v2608, %v2610
        %2612 = vrot.lane.b32.xlu0 %v2609, 127
        %v2613 = vpop.permute.xlu0 %2612
        %2614 = vrot.lane.b32.xlu0 %v2611, 127
        %v2615 = vpop.permute.xlu0 %2614
        %v2618 = vadd.f32 %v2597, %v2613
        %v2619 = vadd.f32 %v2598, %v2615
        %s2620 = sld [smem:[#allocation2 + $0x62]]
        %v2621 = vstv %s2620
        %v2622 = vmul.f32 %v2621, %v765
        %v2623 = vmul.f32 %v2621, %v770
        %v2624 = vmul.f32 %v2621, %v775
        %v2628 = vrot.slane %v2622, 2
        %v2629 = vrot.slane %v2623, 2
        %v2630 = vsel %vm1051, %v2628, %v2629
        %v2631 = vrot.slane %v2624, 2
        %v2632 = vsel %vm1051, %v2629, %v2631
        %2633 = vrot.lane.b32.xlu0 %v2630, 126
        %v2634 = vpop.permute.xlu0 %2633
        %2635 = vrot.lane.b32.xlu0 %v2632, 126
        %v2636 = vpop.permute.xlu0 %2635
        %v2639 = vadd.f32 %v2618, %v2634
        %v2640 = vadd.f32 %v2619, %v2636
        %s2641 = sld [smem:[#allocation2 + $0x63]]
        %v2642 = vstv %s2641
        %v2643 = vmul.f32 %v2642, %v936
        %v2644 = vmul.f32 %v2642, %v941
        %v2645 = vadd.f32 %v2639, %v2643
        %v2646 = vadd.f32 %v2640, %v2644
        %s2647 = sld [smem:[#allocation2 + $0x64]]
        %v2648 = vstv %s2647
        %v2649 = vmul.f32 %v2648, %v936
        %v2650 = vmul.f32 %v2648, %v941
        %2653 = vrot.lane.b32.xlu0 %v2649, 127
        %v2654 = vpop.permute.xlu0 %2653
        %2655 = vrot.lane.b32.xlu0 %v2650, 127
        %v2656 = vpop.permute.xlu0 %2655
        %v2659 = vadd.f32 %v2645, %v2654
        %v2660 = vadd.f32 %v2646, %v2656
        %s2661 = sld [smem:[#allocation2 + $0x65]]
        %v2662 = vstv %s2661
        %v2663 = vmul.f32 %v2662, %v936
        %v2664 = vmul.f32 %v2662, %v941
        %2667 = vrot.lane.b32.xlu0 %v2663, 126
        %v2668 = vpop.permute.xlu0 %2667
        %2669 = vrot.lane.b32.xlu0 %v2664, 126
        %v2670 = vpop.permute.xlu0 %2669
        %v2673 = vadd.f32 %v2659, %v2668
        %v2674 = vadd.f32 %v2660, %v2670
        %s2675 = sld [smem:[#allocation2 + $0x66]]
        %v2676 = vstv %s2675
        %v2677 = vmul.f32 %v2676, %v936
        %v2678 = vmul.f32 %v2676, %v941
        %v2679 = vmul.f32 %v2676, %v946
        %v2683 = vrot.slane %v2677, 1
        %v2684 = vrot.slane %v2678, 1
        %v2685 = vsel %vm991, %v2683, %v2684
        %v2686 = vrot.slane %v2679, 1
        %v2687 = vsel %vm991, %v2684, %v2686
        %v2690 = vadd.f32 %v2673, %v2685
        %v2691 = vadd.f32 %v2674, %v2687
        %s2692 = sld [smem:[#allocation2 + $0x67]]
        %v2693 = vstv %s2692
        %v2694 = vmul.f32 %v2693, %v936
        %v2695 = vmul.f32 %v2693, %v941
        %v2696 = vmul.f32 %v2693, %v946
        %v2700 = vrot.slane %v2694, 1
        %v2701 = vrot.slane %v2695, 1
        %v2702 = vsel %vm991, %v2700, %v2701
        %v2703 = vrot.slane %v2696, 1
        %v2704 = vsel %vm991, %v2701, %v2703
        %2705 = vrot.lane.b32.xlu0 %v2702, 127
        %v2706 = vpop.permute.xlu0 %2705
        %2707 = vrot.lane.b32.xlu0 %v2704, 127
        %v2708 = vpop.permute.xlu0 %2707
        %v2711 = vadd.f32 %v2690, %v2706
        %v2712 = vadd.f32 %v2691, %v2708
        %s2713 = sld [smem:[#allocation2 + $0x68]]
        %v2714 = vstv %s2713
        %v2715 = vmul.f32 %v2714, %v936
        %v2716 = vmul.f32 %v2714, %v941
        %v2717 = vmul.f32 %v2714, %v946
        %v2721 = vrot.slane %v2715, 1
        %v2722 = vrot.slane %v2716, 1
        %v2723 = vsel %vm991, %v2721, %v2722
        %v2724 = vrot.slane %v2717, 1
        %v2725 = vsel %vm991, %v2722, %v2724
        %2726 = vrot.lane.b32.xlu0 %v2723, 126
        %v2727 = vpop.permute.xlu0 %2726
        %2728 = vrot.lane.b32.xlu0 %v2725, 126
        %v2729 = vpop.permute.xlu0 %2728
        %v2732 = vadd.f32 %v2711, %v2727
        %v2733 = vadd.f32 %v2712, %v2729
        %s2734 = sld [smem:[#allocation2 + $0x69]]
        %v2735 = vstv %s2734
        %v2736 = vmul.f32 %v2735, %v936
        %v2737 = vmul.f32 %v2735, %v941
        %v2738 = vmul.f32 %v2735, %v946
        %v2742 = vrot.slane %v2736, 2
        %v2743 = vrot.slane %v2737, 2
        %v2744 = vsel %vm1051, %v2742, %v2743
        %v2745 = vrot.slane %v2738, 2
        %v2746 = vsel %vm1051, %v2743, %v2745
        %v2749 = vadd.f32 %v2732, %v2744
        %v2750 = vadd.f32 %v2733, %v2746
        %s2751 = sld [smem:[#allocation2 + $0x6a]]
        %v2752 = vstv %s2751
        %v2753 = vmul.f32 %v2752, %v936
        %v2754 = vmul.f32 %v2752, %v941
        %v2755 = vmul.f32 %v2752, %v946
        %v2759 = vrot.slane %v2753, 2
        %v2760 = vrot.slane %v2754, 2
        %v2761 = vsel %vm1051, %v2759, %v2760
        %v2762 = vrot.slane %v2755, 2
        %v2763 = vsel %vm1051, %v2760, %v2762
        %2764 = vrot.lane.b32.xlu0 %v2761, 127
        %v2765 = vpop.permute.xlu0 %2764
        %2766 = vrot.lane.b32.xlu0 %v2763, 127
        %v2767 = vpop.permute.xlu0 %2766
        %v2770 = vadd.f32 %v2749, %v2765
        %v2771 = vadd.f32 %v2750, %v2767
        %s2772 = sld [smem:[#allocation2 + $0x6b]]
        %v2773 = vstv %s2772
        %v2774 = vmul.f32 %v2773, %v936
        %v2775 = vmul.f32 %v2773, %v941
        %v2776 = vmul.f32 %v2773, %v946
        %v2780 = vrot.slane %v2774, 2
        %v2781 = vrot.slane %v2775, 2
        %v2782 = vsel %vm1051, %v2780, %v2781
        %v2783 = vrot.slane %v2776, 2
        %v2784 = vsel %vm1051, %v2781, %v2783
        %2785 = vrot.lane.b32.xlu0 %v2782, 126
        %v2786 = vpop.permute.xlu0 %2785
        %2787 = vrot.lane.b32.xlu0 %v2784, 126
        %v2788 = vpop.permute.xlu0 %2787
        %v2791 = vadd.f32 %v2770, %v2786
        %v2792 = vadd.f32 %v2771, %v2788
        %s2793 = sld [smem:[#allocation4 + $0x2]]
        %v2794 = vstv %s2793
        %v2795 = vadd.f32 %v2791, %v2794
        %v2796 = vadd.f32 %v2792, %v2794
        %v2797 = vmax.f32 %v2795, 0.0
        %v2798 = vmax.f32 %v2796, 0.0
        %s2799 = scalar_lea.vmem %s251, 32
        %2800 = vst.msk [vmem:[%s2799] sm:$0xff] %vm1565, %v2797
        %2801 = vst.msk [vmem:[%s2799 + $0x8] sm:$0xff] %vm1565, %v2798
        %s2802 = sld [smem:[#allocation2 + $0x6c]]
        %v2803 = vstv %s2802
        %v2804 = vmul.f32 %v2803, %v423
        %v2805 = vmul.f32 %v2803, %v428
        %v2806 = vadd.f32 %v2804, 0.0
        %v2807 = vadd.f32 %v2805, 0.0
        %s2808 = sld [smem:[#allocation2 + $0x6d]]
        %v2809 = vstv %s2808
        %v2810 = vmul.f32 %v2809, %v423
        %v2811 = vmul.f32 %v2809, %v428
        %2814 = vrot.lane.b32.xlu0 %v2810, 127
        %v2815 = vpop.permute.xlu0 %2814
        %2816 = vrot.lane.b32.xlu0 %v2811, 127
        %v2817 = vpop.permute.xlu0 %2816
        %v2820 = vadd.f32 %v2806, %v2815
        %v2821 = vadd.f32 %v2807, %v2817
        %s2822 = sld [smem:[#allocation2 + $0x6e]]
        %v2823 = vstv %s2822
        %v2824 = vmul.f32 %v2823, %v423
        %v2825 = vmul.f32 %v2823, %v428
        %2828 = vrot.lane.b32.xlu0 %v2824, 126
        %v2829 = vpop.permute.xlu0 %2828
        %2830 = vrot.lane.b32.xlu0 %v2825, 126
        %v2831 = vpop.permute.xlu0 %2830
        %v2834 = vadd.f32 %v2820, %v2829
        %v2835 = vadd.f32 %v2821, %v2831
        %s2836 = sld [smem:[#allocation2 + $0x6f]]
        %v2837 = vstv %s2836
        %v2838 = vmul.f32 %v2837, %v423
        %v2839 = vmul.f32 %v2837, %v428
        %v2840 = vmul.f32 %v2837, %v433
        %v2844 = vrot.slane %v2838, 1
        %v2845 = vrot.slane %v2839, 1
        %v2846 = vsel %vm991, %v2844, %v2845
        %v2847 = vrot.slane %v2840, 1
        %v2848 = vsel %vm991, %v2845, %v2847
        %v2851 = vadd.f32 %v2834, %v2846
        %v2852 = vadd.f32 %v2835, %v2848
        %s2853 = sld [smem:[#allocation2 + $0x70]]
        %v2854 = vstv %s2853
        %v2855 = vmul.f32 %v2854, %v423
        %v2856 = vmul.f32 %v2854, %v428
        %v2857 = vmul.f32 %v2854, %v433
        %v2861 = vrot.slane %v2855, 1
        %v2862 = vrot.slane %v2856, 1
        %v2863 = vsel %vm991, %v2861, %v2862
        %v2864 = vrot.slane %v2857, 1
        %v2865 = vsel %vm991, %v2862, %v2864
        %2866 = vrot.lane.b32.xlu0 %v2863, 127
        %v2867 = vpop.permute.xlu0 %2866
        %2868 = vrot.lane.b32.xlu0 %v2865, 127
        %v2869 = vpop.permute.xlu0 %2868
        %v2872 = vadd.f32 %v2851, %v2867
        %v2873 = vadd.f32 %v2852, %v2869
        %s2874 = sld [smem:[#allocation2 + $0x71]]
        %v2875 = vstv %s2874
        %v2876 = vmul.f32 %v2875, %v423
        %v2877 = vmul.f32 %v2875, %v428
        %v2878 = vmul.f32 %v2875, %v433
        %v2882 = vrot.slane %v2876, 1
        %v2883 = vrot.slane %v2877, 1
        %v2884 = vsel %vm991, %v2882, %v2883
        %v2885 = vrot.slane %v2878, 1
        %v2886 = vsel %vm991, %v2883, %v2885
        %2887 = vrot.lane.b32.xlu0 %v2884, 126
        %v2888 = vpop.permute.xlu0 %2887
        %2889 = vrot.lane.b32.xlu0 %v2886, 126
        %v2890 = vpop.permute.xlu0 %2889
        %v2893 = vadd.f32 %v2872, %v2888
        %v2894 = vadd.f32 %v2873, %v2890
        %s2895 = sld [smem:[#allocation2 + $0x72]]
        %v2896 = vstv %s2895
        %v2897 = vmul.f32 %v2896, %v423
        %v2898 = vmul.f32 %v2896, %v428
        %v2899 = vmul.f32 %v2896, %v433
        %v2903 = vrot.slane %v2897, 2
        %v2904 = vrot.slane %v2898, 2
        %v2905 = vsel %vm1051, %v2903, %v2904
        %v2906 = vrot.slane %v2899, 2
        %v2907 = vsel %vm1051, %v2904, %v2906
        %v2910 = vadd.f32 %v2893, %v2905
        %v2911 = vadd.f32 %v2894, %v2907
        %s2912 = sld [smem:[#allocation2 + $0x73]]
        %v2913 = vstv %s2912
        %v2914 = vmul.f32 %v2913, %v423
        %v2915 = vmul.f32 %v2913, %v428
        %v2916 = vmul.f32 %v2913, %v433
        %v2920 = vrot.slane %v2914, 2
        %v2921 = vrot.slane %v2915, 2
        %v2922 = vsel %vm1051, %v2920, %v2921
        %v2923 = vrot.slane %v2916, 2
        %v2924 = vsel %vm1051, %v2921, %v2923
        %2925 = vrot.lane.b32.xlu0 %v2922, 127
        %v2926 = vpop.permute.xlu0 %2925
        %2927 = vrot.lane.b32.xlu0 %v2924, 127
        %v2928 = vpop.permute.xlu0 %2927
        %v2931 = vadd.f32 %v2910, %v2926
        %v2932 = vadd.f32 %v2911, %v2928
        %s2933 = sld [smem:[#allocation2 + $0x74]]
        %v2934 = vstv %s2933
        %v2935 = vmul.f32 %v2934, %v423
        %v2936 = vmul.f32 %v2934, %v428
        %v2937 = vmul.f32 %v2934, %v433
        %v2941 = vrot.slane %v2935, 2
        %v2942 = vrot.slane %v2936, 2
        %v2943 = vsel %vm1051, %v2941, %v2942
        %v2944 = vrot.slane %v2937, 2
        %v2945 = vsel %vm1051, %v2942, %v2944
        %2946 = vrot.lane.b32.xlu0 %v2943, 126
        %v2947 = vpop.permute.xlu0 %2946
        %2948 = vrot.lane.b32.xlu0 %v2945, 126
        %v2949 = vpop.permute.xlu0 %2948
        %v2952 = vadd.f32 %v2931, %v2947
        %v2953 = vadd.f32 %v2932, %v2949
        %s2954 = sld [smem:[#allocation2 + $0x75]]
        %v2955 = vstv %s2954
        %v2956 = vmul.f32 %v2955, %v594
        %v2957 = vmul.f32 %v2955, %v599
        %v2958 = vadd.f32 %v2952, %v2956
        %v2959 = vadd.f32 %v2953, %v2957
        %s2960 = sld [smem:[#allocation2 + $0x76]]
        %v2961 = vstv %s2960
        %v2962 = vmul.f32 %v2961, %v594
        %v2963 = vmul.f32 %v2961, %v599
        %2966 = vrot.lane.b32.xlu0 %v2962, 127
        %v2967 = vpop.permute.xlu0 %2966
        %2968 = vrot.lane.b32.xlu0 %v2963, 127
        %v2969 = vpop.permute.xlu0 %2968
        %v2972 = vadd.f32 %v2958, %v2967
        %v2973 = vadd.f32 %v2959, %v2969
        %s2974 = sld [smem:[#allocation2 + $0x77]]
        %v2975 = vstv %s2974
        %v2976 = vmul.f32 %v2975, %v594
        %v2977 = vmul.f32 %v2975, %v599
        %2980 = vrot.lane.b32.xlu0 %v2976, 126
        %v2981 = vpop.permute.xlu0 %2980
        %2982 = vrot.lane.b32.xlu0 %v2977, 126
        %v2983 = vpop.permute.xlu0 %2982
        %v2986 = vadd.f32 %v2972, %v2981
        %v2987 = vadd.f32 %v2973, %v2983
        %s2988 = sld [smem:[#allocation2 + $0x78]]
        %v2989 = vstv %s2988
        %v2990 = vmul.f32 %v2989, %v594
        %v2991 = vmul.f32 %v2989, %v599
        %v2992 = vmul.f32 %v2989, %v604
        %v2996 = vrot.slane %v2990, 1
        %v2997 = vrot.slane %v2991, 1
        %v2998 = vsel %vm991, %v2996, %v2997
        %v2999 = vrot.slane %v2992, 1
        %v3000 = vsel %vm991, %v2997, %v2999
        %v3003 = vadd.f32 %v2986, %v2998
        %v3004 = vadd.f32 %v2987, %v3000
        %s3005 = sld [smem:[#allocation2 + $0x79]]
        %v3006 = vstv %s3005
        %v3007 = vmul.f32 %v3006, %v594
        %v3008 = vmul.f32 %v3006, %v599
        %v3009 = vmul.f32 %v3006, %v604
        %v3013 = vrot.slane %v3007, 1
        %v3014 = vrot.slane %v3008, 1
        %v3015 = vsel %vm991, %v3013, %v3014
        %v3016 = vrot.slane %v3009, 1
        %v3017 = vsel %vm991, %v3014, %v3016
        %3018 = vrot.lane.b32.xlu0 %v3015, 127
        %v3019 = vpop.permute.xlu0 %3018
        %3020 = vrot.lane.b32.xlu0 %v3017, 127
        %v3021 = vpop.permute.xlu0 %3020
        %v3024 = vadd.f32 %v3003, %v3019
        %v3025 = vadd.f32 %v3004, %v3021
        %s3026 = sld [smem:[#allocation2 + $0x7a]]
        %v3027 = vstv %s3026
        %v3028 = vmul.f32 %v3027, %v594
        %v3029 = vmul.f32 %v3027, %v599
        %v3030 = vmul.f32 %v3027, %v604
        %v3034 = vrot.slane %v3028, 1
        %v3035 = vrot.slane %v3029, 1
        %v3036 = vsel %vm991, %v3034, %v3035
        %v3037 = vrot.slane %v3030, 1
        %v3038 = vsel %vm991, %v3035, %v3037
        %3039 = vrot.lane.b32.xlu0 %v3036, 126
        %v3040 = vpop.permute.xlu0 %3039
        %3041 = vrot.lane.b32.xlu0 %v3038, 126
        %v3042 = vpop.permute.xlu0 %3041
        %v3045 = vadd.f32 %v3024, %v3040
        %v3046 = vadd.f32 %v3025, %v3042
        %s3047 = sld [smem:[#allocation2 + $0x7b]]
        %v3048 = vstv %s3047
        %v3049 = vmul.f32 %v3048, %v594
        %v3050 = vmul.f32 %v3048, %v599
        %v3051 = vmul.f32 %v3048, %v604
        %v3055 = vrot.slane %v3049, 2
        %v3056 = vrot.slane %v3050, 2
        %v3057 = vsel %vm1051, %v3055, %v3056
        %v3058 = vrot.slane %v3051, 2
        %v3059 = vsel %vm1051, %v3056, %v3058
        %v3062 = vadd.f32 %v3045, %v3057
        %v3063 = vadd.f32 %v3046, %v3059
        %s3064 = sld [smem:[#allocation2 + $0x7c]]
        %v3065 = vstv %s3064
        %v3066 = vmul.f32 %v3065, %v594
        %v3067 = vmul.f32 %v3065, %v599
        %v3068 = vmul.f32 %v3065, %v604
        %v3072 = vrot.slane %v3066, 2
        %v3073 = vrot.slane %v3067, 2
        %v3074 = vsel %vm1051, %v3072, %v3073
        %v3075 = vrot.slane %v3068, 2
        %v3076 = vsel %vm1051, %v3073, %v3075
        %3077 = vrot.lane.b32.xlu0 %v3074, 127
        %v3078 = vpop.permute.xlu0 %3077
        %3079 = vrot.lane.b32.xlu0 %v3076, 127
        %v3080 = vpop.permute.xlu0 %3079
        %v3083 = vadd.f32 %v3062, %v3078
        %v3084 = vadd.f32 %v3063, %v3080
        %s3085 = sld [smem:[#allocation2 + $0x7d]]
        %v3086 = vstv %s3085
        %v3087 = vmul.f32 %v3086, %v594
        %v3088 = vmul.f32 %v3086, %v599
        %v3089 = vmul.f32 %v3086, %v604
        %v3093 = vrot.slane %v3087, 2
        %v3094 = vrot.slane %v3088, 2
        %v3095 = vsel %vm1051, %v3093, %v3094
        %v3096 = vrot.slane %v3089, 2
        %v3097 = vsel %vm1051, %v3094, %v3096
        %3098 = vrot.lane.b32.xlu0 %v3095, 126
        %v3099 = vpop.permute.xlu0 %3098
        %3100 = vrot.lane.b32.xlu0 %v3097, 126
        %v3101 = vpop.permute.xlu0 %3100
        %v3104 = vadd.f32 %v3083, %v3099
        %v3105 = vadd.f32 %v3084, %v3101
        %s3106 = sld [smem:[#allocation2 + $0x7e]]
        %v3107 = vstv %s3106
        %v3108 = vmul.f32 %v3107, %v765
        %v3109 = vmul.f32 %v3107, %v770
        %v3110 = vadd.f32 %v3104, %v3108
        %v3111 = vadd.f32 %v3105, %v3109
        %s3112 = sld [smem:[#allocation2 + $0x7f]]
        %v3113 = vstv %s3112
        %v3114 = vmul.f32 %v3113, %v765
        %v3115 = vmul.f32 %v3113, %v770
        %3118 = vrot.lane.b32.xlu0 %v3114, 127
        %v3119 = vpop.permute.xlu0 %3118
        %3120 = vrot.lane.b32.xlu0 %v3115, 127
        %v3121 = vpop.permute.xlu0 %3120
        %v3124 = vadd.f32 %v3110, %v3119
        %v3125 = vadd.f32 %v3111, %v3121
        %s3126 = sld [smem:[#allocation2 + $0x80]]
        %v3127 = vstv %s3126
        %v3128 = vmul.f32 %v3127, %v765
        %v3129 = vmul.f32 %v3127, %v770
        %3132 = vrot.lane.b32.xlu0 %v3128, 126
        %v3133 = vpop.permute.xlu0 %3132
        %3134 = vrot.lane.b32.xlu0 %v3129, 126
        %v3135 = vpop.permute.xlu0 %3134
        %v3138 = vadd.f32 %v3124, %v3133
        %v3139 = vadd.f32 %v3125, %v3135
        %s3140 = sld [smem:[#allocation2 + $0x81]]
        %v3141 = vstv %s3140
        %v3142 = vmul.f32 %v3141, %v765
        %v3143 = vmul.f32 %v3141, %v770
        %v3144 = vmul.f32 %v3141, %v775
        %v3148 = vrot.slane %v3142, 1
        %v3149 = vrot.slane %v3143, 1
        %v3150 = vsel %vm991, %v3148, %v3149
        %v3151 = vrot.slane %v3144, 1
        %v3152 = vsel %vm991, %v3149, %v3151
        %v3155 = vadd.f32 %v3138, %v3150
        %v3156 = vadd.f32 %v3139, %v3152
        %s3157 = sld [smem:[#allocation2 + $0x82]]
        %v3158 = vstv %s3157
        %v3159 = vmul.f32 %v3158, %v765
        %v3160 = vmul.f32 %v3158, %v770
        %v3161 = vmul.f32 %v3158, %v775
        %v3165 = vrot.slane %v3159, 1
        %v3166 = vrot.slane %v3160, 1
        %v3167 = vsel %vm991, %v3165, %v3166
        %v3168 = vrot.slane %v3161, 1
        %v3169 = vsel %vm991, %v3166, %v3168
        %3170 = vrot.lane.b32.xlu0 %v3167, 127
        %v3171 = vpop.permute.xlu0 %3170
        %3172 = vrot.lane.b32.xlu0 %v3169, 127
        %v3173 = vpop.permute.xlu0 %3172
        %v3176 = vadd.f32 %v3155, %v3171
        %v3177 = vadd.f32 %v3156, %v3173
        %s3178 = sld [smem:[#allocation2 + $0x83]]
        %v3179 = vstv %s3178
        %v3180 = vmul.f32 %v3179, %v765
        %v3181 = vmul.f32 %v3179, %v770
        %v3182 = vmul.f32 %v3179, %v775
        %v3186 = vrot.slane %v3180, 1
        %v3187 = vrot.slane %v3181, 1
        %v3188 = vsel %vm991, %v3186, %v3187
        %v3189 = vrot.slane %v3182, 1
        %v3190 = vsel %vm991, %v3187, %v3189
        %3191 = vrot.lane.b32.xlu0 %v3188, 126
        %v3192 = vpop.permute.xlu0 %3191
        %3193 = vrot.lane.b32.xlu0 %v3190, 126
        %v3194 = vpop.permute.xlu0 %3193
        %v3197 = vadd.f32 %v3176, %v3192
        %v3198 = vadd.f32 %v3177, %v3194
        %s3199 = sld [smem:[#allocation2 + $0x84]]
        %v3200 = vstv %s3199
        %v3201 = vmul.f32 %v3200, %v765
        %v3202 = vmul.f32 %v3200, %v770
        %v3203 = vmul.f32 %v3200, %v775
        %v3207 = vrot.slane %v3201, 2
        %v3208 = vrot.slane %v3202, 2
        %v3209 = vsel %vm1051, %v3207, %v3208
        %v3210 = vrot.slane %v3203, 2
        %v3211 = vsel %vm1051, %v3208, %v3210
        %v3214 = vadd.f32 %v3197, %v3209
        %v3215 = vadd.f32 %v3198, %v3211
        %s3216 = sld [smem:[#allocation2 + $0x85]]
        %v3217 = vstv %s3216
        %v3218 = vmul.f32 %v3217, %v765
        %v3219 = vmul.f32 %v3217, %v770
        %v3220 = vmul.f32 %v3217, %v775
        %v3224 = vrot.slane %v3218, 2
        %v3225 = vrot.slane %v3219, 2
        %v3226 = vsel %vm1051, %v3224, %v3225
        %v3227 = vrot.slane %v3220, 2
        %v3228 = vsel %vm1051, %v3225, %v3227
        %3229 = vrot.lane.b32.xlu0 %v3226, 127
        %v3230 = vpop.permute.xlu0 %3229
        %3231 = vrot.lane.b32.xlu0 %v3228, 127
        %v3232 = vpop.permute.xlu0 %3231
        %v3235 = vadd.f32 %v3214, %v3230
        %v3236 = vadd.f32 %v3215, %v3232
        %s3237 = sld [smem:[#allocation2 + $0x86]]
        %v3238 = vstv %s3237
        %v3239 = vmul.f32 %v3238, %v765
        %v3240 = vmul.f32 %v3238, %v770
        %v3241 = vmul.f32 %v3238, %v775
        %v3245 = vrot.slane %v3239, 2
        %v3246 = vrot.slane %v3240, 2
        %v3247 = vsel %vm1051, %v3245, %v3246
        %v3248 = vrot.slane %v3241, 2
        %v3249 = vsel %vm1051, %v3246, %v3248
        %3250 = vrot.lane.b32.xlu0 %v3247, 126
        %v3251 = vpop.permute.xlu0 %3250
        %3252 = vrot.lane.b32.xlu0 %v3249, 126
        %v3253 = vpop.permute.xlu0 %3252
        %v3256 = vadd.f32 %v3235, %v3251
        %v3257 = vadd.f32 %v3236, %v3253
        %s3258 = sld [smem:[#allocation2 + $0x87]]
        %v3259 = vstv %s3258
        %v3260 = vmul.f32 %v3259, %v936
        %v3261 = vmul.f32 %v3259, %v941
        %v3262 = vadd.f32 %v3256, %v3260
        %v3263 = vadd.f32 %v3257, %v3261
        %s3264 = sld [smem:[#allocation2 + $0x88]]
        %v3265 = vstv %s3264
        %v3266 = vmul.f32 %v3265, %v936
        %v3267 = vmul.f32 %v3265, %v941
        %3270 = vrot.lane.b32.xlu0 %v3266, 127
        %v3271 = vpop.permute.xlu0 %3270
        %3272 = vrot.lane.b32.xlu0 %v3267, 127
        %v3273 = vpop.permute.xlu0 %3272
        %v3276 = vadd.f32 %v3262, %v3271
        %v3277 = vadd.f32 %v3263, %v3273
        %s3278 = sld [smem:[#allocation2 + $0x89]]
        %v3279 = vstv %s3278
        %v3280 = vmul.f32 %v3279, %v936
        %v3281 = vmul.f32 %v3279, %v941
        %3284 = vrot.lane.b32.xlu0 %v3280, 126
        %v3285 = vpop.permute.xlu0 %3284
        %3286 = vrot.lane.b32.xlu0 %v3281, 126
        %v3287 = vpop.permute.xlu0 %3286
        %v3290 = vadd.f32 %v3276, %v3285
        %v3291 = vadd.f32 %v3277, %v3287
        %s3292 = sld [smem:[#allocation2 + $0x8a]]
        %v3293 = vstv %s3292
        %v3294 = vmul.f32 %v3293, %v936
        %v3295 = vmul.f32 %v3293, %v941
        %v3296 = vmul.f32 %v3293, %v946
        %v3300 = vrot.slane %v3294, 1
        %v3301 = vrot.slane %v3295, 1
        %v3302 = vsel %vm991, %v3300, %v3301
        %v3303 = vrot.slane %v3296, 1
        %v3304 = vsel %vm991, %v3301, %v3303
        %v3307 = vadd.f32 %v3290, %v3302
        %v3308 = vadd.f32 %v3291, %v3304
        %s3309 = sld [smem:[#allocation2 + $0x8b]]
        %v3310 = vstv %s3309
        %v3311 = vmul.f32 %v3310, %v936
        %v3312 = vmul.f32 %v3310, %v941
        %v3313 = vmul.f32 %v3310, %v946
        %v3317 = vrot.slane %v3311, 1
        %v3318 = vrot.slane %v3312, 1
        %v3319 = vsel %vm991, %v3317, %v3318
        %v3320 = vrot.slane %v3313, 1
        %v3321 = vsel %vm991, %v3318, %v3320
        %3322 = vrot.lane.b32.xlu0 %v3319, 127
        %v3323 = vpop.permute.xlu0 %3322
        %3324 = vrot.lane.b32.xlu0 %v3321, 127
        %v3325 = vpop.permute.xlu0 %3324
        %v3328 = vadd.f32 %v3307, %v3323
        %v3329 = vadd.f32 %v3308, %v3325
        %s3330 = sld [smem:[#allocation2 + $0x8c]]
        %v3331 = vstv %s3330
        %v3332 = vmul.f32 %v3331, %v936
        %v3333 = vmul.f32 %v3331, %v941
        %v3334 = vmul.f32 %v3331, %v946
        %v3338 = vrot.slane %v3332, 1
        %v3339 = vrot.slane %v3333, 1
        %v3340 = vsel %vm991, %v3338, %v3339
        %v3341 = vrot.slane %v3334, 1
        %v3342 = vsel %vm991, %v3339, %v3341
        %3343 = vrot.lane.b32.xlu0 %v3340, 126
        %v3344 = vpop.permute.xlu0 %3343
        %3345 = vrot.lane.b32.xlu0 %v3342, 126
        %v3346 = vpop.permute.xlu0 %3345
        %v3349 = vadd.f32 %v3328, %v3344
        %v3350 = vadd.f32 %v3329, %v3346
        %s3351 = sld [smem:[#allocation2 + $0x8d]]
        %v3352 = vstv %s3351
        %v3353 = vmul.f32 %v3352, %v936
        %v3354 = vmul.f32 %v3352, %v941
        %v3355 = vmul.f32 %v3352, %v946
        %v3359 = vrot.slane %v3353, 2
        %v3360 = vrot.slane %v3354, 2
        %v3361 = vsel %vm1051, %v3359, %v3360
        %v3362 = vrot.slane %v3355, 2
        %v3363 = vsel %vm1051, %v3360, %v3362
        %v3366 = vadd.f32 %v3349, %v3361
        %v3367 = vadd.f32 %v3350, %v3363
        %s3368 = sld [smem:[#allocation2 + $0x8e]]
        %v3369 = vstv %s3368
        %v3370 = vmul.f32 %v3369, %v936
        %v3371 = vmul.f32 %v3369, %v941
        %v3372 = vmul.f32 %v3369, %v946
        %v3376 = vrot.slane %v3370, 2
        %v3377 = vrot.slane %v3371, 2
        %v3378 = vsel %vm1051, %v3376, %v3377
        %v3379 = vrot.slane %v3372, 2
        %v3380 = vsel %vm1051, %v3377, %v3379
        %3381 = vrot.lane.b32.xlu0 %v3378, 127
        %v3382 = vpop.permute.xlu0 %3381
        %3383 = vrot.lane.b32.xlu0 %v3380, 127
        %v3384 = vpop.permute.xlu0 %3383
        %v3387 = vadd.f32 %v3366, %v3382
        %v3388 = vadd.f32 %v3367, %v3384
        %s3389 = sld [smem:[#allocation2 + $0x8f]]
        %v3390 = vstv %s3389
        %v3391 = vmul.f32 %v3390, %v936
        %v3392 = vmul.f32 %v3390, %v941
        %v3393 = vmul.f32 %v3390, %v946
        %v3397 = vrot.slane %v3391, 2
        %v3398 = vrot.slane %v3392, 2
        %v3399 = vsel %vm1051, %v3397, %v3398
        %v3400 = vrot.slane %v3393, 2
        %v3401 = vsel %vm1051, %v3398, %v3400
        %3402 = vrot.lane.b32.xlu0 %v3399, 126
        %v3403 = vpop.permute.xlu0 %3402
        %3404 = vrot.lane.b32.xlu0 %v3401, 126
        %v3405 = vpop.permute.xlu0 %3404
        %v3408 = vadd.f32 %v3387, %v3403
        %v3409 = vadd.f32 %v3388, %v3405
        %s3410 = sld [smem:[#allocation4 + $0x3]]
        %v3411 = vstv %s3410
        %v3412 = vadd.f32 %v3408, %v3411
        %v3413 = vadd.f32 %v3409, %v3411
        %v3414 = vmax.f32 %v3412, 0.0
        %v3415 = vmax.f32 %v3413, 0.0
        %s3416 = scalar_lea.vmem %s251, 48
        %3417 = vst.msk [vmem:[%s3416] sm:$0xff] %vm1565, %v3414
        %3418 = vst.msk [vmem:[%s3416 + $0x8] sm:$0xff] %vm1565, %v3415
        %p3419 = scmp.lt.s32.totalorder %s18, 1
        %s3420 = scalar_select %p3419, %s18, 1
        %s3421 = smul.addr %s3420, 8
        %s3422 = smul.addr %s3421, 8
        %s3423 = scalar_lea.vmem %s5, %s3422
        // Predicated region
        $region49: #{csph_forward.6} parent=39 // pred_check
          %p3424 = pneg %p146
        $region50: #{csph_forward.6} parent=39 // pred_check_branch
          %3426 = sbr.rel (%p3424) target = $region52
        $region51: #{csph_forward.6} parent=39 // pred_region
          _
        $region52: #{csph_forward.6} parent=39 // pred_fallthru
          _
      $region40: #{csph_forward.6} parent=5 // pred_fallthru
        _
      %p3427 = scmp.le.s32.totalorder 2, %s13
      // Predicated region
      $region53: #{csph_forward.6} parent=5 // pred_check
        %p3428 = pneg %p3427
      $region54: #{csph_forward.6} parent=5 // pred_check_branch
        %3430 = sbr.rel (%p3428) target = $region56
      $region55: #{csph_forward.6} parent=5 // pred_region
        %s3431 = ssub.s32 %s13, 2
        // Predicated region
        $region57: #{csph_forward.6} parent=55 // pred_check
          %p3432 = pneg %p152
        $region58: #{csph_forward.6} parent=55 // pred_check_branch
          %3434 = sbr.rel (%p3432) target = $region60
        $region59: #{csph_forward.6} parent=55 // pred_region
          %p3435 = scmp.lt.s32.totalorder %s19, 1
          %s3436 = scalar_select %p3435, %s19, 1
          %s3437 = smul.addr %s3436, 8
          %s3438 = smul.addr %s3437, 8
          %s3439 = scalar_lea.vmem %s5, %s3438
        $region60: #{csph_forward.6} parent=55 // pred_fallthru
          _
      $region56: #{csph_forward.6} parent=5 // pred_fallthru
        _
    $region6: #{csph_forward.6} parent=1 // loop_footer
      %s17 = sadd.s32 1, %s13
    $region7: #{csph_forward.6} parent=1 // loop_footer_branch
      %12 = sbr.rel target = $region3
    $region8: #{csph_forward.6} parent=1 // loop_exit
      _
    %3440 = vsyncpa [#allocation3], 1
    %s3441 = scalar_lea.sflag [#allocation3], 1
    %3442 = vsyncpa %s3441, 1
    %3443 = vsyncpa [#allocation5], 1

// kernel: csph_forward.5
$region0: #{csph_forward.5}
  #allocation0 [shape = 'u32[]', space=smem, size = 0x4, offset = 0x4, fixed_abs, tag = 'smem constant byte address 0x4 - core index']
  #allocation1 [shape = 'u32[144,128]{1,0:T(1,128)}', space=vmem, size = 0x12000, scoped, tag = 'internal scratch']
  %s0 = inlined_call_operand.vmem [shape: f32[2,4,4,4], index: 0, kind: input, shape index: {}]
  %s1 = inlined_call_operand.vmem [shape: f32[10,4], index: 1, kind: input, shape index: {}]
  %s2 = inlined_call_operand.vmem [shape: f32[4,10], index: 2, kind: input, shape index: {}]
  %s3 = inlined_call_operand.vmem [shape: f32[144], index: 3, kind: input, shape index: {}]
  %s4 = inlined_call_operand.vmem [shape: f32[4], index: 4, kind: input, shape index: {}]
  %s5 = inlined_call_operand.vmem [shape: f32[2,4,8,8], index: 5, kind: output, shape index: {}]
  %s6 = sld [smem:[#allocation0]]
  $region61: #{csph_forward.5} parent=0
    _
  %s8 = ssub.s32 1, %s6
  %s9 = scalar_select 0, %s8, %s6
  $region1: #{csph_forward.5} parent=0
    #allocation2 [shape = 'u8[1024]{0}', space=smem, size = 0x400, scoped, tag = 'input window, operand 3, single buffered']
    #allocation3 [shape = 's32[2]{0}', space=sflag, size = 0x8, scoped, tag = 'scoped memory for csph_forward.5']
    #allocation4 [shape = 'u8[512]{0}', space=smem, size = 0x200, scoped, tag = 'input window, operand 4, single buffered']
    #allocation5 [shape = 's32[1]{0}', space=sflag, size = 0x4, scoped, tag = 'scoped memory for csph_forward.5']
    %10 = vsyncpa [#allocation3], 0
    %11 = vsyncpa [#allocation5], 0
    loop: start=0, step=1, limit=4
    $region2: #{csph_forward.5} parent=1 // loop_pre_header
      _
    $region3: #{csph_forward.5} parent=1 // loop_header
      %s13 = sphi 0, %s17
      %p14 = scmp.ge.s32.totalorder %s13, 4
      %s23 = sphi 0, %s25
      %s26 = sphi 0, %s23
      %s27 = sphi 0, %s26
      %s43 = sphi 0, %s27
      %s47 = sphi 0, %s47
      %s49 = sphi 0, %s47
      %s50 = sphi 0, %s49
      %s64 = sphi 0, %s50
      %s68 = sphi 0, %s68
      %s70 = sphi 0, %s68
      %s71 = sphi 0, %s70
      %s85 = sphi 0, %s71
      %s89 = sphi 0, %s89
      %s91 = sphi 0, %s89
      %s92 = sphi 0, %s91
      %s106 = sphi 0, %s92
      %s110 = sphi 0, %s110
      %s112 = sphi 0, %s110
      %s113 = sphi 0, %s112
      %s127 = sphi 0, %s113
      %s133 = sphi 0, %s135
      %s136 = sphi 0, %s133
      %s137 = sphi 0, %s136
      %s153 = sphi 0, %s137
    $region4: #{csph_forward.5} parent=1 // loop_header_branch
      %16 = sbr.rel (%p14) target = $region8
    $region5: #{csph_forward.5} parent=1 // loop_body
      %s18 = ssub.s32 %s13, 1
      %s19 = ssub.s32 %s13, 2
      %s20 = sadd.s32 %s13, 1
      %s21 = ssub.s32 %s13, %s20
      %p22 = scmp.eq.s32.totalorder %s21, 0
      %s24 = sadd.s32 %s23, 1
      %s25 = scalar_select %p22, %s23, %s24
      %p28 = pneg %p22
      %p29 = scmp.eq.s32.totalorder %s13, 1
      %p30 = por %p28, %p29
      %p31 = scmp.ne.s32.totalorder %s23, %s26
      %p32 = scmp.eq.s32.totalorder %s13, 0
      %p33 = por %p31, %p32
      %p34 = scmp.ne.s32.totalorder %s23, %s26
      %p35 = scmp.eq.s32.totalorder %s18, 1
      %p36 = por %p34, %p35
      %p37 = scmp.ne.s32.totalorder %s26, %s27
      %p38 = scmp.eq.s32.totalorder %s18, 0
      %p39 = por %p37, %p38
      %p40 = scmp.ne.s32.totalorder %s26, %s27
      %p41 = scmp.eq.s32.totalorder %s19, 1
      %p42 = por %p40, %p41
      %p44 = scmp.ne.s32.totalorder %s27, %s43
      %p45 = scmp.eq.s32.totalorder %s19, 0
      %p46 = por %p44, %p45
      %s48 = sadd.s32 %s47, 1
      %p51 = scmp.eq.s32.totalorder %s13, 1
      %p52 = scmp.ne.s32.totalorder %s47, %s49
      %p53 = scmp.eq.s32.totalorder %s13, 0
      %p54 = por %p52, %p53
      %p55 = scmp.ne.s32.totalorder %s47, %s49
      %p56 = scmp.eq.s32.totalorder %s18, 1
      %p57 = por %p55, %p56
      %p58 = scmp.ne.s32.totalorder %s49, %s50
      %p59 = scmp.eq.s32.totalorder %s18, 0
      %p60 = por %p58, %p59
      %p61 = scmp.ne.s32.totalorder %s49, %s50
      %p62 = scmp.eq.s32.totalorder %s19, 1
      %p63 = por %p61, %p62
      %p65 = scmp.ne.s32.totalorder %s50, %s64
      %p66 = scmp.eq.s32.totalorder %s19, 0
      %p67 = por %p65, %p66
      %s69 = sadd.s32 %s68, 1
      %p72 = scmp.eq.s32.totalorder %s13, 1
      %p73 = scmp.ne.s32.totalorder %s68, %s70
      %p74 = scmp.eq.s32.totalorder %s13, 0
      %p75 = por %p73, %p74
      %p76 = scmp.ne.s32.totalorder %s68, %s70
      %p77 = scmp.eq.s32.totalorder %s18, 1
      %p78 = por %p76, %p77
      %p79 = scmp.ne.s32.totalorder %s70, %s71
      %p80 = scmp.eq.s32.totalorder %s18, 0
      %p81 = por %p79, %p80
      %p82 = scmp.ne.s32.totalorder %s70, %s71
      %p83 = scmp.eq.s32.totalorder %s19, 1
      %p84 = por %p82, %p83
      %p86 = scmp.ne.s32.totalorder %s71, %s85
      %p87 = scmp.eq.s32.totalorder %s19, 0
      %p88 = por %p86, %p87
      %s90 = sadd.s32 %s89, 1
      %p93 = scmp.eq.s32.totalorder %s13, 1
      %p94 = scmp.ne.s32.totalorder %s89, %s91
      %p95 = scmp.eq.s32.totalorder %s13, 0
      %p96 = por %p94, %p95
      %p97 = scmp.ne.s32.totalorder %s89, %s91
      %p98 = scmp.eq.s32.totalorder %s18, 1
      %p99 = por %p97, %p98
      %p100 = scmp.ne.s32.totalorder %s91, %s92
      %p101 = scmp.eq.s32.totalorder %s18, 0
      %p102 = por %p100, %p101
      %p103 = scmp.ne.s32.totalorder %s91, %s92
      %p104 = scmp.eq.s32.totalorder %s19, 1
      %p105 = por %p103, %p104
      %p107 = scmp.ne.s32.totalorder %s92, %s106
      %p108 = scmp.eq.s32.totalorder %s19, 0
      %p109 = por %p107, %p108
      %s111 = sadd.s32 %s110, 1
      %p114 = scmp.eq.s32.totalorder %s13, 1
      %p115 = scmp.ne.s32.totalorder %s110, %s112
      %p116 = scmp.eq.s32.totalorder %s13, 0
      %p117 = por %p115, %p116
      %p118 = scmp.ne.s32.totalorder %s110, %s112
      %p119 = scmp.eq.s32.totalorder %s18, 1
      %p120 = por %p118, %p119
      %p121 = scmp.ne.s32.totalorder %s112, %s113
      %p122 = scmp.eq.s32.totalorder %s18, 0
      %p123 = por %p121, %p122
      %p124 = scmp.ne.s32.totalorder %s112, %s113
      %p125 = scmp.eq.s32.totalorder %s19, 1
      %p126 = por %p124, %p125
      %p128 = scmp.ne.s32.totalorder %s113, %s127
      %p129 = scmp.eq.s32.totalorder %s19, 0
      %p130 = por %p128, %p129
      %s131 = ssub.s32 %s13, %s20
      %p132 = scmp.eq.s32.totalorder %s131, 0
      %s134 = sadd.s32 %s133, 1
      %s135 = scalar_select %p132, %s133, %s134
      %p138 = pneg %p132
      %p139 = scmp.eq.s32.totalorder %s13, 1
      %p140 = por %p138, %p139
      %p141 = scmp.ne.s32.totalorder %s133, %s136
      %p142 = scmp.eq.s32.totalorder %s13, 0
      %p143 = por %p141, %p142
      %p144 = scmp.ne.s32.totalorder %s133, %s136
      %p145 = scmp.eq.s32.totalorder %s18, 1
      %p146 = por %p144, %p145
      %p147 = scmp.ne.s32.totalorder %s136, %s137
      %p148 = scmp.eq.s32.totalorder %s18, 0
      %p149 = por %p147, %p148
      %p150 = scmp.ne.s32.totalorder %s136, %s137
      %p151 = scmp.eq.s32.totalorder %s19, 1
      %p152 = por %p150, %p151
      %p154 = scmp.ne.s32.totalorder %s137, %s153
      %p155 = scmp.eq.s32.totalorder %s19, 0
      %p156 = por %p154, %p155
      %p157 = scmp.le.s32.totalorder 1, %s13
      %p158 = scmp.lt.s32.totalorder %s13, 3
      %p159 = pnand %p157, %p158
      %p160 = pneg %p159
      // Predicated region
      $region9: #{csph_forward.5} parent=5 // pred_check
        _
      $region10: #{csph_forward.5} parent=5 // pred_check_branch
        %162 = sbr.rel (%p159) target = $region12
      $region11: #{csph_forward.5} parent=5 // pred_region
        %s163 = ssub.s32 %s13, 1
        // Predicated region
        $region13: #{csph_forward.5} parent=11 // pred_check
          %p164 = pneg %p60
        $region14: #{csph_forward.5} parent=11 // pred_check_branch
          %166 = sbr.rel (%p164) target = $region16
        $region15: #{csph_forward.5} parent=11 // pred_region
          _
        $region16: #{csph_forward.5} parent=11 // pred_fallthru
          _
        // Predicated region
        $region17: #{csph_forward.5} parent=11 // pred_check
          %p167 = pneg %p81
        $region18: #{csph_forward.5} parent=11 // pred_check_branch
          %169 = sbr.rel (%p167) target = $region20
        $region19: #{csph_forward.5} parent=11 // pred_region
          _
        $region20: #{csph_forward.5} parent=11 // pred_fallthru
          _
        // Predicated region
        $region21: #{csph_forward.5} parent=11 // pred_check
          %p170 = pneg %p102
        $region22: #{csph_forward.5} parent=11 // pred_check_branch
          %172 = sbr.rel (%p170) target = $region24
        $region23: #{csph_forward.5} parent=11 // pred_region
          %s174 = ssub.s32 32, 32
          %175 = vsyncadd [#allocation3], %s174
          %s177 = sshll.u32 %s3, 4
          %s178 = int_to_ptr.vmem [resolvable:$true] %s177
          %180 = dma.vmem_to_smem %s178, 32, [#allocation2], [#allocation3]
        $region24: #{csph_forward.5} parent=11 // pred_fallthru
          _
        // Predicated region
        $region25: #{csph_forward.5} parent=11 // pred_check
          %p181 = pneg %p123
        $region26: #{csph_forward.5} parent=11 // pred_check_branch
          %183 = sbr.rel (%p181) target = $region28
        $region27: #{csph_forward.5} parent=11 // pred_region
          %s185 = ssub.s32 16, 16
          %186 = vsyncadd [#allocation5], %s185
          %s188 = sshll.u32 %s4, 4
          %s189 = int_to_ptr.vmem [resolvable:$true] %s188
          %191 = dma.vmem_to_smem %s189, 16, [#allocation4], [#allocation5]
        $region28: #{csph_forward.5} parent=11 // pred_fallthru
          _
      $region12: #{csph_forward.5} parent=5 // pred_fallthru
        _
      %p192 = scmp.lt.s32.totalorder %s13, 2
      // Predicated region
      $region29: #{csph_forward.5} parent=5 // pred_check
        %p193 = pneg %p192
      $region30: #{csph_forward.5} parent=5 // pred_check_branch
        %195 = sbr.rel (%p193) target = $region32
      $region31: #{csph_forward.5} parent=5 // pred_region
        // Predicated region
        $region33: #{csph_forward.5} parent=31 // pred_check
          %p196 = pneg %p33
        $region34: #{csph_forward.5} parent=31 // pred_check_branch
          %198 = sbr.rel (%p196) target = $region36
        $region35: #{csph_forward.5} parent=31 // pred_region
          %p199 = scmp.lt.s32.totalorder %s13, 1
          %s200 = scalar_select %p199, %s13, 1
          %s201 = smul.addr %s200, 4
          %s202 = smul.addr %s201, 4
          %s203 = scalar_lea.vmem %s0, %s202
        $region36: #{csph_forward.5} parent=31 // pred_fallthru
          _
      $region32: #{csph_forward.5} parent=5 // pred_fallthru
        _
      %p204 = scmp.le.s32.totalorder 1, %s13
      %p205 = scmp.lt.s32.totalorder %s13, 3
      %p206 = pnand %p204, %p205
      %p207 = pneg %p206
      // Predicated region
      $region37: #{csph_forward.5} parent=5 // pred_check
        _
      $region38: #{csph_forward.5} parent=5 // pred_check_branch
        %209 = sbr.rel (%p206) target = $region40
      $region39: #{csph_forward.5} parent=5 // pred_region
        %s210 = ssub.s32 %s13, 1
        // Predicated region
        $region41: #{csph_forward.5} parent=39 // pred_check
          %p211 = pneg %p102
        $region42: #{csph_forward.5} parent=39 // pred_check_branch
          %213 = sbr.rel (%p211) target = $region44
        $region43: #{csph_forward.5} parent=39 // pred_region
          %214 = dma.done [#allocation3], 32
        $region44: #{csph_forward.5} parent=39 // pred_fallthru
          _
        // Predicated region
        $region45: #{csph_forward.5} parent=39 // pred_check
          %p215 = pneg %p123
        $region46: #{csph_forward.5} parent=39 // pred_check_branch
          %217 = sbr.rel (%p215) target = $region48
        $region47: #{csph_forward.5} parent=39 // pred_region
          %218 = dma.done [#allocation5], 16
        $region48: #{csph_forward.5} parent=39 // pred_fallthru
          _
        %219 = sfence
        %p220 = scmp.lt.s32.totalorder %s18, 1
        %s221 = scalar_select %p220, %s18, 1
        %s222 = smul.addr %s221, 4
        %s223 = smul.addr %s222, 4
        %s224 = scalar_lea.vmem %s0, %s223
        %p225 = pneg %p39
        %p226 = pneg %p36
        %p227 = pneg %p60
        %p228 = pneg %p57
        %p229 = pneg %p81
        %p230 = pneg %p78
        %p231 = pneg %p102
        %p232 = pneg %p99
        %p233 = pneg %p123
        %p234 = pneg %p120
        %p235 = pneg %p149
        %p236 = pneg %p146
        %p237 = scmp.lt.s32.totalorder %s18, 1
        %s238 = scalar_select %p237, %s18, 1
        %s239 = smul.addr %s238, 4
        %s240 = smul.addr %s239, 8
        %s241 = scalar_lea.vmem %s5, %s240
        %p242 = scmp.lt.s32.totalorder %s18, 1
        %s243 = scalar_select %p242, %s18, 1
        %s244 = smul.addr %s243, 4
        %s245 = smul.addr %s244, 4
        %s246 = scalar_lea.vmem %s0, %s245
        %p247 = scmp.lt.s32.totalorder %s18, 1
        %s248 = scalar_select %p247, %s18, 1
        %s249 = smul.addr %s248, 4
        %s250 = smul.addr %s249, 8
        %s251 = scalar_lea.vmem %s5, %s250
        %v252 = vld [vmem:[%s246] sm:$0xf]
        %v253 = vld [vmem:[%s1] sm:$0xff]
        %v254 = vld [vmem:[%s1 + $0x8] sm:$0x3]
        %vm255 = vcmask 31744
        %v257 = vsel %vm255, %v253, 0
        %v260 = vsel %vm255, %v254, 0
        %vm262 = vcmask 1043456
        %v264 = vsel %vm262, %v252, 0
        %266 = vmatprep.subr.mxu0 0.0
        %267 = vmatpush1.msra.mxu0 0.0
        %268 = vmatprep.subr.mxu0 0.0
        %269 = vmatpush1.msra.mxu0 0.0
        %270 = vmatprep.subr.mxu0 0.0
        %271 = vmatpush1.msra.mxu0 0.0
        %272 = vmatprep.subr.mxu0 0.0
        %273 = vmatpush1.msra.mxu0 0.0
        %274 = vmatprep.subr.mxu0 0.0
        %275 = vmatpush1.msra.mxu0 0.0
        %276 = vmatprep.subr.mxu0 0.0
        %277 = vmatpush1.msra.mxu0 0.0
        %278 = vmatprep.subr.mxu0 0.0
        %279 = vmatpush1.msra.mxu0 0.0
        %280 = vmatprep.subr.mxu0 0.0
        %281 = vmatpush1.msra.mxu0 0.0
        %282 = vmatprep.subr.mxu0 0.0
        %283 = vmatpush1.msra.mxu0 0.0
        %284 = vmatprep.subr.mxu0 0.0
        %285 = vmatpush1.msra.mxu0 0.0
        %286 = vmatprep.subr.mxu0 0.0
        %287 = vmatpush1.msra.mxu0 0.0
        %288 = vmatprep.subr.mxu0 0.0
        %289 = vmatpush1.msra.mxu0 0.0
        %290 = vmatprep.subr.mxu0 0.0
        %291 = vmatpush1.msra.mxu0 0.0
        %292 = vmatprep.subr.mxu0 0.0
        %293 = vmatpush1.msra.mxu0 0.0
        %294 = vmatprep.subr.mxu0 0.0
        %295 = vmatpush1.msra.mxu0 0.0
        %296 = vmatprep.subr.mxu0 0.0
        %297 = vmatpush1.msra.mxu0 %v264
        %298 = vmatprep.subr.mxu0 0.0
        %299 = vmatpush2.msra.mxu0 0.0
        %300 = vmatprep.subr.mxu0 0.0
        %301 = vmatpush2.msra.mxu0 0.0
        %302 = vmatprep.subr.mxu0 0.0
        %303 = vmatpush2.msra.mxu0 0.0
        %304 = vmatprep.subr.mxu0 0.0
        %305 = vmatpush2.msra.mxu0 0.0
        %306 = vmatprep.subr.mxu0 0.0
        %307 = vmatpush2.msra.mxu0 0.0
        %308 = vmatprep.subr.mxu0 0.0
        %309 = vmatpush2.msra.mxu0 0.0
        %310 = vmatprep.subr.mxu0 0.0
        %311 = vmatpush2.msra.mxu0 0.0
        %312 = vmatprep.subr.mxu0 0.0
        %313 = vmatpush2.msra.mxu0 0.0
        %314 = vmatprep.subr.mxu0 0.0
        %315 = vmatpush2.msra.mxu0 0.0
        %316 = vmatprep.subr.mxu0 0.0
        %317 = vmatpush2.msra.mxu0 0.0
        %318 = vmatprep.subr.mxu0 0.0
        %319 = vmatpush2.msra.mxu0 0.0
        %320 = vmatprep.subr.mxu0 0.0
        %321 = vmatpush2.msra.mxu0 0.0
        %322 = vmatprep.subr.mxu0 0.0
        %323 = vmatpush2.msra.mxu0 0.0
        %324 = vmatprep.subr.mxu0 0.0
        %325 = vmatpush2.msra.mxu0 0.0
        %326 = vmatprep.subr.mxu0 0.0
        %327 = vmatpush2.msra.mxu0 0.0
        %328 = vmatprep.subr.mxu0 0.0
        %329 = vmatpush2.msra.mxu0 0.0
        %330 = vmatprep.mubr.f32.mxu0 0.0
        %331 = vmatmul.mubr.f32.gmra.mxu0 %v257
        %v332 = vpop.f32.mrf.mxu0
        %v333 = vadd.f32 0.0, %v332
        %v334 = vpop.f32.mrf.mxu0
        %335 = vmatprep.mubr.f32.mxu0 0.0
        %336 = vmatmul.mubr.f32.gmra.mxu0 %v260
        %v337 = vpop.f32.mrf.mxu0
        %v338 = vadd.f32 0.0, %v337
        %v339 = vpop.f32.mrf.mxu0
        %340 = vdwg.mxu0
        %v341 = vld [vmem:[%s2] sm:$0xf]
        %v343 = vsel %vm255, %v333, 0
        %v346 = vsel %vm255, %v338, 0
        %v349 = vsel %vm262, %v341, 0
        %351 = vmatprep.subr.mxu0 0.0
        %352 = vmatpush1.msra.mxu0 0.0
        %353 = vmatprep.subr.mxu0 0.0
        %354 = vmatpush1.msra.mxu0 0.0
        %355 = vmatprep.subr.mxu0 0.0
        %356 = vmatpush1.msra.mxu0 0.0
        %357 = vmatprep.subr.mxu0 0.0
        %358 = vmatpush1.msra.mxu0 0.0
        %359 = vmatprep.subr.mxu0 0.0
        %360 = vmatpush1.msra.mxu0 0.0
        %361 = vmatprep.subr.mxu0 0.0
        %362 = vmatpush1.msra.mxu0 0.0
        %363 = vmatprep.subr.mxu0 0.0
        %364 = vmatpush1.msra.mxu0 0.0
        %365 = vmatprep.subr.mxu0 0.0
        %366 = vmatpush1.msra.mxu0 0.0
        %367 = vmatprep.subr.mxu0 0.0
        %368 = vmatpush1.msra.mxu0 0.0
        %369 = vmatprep.subr.mxu0 0.0
        %370 = vmatpush1.msra.mxu0 0.0
        %371 = vmatprep.subr.mxu0 0.0
        %372 = vmatpush1.msra.mxu0 0.0
        %373 = vmatprep.subr.mxu0 0.0
        %374 = vmatpush1.msra.mxu0 0.0
        %375 = vmatprep.subr.mxu0 0.0
        %376 = vmatpush1.msra.mxu0 0.0
        %377 = vmatprep.subr.mxu0 0.0
        %378 = vmatpush1.msra.mxu0 0.0
        %379 = vmatprep.subr.mxu0 0.0
        %380 = vmatpush1.msra.mxu0 0.0
        %381 = vmatprep.subr.mxu0 0.0
        %382 = vmatpush1.msra.mxu0 %v349
        %383 = vmatprep.subr.mxu0 0.0
        %384 = vmatpush2.msra.mxu0 0.0
        %385 = vmatprep.subr.mxu0 0.0
        %386 = vmatpush2.msra.mxu0 0.0
        %387 = vmatprep.subr.mxu0 0.0
        %388 = vmatpush2.msra.mxu0 0.0
        %389 = vmatprep.subr.mxu0 0.0
        %390 = vmatpush2.msra.mxu0 0.0
        %391 = vmatprep.subr.mxu0 0.0
        %392 = vmatpush2.msra.mxu0 0.0
        %393 = vmatprep.subr.mxu0 0.0
        %394 = vmatpush2.msra.mxu0 0.0
        %395 = vmatprep.subr.mxu0 0.0
        %396 = vmatpush2.msra.mxu0 0.0
        %397 = vmatprep.subr.mxu0 0.0
        %398 = vmatpush2.msra.mxu0 0.0
        %399 = vmatprep.subr.mxu0 0.0
        %400 = vmatpush2.msra.mxu0 0.0
        %401 = vmatprep.subr.mxu0 0.0
        %402 = vmatpush2.msra.mxu0 0.0
        %403 = vmatprep.subr.mxu0 0.0
        %404 = vmatpush2.msra.mxu0 0.0
        %405 = vmatprep.subr.mxu0 0.0
        %406 = vmatpush2.msra.mxu0 0.0
        %407 = vmatprep.subr.mxu0 0.0
        %408 = vmatpush2.msra.mxu0 0.0
        %409 = vmatprep.subr.mxu0 0.0
        %410 = vmatpush2.msra.mxu0 0.0
        %411 = vmatprep.subr.mxu0 0.0
        %412 = vmatpush2.msra.mxu0 0.0
        %413 = vmatprep.subr.mxu0 0.0
        %414 = vmatpush2.msra.mxu0 0.0
        %415 = vmatprep.mubr.f32.mxu0 0.0
        %416 = vmatmul.mubr.f32.gmra.mxu0 %v343
        %v417 = vpop.f32.mrf.mxu0
        %v418 = vadd.f32 0.0, %v417
        %v419 = vpop.f32.mrf.mxu0
        %420 = vmatprep.mubr.f32.mxu0 0.0
        %421 = vmatmul.mubr.f32.gmra.mxu0 %v346
        %v422 = vpop.f32.mrf.mxu0
        %v423 = vadd.f32 0.0, %v422
        %v424 = vpop.f32.mrf.mxu0
        %425 = vdwg.mxu0
        %s426 = scalar_lea.vmem %s246, 4
        %v427 = vld [vmem:[%s426] sm:$0xf]
        %v429 = vsel %vm262, %v427, 0
        %431 = vmatprep.subr.mxu0 0.0
        %432 = vmatpush1.msra.mxu0 0.0
        %433 = vmatprep.subr.mxu0 0.0
        %434 = vmatpush1.msra.mxu0 0.0
        %435 = vmatprep.subr.mxu0 0.0
        %436 = vmatpush1.msra.mxu0 0.0
        %437 = vmatprep.subr.mxu0 0.0
        %438 = vmatpush1.msra.mxu0 0.0
        %439 = vmatprep.subr.mxu0 0.0
        %440 = vmatpush1.msra.mxu0 0.0
        %441 = vmatprep.subr.mxu0 0.0
        %442 = vmatpush1.msra.mxu0 0.0
        %443 = vmatprep.subr.mxu0 0.0
        %444 = vmatpush1.msra.mxu0 0.0
        %445 = vmatprep.subr.mxu0 0.0
        %446 = vmatpush1.msra.mxu0 0.0
        %447 = vmatprep.subr.mxu0 0.0
        %448 = vmatpush1.msra.mxu0 0.0
        %449 = vmatprep.subr.mxu0 0.0
        %450 = vmatpush1.msra.mxu0 0.0
        %451 = vmatprep.subr.mxu0 0.0
        %452 = vmatpush1.msra.mxu0 0.0
        %453 = vmatprep.subr.mxu0 0.0
        %454 = vmatpush1.msra.mxu0 0.0
        %455 = vmatprep.subr.mxu0 0.0
        %456 = vmatpush1.msra.mxu0 0.0
        %457 = vmatprep.subr.mxu0 0.0
        %458 = vmatpush1.msra.mxu0 0.0
        %459 = vmatprep.subr.mxu0 0.0
        %460 = vmatpush1.msra.mxu0 0.0
        %461 = vmatprep.subr.mxu0 0.0
        %462 = vmatpush1.msra.mxu0 %v429
        %463 = vmatprep.subr.mxu0 0.0
        %464 = vmatpush2.msra.mxu0 0.0
        %465 = vmatprep.subr.mxu0 0.0
        %466 = vmatpush2.msra.mxu0 0.0
        %467 = vmatprep.subr.mxu0 0.0
        %468 = vmatpush2.msra.mxu0 0.0
        %469 = vmatprep.subr.mxu0 0.0
        %470 = vmatpush2.msra.mxu0 0.0
        %471 = vmatprep.subr.mxu0 0.0
        %472 = vmatpush2.msra.mxu0 0.0
        %473 = vmatprep.subr.mxu0 0.0
        %474 = vmatpush2.msra.mxu0 0.0
        %475 = vmatprep.subr.mxu0 0.0
        %476 = vmatpush2.msra.mxu0 0.0
        %477 = vmatprep.subr.mxu0 0.0
        %478 = vmatpush2.msra.mxu0 0.0
        %479 = vmatprep.subr.mxu0 0.0
        %480 = vmatpush2.msra.mxu0 0.0
        %481 = vmatprep.subr.mxu0 0.0
        %482 = vmatpush2.msra.mxu0 0.0
        %483 = vmatprep.subr.mxu0 0.0
        %484 = vmatpush2.msra.mxu0 0.0
        %485 = vmatprep.subr.mxu0 0.0
        %486 = vmatpush2.msra.mxu0 0.0
        %487 = vmatprep.subr.mxu0 0.0
        %488 = vmatpush2.msra.mxu0 0.0
        %489 = vmatprep.subr.mxu0 0.0
        %490 = vmatpush2.msra.mxu0 0.0
        %491 = vmatprep.subr.mxu0 0.0
        %492 = vmatpush2.msra.mxu0 0.0
        %493 = vmatprep.subr.mxu0 0.0
        %494 = vmatpush2.msra.mxu0 0.0
        %495 = vmatprep.mubr.f32.mxu0 0.0
        %496 = vmatmul.mubr.f32.gmra.mxu0 %v257
        %v497 = vpop.f32.mrf.mxu0
        %v498 = vadd.f32 0.0, %v497
        %v499 = vpop.f32.mrf.mxu0
        %500 = vmatprep.mubr.f32.mxu0 0.0
        %501 = vmatmul.mubr.f32.gmra.mxu0 %v260
        %v502 = vpop.f32.mrf.mxu0
        %v503 = vadd.f32 0.0, %v502
        %v504 = vpop.f32.mrf.mxu0
        %505 = vdwg.mxu0
        %v507 = vsel %vm255, %v498, 0
        %v510 = vsel %vm255, %v503, 0
        %512 = vmatprep.subr.mxu0 0.0
        %513 = vmatpush1.msra.mxu0 0.0
        %514 = vmatprep.subr.mxu0 0.0
        %515 = vmatpush1.msra.mxu0 0.0
        %516 = vmatprep.subr.mxu0 0.0
        %517 = vmatpush1.msra.mxu0 0.0
        %518 = vmatprep.subr.mxu0 0.0
        %519 = vmatpush1.msra.mxu0 0.0
        %520 = vmatprep.subr.mxu0 0.0
        %521 = vmatpush1.msra.mxu0 0.0
        %522 = vmatprep.subr.mxu0 0.0
        %523 = vmatpush1.msra.mxu0 0.0
        %524 = vmatprep.subr.mxu0 0.0
        %525 = vmatpush1.msra.mxu0 0.0
        %526 = vmatprep.subr.mxu0 0.0
        %527 = vmatpush1.msra.mxu0 0.0
        %528 = vmatprep.subr.mxu0 0.0
        %529 = vmatpush1.msra.mxu0 0.0
        %530 = vmatprep.subr.mxu0 0.0
        %531 = vmatpush1.msra.mxu0 0.0
        %532 = vmatprep.subr.mxu0 0.0
        %533 = vmatpush1.msra.mxu0 0.0
        %534 = vmatprep.subr.mxu0 0.0
        %535 = vmatpush1.msra.mxu0 0.0
        %536 = vmatprep.subr.mxu0 0.0
        %537 = vmatpush1.msra.mxu0 0.0
        %538 = vmatprep.subr.mxu0 0.0
        %539 = vmatpush1.msra.mxu0 0.0
        %540 = vmatprep.subr.mxu0 0.0
        %541 = vmatpush1.msra.mxu0 0.0
        %542 = vmatprep.subr.mxu0 0.0
        %543 = vmatpush1.msra.mxu0 %v349
        %544 = vmatprep.subr.mxu0 0.0
        %545 = vmatpush2.msra.mxu0 0.0
        %546 = vmatprep.subr.mxu0 0.0
        %547 = vmatpush2.msra.mxu0 0.0
        %548 = vmatprep.subr.mxu0 0.0
        %549 = vmatpush2.msra.mxu0 0.0
        %550 = vmatprep.subr.mxu0 0.0
        %551 = vmatpush2.msra.mxu0 0.0
        %552 = vmatprep.subr.mxu0 0.0
        %553 = vmatpush2.msra.mxu0 0.0
        %554 = vmatprep.subr.mxu0 0.0
        %555 = vmatpush2.msra.mxu0 0.0
        %556 = vmatprep.subr.mxu0 0.0
        %557 = vmatpush2.msra.mxu0 0.0
        %558 = vmatprep.subr.mxu0 0.0
        %559 = vmatpush2.msra.mxu0 0.0
        %560 = vmatprep.subr.mxu0 0.0
        %561 = vmatpush2.msra.mxu0 0.0
        %562 = vmatprep.subr.mxu0 0.0
        %563 = vmatpush2.msra.mxu0 0.0
        %564 = vmatprep.subr.mxu0 0.0
        %565 = vmatpush2.msra.mxu0 0.0
        %566 = vmatprep.subr.mxu0 0.0
        %567 = vmatpush2.msra.mxu0 0.0
        %568 = vmatprep.subr.mxu0 0.0
        %569 = vmatpush2.msra.mxu0 0.0
        %570 = vmatprep.subr.mxu0 0.0
        %571 = vmatpush2.msra.mxu0 0.0
        %572 = vmatprep.subr.mxu0 0.0
        %573 = vmatpush2.msra.mxu0 0.0
        %574 = vmatprep.subr.mxu0 0.0
        %575 = vmatpush2.msra.mxu0 0.0
        %576 = vmatprep.mubr.f32.mxu0 0.0
        %577 = vmatmul.mubr.f32.gmra.mxu0 %v507
        %v578 = vpop.f32.mrf.mxu0
        %v579 = vadd.f32 0.0, %v578
        %v580 = vpop.f32.mrf.mxu0
        %581 = vmatprep.mubr.f32.mxu0 0.0
        %582 = vmatmul.mubr.f32.gmra.mxu0 %v510
        %v583 = vpop.f32.mrf.mxu0
        %v584 = vadd.f32 0.0, %v583
        %v585 = vpop.f32.mrf.mxu0
        %586 = vdwg.mxu0
        %s587 = scalar_lea.vmem %s246, 8
        %v588 = vld [vmem:[%s587] sm:$0xf]
        %v590 = vsel %vm262, %v588, 0
        %592 = vmatprep.subr.mxu0 0.0
        %593 = vmatpush1.msra.mxu0 0.0
        %594 = vmatprep.subr.mxu0 0.0
        %595 = vmatpush1.msra.mxu0 0.0
        %596 = vmatprep.subr.mxu0 0.0
        %597 = vmatpush1.msra.mxu0 0.0
        %598 = vmatprep.subr.mxu0 0.0
        %599 = vmatpush1.msra.mxu0 0.0
        %600 = vmatprep.subr.mxu0 0.0
        %601 = vmatpush1.msra.mxu0 0.0
        %602 = vmatprep.subr.mxu0 0.0
        %603 = vmatpush1.msra.mxu0 0.0
        %604 = vmatprep.subr.mxu0 0.0
        %605 = vmatpush1.msra.mxu0 0.0
        %606 = vmatprep.subr.mxu0 0.0
        %607 = vmatpush1.msra.mxu0 0.0
        %608 = vmatprep.subr.mxu0 0.0
        %609 = vmatpush1.msra.mxu0 0.0
        %610 = vmatprep.subr.mxu0 0.0
        %611 = vmatpush1.msra.mxu0 0.0
        %612 = vmatprep.subr.mxu0 0.0
        %613 = vmatpush1.msra.mxu0 0.0
        %614 = vmatprep.subr.mxu0 0.0
        %615 = vmatpush1.msra.mxu0 0.0
        %616 = vmatprep.subr.mxu0 0.0
        %617 = vmatpush1.msra.mxu0 0.0
        %618 = vmatprep.subr.mxu0 0.0
        %619 = vmatpush1.msra.mxu0 0.0
        %620 = vmatprep.subr.mxu0 0.0
        %621 = vmatpush1.msra.mxu0 0.0
        %622 = vmatprep.subr.mxu0 0.0
        %623 = vmatpush1.msra.mxu0 %v590
        %624 = vmatprep.subr.mxu0 0.0
        %625 = vmatpush2.msra.mxu0 0.0
        %626 = vmatprep.subr.mxu0 0.0
        %627 = vmatpush2.msra.mxu0 0.0
        %628 = vmatprep.subr.mxu0 0.0
        %629 = vmatpush2.msra.mxu0 0.0
        %630 = vmatprep.subr.mxu0 0.0
        %631 = vmatpush2.msra.mxu0 0.0
        %632 = vmatprep.subr.mxu0 0.0
        %633 = vmatpush2.msra.mxu0 0.0
        %634 = vmatprep.subr.mxu0 0.0
        %635 = vmatpush2.msra.mxu0 0.0
        %636 = vmatprep.subr.mxu0 0.0
        %637 = vmatpush2.msra.mxu0 0.0
        %638 = vmatprep.subr.mxu0 0.0
        %639 = vmatpush2.msra.mxu0 0.0
        %640 = vmatprep.subr.mxu0 0.0
        %641 = vmatpush2.msra.mxu0 0.0
        %642 = vmatprep.subr.mxu0 0.0
        %643 = vmatpush2.msra.mxu0 0.0
        %644 = vmatprep.subr.mxu0 0.0
        %645 = vmatpush2.msra.mxu0 0.0
        %646 = vmatprep.subr.mxu0 0.0
        %647 = vmatpush2.msra.mxu0 0.0
        %648 = vmatprep.subr.mxu0 0.0
        %649 = vmatpush2.msra.mxu0 0.0
        %650 = vmatprep.subr.mxu0 0.0
        %651 = vmatpush2.msra.mxu0 0.0
        %652 = vmatprep.subr.mxu0 0.0
        %653 = vmatpush2.msra.mxu0 0.0
        %654 = vmatprep.subr.mxu0 0.0
        %655 = vmatpush2.msra.mxu0 0.0
        %656 = vmatprep.mubr.f32.mxu0 0.0
        %657 = vmatmul.mubr.f32.gmra.mxu0 %v257
        %v658 = vpop.f32.mrf.mxu0
        %v659 = vadd.f32 0.0, %v658
        %v660 = vpop.f32.mrf.mxu0
        %661 = vmatprep.mubr.f32.mxu0 0.0
        %662 = vmatmul.mubr.f32.gmra.mxu0 %v260
        %v663 = vpop.f32.mrf.mxu0
        %v664 = vadd.f32 0.0, %v663
        %v665 = vpop.f32.mrf.mxu0
        %666 = vdwg.mxu0
        %v668 = vsel %vm255, %v659, 0
        %v671 = vsel %vm255, %v664, 0
        %673 = vmatprep.subr.mxu0 0.0
        %674 = vmatpush1.msra.mxu0 0.0
        %675 = vmatprep.subr.mxu0 0.0
        %676 = vmatpush1.msra.mxu0 0.0
        %677 = vmatprep.subr.mxu0 0.0
        %678 = vmatpush1.msra.mxu0 0.0
        %679 = vmatprep.subr.mxu0 0.0
        %680 = vmatpush1.msra.mxu0 0.0
        %681 = vmatprep.subr.mxu0 0.0
        %682 = vmatpush1.msra.mxu0 0.0
        %683 = vmatprep.subr.mxu0 0.0
        %684 = vmatpush1.msra.mxu0 0.0
        %685 = vmatprep.subr.mxu0 0.0
        %686 = vmatpush1.msra.mxu0 0.0
        %687 = vmatprep.subr.mxu0 0.0
        %688 = vmatpush1.msra.mxu0 0.0
        %689 = vmatprep.subr.mxu0 0.0
        %690 = vmatpush1.msra.mxu0 0.0
        %691 = vmatprep.subr.mxu0 0.0
        %692 = vmatpush1.msra.mxu0 0.0
        %693 = vmatprep.subr.mxu0 0.0
        %694 = vmatpush1.msra.mxu0 0.0
        %695 = vmatprep.subr.mxu0 0.0
        %696 = vmatpush1.msra.mxu0 0.0
        %697 = vmatprep.subr.mxu0 0.0
        %698 = vmatpush1.msra.mxu0 0.0
        %699 = vmatprep.subr.mxu0 0.0
        %700 = vmatpush1.msra.mxu0 0.0
        %701 = vmatprep.subr.mxu0 0.0
        %702 = vmatpush1.msra.mxu0 0.0
        %703 = vmatprep.subr.mxu0 0.0
        %704 = vmatpush1.msra.mxu0 %v349
        %705 = vmatprep.subr.mxu0 0.0
        %706 = vmatpush2.msra.mxu0 0.0
        %707 = vmatprep.subr.mxu0 0.0
        %708 = vmatpush2.msra.mxu0 0.0
        %709 = vmatprep.subr.mxu0 0.0
        %710 = vmatpush2.msra.mxu0 0.0
        %711 = vmatprep.subr.mxu0 0.0
        %712 = vmatpush2.msra.mxu0 0.0
        %713 = vmatprep.subr.mxu0 0.0
        %714 = vmatpush2.msra.mxu0 0.0
        %715 = vmatprep.subr.mxu0 0.0
        %716 = vmatpush2.msra.mxu0 0.0
        %717 = vmatprep.subr.mxu0 0.0
        %718 = vmatpush2.msra.mxu0 0.0
        %719 = vmatprep.subr.mxu0 0.0
        %720 = vmatpush2.msra.mxu0 0.0
        %721 = vmatprep.subr.mxu0 0.0
        %722 = vmatpush2.msra.mxu0 0.0
        %723 = vmatprep.subr.mxu0 0.0
        %724 = vmatpush2.msra.mxu0 0.0
        %725 = vmatprep.subr.mxu0 0.0
        %726 = vmatpush2.msra.mxu0 0.0
        %727 = vmatprep.subr.mxu0 0.0
        %728 = vmatpush2.msra.mxu0 0.0
        %729 = vmatprep.subr.mxu0 0.0
        %730 = vmatpush2.msra.mxu0 0.0
        %731 = vmatprep.subr.mxu0 0.0
        %732 = vmatpush2.msra.mxu0 0.0
        %733 = vmatprep.subr.mxu0 0.0
        %734 = vmatpush2.msra.mxu0 0.0
        %735 = vmatprep.subr.mxu0 0.0
        %736 = vmatpush2.msra.mxu0 0.0
        %737 = vmatprep.mubr.f32.mxu0 0.0
        %738 = vmatmul.mubr.f32.gmra.mxu0 %v668
        %v739 = vpop.f32.mrf.mxu0
        %v740 = vadd.f32 0.0, %v739
        %v741 = vpop.f32.mrf.mxu0
        %742 = vmatprep.mubr.f32.mxu0 0.0
        %743 = vmatmul.mubr.f32.gmra.mxu0 %v671
        %v744 = vpop.f32.mrf.mxu0
        %v745 = vadd.f32 0.0, %v744
        %v746 = vpop.f32.mrf.mxu0
        %747 = vdwg.mxu0
        %s748 = scalar_lea.vmem %s246, 12
        %v749 = vld [vmem:[%s748] sm:$0xf]
        %v751 = vsel %vm262, %v749, 0
        %753 = vmatprep.subr.mxu0 0.0
        %754 = vmatpush1.msra.mxu0 0.0
        %755 = vmatprep.subr.mxu0 0.0
        %756 = vmatpush1.msra.mxu0 0.0
        %757 = vmatprep.subr.mxu0 0.0
        %758 = vmatpush1.msra.mxu0 0.0
        %759 = vmatprep.subr.mxu0 0.0
        %760 = vmatpush1.msra.mxu0 0.0
        %761 = vmatprep.subr.mxu0 0.0
        %762 = vmatpush1.msra.mxu0 0.0
        %763 = vmatprep.subr.mxu0 0.0
        %764 = vmatpush1.msra.mxu0 0.0
        %765 = vmatprep.subr.mxu0 0.0
        %766 = vmatpush1.msra.mxu0 0.0
        %767 = vmatprep.subr.mxu0 0.0
        %768 = vmatpush1.msra.mxu0 0.0
        %769 = vmatprep.subr.mxu0 0.0
        %770 = vmatpush1.msra.mxu0 0.0
        %771 = vmatprep.subr.mxu0 0.0
        %772 = vmatpush1.msra.mxu0 0.0
        %773 = vmatprep.subr.mxu0 0.0
        %774 = vmatpush1.msra.mxu0 0.0
        %775 = vmatprep.subr.mxu0 0.0
        %776 = vmatpush1.msra.mxu0 0.0
        %777 = vmatprep.subr.mxu0 0.0
        %778 = vmatpush1.msra.mxu0 0.0
        %779 = vmatprep.subr.mxu0 0.0
        %780 = vmatpush1.msra.mxu0 0.0
        %781 = vmatprep.subr.mxu0 0.0
        %782 = vmatpush1.msra.mxu0 0.0
        %783 = vmatprep.subr.mxu0 0.0
        %784 = vmatpush1.msra.mxu0 %v751
        %785 = vmatprep.subr.mxu0 0.0
        %786 = vmatpush2.msra.mxu0 0.0
        %787 = vmatprep.subr.mxu0 0.0
        %788 = vmatpush2.msra.mxu0 0.0
        %789 = vmatprep.subr.mxu0 0.0
        %790 = vmatpush2.msra.mxu0 0.0
        %791 = vmatprep.subr.mxu0 0.0
        %792 = vmatpush2.msra.mxu0 0.0
        %793 = vmatprep.subr.mxu0 0.0
        %794 = vmatpush2.msra.mxu0 0.0
        %795 = vmatprep.subr.mxu0 0.0
        %796 = vmatpush2.msra.mxu0 0.0
        %797 = vmatprep.subr.mxu0 0.0
        %798 = vmatpush2.msra.mxu0 0.0
        %799 = vmatprep.subr.mxu0 0.0
        %800 = vmatpush2.msra.mxu0 0.0
        %801 = vmatprep.subr.mxu0 0.0
        %802 = vmatpush2.msra.mxu0 0.0
        %803 = vmatprep.subr.mxu0 0.0
        %804 = vmatpush2.msra.mxu0 0.0
        %805 = vmatprep.subr.mxu0 0.0
        %806 = vmatpush2.msra.mxu0 0.0
        %807 = vmatprep.subr.mxu0 0.0
        %808 = vmatpush2.msra.mxu0 0.0
        %809 = vmatprep.subr.mxu0 0.0
        %810 = vmatpush2.msra.mxu0 0.0
        %811 = vmatprep.subr.mxu0 0.0
        %812 = vmatpush2.msra.mxu0 0.0
        %813 = vmatprep.subr.mxu0 0.0
        %814 = vmatpush2.msra.mxu0 0.0
        %815 = vmatprep.subr.mxu0 0.0
        %816 = vmatpush2.msra.mxu0 0.0
        %817 = vmatprep.mubr.f32.mxu0 0.0
        %818 = vmatmul.mubr.f32.gmra.mxu0 %v257
        %v819 = vpop.f32.mrf.mxu0
        %v820 = vadd.f32 0.0, %v819
        %v821 = vpop.f32.mrf.mxu0
        %822 = vmatprep.mubr.f32.mxu0 0.0
        %823 = vmatmul.mubr.f32.gmra.mxu0 %v260
        %v824 = vpop.f32.mrf.mxu0
        %v825 = vadd.f32 0.0, %v824
        %v826 = vpop.f32.mrf.mxu0
        %827 = vdwg.mxu0
        %v829 = vsel %vm255, %v820, 0
        %v832 = vsel %vm255, %v825, 0
        %834 = vmatprep.subr.mxu0 0.0
        %835 = vmatpush1.msra.mxu0 0.0
        %836 = vmatprep.subr.mxu0 0.0
        %837 = vmatpush1.msra.mxu0 0.0
        %838 = vmatprep.subr.mxu0 0.0
        %839 = vmatpush1.msra.mxu0 0.0
        %840 = vmatprep.subr.mxu0 0.0
        %841 = vmatpush1.msra.mxu0 0.0
        %842 = vmatprep.subr.mxu0 0.0
        %843 = vmatpush1.msra.mxu0 0.0
        %844 = vmatprep.subr.mxu0 0.0
        %845 = vmatpush1.msra.mxu0 0.0
        %846 = vmatprep.subr.mxu0 0.0
        %847 = vmatpush1.msra.mxu0 0.0
        %848 = vmatprep.subr.mxu0 0.0
        %849 = vmatpush1.msra.mxu0 0.0
        %850 = vmatprep.subr.mxu0 0.0
        %851 = vmatpush1.msra.mxu0 0.0
        %852 = vmatprep.subr.mxu0 0.0
        %853 = vmatpush1.msra.mxu0 0.0
        %854 = vmatprep.subr.mxu0 0.0
        %855 = vmatpush1.msra.mxu0 0.0
        %856 = vmatprep.subr.mxu0 0.0
        %857 = vmatpush1.msra.mxu0 0.0
        %858 = vmatprep.subr.mxu0 0.0
        %859 = vmatpush1.msra.mxu0 0.0
        %860 = vmatprep.subr.mxu0 0.0
        %861 = vmatpush1.msra.mxu0 0.0
        %862 = vmatprep.subr.mxu0 0.0
        %863 = vmatpush1.msra.mxu0 0.0
        %864 = vmatprep.subr.mxu0 0.0
        %865 = vmatpush1.msra.mxu0 %v349
        %866 = vmatprep.subr.mxu0 0.0
        %867 = vmatpush2.msra.mxu0 0.0
        %868 = vmatprep.subr.mxu0 0.0
        %869 = vmatpush2.msra.mxu0 0.0
        %870 = vmatprep.subr.mxu0 0.0
        %871 = vmatpush2.msra.mxu0 0.0
        %872 = vmatprep.subr.mxu0 0.0
        %873 = vmatpush2.msra.mxu0 0.0
        %874 = vmatprep.subr.mxu0 0.0
        %875 = vmatpush2.msra.mxu0 0.0
        %876 = vmatprep.subr.mxu0 0.0
        %877 = vmatpush2.msra.mxu0 0.0
        %878 = vmatprep.subr.mxu0 0.0
        %879 = vmatpush2.msra.mxu0 0.0
        %880 = vmatprep.subr.mxu0 0.0
        %881 = vmatpush2.msra.mxu0 0.0
        %882 = vmatprep.subr.mxu0 0.0
        %883 = vmatpush2.msra.mxu0 0.0
        %884 = vmatprep.subr.mxu0 0.0
        %885 = vmatpush2.msra.mxu0 0.0
        %886 = vmatprep.subr.mxu0 0.0
        %887 = vmatpush2.msra.mxu0 0.0
        %888 = vmatprep.subr.mxu0 0.0
        %889 = vmatpush2.msra.mxu0 0.0
        %890 = vmatprep.subr.mxu0 0.0
        %891 = vmatpush2.msra.mxu0 0.0
        %892 = vmatprep.subr.mxu0 0.0
        %893 = vmatpush2.msra.mxu0 0.0
        %894 = vmatprep.subr.mxu0 0.0
        %895 = vmatpush2.msra.mxu0 0.0
        %896 = vmatprep.subr.mxu0 0.0
        %897 = vmatpush2.msra.mxu0 0.0
        %898 = vmatprep.mubr.f32.mxu0 0.0
        %899 = vmatmul.mubr.f32.gmra.mxu0 %v829
        %v900 = vpop.f32.mrf.mxu0
        %v901 = vadd.f32 0.0, %v900
        %v902 = vpop.f32.mrf.mxu0
        %903 = vmatprep.mubr.f32.mxu0 0.0
        %904 = vmatmul.mubr.f32.gmra.mxu0 %v832
        %v905 = vpop.f32.mrf.mxu0
        %v906 = vadd.f32 0.0, %v905
        %v907 = vpop.f32.mrf.mxu0
        %908 = vdwg.mxu0
        %s909 = sld [smem:[#allocation2]]
        %v910 = vstv %s909
        %v911 = vmul.f32 %v910, %v418
        %v912 = vadd.f32 %v911, 0.0
        %s913 = sld [smem:[#allocation2 + $0x1]]
        %v914 = vstv %s913
        %v915 = vmul.f32 %v914, %v418
        %917 = vrot.lane.b32.xlu0 %v915, 127
        %v918 = vpop.permute.xlu0 %917
        %v920 = vadd.f32 %v912, %v918
        %s921 = sld [smem:[#allocation2 + $0x2]]
        %v922 = vstv %s921
        %v923 = vmul.f32 %v922, %v418
        %925 = vrot.lane.b32.xlu0 %v923, 126
        %v926 = vpop.permute.xlu0 %925
        %v928 = vadd.f32 %v920, %v926
        %s929 = sld [smem:[#allocation2 + $0x3]]
        %v930 = vstv %s929
        %v931 = vmul.f32 %v930, %v418
        %v932 = vmul.f32 %v930, %v423
        %vm935 = vcmask 1046528
        %v936 = vrot.slane %v931, 1
        %v937 = vrot.slane %v932, 1
        %v938 = vsel %vm935, %v936, %v937
        %v940 = vadd.f32 %v928, %v938
        %s941 = sld [smem:[#allocation2 + $0x4]]
        %v942 = vstv %s941
        %v943 = vmul.f32 %v942, %v418
        %v944 = vmul.f32 %v942, %v423
        %v947 = vrot.slane %v943, 1
        %v948 = vrot.slane %v944, 1
        %v949 = vsel %vm935, %v947, %v948
        %950 = vrot.lane.b32.xlu0 %v949, 127
        %v951 = vpop.permute.xlu0 %950
        %v953 = vadd.f32 %v940, %v951
        %s954 = sld [smem:[#allocation2 + $0x5]]
        %v955 = vstv %s954
        %v956 = vmul.f32 %v955, %v418
        %v957 = vmul.f32 %v955, %v423
        %v960 = vrot.slane %v956, 1
        %v961 = vrot.slane %v957, 1
        %v962 = vsel %vm935, %v960, %v961
        %963 = vrot.lane.b32.xlu0 %v962, 126
        %v964 = vpop.permute.xlu0 %963
        %v966 = vadd.f32 %v953, %v964
        %s967 = sld [smem:[#allocation2 + $0x6]]
        %v968 = vstv %s967
        %v969 = vmul.f32 %v968, %v418
        %v970 = vmul.f32 %v968, %v423
        %vm973 = vcmask 1045504
        %v974 = vrot.slane %v969, 2
        %v975 = vrot.slane %v970, 2
        %v976 = vsel %vm973, %v974, %v975
        %v978 = vadd.f32 %v966, %v976
        %s979 = sld [smem:[#allocation2 + $0x7]]
        %v980 = vstv %s979
        %v981 = vmul.f32 %v980, %v418
        %v982 = vmul.f32 %v980, %v423
        %v985 = vrot.slane %v981, 2
        %v986 = vrot.slane %v982, 2
        %v987 = vsel %vm973, %v985, %v986
        %988 = vrot.lane.b32.xlu0 %v987, 127
        %v989 = vpop.permute.xlu0 %988
        %v991 = vadd.f32 %v978, %v989
        %s992 = sld [smem:[#allocation2 + $0x8]]
        %v993 = vstv %s992
        %v994 = vmul.f32 %v993, %v418
        %v995 = vmul.f32 %v993, %v423
        %v998 = vrot.slane %v994, 2
        %v999 = vrot.slane %v995, 2
        %v1000 = vsel %vm973, %v998, %v999
        %1001 = vrot.lane.b32.xlu0 %v1000, 126
        %v1002 = vpop.permute.xlu0 %1001
        %v1004 = vadd.f32 %v991, %v1002
        %s1005 = sld [smem:[#allocation2 + $0x9]]
        %v1006 = vstv %s1005
        %v1007 = vmul.f32 %v1006, %v579
        %v1008 = vadd.f32 %v1004, %v1007
        %s1009 = sld [smem:[#allocation2 + $0xa]]
        %v1010 = vstv %s1009
        %v1011 = vmul.f32 %v1010, %v579
        %1013 = vrot.lane.b32.xlu0 %v1011, 127
        %v1014 = vpop.permute.xlu0 %1013
        %v1016 = vadd.f32 %v1008, %v1014
        %s1017 = sld [smem:[#allocation2 + $0xb]]
        %v1018 = vstv %s1017
        %v1019 = vmul.f32 %v1018, %v579
        %1021 = vrot.lane.b32.xlu0 %v1019, 126
        %v1022 = vpop.permute.xlu0 %1021
        %v1024 = vadd.f32 %v1016, %v1022
        %s1025 = sld [smem:[#allocation2 + $0xc]]
        %v1026 = vstv %s1025
        %v1027 = vmul.f32 %v1026, %v579
        %v1028 = vmul.f32 %v1026, %v584
        %v1031 = vrot.slane %v1027, 1
        %v1032 = vrot.slane %v1028, 1
        %v1033 = vsel %vm935, %v1031, %v1032
        %v1035 = vadd.f32 %v1024, %v1033
        %s1036 = sld [smem:[#allocation2 + $0xd]]
        %v1037 = vstv %s1036
        %v1038 = vmul.f32 %v1037, %v579
        %v1039 = vmul.f32 %v1037, %v584
        %v1042 = vrot.slane %v1038, 1
        %v1043 = vrot.slane %v1039, 1
        %v1044 = vsel %vm935, %v1042, %v1043
        %1045 = vrot.lane.b32.xlu0 %v1044, 127
        %v1046 = vpop.permute.xlu0 %1045
        %v1048 = vadd.f32 %v1035, %v1046
        %s1049 = sld [smem:[#allocation2 + $0xe]]
        %v1050 = vstv %s1049
        %v1051 = vmul.f32 %v1050, %v579
        %v1052 = vmul.f32 %v1050, %v584
        %v1055 = vrot.slane %v1051, 1
        %v1056 = vrot.slane %v1052, 1
        %v1057 = vsel %vm935, %v1055, %v1056
        %1058 = vrot.lane.b32.xlu0 %v1057, 126
        %v1059 = vpop.permute.xlu0 %1058
        %v1061 = vadd.f32 %v1048, %v1059
        %s1062 = sld [smem:[#allocation2 + $0xf]]
        %v1063 = vstv %s1062
        %v1064 = vmul.f32 %v1063, %v579
        %v1065 = vmul.f32 %v1063, %v584
        %v1068 = vrot.slane %v1064, 2
        %v1069 = vrot.slane %v1065, 2
        %v1070 = vsel %vm973, %v1068, %v1069
        %v1072 = vadd.f32 %v1061, %v1070
        %s1073 = sld [smem:[#allocation2 + $0x10]]
        %v1074 = vstv %s1073
        %v1075 = vmul.f32 %v1074, %v579
        %v1076 = vmul.f32 %v1074, %v584
        %v1079 = vrot.slane %v1075, 2
        %v1080 = vrot.slane %v1076, 2
        %v1081 = vsel %vm973, %v1079, %v1080
        %1082 = vrot.lane.b32.xlu0 %v1081, 127
        %v1083 = vpop.permute.xlu0 %1082
        %v1085 = vadd.f32 %v1072, %v1083
        %s1086 = sld [smem:[#allocation2 + $0x11]]
        %v1087 = vstv %s1086
        %v1088 = vmul.f32 %v1087, %v579
        %v1089 = vmul.f32 %v1087, %v584
        %v1092 = vrot.slane %v1088, 2
        %v1093 = vrot.slane %v1089, 2
        %v1094 = vsel %vm973, %v1092, %v1093
        %1095 = vrot.lane.b32.xlu0 %v1094, 126
        %v1096 = vpop.permute.xlu0 %1095
        %v1098 = vadd.f32 %v1085, %v1096
        %s1099 = sld [smem:[#allocation2 + $0x12]]
        %v1100 = vstv %s1099
        %v1101 = vmul.f32 %v1100, %v740
        %v1102 = vadd.f32 %v1098, %v1101
        %s1103 = sld [smem:[#allocation2 + $0x13]]
        %v1104 = vstv %s1103
        %v1105 = vmul.f32 %v1104, %v740
        %1107 = vrot.lane.b32.xlu0 %v1105, 127
        %v1108 = vpop.permute.xlu0 %1107
        %v1110 = vadd.f32 %v1102, %v1108
        %s1111 = sld [smem:[#allocation2 + $0x14]]
        %v1112 = vstv %s1111
        %v1113 = vmul.f32 %v1112, %v740
        %1115 = vrot.lane.b32.xlu0 %v1113, 126
        %v1116 = vpop.permute.xlu0 %1115
        %v1118 = vadd.f32 %v1110, %v1116
        %s1119 = sld [smem:[#allocation2 + $0x15]]
        %v1120 = vstv %s1119
        %v1121 = vmul.f32 %v1120, %v740
        %v1122 = vmul.f32 %v1120, %v745
        %v1125 = vrot.slane %v1121, 1
        %v1126 = vrot.slane %v1122, 1
        %v1127 = vsel %vm935, %v1125, %v1126
        %v1129 = vadd.f32 %v1118, %v1127
        %s1130 = sld [smem:[#allocation2 + $0x16]]
        %v1131 = vstv %s1130
        %v1132 = vmul.f32 %v1131, %v740
        %v1133 = vmul.f32 %v1131, %v745
        %v1136 = vrot.slane %v1132, 1
        %v1137 = vrot.slane %v1133, 1
        %v1138 = vsel %vm935, %v1136, %v1137
        %1139 = vrot.lane.b32.xlu0 %v1138, 127
        %v1140 = vpop.permute.xlu0 %1139
        %v1142 = vadd.f32 %v1129, %v1140
        %s1143 = sld [smem:[#allocation2 + $0x17]]
        %v1144 = vstv %s1143
        %v1145 = vmul.f32 %v1144, %v740
        %v1146 = vmul.f32 %v1144, %v745
        %v1149 = vrot.slane %v1145, 1
        %v1150 = vrot.slane %v1146, 1
        %v1151 = vsel %vm935, %v1149, %v1150
        %1152 = vrot.lane.b32.xlu0 %v1151, 126
        %v1153 = vpop.permute.xlu0 %1152
        %v1155 = vadd.f32 %v1142, %v1153
        %s1156 = sld [smem:[#allocation2 + $0x18]]
        %v1157 = vstv %s1156
        %v1158 = vmul.f32 %v1157, %v740
        %v1159 = vmul.f32 %v1157, %v745
        %v1162 = vrot.slane %v1158, 2
        %v1163 = vrot.slane %v1159, 2
        %v1164 = vsel %vm973, %v1162, %v1163
        %v1166 = vadd.f32 %v1155, %v1164
        %s1167 = sld [smem:[#allocation2 + $0x19]]
        %v1168 = vstv %s1167
        %v1169 = vmul.f32 %v1168, %v740
        %v1170 = vmul.f32 %v1168, %v745
        %v1173 = vrot.slane %v1169, 2
        %v1174 = vrot.slane %v1170, 2
        %v1175 = vsel %vm973, %v1173, %v1174
        %1176 = vrot.lane.b32.xlu0 %v1175, 127
        %v1177 = vpop.permute.xlu0 %1176
        %v1179 = vadd.f32 %v1166, %v1177
        %s1180 = sld [smem:[#allocation2 + $0x1a]]
        %v1181 = vstv %s1180
        %v1182 = vmul.f32 %v1181, %v740
        %v1183 = vmul.f32 %v1181, %v745
        %v1186 = vrot.slane %v1182, 2
        %v1187 = vrot.slane %v1183, 2
        %v1188 = vsel %vm973, %v1186, %v1187
        %1189 = vrot.lane.b32.xlu0 %v1188, 126
        %v1190 = vpop.permute.xlu0 %1189
        %v1192 = vadd.f32 %v1179, %v1190
        %s1193 = sld [smem:[#allocation2 + $0x1b]]
        %v1194 = vstv %s1193
        %v1195 = vmul.f32 %v1194, %v901
        %v1196 = vadd.f32 %v1192, %v1195
        %s1197 = sld [smem:[#allocation2 + $0x1c]]
        %v1198 = vstv %s1197
        %v1199 = vmul.f32 %v1198, %v901
        %1201 = vrot.lane.b32.xlu0 %v1199, 127
        %v1202 = vpop.permute.xlu0 %1201
        %v1204 = vadd.f32 %v1196, %v1202
        %s1205 = sld [smem:[#allocation2 + $0x1d]]
        %v1206 = vstv %s1205
        %v1207 = vmul.f32 %v1206, %v901
        %1209 = vrot.lane.b32.xlu0 %v1207, 126
        %v1210 = vpop.permute.xlu0 %1209
        %v1212 = vadd.f32 %v1204, %v1210
        %s1213 = sld [smem:[#allocation2 + $0x1e]]
        %v1214 = vstv %s1213
        %v1215 = vmul.f32 %v1214, %v901
        %v1216 = vmul.f32 %v1214, %v906
        %v1219 = vrot.slane %v1215, 1
        %v1220 = vrot.slane %v1216, 1
        %v1221 = vsel %vm935, %v1219, %v1220
        %v1223 = vadd.f32 %v1212, %v1221
        %s1224 = sld [smem:[#allocation2 + $0x1f]]
        %v1225 = vstv %s1224
        %v1226 = vmul.f32 %v1225, %v901
        %v1227 = vmul.f32 %v1225, %v906
        %v1230 = vrot.slane %v1226, 1
        %v1231 = vrot.slane %v1227, 1
        %v1232 = vsel %vm935, %v1230, %v1231
        %1233 = vrot.lane.b32.xlu0 %v1232, 127
        %v1234 = vpop.permute.xlu0 %1233
        %v1236 = vadd.f32 %v1223, %v1234
        %s1237 = sld [smem:[#allocation2 + $0x20]]
        %v1238 = vstv %s1237
        %v1239 = vmul.f32 %v1238, %v901
        %v1240 = vmul.f32 %v1238, %v906
        %v1243 = vrot.slane %v1239, 1
        %v1244 = vrot.slane %v1240, 1
        %v1245 = vsel %vm935, %v1243, %v1244
        %1246 = vrot.lane.b32.xlu0 %v1245, 126
        %v1247 = vpop.permute.xlu0 %1246
        %v1249 = vadd.f32 %v1236, %v1247
        %s1250 = sld [smem:[#allocation2 + $0x21]]
        %v1251 = vstv %s1250
        %v1252 = vmul.f32 %v1251, %v901
        %v1253 = vmul.f32 %v1251, %v906
        %v1256 = vrot.slane %v1252, 2
        %v1257 = vrot.slane %v1253, 2
        %v1258 = vsel %vm973, %v1256, %v1257
        %v1260 = vadd.f32 %v1249, %v1258
        %s1261 = sld [smem:[#allocation2 + $0x22]]
        %v1262 = vstv %s1261
        %v1263 = vmul.f32 %v1262, %v901
        %v1264 = vmul.f32 %v1262, %v906
        %v1267 = vrot.slane %v1263, 2
        %v1268 = vrot.slane %v1264, 2
        %v1269 = vsel %vm973, %v1267, %v1268
        %1270 = vrot.lane.b32.xlu0 %v1269, 127
        %v1271 = vpop.permute.xlu0 %1270
        %v1273 = vadd.f32 %v1260, %v1271
        %s1274 = sld [smem:[#allocation2 + $0x23]]
        %v1275 = vstv %s1274
        %v1276 = vmul.f32 %v1275, %v901
        %v1277 = vmul.f32 %v1275, %v906
        %v1280 = vrot.slane %v1276, 2
        %v1281 = vrot.slane %v1277, 2
        %v1282 = vsel %vm973, %v1280, %v1281
        %1283 = vrot.lane.b32.xlu0 %v1282, 126
        %v1284 = vpop.permute.xlu0 %1283
        %v1286 = vadd.f32 %v1273, %v1284
        %s1287 = sld [smem:[#allocation4]]
        %v1288 = vstv %s1287
        %v1289 = vadd.f32 %v1286, %v1288
        %v1290 = vmax.f32 %v1289, 0.0
        %vm1291 = vcmask 64512
        %1292 = vst.msk [vmem:[%s251] sm:$0xff] %vm1291, %v1290
        %s1293 = sld [smem:[#allocation2 + $0x24]]
        %v1294 = vstv %s1293
        %v1295 = vmul.f32 %v1294, %v418
        %v1296 = vadd.f32 %v1295, 0.0
        %s1297 = sld [smem:[#allocation2 + $0x25]]
        %v1298 = vstv %s1297
        %v1299 = vmul.f32 %v1298, %v418
        %1301 = vrot.lane.b32.xlu0 %v1299, 127
        %v1302 = vpop.permute.xlu0 %1301
        %v1304 = vadd.f32 %v1296, %v1302
        %s1305 = sld [smem:[#allocation2 + $0x26]]
        %v1306 = vstv %s1305
        %v1307 = vmul.f32 %v1306, %v418
        %1309 = vrot.lane.b32.xlu0 %v1307, 126
        %v1310 = vpop.permute.xlu0 %1309
        %v1312 = vadd.f32 %v1304, %v1310
        %s1313 = sld [smem:[#allocation2 + $0x27]]
        %v1314 = vstv %s1313
        %v1315 = vmul.f32 %v1314, %v418
        %v1316 = vmul.f32 %v1314, %v423
        %v1319 = vrot.slane %v1315, 1
        %v1320 = vrot.slane %v1316, 1
        %v1321 = vsel %vm935, %v1319, %v1320
        %v1323 = vadd.f32 %v1312, %v1321
        %s1324 = sld [smem:[#allocation2 + $0x28]]
        %v1325 = vstv %s1324
        %v1326 = vmul.f32 %v1325, %v418
        %v1327 = vmul.f32 %v1325, %v423
        %v1330 = vrot.slane %v1326, 1
        %v1331 = vrot.slane %v1327, 1
        %v1332 = vsel %vm935, %v1330, %v1331
        %1333 = vrot.lane.b32.xlu0 %v1332, 127
        %v1334 = vpop.permute.xlu0 %1333
        %v1336 = vadd.f32 %v1323, %v1334
        %s1337 = sld [smem:[#allocation2 + $0x29]]
        %v1338 = vstv %s1337
        %v1339 = vmul.f32 %v1338, %v418
        %v1340 = vmul.f32 %v1338, %v423
        %v1343 = vrot.slane %v1339, 1
        %v1344 = vrot.slane %v1340, 1
        %v1345 = vsel %vm935, %v1343, %v1344
        %1346 = vrot.lane.b32.xlu0 %v1345, 126
        %v1347 = vpop.permute.xlu0 %1346
        %v1349 = vadd.f32 %v1336, %v1347
        %s1350 = sld [smem:[#allocation2 + $0x2a]]
        %v1351 = vstv %s1350
        %v1352 = vmul.f32 %v1351, %v418
        %v1353 = vmul.f32 %v1351, %v423
        %v1356 = vrot.slane %v1352, 2
        %v1357 = vrot.slane %v1353, 2
        %v1358 = vsel %vm973, %v1356, %v1357
        %v1360 = vadd.f32 %v1349, %v1358
        %s1361 = sld [smem:[#allocation2 + $0x2b]]
        %v1362 = vstv %s1361
        %v1363 = vmul.f32 %v1362, %v418
        %v1364 = vmul.f32 %v1362, %v423
        %v1367 = vrot.slane %v1363, 2
        %v1368 = vrot.slane %v1364, 2
        %v1369 = vsel %vm973, %v1367, %v1368
        %1370 = vrot.lane.b32.xlu0 %v1369, 127
        %v1371 = vpop.permute.xlu0 %1370
        %v1373 = vadd.f32 %v1360, %v1371
        %s1374 = sld [smem:[#allocation2 + $0x2c]]
        %v1375 = vstv %s1374
        %v1376 = vmul.f32 %v1375, %v418
        %v1377 = vmul.f32 %v1375, %v423
        %v1380 = vrot.slane %v1376, 2
        %v1381 = vrot.slane %v1377, 2
        %v1382 = vsel %vm973, %v1380, %v1381
        %1383 = vrot.lane.b32.xlu0 %v1382, 126
        %v1384 = vpop.permute.xlu0 %1383
        %v1386 = vadd.f32 %v1373, %v1384
        %s1387 = sld [smem:[#allocation2 + $0x2d]]
        %v1388 = vstv %s1387
        %v1389 = vmul.f32 %v1388, %v579
        %v1390 = vadd.f32 %v1386, %v1389
        %s1391 = sld [smem:[#allocation2 + $0x2e]]
        %v1392 = vstv %s1391
        %v1393 = vmul.f32 %v1392, %v579
        %1395 = vrot.lane.b32.xlu0 %v1393, 127
        %v1396 = vpop.permute.xlu0 %1395
        %v1398 = vadd.f32 %v1390, %v1396
        %s1399 = sld [smem:[#allocation2 + $0x2f]]
        %v1400 = vstv %s1399
        %v1401 = vmul.f32 %v1400, %v579
        %1403 = vrot.lane.b32.xlu0 %v1401, 126
        %v1404 = vpop.permute.xlu0 %1403
        %v1406 = vadd.f32 %v1398, %v1404
        %s1407 = sld [smem:[#allocation2 + $0x30]]
        %v1408 = vstv %s1407
        %v1409 = vmul.f32 %v1408, %v579
        %v1410 = vmul.f32 %v1408, %v584
        %v1413 = vrot.slane %v1409, 1
        %v1414 = vrot.slane %v1410, 1
        %v1415 = vsel %vm935, %v1413, %v1414
        %v1417 = vadd.f32 %v1406, %v1415
        %s1418 = sld [smem:[#allocation2 + $0x31]]
        %v1419 = vstv %s1418
        %v1420 = vmul.f32 %v1419, %v579
        %v1421 = vmul.f32 %v1419, %v584
        %v1424 = vrot.slane %v1420, 1
        %v1425 = vrot.slane %v1421, 1
        %v1426 = vsel %vm935, %v1424, %v1425
        %1427 = vrot.lane.b32.xlu0 %v1426, 127
        %v1428 = vpop.permute.xlu0 %1427
        %v1430 = vadd.f32 %v1417, %v1428
        %s1431 = sld [smem:[#allocation2 + $0x32]]
        %v1432 = vstv %s1431
        %v1433 = vmul.f32 %v1432, %v579
        %v1434 = vmul.f32 %v1432, %v584
        %v1437 = vrot.slane %v1433, 1
        %v1438 = vrot.slane %v1434, 1
        %v1439 = vsel %vm935, %v1437, %v1438
        %1440 = vrot.lane.b32.xlu0 %v1439, 126
        %v1441 = vpop.permute.xlu0 %1440
        %v1443 = vadd.f32 %v1430, %v1441
        %s1444 = sld [smem:[#allocation2 + $0x33]]
        %v1445 = vstv %s1444
        %v1446 = vmul.f32 %v1445, %v579
        %v1447 = vmul.f32 %v1445, %v584
        %v1450 = vrot.slane %v1446, 2
        %v1451 = vrot.slane %v1447, 2
        %v1452 = vsel %vm973, %v1450, %v1451
        %v1454 = vadd.f32 %v1443, %v1452
        %s1455 = sld [smem:[#allocation2 + $0x34]]
        %v1456 = vstv %s1455
        %v1457 = vmul.f32 %v1456, %v579
        %v1458 = vmul.f32 %v1456, %v584
        %v1461 = vrot.slane %v1457, 2
        %v1462 = vrot.slane %v1458, 2
        %v1463 = vsel %vm973, %v1461, %v1462
        %1464 = vrot.lane.b32.xlu0 %v1463, 127
        %v1465 = vpop.permute.xlu0 %1464
        %v1467 = vadd.f32 %v1454, %v1465
        %s1468 = sld [smem:[#allocation2 + $0x35]]
        %v1469 = vstv %s1468
        %v1470 = vmul.f32 %v1469, %v579
        %v1471 = vmul.f32 %v1469, %v584
        %v1474 = vrot.slane %v1470, 2
        %v1475 = vrot.slane %v1471, 2
        %v1476 = vsel %vm973, %v1474, %v1475
        %1477 = vrot.lane.b32.xlu0 %v1476, 126
        %v1478 = vpop.permute.xlu0 %1477
        %v1480 = vadd.f32 %v1467, %v1478
        %s1481 = sld [smem:[#allocation2 + $0x36]]
        %v1482 = vstv %s1481
        %v1483 = vmul.f32 %v1482, %v740
        %v1484 = vadd.f32 %v1480, %v1483
        %s1485 = sld [smem:[#allocation2 + $0x37]]
        %v1486 = vstv %s1485
        %v1487 = vmul.f32 %v1486, %v740
        %1489 = vrot.lane.b32.xlu0 %v1487, 127
        %v1490 = vpop.permute.xlu0 %1489
        %v1492 = vadd.f32 %v1484, %v1490
        %s1493 = sld [smem:[#allocation2 + $0x38]]
        %v1494 = vstv %s1493
        %v1495 = vmul.f32 %v1494, %v740
        %1497 = vrot.lane.b32.xlu0 %v1495, 126
        %v1498 = vpop.permute.xlu0 %1497
        %v1500 = vadd.f32 %v1492, %v1498
        %s1501 = sld [smem:[#allocation2 + $0x39]]
        %v1502 = vstv %s1501
        %v1503 = vmul.f32 %v1502, %v740
        %v1504 = vmul.f32 %v1502, %v745
        %v1507 = vrot.slane %v1503, 1
        %v1508 = vrot.slane %v1504, 1
        %v1509 = vsel %vm935, %v1507, %v1508
        %v1511 = vadd.f32 %v1500, %v1509
        %s1512 = sld [smem:[#allocation2 + $0x3a]]
        %v1513 = vstv %s1512
        %v1514 = vmul.f32 %v1513, %v740
        %v1515 = vmul.f32 %v1513, %v745
        %v1518 = vrot.slane %v1514, 1
        %v1519 = vrot.slane %v1515, 1
        %v1520 = vsel %vm935, %v1518, %v1519
        %1521 = vrot.lane.b32.xlu0 %v1520, 127
        %v1522 = vpop.permute.xlu0 %1521
        %v1524 = vadd.f32 %v1511, %v1522
        %s1525 = sld [smem:[#allocation2 + $0x3b]]
        %v1526 = vstv %s1525
        %v1527 = vmul.f32 %v1526, %v740
        %v1528 = vmul.f32 %v1526, %v745
        %v1531 = vrot.slane %v1527, 1
        %v1532 = vrot.slane %v1528, 1
        %v1533 = vsel %vm935, %v1531, %v1532
        %1534 = vrot.lane.b32.xlu0 %v1533, 126
        %v1535 = vpop.permute.xlu0 %1534
        %v1537 = vadd.f32 %v1524, %v1535
        %s1538 = sld [smem:[#allocation2 + $0x3c]]
        %v1539 = vstv %s1538
        %v1540 = vmul.f32 %v1539, %v740
        %v1541 = vmul.f32 %v1539, %v745
        %v1544 = vrot.slane %v1540, 2
        %v1545 = vrot.slane %v1541, 2
        %v1546 = vsel %vm973, %v1544, %v1545
        %v1548 = vadd.f32 %v1537, %v1546
        %s1549 = sld [smem:[#allocation2 + $0x3d]]
        %v1550 = vstv %s1549
        %v1551 = vmul.f32 %v1550, %v740
        %v1552 = vmul.f32 %v1550, %v745
        %v1555 = vrot.slane %v1551, 2
        %v1556 = vrot.slane %v1552, 2
        %v1557 = vsel %vm973, %v1555, %v1556
        %1558 = vrot.lane.b32.xlu0 %v1557, 127
        %v1559 = vpop.permute.xlu0 %1558
        %v1561 = vadd.f32 %v1548, %v1559
        %s1562 = sld [smem:[#allocation2 + $0x3e]]
        %v1563 = vstv %s1562
        %v1564 = vmul.f32 %v1563, %v740
        %v1565 = vmul.f32 %v1563, %v745
        %v1568 = vrot.slane %v1564, 2
        %v1569 = vrot.slane %v1565, 2
        %v1570 = vsel %vm973, %v1568, %v1569
        %1571 = vrot.lane.b32.xlu0 %v1570, 126
        %v1572 = vpop.permute.xlu0 %1571
        %v1574 = vadd.f32 %v1561, %v1572
        %s1575 = sld [smem:[#allocation2 + $0x3f]]
        %v1576 = vstv %s1575
        %v1577 = vmul.f32 %v1576, %v901
        %v1578 = vadd.f32 %v1574, %v1577
        %s1579 = sld [smem:[#allocation2 + $0x40]]
        %v1580 = vstv %s1579
        %v1581 = vmul.f32 %v1580, %v901
        %1583 = vrot.lane.b32.xlu0 %v1581, 127
        %v1584 = vpop.permute.xlu0 %1583
        %v1586 = vadd.f32 %v1578, %v1584
        %s1587 = sld [smem:[#allocation2 + $0x41]]
        %v1588 = vstv %s1587
        %v1589 = vmul.f32 %v1588, %v901
        %1591 = vrot.lane.b32.xlu0 %v1589, 126
        %v1592 = vpop.permute.xlu0 %1591
        %v1594 = vadd.f32 %v1586, %v1592
        %s1595 = sld [smem:[#allocation2 + $0x42]]
        %v1596 = vstv %s1595
        %v1597 = vmul.f32 %v1596, %v901
        %v1598 = vmul.f32 %v1596, %v906
        %v1601 = vrot.slane %v1597, 1
        %v1602 = vrot.slane %v1598, 1
        %v1603 = vsel %vm935, %v1601, %v1602
        %v1605 = vadd.f32 %v1594, %v1603
        %s1606 = sld [smem:[#allocation2 + $0x43]]
        %v1607 = vstv %s1606
        %v1608 = vmul.f32 %v1607, %v901
        %v1609 = vmul.f32 %v1607, %v906
        %v1612 = vrot.slane %v1608, 1
        %v1613 = vrot.slane %v1609, 1
        %v1614 = vsel %vm935, %v1612, %v1613
        %1615 = vrot.lane.b32.xlu0 %v1614, 127
        %v1616 = vpop.permute.xlu0 %1615
        %v1618 = vadd.f32 %v1605, %v1616
        %s1619 = sld [smem:[#allocation2 + $0x44]]
        %v1620 = vstv %s1619
        %v1621 = vmul.f32 %v1620, %v901
        %v1622 = vmul.f32 %v1620, %v906
        %v1625 = vrot.slane %v1621, 1
        %v1626 = vrot.slane %v1622, 1
        %v1627 = vsel %vm935, %v1625, %v1626
        %1628 = vrot.lane.b32.xlu0 %v1627, 126
        %v1629 = vpop.permute.xlu0 %1628
        %v1631 = vadd.f32 %v1618, %v1629
        %s1632 = sld [smem:[#allocation2 + $0x45]]
        %v1633 = vstv %s1632
        %v1634 = vmul.f32 %v1633, %v901
        %v1635 = vmul.f32 %v1633, %v906
        %v1638 = vrot.slane %v1634, 2
        %v1639 = vrot.slane %v1635, 2
        %v1640 = vsel %vm973, %v1638, %v1639
        %v1642 = vadd.f32 %v1631, %v1640
        %s1643 = sld [smem:[#allocation2 + $0x46]]
        %v1644 = vstv %s1643
        %v1645 = vmul.f32 %v1644, %v901
        %v1646 = vmul.f32 %v1644, %v906
        %v1649 = vrot.slane %v1645, 2
        %v1650 = vrot.slane %v1646, 2
        %v1651 = vsel %vm973, %v1649, %v1650
        %1652 = vrot.lane.b32.xlu0 %v1651, 127
        %v1653 = vpop.permute.xlu0 %1652
        %v1655 = vadd.f32 %v1642, %v1653
        %s1656 = sld [smem:[#allocation2 + $0x47]]
        %v1657 = vstv %s1656
        %v1658 = vmul.f32 %v1657, %v901
        %v1659 = vmul.f32 %v1657, %v906
        %v1662 = vrot.slane %v1658, 2
        %v1663 = vrot.slane %v1659, 2
        %v1664 = vsel %vm973, %v1662, %v1663
        %1665 = vrot.lane.b32.xlu0 %v1664, 126
        %v1666 = vpop.permute.xlu0 %1665
        %v1668 = vadd.f32 %v1655, %v1666
        %s1669 = sld [smem:[#allocation4 + $0x1]]
        %v1670 = vstv %s1669
        %v1671 = vadd.f32 %v1668, %v1670
        %v1672 = vmax.f32 %v1671, 0.0
        %s1673 = scalar_lea.vmem %s251, 8
        %1674 = vst.msk [vmem:[%s1673] sm:$0xff] %vm1291, %v1672
        %s1675 = sld [smem:[#allocation2 + $0x48]]
        %v1676 = vstv %s1675
        %v1677 = vmul.f32 %v1676, %v418
        %v1678 = vadd.f32 %v1677, 0.0
        %s1679 = sld [smem:[#allocation2 + $0x49]]
        %v1680 = vstv %s1679
        %v1681 = vmul.f32 %v1680, %v418
        %1683 = vrot.lane.b32.xlu0 %v1681, 127
        %v1684 = vpop.permute.xlu0 %1683
        %v1686 = vadd.f32 %v1678, %v1684
        %s1687 = sld [smem:[#allocation2 + $0x4a]]
        %v1688 = vstv %s1687
        %v1689 = vmul.f32 %v1688, %v418
        %1691 = vrot.lane.b32.xlu0 %v1689, 126
        %v1692 = vpop.permute.xlu0 %1691
        %v1694 = vadd.f32 %v1686, %v1692
        %s1695 = sld [smem:[#allocation2 + $0x4b]]
        %v1696 = vstv %s1695
        %v1697 = vmul.f32 %v1696, %v418
        %v1698 = vmul.f32 %v1696, %v423
        %v1701 = vrot.slane %v1697, 1
        %v1702 = vrot.slane %v1698, 1
        %v1703 = vsel %vm935, %v1701, %v1702
        %v1705 = vadd.f32 %v1694, %v1703
        %s1706 = sld [smem:[#allocation2 + $0x4c]]
        %v1707 = vstv %s1706
        %v1708 = vmul.f32 %v1707, %v418
        %v1709 = vmul.f32 %v1707, %v423
        %v1712 = vrot.slane %v1708, 1
        %v1713 = vrot.slane %v1709, 1
        %v1714 = vsel %vm935, %v1712, %v1713
        %1715 = vrot.lane.b32.xlu0 %v1714, 127
        %v1716 = vpop.permute.xlu0 %1715
        %v1718 = vadd.f32 %v1705, %v1716
        %s1719 = sld [smem:[#allocation2 + $0x4d]]
        %v1720 = vstv %s1719
        %v1721 = vmul.f32 %v1720, %v418
        %v1722 = vmul.f32 %v1720, %v423
        %v1725 = vrot.slane %v1721, 1
        %v1726 = vrot.slane %v1722, 1
        %v1727 = vsel %vm935, %v1725, %v1726
        %1728 = vrot.lane.b32.xlu0 %v1727, 126
        %v1729 = vpop.permute.xlu0 %1728
        %v1731 = vadd.f32 %v1718, %v1729
        %s1732 = sld [smem:[#allocation2 + $0x4e]]
        %v1733 = vstv %s1732
        %v1734 = vmul.f32 %v1733, %v418
        %v1735 = vmul.f32 %v1733, %v423
        %v1738 = vrot.slane %v1734, 2
        %v1739 = vrot.slane %v1735, 2
        %v1740 = vsel %vm973, %v1738, %v1739
        %v1742 = vadd.f32 %v1731, %v1740
        %s1743 = sld [smem:[#allocation2 + $0x4f]]
        %v1744 = vstv %s1743
        %v1745 = vmul.f32 %v1744, %v418
        %v1746 = vmul.f32 %v1744, %v423
        %v1749 = vrot.slane %v1745, 2
        %v1750 = vrot.slane %v1746, 2
        %v1751 = vsel %vm973, %v1749, %v1750
        %1752 = vrot.lane.b32.xlu0 %v1751, 127
        %v1753 = vpop.permute.xlu0 %1752
        %v1755 = vadd.f32 %v1742, %v1753
        %s1756 = sld [smem:[#allocation2 + $0x50]]
        %v1757 = vstv %s1756
        %v1758 = vmul.f32 %v1757, %v418
        %v1759 = vmul.f32 %v1757, %v423
        %v1762 = vrot.slane %v1758, 2
        %v1763 = vrot.slane %v1759, 2
        %v1764 = vsel %vm973, %v1762, %v1763
        %1765 = vrot.lane.b32.xlu0 %v1764, 126
        %v1766 = vpop.permute.xlu0 %1765
        %v1768 = vadd.f32 %v1755, %v1766
        %s1769 = sld [smem:[#allocation2 + $0x51]]
        %v1770 = vstv %s1769
        %v1771 = vmul.f32 %v1770, %v579
        %v1772 = vadd.f32 %v1768, %v1771
        %s1773 = sld [smem:[#allocation2 + $0x52]]
        %v1774 = vstv %s1773
        %v1775 = vmul.f32 %v1774, %v579
        %1777 = vrot.lane.b32.xlu0 %v1775, 127
        %v1778 = vpop.permute.xlu0 %1777
        %v1780 = vadd.f32 %v1772, %v1778
        %s1781 = sld [smem:[#allocation2 + $0x53]]
        %v1782 = vstv %s1781
        %v1783 = vmul.f32 %v1782, %v579
        %1785 = vrot.lane.b32.xlu0 %v1783, 126
        %v1786 = vpop.permute.xlu0 %1785
        %v1788 = vadd.f32 %v1780, %v1786
        %s1789 = sld [smem:[#allocation2 + $0x54]]
        %v1790 = vstv %s1789
        %v1791 = vmul.f32 %v1790, %v579
        %v1792 = vmul.f32 %v1790, %v584
        %v1795 = vrot.slane %v1791, 1
        %v1796 = vrot.slane %v1792, 1
        %v1797 = vsel %vm935, %v1795, %v1796
        %v1799 = vadd.f32 %v1788, %v1797
        %s1800 = sld [smem:[#allocation2 + $0x55]]
        %v1801 = vstv %s1800
        %v1802 = vmul.f32 %v1801, %v579
        %v1803 = vmul.f32 %v1801, %v584
        %v1806 = vrot.slane %v1802, 1
        %v1807 = vrot.slane %v1803, 1
        %v1808 = vsel %vm935, %v1806, %v1807
        %1809 = vrot.lane.b32.xlu0 %v1808, 127
        %v1810 = vpop.permute.xlu0 %1809
        %v1812 = vadd.f32 %v1799, %v1810
        %s1813 = sld [smem:[#allocation2 + $0x56]]
        %v1814 = vstv %s1813
        %v1815 = vmul.f32 %v1814, %v579
        %v1816 = vmul.f32 %v1814, %v584
        %v1819 = vrot.slane %v1815, 1
        %v1820 = vrot.slane %v1816, 1
        %v1821 = vsel %vm935, %v1819, %v1820
        %1822 = vrot.lane.b32.xlu0 %v1821, 126
        %v1823 = vpop.permute.xlu0 %1822
        %v1825 = vadd.f32 %v1812, %v1823
        %s1826 = sld [smem:[#allocation2 + $0x57]]
        %v1827 = vstv %s1826
        %v1828 = vmul.f32 %v1827, %v579
        %v1829 = vmul.f32 %v1827, %v584
        %v1832 = vrot.slane %v1828, 2
        %v1833 = vrot.slane %v1829, 2
        %v1834 = vsel %vm973, %v1832, %v1833
        %v1836 = vadd.f32 %v1825, %v1834
        %s1837 = sld [smem:[#allocation2 + $0x58]]
        %v1838 = vstv %s1837
        %v1839 = vmul.f32 %v1838, %v579
        %v1840 = vmul.f32 %v1838, %v584
        %v1843 = vrot.slane %v1839, 2
        %v1844 = vrot.slane %v1840, 2
        %v1845 = vsel %vm973, %v1843, %v1844
        %1846 = vrot.lane.b32.xlu0 %v1845, 127
        %v1847 = vpop.permute.xlu0 %1846
        %v1849 = vadd.f32 %v1836, %v1847
        %s1850 = sld [smem:[#allocation2 + $0x59]]
        %v1851 = vstv %s1850
        %v1852 = vmul.f32 %v1851, %v579
        %v1853 = vmul.f32 %v1851, %v584
        %v1856 = vrot.slane %v1852, 2
        %v1857 = vrot.slane %v1853, 2
        %v1858 = vsel %vm973, %v1856, %v1857
        %1859 = vrot.lane.b32.xlu0 %v1858, 126
        %v1860 = vpop.permute.xlu0 %1859
        %v1862 = vadd.f32 %v1849, %v1860
        %s1863 = sld [smem:[#allocation2 + $0x5a]]
        %v1864 = vstv %s1863
        %v1865 = vmul.f32 %v1864, %v740
        %v1866 = vadd.f32 %v1862, %v1865
        %s1867 = sld [smem:[#allocation2 + $0x5b]]
        %v1868 = vstv %s1867
        %v1869 = vmul.f32 %v1868, %v740
        %1871 = vrot.lane.b32.xlu0 %v1869, 127
        %v1872 = vpop.permute.xlu0 %1871
        %v1874 = vadd.f32 %v1866, %v1872
        %s1875 = sld [smem:[#allocation2 + $0x5c]]
        %v1876 = vstv %s1875
        %v1877 = vmul.f32 %v1876, %v740
        %1879 = vrot.lane.b32.xlu0 %v1877, 126
        %v1880 = vpop.permute.xlu0 %1879
        %v1882 = vadd.f32 %v1874, %v1880
        %s1883 = sld [smem:[#allocation2 + $0x5d]]
        %v1884 = vstv %s1883
        %v1885 = vmul.f32 %v1884, %v740
        %v1886 = vmul.f32 %v1884, %v745
        %v1889 = vrot.slane %v1885, 1
        %v1890 = vrot.slane %v1886, 1
        %v1891 = vsel %vm935, %v1889, %v1890
        %v1893 = vadd.f32 %v1882, %v1891
        %s1894 = sld [smem:[#allocation2 + $0x5e]]
        %v1895 = vstv %s1894
        %v1896 = vmul.f32 %v1895, %v740
        %v1897 = vmul.f32 %v1895, %v745
        %v1900 = vrot.slane %v1896, 1
        %v1901 = vrot.slane %v1897, 1
        %v1902 = vsel %vm935, %v1900, %v1901
        %1903 = vrot.lane.b32.xlu0 %v1902, 127
        %v1904 = vpop.permute.xlu0 %1903
        %v1906 = vadd.f32 %v1893, %v1904
        %s1907 = sld [smem:[#allocation2 + $0x5f]]
        %v1908 = vstv %s1907
        %v1909 = vmul.f32 %v1908, %v740
        %v1910 = vmul.f32 %v1908, %v745
        %v1913 = vrot.slane %v1909, 1
        %v1914 = vrot.slane %v1910, 1
        %v1915 = vsel %vm935, %v1913, %v1914
        %1916 = vrot.lane.b32.xlu0 %v1915, 126
        %v1917 = vpop.permute.xlu0 %1916
        %v1919 = vadd.f32 %v1906, %v1917
        %s1920 = sld [smem:[#allocation2 + $0x60]]
        %v1921 = vstv %s1920
        %v1922 = vmul.f32 %v1921, %v740
        %v1923 = vmul.f32 %v1921, %v745
        %v1926 = vrot.slane %v1922, 2
        %v1927 = vrot.slane %v1923, 2
        %v1928 = vsel %vm973, %v1926, %v1927
        %v1930 = vadd.f32 %v1919, %v1928
        %s1931 = sld [smem:[#allocation2 + $0x61]]
        %v1932 = vstv %s1931
        %v1933 = vmul.f32 %v1932, %v740
        %v1934 = vmul.f32 %v1932, %v745
        %v1937 = vrot.slane %v1933, 2
        %v1938 = vrot.slane %v1934, 2
        %v1939 = vsel %vm973, %v1937, %v1938
        %1940 = vrot.lane.b32.xlu0 %v1939, 127
        %v1941 = vpop.permute.xlu0 %1940
        %v1943 = vadd.f32 %v1930, %v1941
        %s1944 = sld [smem:[#allocation2 + $0x62]]
        %v1945 = vstv %s1944
        %v1946 = vmul.f32 %v1945, %v740
        %v1947 = vmul.f32 %v1945, %v745
        %v1950 = vrot.slane %v1946, 2
        %v1951 = vrot.slane %v1947, 2
        %v1952 = vsel %vm973, %v1950, %v1951
        %1953 = vrot.lane.b32.xlu0 %v1952, 126
        %v1954 = vpop.permute.xlu0 %1953
        %v1956 = vadd.f32 %v1943, %v1954
        %s1957 = sld [smem:[#allocation2 + $0x63]]
        %v1958 = vstv %s1957
        %v1959 = vmul.f32 %v1958, %v901
        %v1960 = vadd.f32 %v1956, %v1959
        %s1961 = sld [smem:[#allocation2 + $0x64]]
        %v1962 = vstv %s1961
        %v1963 = vmul.f32 %v1962, %v901
        %1965 = vrot.lane.b32.xlu0 %v1963, 127
        %v1966 = vpop.permute.xlu0 %1965
        %v1968 = vadd.f32 %v1960, %v1966
        %s1969 = sld [smem:[#allocation2 + $0x65]]
        %v1970 = vstv %s1969
        %v1971 = vmul.f32 %v1970, %v901
        %1973 = vrot.lane.b32.xlu0 %v1971, 126
        %v1974 = vpop.permute.xlu0 %1973
        %v1976 = vadd.f32 %v1968, %v1974
        %s1977 = sld [smem:[#allocation2 + $0x66]]
        %v1978 = vstv %s1977
        %v1979 = vmul.f32 %v1978, %v901
        %v1980 = vmul.f32 %v1978, %v906
        %v1983 = vrot.slane %v1979, 1
        %v1984 = vrot.slane %v1980, 1
        %v1985 = vsel %vm935, %v1983, %v1984
        %v1987 = vadd.f32 %v1976, %v1985
        %s1988 = sld [smem:[#allocation2 + $0x67]]
        %v1989 = vstv %s1988
        %v1990 = vmul.f32 %v1989, %v901
        %v1991 = vmul.f32 %v1989, %v906
        %v1994 = vrot.slane %v1990, 1
        %v1995 = vrot.slane %v1991, 1
        %v1996 = vsel %vm935, %v1994, %v1995
        %1997 = vrot.lane.b32.xlu0 %v1996, 127
        %v1998 = vpop.permute.xlu0 %1997
        %v2000 = vadd.f32 %v1987, %v1998
        %s2001 = sld [smem:[#allocation2 + $0x68]]
        %v2002 = vstv %s2001
        %v2003 = vmul.f32 %v2002, %v901
        %v2004 = vmul.f32 %v2002, %v906
        %v2007 = vrot.slane %v2003, 1
        %v2008 = vrot.slane %v2004, 1
        %v2009 = vsel %vm935, %v2007, %v2008
        %2010 = vrot.lane.b32.xlu0 %v2009, 126
        %v2011 = vpop.permute.xlu0 %2010
        %v2013 = vadd.f32 %v2000, %v2011
        %s2014 = sld [smem:[#allocation2 + $0x69]]
        %v2015 = vstv %s2014
        %v2016 = vmul.f32 %v2015, %v901
        %v2017 = vmul.f32 %v2015, %v906
        %v2020 = vrot.slane %v2016, 2
        %v2021 = vrot.slane %v2017, 2
        %v2022 = vsel %vm973, %v2020, %v2021
        %v2024 = vadd.f32 %v2013, %v2022
        %s2025 = sld [smem:[#allocation2 + $0x6a]]
        %v2026 = vstv %s2025
        %v2027 = vmul.f32 %v2026, %v901
        %v2028 = vmul.f32 %v2026, %v906
        %v2031 = vrot.slane %v2027, 2
        %v2032 = vrot.slane %v2028, 2
        %v2033 = vsel %vm973, %v2031, %v2032
        %2034 = vrot.lane.b32.xlu0 %v2033, 127
        %v2035 = vpop.permute.xlu0 %2034
        %v2037 = vadd.f32 %v2024, %v2035
        %s2038 = sld [smem:[#allocation2 + $0x6b]]
        %v2039 = vstv %s2038
        %v2040 = vmul.f32 %v2039, %v901
        %v2041 = vmul.f32 %v2039, %v906
        %v2044 = vrot.slane %v2040, 2
        %v2045 = vrot.slane %v2041, 2
        %v2046 = vsel %vm973, %v2044, %v2045
        %2047 = vrot.lane.b32.xlu0 %v2046, 126
        %v2048 = vpop.permute.xlu0 %2047
        %v2050 = vadd.f32 %v2037, %v2048
        %s2051 = sld [smem:[#allocation4 + $0x2]]
        %v2052 = vstv %s2051
        %v2053 = vadd.f32 %v2050, %v2052
        %v2054 = vmax.f32 %v2053, 0.0
        %s2055 = scalar_lea.vmem %s251, 16
        %2056 = vst.msk [vmem:[%s2055] sm:$0xff] %vm1291, %v2054
        %s2057 = sld [smem:[#allocation2 + $0x6c]]
        %v2058 = vstv %s2057
        %v2059 = vmul.f32 %v2058, %v418
        %v2060 = vadd.f32 %v2059, 0.0
        %s2061 = sld [smem:[#allocation2 + $0x6d]]
        %v2062 = vstv %s2061
        %v2063 = vmul.f32 %v2062, %v418
        %2065 = vrot.lane.b32.xlu0 %v2063, 127
        %v2066 = vpop.permute.xlu0 %2065
        %v2068 = vadd.f32 %v2060, %v2066
        %s2069 = sld [smem:[#allocation2 + $0x6e]]
        %v2070 = vstv %s2069
        %v2071 = vmul.f32 %v2070, %v418
        %2073 = vrot.lane.b32.xlu0 %v2071, 126
        %v2074 = vpop.permute.xlu0 %2073
        %v2076 = vadd.f32 %v2068, %v2074
        %s2077 = sld [smem:[#allocation2 + $0x6f]]
        %v2078 = vstv %s2077
        %v2079 = vmul.f32 %v2078, %v418
        %v2080 = vmul.f32 %v2078, %v423
        %v2083 = vrot.slane %v2079, 1
        %v2084 = vrot.slane %v2080, 1
        %v2085 = vsel %vm935, %v2083, %v2084
        %v2087 = vadd.f32 %v2076, %v2085
        %s2088 = sld [smem:[#allocation2 + $0x70]]
        %v2089 = vstv %s2088
        %v2090 = vmul.f32 %v2089, %v418
        %v2091 = vmul.f32 %v2089, %v423
        %v2094 = vrot.slane %v2090, 1
        %v2095 = vrot.slane %v2091, 1
        %v2096 = vsel %vm935, %v2094, %v2095
        %2097 = vrot.lane.b32.xlu0 %v2096, 127
        %v2098 = vpop.permute.xlu0 %2097
        %v2100 = vadd.f32 %v2087, %v2098
        %s2101 = sld [smem:[#allocation2 + $0x71]]
        %v2102 = vstv %s2101
        %v2103 = vmul.f32 %v2102, %v418
        %v2104 = vmul.f32 %v2102, %v423
        %v2107 = vrot.slane %v2103, 1
        %v2108 = vrot.slane %v2104, 1
        %v2109 = vsel %vm935, %v2107, %v2108
        %2110 = vrot.lane.b32.xlu0 %v2109, 126
        %v2111 = vpop.permute.xlu0 %2110
        %v2113 = vadd.f32 %v2100, %v2111
        %s2114 = sld [smem:[#allocation2 + $0x72]]
        %v2115 = vstv %s2114
        %v2116 = vmul.f32 %v2115, %v418
        %v2117 = vmul.f32 %v2115, %v423
        %v2120 = vrot.slane %v2116, 2
        %v2121 = vrot.slane %v2117, 2
        %v2122 = vsel %vm973, %v2120, %v2121
        %v2124 = vadd.f32 %v2113, %v2122
        %s2125 = sld [smem:[#allocation2 + $0x73]]
        %v2126 = vstv %s2125
        %v2127 = vmul.f32 %v2126, %v418
        %v2128 = vmul.f32 %v2126, %v423
        %v2131 = vrot.slane %v2127, 2
        %v2132 = vrot.slane %v2128, 2
        %v2133 = vsel %vm973, %v2131, %v2132
        %2134 = vrot.lane.b32.xlu0 %v2133, 127
        %v2135 = vpop.permute.xlu0 %2134
        %v2137 = vadd.f32 %v2124, %v2135
        %s2138 = sld [smem:[#allocation2 + $0x74]]
        %v2139 = vstv %s2138
        %v2140 = vmul.f32 %v2139, %v418
        %v2141 = vmul.f32 %v2139, %v423
        %v2144 = vrot.slane %v2140, 2
        %v2145 = vrot.slane %v2141, 2
        %v2146 = vsel %vm973, %v2144, %v2145
        %2147 = vrot.lane.b32.xlu0 %v2146, 126
        %v2148 = vpop.permute.xlu0 %2147
        %v2150 = vadd.f32 %v2137, %v2148
        %s2151 = sld [smem:[#allocation2 + $0x75]]
        %v2152 = vstv %s2151
        %v2153 = vmul.f32 %v2152, %v579
        %v2154 = vadd.f32 %v2150, %v2153
        %s2155 = sld [smem:[#allocation2 + $0x76]]
        %v2156 = vstv %s2155
        %v2157 = vmul.f32 %v2156, %v579
        %2159 = vrot.lane.b32.xlu0 %v2157, 127
        %v2160 = vpop.permute.xlu0 %2159
        %v2162 = vadd.f32 %v2154, %v2160
        %s2163 = sld [smem:[#allocation2 + $0x77]]
        %v2164 = vstv %s2163
        %v2165 = vmul.f32 %v2164, %v579
        %2167 = vrot.lane.b32.xlu0 %v2165, 126
        %v2168 = vpop.permute.xlu0 %2167
        %v2170 = vadd.f32 %v2162, %v2168
        %s2171 = sld [smem:[#allocation2 + $0x78]]
        %v2172 = vstv %s2171
        %v2173 = vmul.f32 %v2172, %v579
        %v2174 = vmul.f32 %v2172, %v584
        %v2177 = vrot.slane %v2173, 1
        %v2178 = vrot.slane %v2174, 1
        %v2179 = vsel %vm935, %v2177, %v2178
        %v2181 = vadd.f32 %v2170, %v2179
        %s2182 = sld [smem:[#allocation2 + $0x79]]
        %v2183 = vstv %s2182
        %v2184 = vmul.f32 %v2183, %v579
        %v2185 = vmul.f32 %v2183, %v584
        %v2188 = vrot.slane %v2184, 1
        %v2189 = vrot.slane %v2185, 1
        %v2190 = vsel %vm935, %v2188, %v2189
        %2191 = vrot.lane.b32.xlu0 %v2190, 127
        %v2192 = vpop.permute.xlu0 %2191
        %v2194 = vadd.f32 %v2181, %v2192
        %s2195 = sld [smem:[#allocation2 + $0x7a]]
        %v2196 = vstv %s2195
        %v2197 = vmul.f32 %v2196, %v579
        %v2198 = vmul.f32 %v2196, %v584
        %v2201 = vrot.slane %v2197, 1
        %v2202 = vrot.slane %v2198, 1
        %v2203 = vsel %vm935, %v2201, %v2202
        %2204 = vrot.lane.b32.xlu0 %v2203, 126
        %v2205 = vpop.permute.xlu0 %2204
        %v2207 = vadd.f32 %v2194, %v2205
        %s2208 = sld [smem:[#allocation2 + $0x7b]]
        %v2209 = vstv %s2208
        %v2210 = vmul.f32 %v2209, %v579
        %v2211 = vmul.f32 %v2209, %v584
        %v2214 = vrot.slane %v2210, 2
        %v2215 = vrot.slane %v2211, 2
        %v2216 = vsel %vm973, %v2214, %v2215
        %v2218 = vadd.f32 %v2207, %v2216
        %s2219 = sld [smem:[#allocation2 + $0x7c]]
        %v2220 = vstv %s2219
        %v2221 = vmul.f32 %v2220, %v579
        %v2222 = vmul.f32 %v2220, %v584
        %v2225 = vrot.slane %v2221, 2
        %v2226 = vrot.slane %v2222, 2
        %v2227 = vsel %vm973, %v2225, %v2226
        %2228 = vrot.lane.b32.xlu0 %v2227, 127
        %v2229 = vpop.permute.xlu0 %2228
        %v2231 = vadd.f32 %v2218, %v2229
        %s2232 = sld [smem:[#allocation2 + $0x7d]]
        %v2233 = vstv %s2232
        %v2234 = vmul.f32 %v2233, %v579
        %v2235 = vmul.f32 %v2233, %v584
        %v2238 = vrot.slane %v2234, 2
        %v2239 = vrot.slane %v2235, 2
        %v2240 = vsel %vm973, %v2238, %v2239
        %2241 = vrot.lane.b32.xlu0 %v2240, 126
        %v2242 = vpop.permute.xlu0 %2241
        %v2244 = vadd.f32 %v2231, %v2242
        %s2245 = sld [smem:[#allocation2 + $0x7e]]
        %v2246 = vstv %s2245
        %v2247 = vmul.f32 %v2246, %v740
        %v2248 = vadd.f32 %v2244, %v2247
        %s2249 = sld [smem:[#allocation2 + $0x7f]]
        %v2250 = vstv %s2249
        %v2251 = vmul.f32 %v2250, %v740
        %2253 = vrot.lane.b32.xlu0 %v2251, 127
        %v2254 = vpop.permute.xlu0 %2253
        %v2256 = vadd.f32 %v2248, %v2254
        %s2257 = sld [smem:[#allocation2 + $0x80]]
        %v2258 = vstv %s2257
        %v2259 = vmul.f32 %v2258, %v740
        %2261 = vrot.lane.b32.xlu0 %v2259, 126
        %v2262 = vpop.permute.xlu0 %2261
        %v2264 = vadd.f32 %v2256, %v2262
        %s2265 = sld [smem:[#allocation2 + $0x81]]
        %v2266 = vstv %s2265
        %v2267 = vmul.f32 %v2266, %v740
        %v2268 = vmul.f32 %v2266, %v745
        %v2271 = vrot.slane %v2267, 1
        %v2272 = vrot.slane %v2268, 1
        %v2273 = vsel %vm935, %v2271, %v2272
        %v2275 = vadd.f32 %v2264, %v2273
        %s2276 = sld [smem:[#allocation2 + $0x82]]
        %v2277 = vstv %s2276
        %v2278 = vmul.f32 %v2277, %v740
        %v2279 = vmul.f32 %v2277, %v745
        %v2282 = vrot.slane %v2278, 1
        %v2283 = vrot.slane %v2279, 1
        %v2284 = vsel %vm935, %v2282, %v2283
        %2285 = vrot.lane.b32.xlu0 %v2284, 127
        %v2286 = vpop.permute.xlu0 %2285
        %v2288 = vadd.f32 %v2275, %v2286
        %s2289 = sld [smem:[#allocation2 + $0x83]]
        %v2290 = vstv %s2289
        %v2291 = vmul.f32 %v2290, %v740
        %v2292 = vmul.f32 %v2290, %v745
        %v2295 = vrot.slane %v2291, 1
        %v2296 = vrot.slane %v2292, 1
        %v2297 = vsel %vm935, %v2295, %v2296
        %2298 = vrot.lane.b32.xlu0 %v2297, 126
        %v2299 = vpop.permute.xlu0 %2298
        %v2301 = vadd.f32 %v2288, %v2299
        %s2302 = sld [smem:[#allocation2 + $0x84]]
        %v2303 = vstv %s2302
        %v2304 = vmul.f32 %v2303, %v740
        %v2305 = vmul.f32 %v2303, %v745
        %v2308 = vrot.slane %v2304, 2
        %v2309 = vrot.slane %v2305, 2
        %v2310 = vsel %vm973, %v2308, %v2309
        %v2312 = vadd.f32 %v2301, %v2310
        %s2313 = sld [smem:[#allocation2 + $0x85]]
        %v2314 = vstv %s2313
        %v2315 = vmul.f32 %v2314, %v740
        %v2316 = vmul.f32 %v2314, %v745
        %v2319 = vrot.slane %v2315, 2
        %v2320 = vrot.slane %v2316, 2
        %v2321 = vsel %vm973, %v2319, %v2320
        %2322 = vrot.lane.b32.xlu0 %v2321, 127
        %v2323 = vpop.permute.xlu0 %2322
        %v2325 = vadd.f32 %v2312, %v2323
        %s2326 = sld [smem:[#allocation2 + $0x86]]
        %v2327 = vstv %s2326
        %v2328 = vmul.f32 %v2327, %v740
        %v2329 = vmul.f32 %v2327, %v745
        %v2332 = vrot.slane %v2328, 2
        %v2333 = vrot.slane %v2329, 2
        %v2334 = vsel %vm973, %v2332, %v2333
        %2335 = vrot.lane.b32.xlu0 %v2334, 126
        %v2336 = vpop.permute.xlu0 %2335
        %v2338 = vadd.f32 %v2325, %v2336
        %s2339 = sld [smem:[#allocation2 + $0x87]]
        %v2340 = vstv %s2339
        %v2341 = vmul.f32 %v2340, %v901
        %v2342 = vadd.f32 %v2338, %v2341
        %s2343 = sld [smem:[#allocation2 + $0x88]]
        %v2344 = vstv %s2343
        %v2345 = vmul.f32 %v2344, %v901
        %2347 = vrot.lane.b32.xlu0 %v2345, 127
        %v2348 = vpop.permute.xlu0 %2347
        %v2350 = vadd.f32 %v2342, %v2348
        %s2351 = sld [smem:[#allocation2 + $0x89]]
        %v2352 = vstv %s2351
        %v2353 = vmul.f32 %v2352, %v901
        %2355 = vrot.lane.b32.xlu0 %v2353, 126
        %v2356 = vpop.permute.xlu0 %2355
        %v2358 = vadd.f32 %v2350, %v2356
        %s2359 = sld [smem:[#allocation2 + $0x8a]]
        %v2360 = vstv %s2359
        %v2361 = vmul.f32 %v2360, %v901
        %v2362 = vmul.f32 %v2360, %v906
        %v2365 = vrot.slane %v2361, 1
        %v2366 = vrot.slane %v2362, 1
        %v2367 = vsel %vm935, %v2365, %v2366
        %v2369 = vadd.f32 %v2358, %v2367
        %s2370 = sld [smem:[#allocation2 + $0x8b]]
        %v2371 = vstv %s2370
        %v2372 = vmul.f32 %v2371, %v901
        %v2373 = vmul.f32 %v2371, %v906
        %v2376 = vrot.slane %v2372, 1
        %v2377 = vrot.slane %v2373, 1
        %v2378 = vsel %vm935, %v2376, %v2377
        %2379 = vrot.lane.b32.xlu0 %v2378, 127
        %v2380 = vpop.permute.xlu0 %2379
        %v2382 = vadd.f32 %v2369, %v2380
        %s2383 = sld [smem:[#allocation2 + $0x8c]]
        %v2384 = vstv %s2383
        %v2385 = vmul.f32 %v2384, %v901
        %v2386 = vmul.f32 %v2384, %v906
        %v2389 = vrot.slane %v2385, 1
        %v2390 = vrot.slane %v2386, 1
        %v2391 = vsel %vm935, %v2389, %v2390
        %2392 = vrot.lane.b32.xlu0 %v2391, 126
        %v2393 = vpop.permute.xlu0 %2392
        %v2395 = vadd.f32 %v2382, %v2393
        %s2396 = sld [smem:[#allocation2 + $0x8d]]
        %v2397 = vstv %s2396
        %v2398 = vmul.f32 %v2397, %v901
        %v2399 = vmul.f32 %v2397, %v906
        %v2402 = vrot.slane %v2398, 2
        %v2403 = vrot.slane %v2399, 2
        %v2404 = vsel %vm973, %v2402, %v2403
        %v2406 = vadd.f32 %v2395, %v2404
        %s2407 = sld [smem:[#allocation2 + $0x8e]]
        %v2408 = vstv %s2407
        %v2409 = vmul.f32 %v2408, %v901
        %v2410 = vmul.f32 %v2408, %v906
        %v2413 = vrot.slane %v2409, 2
        %v2414 = vrot.slane %v2410, 2
        %v2415 = vsel %vm973, %v2413, %v2414
        %2416 = vrot.lane.b32.xlu0 %v2415, 127
        %v2417 = vpop.permute.xlu0 %2416
        %v2419 = vadd.f32 %v2406, %v2417
        %s2420 = sld [smem:[#allocation2 + $0x8f]]
        %v2421 = vstv %s2420
        %v2422 = vmul.f32 %v2421, %v901
        %v2423 = vmul.f32 %v2421, %v906
        %v2426 = vrot.slane %v2422, 2
        %v2427 = vrot.slane %v2423, 2
        %v2428 = vsel %vm973, %v2426, %v2427
        %2429 = vrot.lane.b32.xlu0 %v2428, 126
        %v2430 = vpop.permute.xlu0 %2429
        %v2432 = vadd.f32 %v2419, %v2430
        %s2433 = sld [smem:[#allocation4 + $0x3]]
        %v2434 = vstv %s2433
        %v2435 = vadd.f32 %v2432, %v2434
        %v2436 = vmax.f32 %v2435, 0.0
        %s2437 = scalar_lea.vmem %s251, 24
        %2438 = vst.msk [vmem:[%s2437] sm:$0xff] %vm1291, %v2436
        %p2439 = scmp.lt.s32.totalorder %s18, 1
        %s2440 = scalar_select %p2439, %s18, 1
        %s2441 = smul.addr %s2440, 4
        %s2442 = smul.addr %s2441, 8
        %s2443 = scalar_lea.vmem %s5, %s2442
        // Predicated region
        $region49: #{csph_forward.5} parent=39 // pred_check
          %p2444 = pneg %p146
        $region50: #{csph_forward.5} parent=39 // pred_check_branch
          %2446 = sbr.rel (%p2444) target = $region52
        $region51: #{csph_forward.5} parent=39 // pred_region
          _
        $region52: #{csph_forward.5} parent=39 // pred_fallthru
          _
      $region40: #{csph_forward.5} parent=5 // pred_fallthru
        _
      %p2447 = scmp.le.s32.totalorder 2, %s13
      // Predicated region
      $region53: #{csph_forward.5} parent=5 // pred_check
        %p2448 = pneg %p2447
      $region54: #{csph_forward.5} parent=5 // pred_check_branch
        %2450 = sbr.rel (%p2448) target = $region56
      $region55: #{csph_forward.5} parent=5 // pred_region
        %s2451 = ssub.s32 %s13, 2
        // Predicated region
        $region57: #{csph_forward.5} parent=55 // pred_check
          %p2452 = pneg %p152
        $region58: #{csph_forward.5} parent=55 // pred_check_branch
          %2454 = sbr.rel (%p2452) target = $region60
        $region59: #{csph_forward.5} parent=55 // pred_region
          %p2455 = scmp.lt.s32.totalorder %s19, 1
          %s2456 = scalar_select %p2455, %s19, 1
          %s2457 = smul.addr %s2456, 4
          %s2458 = smul.addr %s2457, 8
          %s2459 = scalar_lea.vmem %s5, %s2458
        $region60: #{csph_forward.5} parent=55 // pred_fallthru
          _
      $region56: #{csph_forward.5} parent=5 // pred_fallthru
        _
    $region6: #{csph_forward.5} parent=1 // loop_footer
      %s17 = sadd.s32 1, %s13
    $region7: #{csph_forward.5} parent=1 // loop_footer_branch
      %12 = sbr.rel target = $region3
    $region8: #{csph_forward.5} parent=1 // loop_exit
      _
    %2460 = vsyncpa [#allocation3], 1
    %s2461 = scalar_lea.sflag [#allocation3], 1
    %2462 = vsyncpa %s2461, 1
    %2463 = vsyncpa [#allocation5], 1

</llo_original>
